<compile_context>
chip_gen: v5e
topology: v5e:2x2
jax: 0.10.0
libtpu: 0.0.40
codegen_flags: <defaults>
</compile_context>

<pallas_src>
import jax
import jax.numpy as jnp
from jax.experimental import pallas as pl
from jax.experimental.pallas import tpu as pltpu

NUM_NODES = 25
FEAT_C = 2048     # ResNet50 output channels
HID = 1024        # fc1 output


def _round_up(x, m):
    return ((x + m - 1) // m) * m


def head_kernel(p_ref, w1_ref, b1_ref, w2_ref, b2_ref, o_ref):
    # p_ref : (TB, C)   bf16 pooled features
    # w1_ref: (C, HID)  bf16    b1_ref: (1, HID)  f32
    # w2_ref: (HID, Np) bf16    b2_ref: (1, Np)   f32   (Np = 640, lane-padded)
    # o_ref : (TB, Np)  f32
    # fc1 + ReLU (bf16 MXU inputs, f32 accumulation; epilogue in f32)
    h = jnp.dot(p_ref[...], w1_ref[...],
                preferred_element_type=jnp.float32) + b1_ref[...]
    h = jnp.maximum(h, 0.0)

    # fc2 + sigmoid
    logits = jnp.dot(h.astype(jnp.bfloat16), w2_ref[...],
                     preferred_element_type=jnp.float32) + b2_ref[...]
    o_ref[...] = jax.nn.sigmoid(logits)


def prepare_head_params(w1, b1, w2, b2, num_nodes=NUM_NODES):
    """One-time parameter prep (do NOT call per forward): bf16 cast + lane pad."""
    n2 = num_nodes * num_nodes
    n_pad = _round_up(n2, 128)                       # 625 -> 640 (5 x 128 lanes)
    w1_bf = w1.astype(jnp.bfloat16)                  # (2048, 1024) bf16
    w2_bf = jnp.pad(w2, ((0, 0), (0, n_pad - n2))).astype(jnp.bfloat16)
    b1_f = b1.reshape(1, HID).astype(jnp.float32)
    b2_p = jnp.pad(b2.reshape(1, n2), ((0, 0), (0, n_pad - n2))).astype(jnp.float32)
    return w1_bf, b1_f, w2_bf, b2_p


def graph_analysis_head(feat_nchw, params, num_nodes=NUM_NODES):
    """feat_nchw: (B, 2048, H, W) float32 feature map (post-backbone).
    params: output of prepare_head_params (cached bf16/padded weights)."""
    w1_bf, b1, w2_bf, b2 = params
    B, C, H, W = feat_nchw.shape
    assert C == FEAT_C
    n2 = num_nodes * num_nodes
    n_pad = w2_bf.shape[1]

    # AdaptiveAvgPool2d((1,1)) in the wrapper (XLA fuses it into the backbone
    # epilogue); features stream into the kernel as bf16 (half the DMA bytes).
    pooled = jnp.mean(feat_nchw, axis=(2, 3)).astype(jnp.bfloat16)   # (B, C)

    # Right-sized batch tile, 16-row aligned (bf16 sublane packing).
    if B >= 128:
        # Size the tile so the grid has >= 2 steps: lets v7x's two TensorCores
        # each take half the batch (weight DMA duplication is amortized).
        TB = min(256, _round_up((B + 1) // 2, 16))
    else:
        TB = min(256, _round_up(B, 16))
    B_pad = _round_up(B, TB)
    if B_pad != B:
        pooled = jnp.pad(pooled, ((0, B_pad - B), (0, 0)))
    grid = B_pad // TB
    # Megacore only pays with >= 2 tiles (v7x); harmless on v5e/v6e (1 TC).
    batch_sem = "parallel" if grid >= 2 else "arbitrary"

    # Constant index_maps -> weights stay resident; single buffer saves VMEM.
    resident = pl.Buffered(1)

    out_flat = pl.pallas_call(
        head_kernel,
        out_shape=jax.ShapeDtypeStruct((B_pad, n_pad), jnp.float32),
        grid_spec=pltpu.PrefetchScalarGridSpec(
            num_scalar_prefetch=0,
            grid=(grid,),
            in_specs=[
                pl.BlockSpec((TB, FEAT_C), lambda i: (i, 0)),        # pooled tile
                pl.BlockSpec((FEAT_C, HID), lambda i: (0, 0),
                             pipeline_mode=resident),                # w1 resident
                pl.BlockSpec((1, HID), lambda i: (0, 0),
                             pipeline_mode=resident),                # b1
                pl.BlockSpec((HID, n_pad), lambda i: (0, 0),
                             pipeline_mode=resident),                # w2 resident
                pl.BlockSpec((1, n_pad), lambda i: (0, 0),
                             pipeline_mode=resident),                # b2
            ],
            out_specs=pl.BlockSpec((TB, n_pad), lambda i: (i, 0)),
        ),
        compiler_params=pltpu.CompilerParams(
            dimension_semantics=(batch_sem,),
            vmem_limit_bytes=32 << 20,   # footprint ~8-9 MiB; v5e/v6e/v7x safe
        ),
    )(pooled, w1_bf, b1, w2_bf, b2)

    # Slice away batch / lane padding (padded cols = sigmoid(0) = 0.5 garbage),
    # then reshape like x.view(-1, N, N).
    return out_flat[:B, :n2].reshape(B, num_nodes, num_nodes)


def init_params(key, num_nodes=NUM_NODES):
    """PyTorch-style Linear inits U(-1/sqrt(fan_in), +1/sqrt(fan_in)), f32."""
    k1, k2, k3, k4 = jax.random.split(key, 4)
    lim1 = 1.0 / jnp.sqrt(FEAT_C)
    lim2 = 1.0 / jnp.sqrt(HID)
    w1 = jax.random.uniform(k1, (FEAT_C, HID), jnp.float32, -lim1, lim1)
    b1 = jax.random.uniform(k2, (1, HID), jnp.float32, -lim1, lim1)
    w2 = jax.random.uniform(k3, (HID, num_nodes * num_nodes), jnp.float32, -lim2, lim2)
    b2 = jax.random.uniform(k4, (1, num_nodes * num_nodes), jnp.float32, -lim2, lim2)
    return w1, b1, w2, b2


def reference(feat_nchw, w1, b1, w2, b2, num_nodes=NUM_NODES):
    B = feat_nchw.shape[0]
    pooled = jnp.mean(feat_nchw, axis=(2, 3))            # adaptive avg pool (1,1)
    h = jnp.maximum(pooled @ w1 + b1, 0.0)
    logits = h @ w2 + b2
    return jax.nn.sigmoid(logits).reshape(B, num_nodes, num_nodes)


if __name__ == "__main__":
    key = jax.random.PRNGKey(0)
    kf, kp = jax.random.split(key)

    # Small example: batch=2, ResNet50 feature map for a 128x128 image -> (2, 2048, 4, 4)
    B, Hf, Wf = 2, 4, 4
    feat = jax.random.normal(kf, (B, FEAT_C, Hf, Wf), jnp.float32)

    w1, b1, w2, b2 = init_params(kp)
    # One-time weight prep (cached bf16 / padded params), outside the forward path.
    params = prepare_head_params(w1, b1, w2, b2)

    out = graph_analysis_head(feat, params)
    out = jax.block_until_ready(out)

    ref = reference(feat, w1, b1, w2, b2)
    assert out.shape == (B, NUM_NODES, NUM_NODES)
    # bf16 weights + bf16 pooled features => relaxed tolerance vs f32 reference.
    assert jnp.allclose(out, ref, atol=2e-2, rtol=2e-2), "mismatch vs JAX reference"

    print("KERNEL_OK")
</pallas_src>

<mosaic_0001>
module attributes {stable_mosaic.version = 11 : i64} {
  func.func @head_kernel(%arg0: i32, %arg1: memref<16x2048xbf16, #tpu.memory_space<vmem>>, %arg2: memref<2048x1024xbf16, #tpu.memory_space<vmem>>, %arg3: memref<1x1024xf32, #tpu.memory_space<vmem>>, %arg4: memref<1024x640xbf16, #tpu.memory_space<vmem>>, %arg5: memref<1x640xf32, #tpu.memory_space<vmem>>, %arg6: memref<16x640xf32, #tpu.memory_space<vmem>>) attributes {dimension_semantics = [#tpu.dimension_semantics<arbitrary>], iteration_bounds = array<i64: 1>, scalar_prefetch = 0 : i64, scratch_operands = 0 : i64, tpu.core_type = #tpu.core_type<tc>, window_params = [{transform_indices = @transform_0, window_bounds = array<i64: 16, 2048>}, {pipeline_mode = #tpu.pipeline_mode<synchronous>, transform_indices = @transform_1, window_bounds = array<i64: 2048, 1024>}, {pipeline_mode = #tpu.pipeline_mode<synchronous>, transform_indices = @transform_2, window_bounds = array<i64: 1, 1024>}, {pipeline_mode = #tpu.pipeline_mode<synchronous>, transform_indices = @transform_3, window_bounds = array<i64: 1024, 640>}, {pipeline_mode = #tpu.pipeline_mode<synchronous>, transform_indices = @transform_4, window_bounds = array<i64: 1, 640>}, {transform_indices = @transform_5, window_bounds = array<i64: 16, 640>}]} {
    %c0 = arith.constant 0 : index
    %c0_0 = arith.constant 0 : index
    %0 = vector.load %arg1[%c0, %c0_0] : memref<16x2048xbf16, #tpu.memory_space<vmem>>, vector<16x2048xbf16>
    %c0_1 = arith.constant 0 : index
    %c0_2 = arith.constant 0 : index
    %1 = vector.load %arg2[%c0_1, %c0_2] : memref<2048x1024xbf16, #tpu.memory_space<vmem>>, vector<2048x1024xbf16>
    %cst = arith.constant dense<0.000000e+00> : vector<16x1024xf32>
    %2 = tpu.matmul %0, %1, %cst {dimension_numbers = #tpu.dot_dimension_numbers<[1], [0], [0], [1], [0, 0, 1, 1], [], []>} : vector<16x2048xbf16>, vector<2048x1024xbf16>, vector<16x1024xf32> -> vector<16x1024xf32>
    %c0_3 = arith.constant 0 : index
    %c0_4 = arith.constant 0 : index
    %3 = vector.load %arg3[%c0_3, %c0_4] : memref<1x1024xf32, #tpu.memory_space<vmem>>, vector<1x1024xf32>
    %4 = vector.broadcast %3 : vector<1x1024xf32> to vector<16x1024xf32>
    %5 = arith.addf %2, %4 : vector<16x1024xf32>
    %cst_5 = arith.constant 0.000000e+00 : f32
    %6 = vector.broadcast %cst_5 : f32 to vector<16x1024xf32>
    %7 = arith.maximumf %5, %6 : vector<16x1024xf32>
    %8 = arith.truncf %7 : vector<16x1024xf32> to vector<16x1024xbf16>
    %c0_6 = arith.constant 0 : index
    %c0_7 = arith.constant 0 : index
    %9 = vector.load %arg4[%c0_6, %c0_7] : memref<1024x640xbf16, #tpu.memory_space<vmem>>, vector<1024x640xbf16>
    %cst_8 = arith.constant dense<0.000000e+00> : vector<16x640xf32>
    %10 = tpu.matmul %8, %9, %cst_8 {dimension_numbers = #tpu.dot_dimension_numbers<[1], [0], [0], [1], [0, 0, 1, 1], [], []>} : vector<16x1024xbf16>, vector<1024x640xbf16>, vector<16x640xf32> -> vector<16x640xf32>
    %c0_9 = arith.constant 0 : index
    %c0_10 = arith.constant 0 : index
    %11 = vector.load %arg5[%c0_9, %c0_10] : memref<1x640xf32, #tpu.memory_space<vmem>>, vector<1x640xf32>
    %12 = vector.broadcast %11 : vector<1x640xf32> to vector<16x640xf32>
    %13 = arith.addf %10, %12 : vector<16x640xf32>
    %14 = arith.negf %13 : vector<16x640xf32>
    %15 = math.exp %14 : vector<16x640xf32>
    %cst_11 = arith.constant 1.000000e+00 : f32
    %16 = vector.broadcast %cst_11 : f32 to vector<16x640xf32>
    %17 = arith.addf %16, %15 : vector<16x640xf32>
    %18 = arith.divf %16, %17 : vector<16x640xf32>
    %c0_12 = arith.constant 0 : index
    %c0_13 = arith.constant 0 : index
    %19 = vector.load %arg6[%c0_12, %c0_13] : memref<16x640xf32, #tpu.memory_space<vmem>>, vector<16x640xf32>
    tpu.vector_store %arg6[%c0_12, %c0_13], %18 {strides = array<i32>} : memref<16x640xf32, #tpu.memory_space<vmem>>, vector<16x640xf32>,
    return
  }
  func.func @transform_0(%arg0: i32) -> (i32, i32) {
    %c0_i32 = arith.constant 0 : i32
    %c0_i32_0 = arith.constant 0 : i32
    return %arg0, %c0_i32 : i32, i32
  }
  func.func @transform_1(%arg0: i32) -> (i32, i32) {
    %c0_i32 = arith.constant 0 : i32
    %c0_i32_0 = arith.constant 0 : i32
    %c0_i32_1 = arith.constant 0 : i32
    return %c0_i32, %c0_i32_0 : i32, i32
  }
  func.func @transform_2(%arg0: i32) -> (i32, i32) {
    %c0_i32 = arith.constant 0 : i32
    %c0_i32_0 = arith.constant 0 : i32
    %c0_i32_1 = arith.constant 0 : i32
    return %c0_i32, %c0_i32_0 : i32, i32
  }
  func.func @transform_3(%arg0: i32) -> (i32, i32) {
    %c0_i32 = arith.constant 0 : i32
    %c0_i32_0 = arith.constant 0 : i32
    %c0_i32_1 = arith.constant 0 : i32
    return %c0_i32, %c0_i32_0 : i32, i32
  }
  func.func @transform_4(%arg0: i32) -> (i32, i32) {
    %c0_i32 = arith.constant 0 : i32
    %c0_i32_0 = arith.constant 0 : i32
    %c0_i32_1 = arith.constant 0 : i32
    return %c0_i32, %c0_i32_0 : i32, i32
  }
  func.func @transform_5(%arg0: i32) -> (i32, i32) {
    %c0_i32 = arith.constant 0 : i32
    %c0_i32_0 = arith.constant 0 : i32
    return %arg0, %c0_i32 : i32, i32
  }
}

</mosaic_0001>

<llo_original>
// kernel: tpu_custom_call.1
$region0: #{tpu_custom_call.1}
  #allocation0 [shape = 'u32[]', space=smem, size = 0x4, offset = 0x4, fixed_abs, tag = 'smem constant byte address 0x4 - core index']
  #allocation1 [shape = 'u32[72,128]{1,0:T(1,128)}', space=vmem, size = 0x9000, scoped, tag = 'internal scratch']
  %s0 = inlined_call_operand.hbm [shape: bf16[16,2048], index: 0, kind: input, shape index: {}]
  %s1 = inlined_call_operand.hbm [shape: bf16[2048,1024], index: 1, kind: input, shape index: {}]
  %s2 = inlined_call_operand.hbm [shape: f32[1,1024], index: 2, kind: input, shape index: {}]
  %s3 = inlined_call_operand.hbm [shape: bf16[1024,640], index: 3, kind: input, shape index: {}]
  %s4 = inlined_call_operand.hbm [shape: f32[1,640], index: 4, kind: input, shape index: {}]
  %s5 = inlined_call_operand.hbm [shape: f32[16,640], index: 5, kind: output, shape index: {}]
  %s6 = sld [smem:[#allocation0]]
  $region50: #{tpu_custom_call.1} parent=0
    _
  %s8 = ssub.s32 1, %s6
  %s9 = scalar_select 0, %s8, %s6
  $region1: #{tpu_custom_call.1} parent=0
    #allocation2 [shape = 'u8[65536]{0}', space=vmem, size = 0x10000, scoped, tag = 'input window, operand 0, single buffered']
    #allocation3 [shape = 's32[1]{0}', space=sflag, size = 0x4, scoped, tag = 'scoped memory for tpu_custom_call.1']
    #allocation4 [shape = 's32[1]{0}', space=sflag, size = 0x4, scoped, tag = 'scoped memory for tpu_custom_call.1']
    #allocation5 [shape = 'u8[4194304]{0}', space=vmem, size = 0x400000, scoped, tag = 'input window, operand 1, single buffered']
    #allocation6 [shape = 's32[1]{0}', space=sflag, size = 0x4, scoped, tag = 'scoped memory for tpu_custom_call.1']
    #allocation7 [shape = 'u8[4096]{0}', space=vmem, size = 0x1000, scoped, tag = 'input window, operand 2, single buffered']
    #allocation8 [shape = 'u8[1310720]{0}', space=vmem, size = 0x140000, scoped, tag = 'input window, operand 3, single buffered']
    #allocation9 [shape = 's32[1]{0}', space=sflag, size = 0x4, scoped, tag = 'scoped memory for tpu_custom_call.1']
    #allocation10 [shape = 'u8[2560]{0}', space=vmem, size = 0xc00, scoped, tag = 'input window, operand 4, single buffered']
    #allocation11 [shape = 'u8[40960]{0}', space=vmem, size = 0xa000, scoped, tag = 'output window, operand 0, single buffered']
    %10 = vsyncpa [#allocation3], 0
    %11 = vsyncpa [#allocation6], 0
    %12 = vsyncpa [#allocation9], 0
    %13 = vsyncpa [#allocation4], 0
    // Predicated region
    $region2: #{tpu_custom_call.1} parent=1 // pred_check
      _
    $region3: #{tpu_custom_call.1} parent=1 // pred_check_branch
      %15 = sbr.rel (0) target = $region5
    $region4: #{tpu_custom_call.1} parent=1 // pred_region
      %17 = vsyncadd [#allocation3], 0
      %s18 = sshll.u32 %s0, 4
      %s19 = int_to_ptr.hbm [resolvable:$true] %s18
      %s20 = sshll.u32 [#allocation2], 4
      %s21 = int_to_ptr.vmem [resolvable:$true] %s20
      %26 = dma.hbm_to_vmem [thread:$0]  %s19, 2048, %s21, [#allocation3], 1024, 1024, 64
    $region5: #{tpu_custom_call.1} parent=1 // pred_fallthru
      _
    // Predicated region
    $region6: #{tpu_custom_call.1} parent=1 // pred_check
      _
    $region7: #{tpu_custom_call.1} parent=1 // pred_check_branch
      %28 = sbr.rel (0) target = $region9
    $region8: #{tpu_custom_call.1} parent=1 // pred_region
      %30 = vsyncadd [#allocation6], 0
      %s31 = sshll.u32 %s1, 4
      %s32 = int_to_ptr.hbm [resolvable:$true] %s31
      %s33 = sshll.u32 [#allocation5], 4
      %s34 = int_to_ptr.vmem [resolvable:$true] %s33
      %39 = dma.hbm_to_vmem [thread:$0]  %s32, 131072, %s34, [#allocation6], 512, 512, 32
    $region9: #{tpu_custom_call.1} parent=1 // pred_fallthru
      _
    // Predicated region
    $region10: #{tpu_custom_call.1} parent=1 // pred_check
      _
    $region11: #{tpu_custom_call.1} parent=1 // pred_check_branch
      %41 = sbr.rel (0) target = $region13
    $region12: #{tpu_custom_call.1} parent=1 // pred_region
      %43 = vsyncadd [#allocation6], 0
      %s45 = sshll.u32 %s2, 4
      %s46 = int_to_ptr.hbm [resolvable:$true] %s45
      %s47 = sshll.u32 [#allocation7], 4
      %s48 = int_to_ptr.vmem [resolvable:$true] %s47
      %50 = dma.hbm_to_vmem [thread:$0]  %s46, 128, %s48, [#allocation6]
    $region13: #{tpu_custom_call.1} parent=1 // pred_fallthru
      _
    // Predicated region
    $region14: #{tpu_custom_call.1} parent=1 // pred_check
      _
    $region15: #{tpu_custom_call.1} parent=1 // pred_check_branch
      %52 = sbr.rel (0) target = $region17
    $region16: #{tpu_custom_call.1} parent=1 // pred_region
      %54 = vsyncadd [#allocation9], 0
      %s55 = sshll.u32 %s3, 4
      %s56 = int_to_ptr.hbm [resolvable:$true] %s55
      %s57 = sshll.u32 [#allocation8], 4
      %s58 = int_to_ptr.vmem [resolvable:$true] %s57
      %63 = dma.hbm_to_vmem [thread:$0]  %s56, 40960, %s58, [#allocation9], 320, 320, 20
    $region17: #{tpu_custom_call.1} parent=1 // pred_fallthru
      _
    // Predicated region
    $region18: #{tpu_custom_call.1} parent=1 // pred_check
      _
    $region19: #{tpu_custom_call.1} parent=1 // pred_check_branch
      %65 = sbr.rel (0) target = $region21
    $region20: #{tpu_custom_call.1} parent=1 // pred_region
      %67 = vsyncadd [#allocation9], 0
      %s69 = sshll.u32 %s4, 4
      %s70 = int_to_ptr.hbm [resolvable:$true] %s69
      %s71 = sshll.u32 [#allocation10], 4
      %s72 = int_to_ptr.vmem [resolvable:$true] %s71
      %74 = dma.hbm_to_vmem [thread:$0]  %s70, 80, %s72, [#allocation9]
    $region21: #{tpu_custom_call.1} parent=1 // pred_fallthru
      _
    // Predicated region
    $region22: #{tpu_custom_call.1} parent=1 // pred_check
      _
    $region23: #{tpu_custom_call.1} parent=1 // pred_check_branch
      %76 = sbr.rel (0) target = $region25
    $region24: #{tpu_custom_call.1} parent=1 // pred_region
      %78 = dma.done [#allocation3], 2048
    $region25: #{tpu_custom_call.1} parent=1 // pred_fallthru
      _
    // Predicated region
    $region26: #{tpu_custom_call.1} parent=1 // pred_check
      _
    $region27: #{tpu_custom_call.1} parent=1 // pred_check_branch
      %80 = sbr.rel (0) target = $region29
    $region28: #{tpu_custom_call.1} parent=1 // pred_region
      %82 = dma.done [#allocation6], 131072
    $region29: #{tpu_custom_call.1} parent=1 // pred_fallthru
      _
    // Predicated region
    $region30: #{tpu_custom_call.1} parent=1 // pred_check
      _
    $region31: #{tpu_custom_call.1} parent=1 // pred_check_branch
      %84 = sbr.rel (0) target = $region33
    $region32: #{tpu_custom_call.1} parent=1 // pred_region
      %86 = dma.done [#allocation6], 128
    $region33: #{tpu_custom_call.1} parent=1 // pred_fallthru
      _
    // Predicated region
    $region34: #{tpu_custom_call.1} parent=1 // pred_check
      _
    $region35: #{tpu_custom_call.1} parent=1 // pred_check_branch
      %88 = sbr.rel (0) target = $region37
    $region36: #{tpu_custom_call.1} parent=1 // pred_region
      %90 = dma.done [#allocation9], 40960
    $region37: #{tpu_custom_call.1} parent=1 // pred_fallthru
      _
    // Predicated region
    $region38: #{tpu_custom_call.1} parent=1 // pred_check
      _
    $region39: #{tpu_custom_call.1} parent=1 // pred_check_branch
      %92 = sbr.rel (0) target = $region41
    $region40: #{tpu_custom_call.1} parent=1 // pred_region
      %94 = dma.done [#allocation9], 80
    $region41: #{tpu_custom_call.1} parent=1 // pred_fallthru
      _
    %v95 = vld [vmem:[#allocation2] sm:$0xff]
    %v96 = vld [vmem:[#allocation2 + $0x8] sm:$0xff]
    %v97 = vld [vmem:[#allocation2 + $0x10] sm:$0xff]
    %v98 = vld [vmem:[#allocation2 + $0x18] sm:$0xff]
    %v99 = vld [vmem:[#allocation2 + $0x20] sm:$0xff]
    %v100 = vld [vmem:[#allocation2 + $0x28] sm:$0xff]
    %v101 = vld [vmem:[#allocation2 + $0x30] sm:$0xff]
    %v102 = vld [vmem:[#allocation2 + $0x38] sm:$0xff]
    %v103 = vld [vmem:[#allocation2 + $0x40] sm:$0xff]
    %v104 = vld [vmem:[#allocation2 + $0x48] sm:$0xff]
    %v105 = vld [vmem:[#allocation2 + $0x50] sm:$0xff]
    %v106 = vld [vmem:[#allocation2 + $0x58] sm:$0xff]
    %v107 = vld [vmem:[#allocation2 + $0x60] sm:$0xff]
    %v108 = vld [vmem:[#allocation2 + $0x68] sm:$0xff]
    %v109 = vld [vmem:[#allocation2 + $0x70] sm:$0xff]
    %v110 = vld [vmem:[#allocation2 + $0x78] sm:$0xff]
    %v111 = vld [vmem:[#allocation5] sm:$0xff]
    %v112 = vld [vmem:[#allocation5 + $0x8] sm:$0xff]
    %v113 = vld [vmem:[#allocation5 + $0x10] sm:$0xff]
    %v114 = vld [vmem:[#allocation5 + $0x18] sm:$0xff]
    %v115 = vld [vmem:[#allocation5 + $0x20] sm:$0xff]
    %v116 = vld [vmem:[#allocation5 + $0x28] sm:$0xff]
    %v117 = vld [vmem:[#allocation5 + $0x30] sm:$0xff]
    %v118 = vld [vmem:[#allocation5 + $0x38] sm:$0xff]
    %v119 = vld [vmem:[#allocation5 + $0x40] sm:$0xff]
    %v120 = vld [vmem:[#allocation5 + $0x48] sm:$0xff]
    %v121 = vld [vmem:[#allocation5 + $0x50] sm:$0xff]
    %v122 = vld [vmem:[#allocation5 + $0x58] sm:$0xff]
    %v123 = vld [vmem:[#allocation5 + $0x60] sm:$0xff]
    %v124 = vld [vmem:[#allocation5 + $0x68] sm:$0xff]
    %v125 = vld [vmem:[#allocation5 + $0x70] sm:$0xff]
    %v126 = vld [vmem:[#allocation5 + $0x78] sm:$0xff]
    %v127 = vld [vmem:[#allocation5 + $0x80] sm:$0xff]
    %v128 = vld [vmem:[#allocation5 + $0x88] sm:$0xff]
    %v129 = vld [vmem:[#allocation5 + $0x90] sm:$0xff]
    %v130 = vld [vmem:[#allocation5 + $0x98] sm:$0xff]
    %v131 = vld [vmem:[#allocation5 + $0xa0] sm:$0xff]
    %v132 = vld [vmem:[#allocation5 + $0xa8] sm:$0xff]
    %v133 = vld [vmem:[#allocation5 + $0xb0] sm:$0xff]
    %v134 = vld [vmem:[#allocation5 + $0xb8] sm:$0xff]
    %v135 = vld [vmem:[#allocation5 + $0xc0] sm:$0xff]
    %v136 = vld [vmem:[#allocation5 + $0xc8] sm:$0xff]
    %v137 = vld [vmem:[#allocation5 + $0xd0] sm:$0xff]
    %v138 = vld [vmem:[#allocation5 + $0xd8] sm:$0xff]
    %v139 = vld [vmem:[#allocation5 + $0xe0] sm:$0xff]
    %v140 = vld [vmem:[#allocation5 + $0xe8] sm:$0xff]
    %v141 = vld [vmem:[#allocation5 + $0xf0] sm:$0xff]
    %v142 = vld [vmem:[#allocation5 + $0xf8] sm:$0xff]
    %v143 = vld [vmem:[#allocation5 + $0x100] sm:$0xff]
    %v144 = vld [vmem:[#allocation5 + $0x108] sm:$0xff]
    %v145 = vld [vmem:[#allocation5 + $0x110] sm:$0xff]
    %v146 = vld [vmem:[#allocation5 + $0x118] sm:$0xff]
    %v147 = vld [vmem:[#allocation5 + $0x120] sm:$0xff]
    %v148 = vld [vmem:[#allocation5 + $0x128] sm:$0xff]
    %v149 = vld [vmem:[#allocation5 + $0x130] sm:$0xff]
    %v150 = vld [vmem:[#allocation5 + $0x138] sm:$0xff]
    %v151 = vld [vmem:[#allocation5 + $0x140] sm:$0xff]
    %v152 = vld [vmem:[#allocation5 + $0x148] sm:$0xff]
    %v153 = vld [vmem:[#allocation5 + $0x150] sm:$0xff]
    %v154 = vld [vmem:[#allocation5 + $0x158] sm:$0xff]
    %v155 = vld [vmem:[#allocation5 + $0x160] sm:$0xff]
    %v156 = vld [vmem:[#allocation5 + $0x168] sm:$0xff]
    %v157 = vld [vmem:[#allocation5 + $0x170] sm:$0xff]
    %v158 = vld [vmem:[#allocation5 + $0x178] sm:$0xff]
    %v159 = vld [vmem:[#allocation5 + $0x180] sm:$0xff]
    %v160 = vld [vmem:[#allocation5 + $0x188] sm:$0xff]
    %v161 = vld [vmem:[#allocation5 + $0x190] sm:$0xff]
    %v162 = vld [vmem:[#allocation5 + $0x198] sm:$0xff]
    %v163 = vld [vmem:[#allocation5 + $0x1a0] sm:$0xff]
    %v164 = vld [vmem:[#allocation5 + $0x1a8] sm:$0xff]
    %v165 = vld [vmem:[#allocation5 + $0x1b0] sm:$0xff]
    %v166 = vld [vmem:[#allocation5 + $0x1b8] sm:$0xff]
    %v167 = vld [vmem:[#allocation5 + $0x1c0] sm:$0xff]
    %v168 = vld [vmem:[#allocation5 + $0x1c8] sm:$0xff]
    %v169 = vld [vmem:[#allocation5 + $0x1d0] sm:$0xff]
    %v170 = vld [vmem:[#allocation5 + $0x1d8] sm:$0xff]
    %v171 = vld [vmem:[#allocation5 + $0x1e0] sm:$0xff]
    %v172 = vld [vmem:[#allocation5 + $0x1e8] sm:$0xff]
    %v173 = vld [vmem:[#allocation5 + $0x1f0] sm:$0xff]
    %v174 = vld [vmem:[#allocation5 + $0x1f8] sm:$0xff]
    %v175 = vld [vmem:[#allocation5 + $0x200] sm:$0xff]
    %v176 = vld [vmem:[#allocation5 + $0x208] sm:$0xff]
    %v177 = vld [vmem:[#allocation5 + $0x210] sm:$0xff]
    %v178 = vld [vmem:[#allocation5 + $0x218] sm:$0xff]
    %v179 = vld [vmem:[#allocation5 + $0x220] sm:$0xff]
    %v180 = vld [vmem:[#allocation5 + $0x228] sm:$0xff]
    %v181 = vld [vmem:[#allocation5 + $0x230] sm:$0xff]
    %v182 = vld [vmem:[#allocation5 + $0x238] sm:$0xff]
    %v183 = vld [vmem:[#allocation5 + $0x240] sm:$0xff]
    %v184 = vld [vmem:[#allocation5 + $0x248] sm:$0xff]
    %v185 = vld [vmem:[#allocation5 + $0x250] sm:$0xff]
    %v186 = vld [vmem:[#allocation5 + $0x258] sm:$0xff]
    %v187 = vld [vmem:[#allocation5 + $0x260] sm:$0xff]
    %v188 = vld [vmem:[#allocation5 + $0x268] sm:$0xff]
    %v189 = vld [vmem:[#allocation5 + $0x270] sm:$0xff]
    %v190 = vld [vmem:[#allocation5 + $0x278] sm:$0xff]
    %v191 = vld [vmem:[#allocation5 + $0x280] sm:$0xff]
    %v192 = vld [vmem:[#allocation5 + $0x288] sm:$0xff]
    %v193 = vld [vmem:[#allocation5 + $0x290] sm:$0xff]
    %v194 = vld [vmem:[#allocation5 + $0x298] sm:$0xff]
    %v195 = vld [vmem:[#allocation5 + $0x2a0] sm:$0xff]
    %v196 = vld [vmem:[#allocation5 + $0x2a8] sm:$0xff]
    %v197 = vld [vmem:[#allocation5 + $0x2b0] sm:$0xff]
    %v198 = vld [vmem:[#allocation5 + $0x2b8] sm:$0xff]
    %v199 = vld [vmem:[#allocation5 + $0x2c0] sm:$0xff]
    %v200 = vld [vmem:[#allocation5 + $0x2c8] sm:$0xff]
    %v201 = vld [vmem:[#allocation5 + $0x2d0] sm:$0xff]
    %v202 = vld [vmem:[#allocation5 + $0x2d8] sm:$0xff]
    %v203 = vld [vmem:[#allocation5 + $0x2e0] sm:$0xff]
    %v204 = vld [vmem:[#allocation5 + $0x2e8] sm:$0xff]
    %v205 = vld [vmem:[#allocation5 + $0x2f0] sm:$0xff]
    %v206 = vld [vmem:[#allocation5 + $0x2f8] sm:$0xff]
    %v207 = vld [vmem:[#allocation5 + $0x300] sm:$0xff]
    %v208 = vld [vmem:[#allocation5 + $0x308] sm:$0xff]
    %v209 = vld [vmem:[#allocation5 + $0x310] sm:$0xff]
    %v210 = vld [vmem:[#allocation5 + $0x318] sm:$0xff]
    %v211 = vld [vmem:[#allocation5 + $0x320] sm:$0xff]
    %v212 = vld [vmem:[#allocation5 + $0x328] sm:$0xff]
    %v213 = vld [vmem:[#allocation5 + $0x330] sm:$0xff]
    %v214 = vld [vmem:[#allocation5 + $0x338] sm:$0xff]
    %v215 = vld [vmem:[#allocation5 + $0x340] sm:$0xff]
    %v216 = vld [vmem:[#allocation5 + $0x348] sm:$0xff]
    %v217 = vld [vmem:[#allocation5 + $0x350] sm:$0xff]
    %v218 = vld [vmem:[#allocation5 + $0x358] sm:$0xff]
    %v219 = vld [vmem:[#allocation5 + $0x360] sm:$0xff]
    %v220 = vld [vmem:[#allocation5 + $0x368] sm:$0xff]
    %v221 = vld [vmem:[#allocation5 + $0x370] sm:$0xff]
    %v222 = vld [vmem:[#allocation5 + $0x378] sm:$0xff]
    %v223 = vld [vmem:[#allocation5 + $0x380] sm:$0xff]
    %v224 = vld [vmem:[#allocation5 + $0x388] sm:$0xff]
    %v225 = vld [vmem:[#allocation5 + $0x390] sm:$0xff]
    %v226 = vld [vmem:[#allocation5 + $0x398] sm:$0xff]
    %v227 = vld [vmem:[#allocation5 + $0x3a0] sm:$0xff]
    %v228 = vld [vmem:[#allocation5 + $0x3a8] sm:$0xff]
    %v229 = vld [vmem:[#allocation5 + $0x3b0] sm:$0xff]
    %v230 = vld [vmem:[#allocation5 + $0x3b8] sm:$0xff]
    %v231 = vld [vmem:[#allocation5 + $0x3c0] sm:$0xff]
    %v232 = vld [vmem:[#allocation5 + $0x3c8] sm:$0xff]
    %v233 = vld [vmem:[#allocation5 + $0x3d0] sm:$0xff]
    %v234 = vld [vmem:[#allocation5 + $0x3d8] sm:$0xff]
    %v235 = vld [vmem:[#allocation5 + $0x3e0] sm:$0xff]
    %v236 = vld [vmem:[#allocation5 + $0x3e8] sm:$0xff]
    %v237 = vld [vmem:[#allocation5 + $0x3f0] sm:$0xff]
    %v238 = vld [vmem:[#allocation5 + $0x3f8] sm:$0xff]
    %v239 = vld [vmem:[#allocation5 + $0x400] sm:$0xff]
    %v240 = vld [vmem:[#allocation5 + $0x408] sm:$0xff]
    %v241 = vld [vmem:[#allocation5 + $0x410] sm:$0xff]
    %v242 = vld [vmem:[#allocation5 + $0x418] sm:$0xff]
    %v243 = vld [vmem:[#allocation5 + $0x420] sm:$0xff]
    %v244 = vld [vmem:[#allocation5 + $0x428] sm:$0xff]
    %v245 = vld [vmem:[#allocation5 + $0x430] sm:$0xff]
    %v246 = vld [vmem:[#allocation5 + $0x438] sm:$0xff]
    %v247 = vld [vmem:[#allocation5 + $0x440] sm:$0xff]
    %v248 = vld [vmem:[#allocation5 + $0x448] sm:$0xff]
    %v249 = vld [vmem:[#allocation5 + $0x450] sm:$0xff]
    %v250 = vld [vmem:[#allocation5 + $0x458] sm:$0xff]
    %v251 = vld [vmem:[#allocation5 + $0x460] sm:$0xff]
    %v252 = vld [vmem:[#allocation5 + $0x468] sm:$0xff]
    %v253 = vld [vmem:[#allocation5 + $0x470] sm:$0xff]
    %v254 = vld [vmem:[#allocation5 + $0x478] sm:$0xff]
    %v255 = vld [vmem:[#allocation5 + $0x480] sm:$0xff]
    %v256 = vld [vmem:[#allocation5 + $0x488] sm:$0xff]
    %v257 = vld [vmem:[#allocation5 + $0x490] sm:$0xff]
    %v258 = vld [vmem:[#allocation5 + $0x498] sm:$0xff]
    %v259 = vld [vmem:[#allocation5 + $0x4a0] sm:$0xff]
    %v260 = vld [vmem:[#allocation5 + $0x4a8] sm:$0xff]
    %v261 = vld [vmem:[#allocation5 + $0x4b0] sm:$0xff]
    %v262 = vld [vmem:[#allocation5 + $0x4b8] sm:$0xff]
    %v263 = vld [vmem:[#allocation5 + $0x4c0] sm:$0xff]
    %v264 = vld [vmem:[#allocation5 + $0x4c8] sm:$0xff]
    %v265 = vld [vmem:[#allocation5 + $0x4d0] sm:$0xff]
    %v266 = vld [vmem:[#allocation5 + $0x4d8] sm:$0xff]
    %v267 = vld [vmem:[#allocation5 + $0x4e0] sm:$0xff]
    %v268 = vld [vmem:[#allocation5 + $0x4e8] sm:$0xff]
    %v269 = vld [vmem:[#allocation5 + $0x4f0] sm:$0xff]
    %v270 = vld [vmem:[#allocation5 + $0x4f8] sm:$0xff]
    %v271 = vld [vmem:[#allocation5 + $0x500] sm:$0xff]
    %v272 = vld [vmem:[#allocation5 + $0x508] sm:$0xff]
    %v273 = vld [vmem:[#allocation5 + $0x510] sm:$0xff]
    %v274 = vld [vmem:[#allocation5 + $0x518] sm:$0xff]
    %v275 = vld [vmem:[#allocation5 + $0x520] sm:$0xff]
    %v276 = vld [vmem:[#allocation5 + $0x528] sm:$0xff]
    %v277 = vld [vmem:[#allocation5 + $0x530] sm:$0xff]
    %v278 = vld [vmem:[#allocation5 + $0x538] sm:$0xff]
    %v279 = vld [vmem:[#allocation5 + $0x540] sm:$0xff]
    %v280 = vld [vmem:[#allocation5 + $0x548] sm:$0xff]
    %v281 = vld [vmem:[#allocation5 + $0x550] sm:$0xff]
    %v282 = vld [vmem:[#allocation5 + $0x558] sm:$0xff]
    %v283 = vld [vmem:[#allocation5 + $0x560] sm:$0xff]
    %v284 = vld [vmem:[#allocation5 + $0x568] sm:$0xff]
    %v285 = vld [vmem:[#allocation5 + $0x570] sm:$0xff]
    %v286 = vld [vmem:[#allocation5 + $0x578] sm:$0xff]
    %v287 = vld [vmem:[#allocation5 + $0x580] sm:$0xff]
    %v288 = vld [vmem:[#allocation5 + $0x588] sm:$0xff]
    %v289 = vld [vmem:[#allocation5 + $0x590] sm:$0xff]
    %v290 = vld [vmem:[#allocation5 + $0x598] sm:$0xff]
    %v291 = vld [vmem:[#allocation5 + $0x5a0] sm:$0xff]
    %v292 = vld [vmem:[#allocation5 + $0x5a8] sm:$0xff]
    %v293 = vld [vmem:[#allocation5 + $0x5b0] sm:$0xff]
    %v294 = vld [vmem:[#allocation5 + $0x5b8] sm:$0xff]
    %v295 = vld [vmem:[#allocation5 + $0x5c0] sm:$0xff]
    %v296 = vld [vmem:[#allocation5 + $0x5c8] sm:$0xff]
    %v297 = vld [vmem:[#allocation5 + $0x5d0] sm:$0xff]
    %v298 = vld [vmem:[#allocation5 + $0x5d8] sm:$0xff]
    %v299 = vld [vmem:[#allocation5 + $0x5e0] sm:$0xff]
    %v300 = vld [vmem:[#allocation5 + $0x5e8] sm:$0xff]
    %v301 = vld [vmem:[#allocation5 + $0x5f0] sm:$0xff]
    %v302 = vld [vmem:[#allocation5 + $0x5f8] sm:$0xff]
    %v303 = vld [vmem:[#allocation5 + $0x600] sm:$0xff]
    %v304 = vld [vmem:[#allocation5 + $0x608] sm:$0xff]
    %v305 = vld [vmem:[#allocation5 + $0x610] sm:$0xff]
    %v306 = vld [vmem:[#allocation5 + $0x618] sm:$0xff]
    %v307 = vld [vmem:[#allocation5 + $0x620] sm:$0xff]
    %v308 = vld [vmem:[#allocation5 + $0x628] sm:$0xff]
    %v309 = vld [vmem:[#allocation5 + $0x630] sm:$0xff]
    %v310 = vld [vmem:[#allocation5 + $0x638] sm:$0xff]
    %v311 = vld [vmem:[#allocation5 + $0x640] sm:$0xff]
    %v312 = vld [vmem:[#allocation5 + $0x648] sm:$0xff]
    %v313 = vld [vmem:[#allocation5 + $0x650] sm:$0xff]
    %v314 = vld [vmem:[#allocation5 + $0x658] sm:$0xff]
    %v315 = vld [vmem:[#allocation5 + $0x660] sm:$0xff]
    %v316 = vld [vmem:[#allocation5 + $0x668] sm:$0xff]
    %v317 = vld [vmem:[#allocation5 + $0x670] sm:$0xff]
    %v318 = vld [vmem:[#allocation5 + $0x678] sm:$0xff]
    %v319 = vld [vmem:[#allocation5 + $0x680] sm:$0xff]
    %v320 = vld [vmem:[#allocation5 + $0x688] sm:$0xff]
    %v321 = vld [vmem:[#allocation5 + $0x690] sm:$0xff]
    %v322 = vld [vmem:[#allocation5 + $0x698] sm:$0xff]
    %v323 = vld [vmem:[#allocation5 + $0x6a0] sm:$0xff]
    %v324 = vld [vmem:[#allocation5 + $0x6a8] sm:$0xff]
    %v325 = vld [vmem:[#allocation5 + $0x6b0] sm:$0xff]
    %v326 = vld [vmem:[#allocation5 + $0x6b8] sm:$0xff]
    %v327 = vld [vmem:[#allocation5 + $0x6c0] sm:$0xff]
    %v328 = vld [vmem:[#allocation5 + $0x6c8] sm:$0xff]
    %v329 = vld [vmem:[#allocation5 + $0x6d0] sm:$0xff]
    %v330 = vld [vmem:[#allocation5 + $0x6d8] sm:$0xff]
    %v331 = vld [vmem:[#allocation5 + $0x6e0] sm:$0xff]
    %v332 = vld [vmem:[#allocation5 + $0x6e8] sm:$0xff]
    %v333 = vld [vmem:[#allocation5 + $0x6f0] sm:$0xff]
    %v334 = vld [vmem:[#allocation5 + $0x6f8] sm:$0xff]
    %v335 = vld [vmem:[#allocation5 + $0x700] sm:$0xff]
    %v336 = vld [vmem:[#allocation5 + $0x708] sm:$0xff]
    %v337 = vld [vmem:[#allocation5 + $0x710] sm:$0xff]
    %v338 = vld [vmem:[#allocation5 + $0x718] sm:$0xff]
    %v339 = vld [vmem:[#allocation5 + $0x720] sm:$0xff]
    %v340 = vld [vmem:[#allocation5 + $0x728] sm:$0xff]
    %v341 = vld [vmem:[#allocation5 + $0x730] sm:$0xff]
    %v342 = vld [vmem:[#allocation5 + $0x738] sm:$0xff]
    %v343 = vld [vmem:[#allocation5 + $0x740] sm:$0xff]
    %v344 = vld [vmem:[#allocation5 + $0x748] sm:$0xff]
    %v345 = vld [vmem:[#allocation5 + $0x750] sm:$0xff]
    %v346 = vld [vmem:[#allocation5 + $0x758] sm:$0xff]
    %v347 = vld [vmem:[#allocation5 + $0x760] sm:$0xff]
    %v348 = vld [vmem:[#allocation5 + $0x768] sm:$0xff]
    %v349 = vld [vmem:[#allocation5 + $0x770] sm:$0xff]
    %v350 = vld [vmem:[#allocation5 + $0x778] sm:$0xff]
    %v351 = vld [vmem:[#allocation5 + $0x780] sm:$0xff]
    %v352 = vld [vmem:[#allocation5 + $0x788] sm:$0xff]
    %v353 = vld [vmem:[#allocation5 + $0x790] sm:$0xff]
    %v354 = vld [vmem:[#allocation5 + $0x798] sm:$0xff]
    %v355 = vld [vmem:[#allocation5 + $0x7a0] sm:$0xff]
    %v356 = vld [vmem:[#allocation5 + $0x7a8] sm:$0xff]
    %v357 = vld [vmem:[#allocation5 + $0x7b0] sm:$0xff]
    %v358 = vld [vmem:[#allocation5 + $0x7b8] sm:$0xff]
    %v359 = vld [vmem:[#allocation5 + $0x7c0] sm:$0xff]
    %v360 = vld [vmem:[#allocation5 + $0x7c8] sm:$0xff]
    %v361 = vld [vmem:[#allocation5 + $0x7d0] sm:$0xff]
    %v362 = vld [vmem:[#allocation5 + $0x7d8] sm:$0xff]
    %v363 = vld [vmem:[#allocation5 + $0x7e0] sm:$0xff]
    %v364 = vld [vmem:[#allocation5 + $0x7e8] sm:$0xff]
    %v365 = vld [vmem:[#allocation5 + $0x7f0] sm:$0xff]
    %v366 = vld [vmem:[#allocation5 + $0x7f8] sm:$0xff]
    %v367 = vld [vmem:[#allocation5 + $0x800] sm:$0xff]
    %v368 = vld [vmem:[#allocation5 + $0x808] sm:$0xff]
    %v369 = vld [vmem:[#allocation5 + $0x810] sm:$0xff]
    %v370 = vld [vmem:[#allocation5 + $0x818] sm:$0xff]
    %v371 = vld [vmem:[#allocation5 + $0x820] sm:$0xff]
    %v372 = vld [vmem:[#allocation5 + $0x828] sm:$0xff]
    %v373 = vld [vmem:[#allocation5 + $0x830] sm:$0xff]
    %v374 = vld [vmem:[#allocation5 + $0x838] sm:$0xff]
    %v375 = vld [vmem:[#allocation5 + $0x840] sm:$0xff]
    %v376 = vld [vmem:[#allocation5 + $0x848] sm:$0xff]
    %v377 = vld [vmem:[#allocation5 + $0x850] sm:$0xff]
    %v378 = vld [vmem:[#allocation5 + $0x858] sm:$0xff]
    %v379 = vld [vmem:[#allocation5 + $0x860] sm:$0xff]
    %v380 = vld [vmem:[#allocation5 + $0x868] sm:$0xff]
    %v381 = vld [vmem:[#allocation5 + $0x870] sm:$0xff]
    %v382 = vld [vmem:[#allocation5 + $0x878] sm:$0xff]
    %v383 = vld [vmem:[#allocation5 + $0x880] sm:$0xff]
    %v384 = vld [vmem:[#allocation5 + $0x888] sm:$0xff]
    %v385 = vld [vmem:[#allocation5 + $0x890] sm:$0xff]
    %v386 = vld [vmem:[#allocation5 + $0x898] sm:$0xff]
    %v387 = vld [vmem:[#allocation5 + $0x8a0] sm:$0xff]
    %v388 = vld [vmem:[#allocation5 + $0x8a8] sm:$0xff]
    %v389 = vld [vmem:[#allocation5 + $0x8b0] sm:$0xff]
    %v390 = vld [vmem:[#allocation5 + $0x8b8] sm:$0xff]
    %v391 = vld [vmem:[#allocation5 + $0x8c0] sm:$0xff]
    %v392 = vld [vmem:[#allocation5 + $0x8c8] sm:$0xff]
    %v393 = vld [vmem:[#allocation5 + $0x8d0] sm:$0xff]
    %v394 = vld [vmem:[#allocation5 + $0x8d8] sm:$0xff]
    %v395 = vld [vmem:[#allocation5 + $0x8e0] sm:$0xff]
    %v396 = vld [vmem:[#allocation5 + $0x8e8] sm:$0xff]
    %v397 = vld [vmem:[#allocation5 + $0x8f0] sm:$0xff]
    %v398 = vld [vmem:[#allocation5 + $0x8f8] sm:$0xff]
    %v399 = vld [vmem:[#allocation5 + $0x900] sm:$0xff]
    %v400 = vld [vmem:[#allocation5 + $0x908] sm:$0xff]
    %v401 = vld [vmem:[#allocation5 + $0x910] sm:$0xff]
    %v402 = vld [vmem:[#allocation5 + $0x918] sm:$0xff]
    %v403 = vld [vmem:[#allocation5 + $0x920] sm:$0xff]
    %v404 = vld [vmem:[#allocation5 + $0x928] sm:$0xff]
    %v405 = vld [vmem:[#allocation5 + $0x930] sm:$0xff]
    %v406 = vld [vmem:[#allocation5 + $0x938] sm:$0xff]
    %v407 = vld [vmem:[#allocation5 + $0x940] sm:$0xff]
    %v408 = vld [vmem:[#allocation5 + $0x948] sm:$0xff]
    %v409 = vld [vmem:[#allocation5 + $0x950] sm:$0xff]
    %v410 = vld [vmem:[#allocation5 + $0x958] sm:$0xff]
    %v411 = vld [vmem:[#allocation5 + $0x960] sm:$0xff]
    %v412 = vld [vmem:[#allocation5 + $0x968] sm:$0xff]
    %v413 = vld [vmem:[#allocation5 + $0x970] sm:$0xff]
    %v414 = vld [vmem:[#allocation5 + $0x978] sm:$0xff]
    %v415 = vld [vmem:[#allocation5 + $0x980] sm:$0xff]
    %v416 = vld [vmem:[#allocation5 + $0x988] sm:$0xff]
    %v417 = vld [vmem:[#allocation5 + $0x990] sm:$0xff]
    %v418 = vld [vmem:[#allocation5 + $0x998] sm:$0xff]
    %v419 = vld [vmem:[#allocation5 + $0x9a0] sm:$0xff]
    %v420 = vld [vmem:[#allocation5 + $0x9a8] sm:$0xff]
    %v421 = vld [vmem:[#allocation5 + $0x9b0] sm:$0xff]
    %v422 = vld [vmem:[#allocation5 + $0x9b8] sm:$0xff]
    %v423 = vld [vmem:[#allocation5 + $0x9c0] sm:$0xff]
    %v424 = vld [vmem:[#allocation5 + $0x9c8] sm:$0xff]
    %v425 = vld [vmem:[#allocation5 + $0x9d0] sm:$0xff]
    %v426 = vld [vmem:[#allocation5 + $0x9d8] sm:$0xff]
    %v427 = vld [vmem:[#allocation5 + $0x9e0] sm:$0xff]
    %v428 = vld [vmem:[#allocation5 + $0x9e8] sm:$0xff]
    %v429 = vld [vmem:[#allocation5 + $0x9f0] sm:$0xff]
    %v430 = vld [vmem:[#allocation5 + $0x9f8] sm:$0xff]
    %v431 = vld [vmem:[#allocation5 + $0xa00] sm:$0xff]
    %v432 = vld [vmem:[#allocation5 + $0xa08] sm:$0xff]
    %v433 = vld [vmem:[#allocation5 + $0xa10] sm:$0xff]
    %v434 = vld [vmem:[#allocation5 + $0xa18] sm:$0xff]
    %v435 = vld [vmem:[#allocation5 + $0xa20] sm:$0xff]
    %v436 = vld [vmem:[#allocation5 + $0xa28] sm:$0xff]
    %v437 = vld [vmem:[#allocation5 + $0xa30] sm:$0xff]
    %v438 = vld [vmem:[#allocation5 + $0xa38] sm:$0xff]
    %v439 = vld [vmem:[#allocation5 + $0xa40] sm:$0xff]
    %v440 = vld [vmem:[#allocation5 + $0xa48] sm:$0xff]
    %v441 = vld [vmem:[#allocation5 + $0xa50] sm:$0xff]
    %v442 = vld [vmem:[#allocation5 + $0xa58] sm:$0xff]
    %v443 = vld [vmem:[#allocation5 + $0xa60] sm:$0xff]
    %v444 = vld [vmem:[#allocation5 + $0xa68] sm:$0xff]
    %v445 = vld [vmem:[#allocation5 + $0xa70] sm:$0xff]
    %v446 = vld [vmem:[#allocation5 + $0xa78] sm:$0xff]
    %v447 = vld [vmem:[#allocation5 + $0xa80] sm:$0xff]
    %v448 = vld [vmem:[#allocation5 + $0xa88] sm:$0xff]
    %v449 = vld [vmem:[#allocation5 + $0xa90] sm:$0xff]
    %v450 = vld [vmem:[#allocation5 + $0xa98] sm:$0xff]
    %v451 = vld [vmem:[#allocation5 + $0xaa0] sm:$0xff]
    %v452 = vld [vmem:[#allocation5 + $0xaa8] sm:$0xff]
    %v453 = vld [vmem:[#allocation5 + $0xab0] sm:$0xff]
    %v454 = vld [vmem:[#allocation5 + $0xab8] sm:$0xff]
    %v455 = vld [vmem:[#allocation5 + $0xac0] sm:$0xff]
    %v456 = vld [vmem:[#allocation5 + $0xac8] sm:$0xff]
    %v457 = vld [vmem:[#allocation5 + $0xad0] sm:$0xff]
    %v458 = vld [vmem:[#allocation5 + $0xad8] sm:$0xff]
    %v459 = vld [vmem:[#allocation5 + $0xae0] sm:$0xff]
    %v460 = vld [vmem:[#allocation5 + $0xae8] sm:$0xff]
    %v461 = vld [vmem:[#allocation5 + $0xaf0] sm:$0xff]
    %v462 = vld [vmem:[#allocation5 + $0xaf8] sm:$0xff]
    %v463 = vld [vmem:[#allocation5 + $0xb00] sm:$0xff]
    %v464 = vld [vmem:[#allocation5 + $0xb08] sm:$0xff]
    %v465 = vld [vmem:[#allocation5 + $0xb10] sm:$0xff]
    %v466 = vld [vmem:[#allocation5 + $0xb18] sm:$0xff]
    %v467 = vld [vmem:[#allocation5 + $0xb20] sm:$0xff]
    %v468 = vld [vmem:[#allocation5 + $0xb28] sm:$0xff]
    %v469 = vld [vmem:[#allocation5 + $0xb30] sm:$0xff]
    %v470 = vld [vmem:[#allocation5 + $0xb38] sm:$0xff]
    %v471 = vld [vmem:[#allocation5 + $0xb40] sm:$0xff]
    %v472 = vld [vmem:[#allocation5 + $0xb48] sm:$0xff]
    %v473 = vld [vmem:[#allocation5 + $0xb50] sm:$0xff]
    %v474 = vld [vmem:[#allocation5 + $0xb58] sm:$0xff]
    %v475 = vld [vmem:[#allocation5 + $0xb60] sm:$0xff]
    %v476 = vld [vmem:[#allocation5 + $0xb68] sm:$0xff]
    %v477 = vld [vmem:[#allocation5 + $0xb70] sm:$0xff]
    %v478 = vld [vmem:[#allocation5 + $0xb78] sm:$0xff]
    %v479 = vld [vmem:[#allocation5 + $0xb80] sm:$0xff]
    %v480 = vld [vmem:[#allocation5 + $0xb88] sm:$0xff]
    %v481 = vld [vmem:[#allocation5 + $0xb90] sm:$0xff]
    %v482 = vld [vmem:[#allocation5 + $0xb98] sm:$0xff]
    %v483 = vld [vmem:[#allocation5 + $0xba0] sm:$0xff]
    %v484 = vld [vmem:[#allocation5 + $0xba8] sm:$0xff]
    %v485 = vld [vmem:[#allocation5 + $0xbb0] sm:$0xff]
    %v486 = vld [vmem:[#allocation5 + $0xbb8] sm:$0xff]
    %v487 = vld [vmem:[#allocation5 + $0xbc0] sm:$0xff]
    %v488 = vld [vmem:[#allocation5 + $0xbc8] sm:$0xff]
    %v489 = vld [vmem:[#allocation5 + $0xbd0] sm:$0xff]
    %v490 = vld [vmem:[#allocation5 + $0xbd8] sm:$0xff]
    %v491 = vld [vmem:[#allocation5 + $0xbe0] sm:$0xff]
    %v492 = vld [vmem:[#allocation5 + $0xbe8] sm:$0xff]
    %v493 = vld [vmem:[#allocation5 + $0xbf0] sm:$0xff]
    %v494 = vld [vmem:[#allocation5 + $0xbf8] sm:$0xff]
    %v495 = vld [vmem:[#allocation5 + $0xc00] sm:$0xff]
    %v496 = vld [vmem:[#allocation5 + $0xc08] sm:$0xff]
    %v497 = vld [vmem:[#allocation5 + $0xc10] sm:$0xff]
    %v498 = vld [vmem:[#allocation5 + $0xc18] sm:$0xff]
    %v499 = vld [vmem:[#allocation5 + $0xc20] sm:$0xff]
    %v500 = vld [vmem:[#allocation5 + $0xc28] sm:$0xff]
    %v501 = vld [vmem:[#allocation5 + $0xc30] sm:$0xff]
    %v502 = vld [vmem:[#allocation5 + $0xc38] sm:$0xff]
    %v503 = vld [vmem:[#allocation5 + $0xc40] sm:$0xff]
    %v504 = vld [vmem:[#allocation5 + $0xc48] sm:$0xff]
    %v505 = vld [vmem:[#allocation5 + $0xc50] sm:$0xff]
    %v506 = vld [vmem:[#allocation5 + $0xc58] sm:$0xff]
    %v507 = vld [vmem:[#allocation5 + $0xc60] sm:$0xff]
    %v508 = vld [vmem:[#allocation5 + $0xc68] sm:$0xff]
    %v509 = vld [vmem:[#allocation5 + $0xc70] sm:$0xff]
    %v510 = vld [vmem:[#allocation5 + $0xc78] sm:$0xff]
    %v511 = vld [vmem:[#allocation5 + $0xc80] sm:$0xff]
    %v512 = vld [vmem:[#allocation5 + $0xc88] sm:$0xff]
    %v513 = vld [vmem:[#allocation5 + $0xc90] sm:$0xff]
    %v514 = vld [vmem:[#allocation5 + $0xc98] sm:$0xff]
    %v515 = vld [vmem:[#allocation5 + $0xca0] sm:$0xff]
    %v516 = vld [vmem:[#allocation5 + $0xca8] sm:$0xff]
    %v517 = vld [vmem:[#allocation5 + $0xcb0] sm:$0xff]
    %v518 = vld [vmem:[#allocation5 + $0xcb8] sm:$0xff]
    %v519 = vld [vmem:[#allocation5 + $0xcc0] sm:$0xff]
    %v520 = vld [vmem:[#allocation5 + $0xcc8] sm:$0xff]
    %v521 = vld [vmem:[#allocation5 + $0xcd0] sm:$0xff]
    %v522 = vld [vmem:[#allocation5 + $0xcd8] sm:$0xff]
    %v523 = vld [vmem:[#allocation5 + $0xce0] sm:$0xff]
    %v524 = vld [vmem:[#allocation5 + $0xce8] sm:$0xff]
    %v525 = vld [vmem:[#allocation5 + $0xcf0] sm:$0xff]
    %v526 = vld [vmem:[#allocation5 + $0xcf8] sm:$0xff]
    %v527 = vld [vmem:[#allocation5 + $0xd00] sm:$0xff]
    %v528 = vld [vmem:[#allocation5 + $0xd08] sm:$0xff]
    %v529 = vld [vmem:[#allocation5 + $0xd10] sm:$0xff]
    %v530 = vld [vmem:[#allocation5 + $0xd18] sm:$0xff]
    %v531 = vld [vmem:[#allocation5 + $0xd20] sm:$0xff]
    %v532 = vld [vmem:[#allocation5 + $0xd28] sm:$0xff]
    %v533 = vld [vmem:[#allocation5 + $0xd30] sm:$0xff]
    %v534 = vld [vmem:[#allocation5 + $0xd38] sm:$0xff]
    %v535 = vld [vmem:[#allocation5 + $0xd40] sm:$0xff]
    %v536 = vld [vmem:[#allocation5 + $0xd48] sm:$0xff]
    %v537 = vld [vmem:[#allocation5 + $0xd50] sm:$0xff]
    %v538 = vld [vmem:[#allocation5 + $0xd58] sm:$0xff]
    %v539 = vld [vmem:[#allocation5 + $0xd60] sm:$0xff]
    %v540 = vld [vmem:[#allocation5 + $0xd68] sm:$0xff]
    %v541 = vld [vmem:[#allocation5 + $0xd70] sm:$0xff]
    %v542 = vld [vmem:[#allocation5 + $0xd78] sm:$0xff]
    %v543 = vld [vmem:[#allocation5 + $0xd80] sm:$0xff]
    %v544 = vld [vmem:[#allocation5 + $0xd88] sm:$0xff]
    %v545 = vld [vmem:[#allocation5 + $0xd90] sm:$0xff]
    %v546 = vld [vmem:[#allocation5 + $0xd98] sm:$0xff]
    %v547 = vld [vmem:[#allocation5 + $0xda0] sm:$0xff]
    %v548 = vld [vmem:[#allocation5 + $0xda8] sm:$0xff]
    %v549 = vld [vmem:[#allocation5 + $0xdb0] sm:$0xff]
    %v550 = vld [vmem:[#allocation5 + $0xdb8] sm:$0xff]
    %v551 = vld [vmem:[#allocation5 + $0xdc0] sm:$0xff]
    %v552 = vld [vmem:[#allocation5 + $0xdc8] sm:$0xff]
    %v553 = vld [vmem:[#allocation5 + $0xdd0] sm:$0xff]
    %v554 = vld [vmem:[#allocation5 + $0xdd8] sm:$0xff]
    %v555 = vld [vmem:[#allocation5 + $0xde0] sm:$0xff]
    %v556 = vld [vmem:[#allocation5 + $0xde8] sm:$0xff]
    %v557 = vld [vmem:[#allocation5 + $0xdf0] sm:$0xff]
    %v558 = vld [vmem:[#allocation5 + $0xdf8] sm:$0xff]
    %v559 = vld [vmem:[#allocation5 + $0xe00] sm:$0xff]
    %v560 = vld [vmem:[#allocation5 + $0xe08] sm:$0xff]
    %v561 = vld [vmem:[#allocation5 + $0xe10] sm:$0xff]
    %v562 = vld [vmem:[#allocation5 + $0xe18] sm:$0xff]
    %v563 = vld [vmem:[#allocation5 + $0xe20] sm:$0xff]
    %v564 = vld [vmem:[#allocation5 + $0xe28] sm:$0xff]
    %v565 = vld [vmem:[#allocation5 + $0xe30] sm:$0xff]
    %v566 = vld [vmem:[#allocation5 + $0xe38] sm:$0xff]
    %v567 = vld [vmem:[#allocation5 + $0xe40] sm:$0xff]
    %v568 = vld [vmem:[#allocation5 + $0xe48] sm:$0xff]
    %v569 = vld [vmem:[#allocation5 + $0xe50] sm:$0xff]
    %v570 = vld [vmem:[#allocation5 + $0xe58] sm:$0xff]
    %v571 = vld [vmem:[#allocation5 + $0xe60] sm:$0xff]
    %v572 = vld [vmem:[#allocation5 + $0xe68] sm:$0xff]
    %v573 = vld [vmem:[#allocation5 + $0xe70] sm:$0xff]
    %v574 = vld [vmem:[#allocation5 + $0xe78] sm:$0xff]
    %v575 = vld [vmem:[#allocation5 + $0xe80] sm:$0xff]
    %v576 = vld [vmem:[#allocation5 + $0xe88] sm:$0xff]
    %v577 = vld [vmem:[#allocation5 + $0xe90] sm:$0xff]
    %v578 = vld [vmem:[#allocation5 + $0xe98] sm:$0xff]
    %v579 = vld [vmem:[#allocation5 + $0xea0] sm:$0xff]
    %v580 = vld [vmem:[#allocation5 + $0xea8] sm:$0xff]
    %v581 = vld [vmem:[#allocation5 + $0xeb0] sm:$0xff]
    %v582 = vld [vmem:[#allocation5 + $0xeb8] sm:$0xff]
    %v583 = vld [vmem:[#allocation5 + $0xec0] sm:$0xff]
    %v584 = vld [vmem:[#allocation5 + $0xec8] sm:$0xff]
    %v585 = vld [vmem:[#allocation5 + $0xed0] sm:$0xff]
    %v586 = vld [vmem:[#allocation5 + $0xed8] sm:$0xff]
    %v587 = vld [vmem:[#allocation5 + $0xee0] sm:$0xff]
    %v588 = vld [vmem:[#allocation5 + $0xee8] sm:$0xff]
    %v589 = vld [vmem:[#allocation5 + $0xef0] sm:$0xff]
    %v590 = vld [vmem:[#allocation5 + $0xef8] sm:$0xff]
    %v591 = vld [vmem:[#allocation5 + $0xf00] sm:$0xff]
    %v592 = vld [vmem:[#allocation5 + $0xf08] sm:$0xff]
    %v593 = vld [vmem:[#allocation5 + $0xf10] sm:$0xff]
    %v594 = vld [vmem:[#allocation5 + $0xf18] sm:$0xff]
    %v595 = vld [vmem:[#allocation5 + $0xf20] sm:$0xff]
    %v596 = vld [vmem:[#allocation5 + $0xf28] sm:$0xff]
    %v597 = vld [vmem:[#allocation5 + $0xf30] sm:$0xff]
    %v598 = vld [vmem:[#allocation5 + $0xf38] sm:$0xff]
    %v599 = vld [vmem:[#allocation5 + $0xf40] sm:$0xff]
    %v600 = vld [vmem:[#allocation5 + $0xf48] sm:$0xff]
    %v601 = vld [vmem:[#allocation5 + $0xf50] sm:$0xff]
    %v602 = vld [vmem:[#allocation5 + $0xf58] sm:$0xff]
    %v603 = vld [vmem:[#allocation5 + $0xf60] sm:$0xff]
    %v604 = vld [vmem:[#allocation5 + $0xf68] sm:$0xff]
    %v605 = vld [vmem:[#allocation5 + $0xf70] sm:$0xff]
    %v606 = vld [vmem:[#allocation5 + $0xf78] sm:$0xff]
    %v607 = vld [vmem:[#allocation5 + $0xf80] sm:$0xff]
    %v608 = vld [vmem:[#allocation5 + $0xf88] sm:$0xff]
    %v609 = vld [vmem:[#allocation5 + $0xf90] sm:$0xff]
    %v610 = vld [vmem:[#allocation5 + $0xf98] sm:$0xff]
    %v611 = vld [vmem:[#allocation5 + $0xfa0] sm:$0xff]
    %v612 = vld [vmem:[#allocation5 + $0xfa8] sm:$0xff]
    %v613 = vld [vmem:[#allocation5 + $0xfb0] sm:$0xff]
    %v614 = vld [vmem:[#allocation5 + $0xfb8] sm:$0xff]
    %v615 = vld [vmem:[#allocation5 + $0xfc0] sm:$0xff]
    %v616 = vld [vmem:[#allocation5 + $0xfc8] sm:$0xff]
    %v617 = vld [vmem:[#allocation5 + $0xfd0] sm:$0xff]
    %v618 = vld [vmem:[#allocation5 + $0xfd8] sm:$0xff]
    %v619 = vld [vmem:[#allocation5 + $0xfe0] sm:$0xff]
    %v620 = vld [vmem:[#allocation5 + $0xfe8] sm:$0xff]
    %v621 = vld [vmem:[#allocation5 + $0xff0] sm:$0xff]
    %v622 = vld [vmem:[#allocation5 + $0xff8] sm:$0xff]
    %v623 = vld [vmem:[#allocation5 + $0x1000] sm:$0xff]
    %v624 = vld [vmem:[#allocation5 + $0x1008] sm:$0xff]
    %v625 = vld [vmem:[#allocation5 + $0x1010] sm:$0xff]
    %v626 = vld [vmem:[#allocation5 + $0x1018] sm:$0xff]
    %v627 = vld [vmem:[#allocation5 + $0x1020] sm:$0xff]
    %v628 = vld [vmem:[#allocation5 + $0x1028] sm:$0xff]
    %v629 = vld [vmem:[#allocation5 + $0x1030] sm:$0xff]
    %v630 = vld [vmem:[#allocation5 + $0x1038] sm:$0xff]
    %v631 = vld [vmem:[#allocation5 + $0x1040] sm:$0xff]
    %v632 = vld [vmem:[#allocation5 + $0x1048] sm:$0xff]
    %v633 = vld [vmem:[#allocation5 + $0x1050] sm:$0xff]
    %v634 = vld [vmem:[#allocation5 + $0x1058] sm:$0xff]
    %v635 = vld [vmem:[#allocation5 + $0x1060] sm:$0xff]
    %v636 = vld [vmem:[#allocation5 + $0x1068] sm:$0xff]
    %v637 = vld [vmem:[#allocation5 + $0x1070] sm:$0xff]
    %v638 = vld [vmem:[#allocation5 + $0x1078] sm:$0xff]
    %v639 = vld [vmem:[#allocation5 + $0x1080] sm:$0xff]
    %v640 = vld [vmem:[#allocation5 + $0x1088] sm:$0xff]
    %v641 = vld [vmem:[#allocation5 + $0x1090] sm:$0xff]
    %v642 = vld [vmem:[#allocation5 + $0x1098] sm:$0xff]
    %v643 = vld [vmem:[#allocation5 + $0x10a0] sm:$0xff]
    %v644 = vld [vmem:[#allocation5 + $0x10a8] sm:$0xff]
    %v645 = vld [vmem:[#allocation5 + $0x10b0] sm:$0xff]
    %v646 = vld [vmem:[#allocation5 + $0x10b8] sm:$0xff]
    %v647 = vld [vmem:[#allocation5 + $0x10c0] sm:$0xff]
    %v648 = vld [vmem:[#allocation5 + $0x10c8] sm:$0xff]
    %v649 = vld [vmem:[#allocation5 + $0x10d0] sm:$0xff]
    %v650 = vld [vmem:[#allocation5 + $0x10d8] sm:$0xff]
    %v651 = vld [vmem:[#allocation5 + $0x10e0] sm:$0xff]
    %v652 = vld [vmem:[#allocation5 + $0x10e8] sm:$0xff]
    %v653 = vld [vmem:[#allocation5 + $0x10f0] sm:$0xff]
    %v654 = vld [vmem:[#allocation5 + $0x10f8] sm:$0xff]
    %v655 = vld [vmem:[#allocation5 + $0x1100] sm:$0xff]
    %v656 = vld [vmem:[#allocation5 + $0x1108] sm:$0xff]
    %v657 = vld [vmem:[#allocation5 + $0x1110] sm:$0xff]
    %v658 = vld [vmem:[#allocation5 + $0x1118] sm:$0xff]
    %v659 = vld [vmem:[#allocation5 + $0x1120] sm:$0xff]
    %v660 = vld [vmem:[#allocation5 + $0x1128] sm:$0xff]
    %v661 = vld [vmem:[#allocation5 + $0x1130] sm:$0xff]
    %v662 = vld [vmem:[#allocation5 + $0x1138] sm:$0xff]
    %v663 = vld [vmem:[#allocation5 + $0x1140] sm:$0xff]
    %v664 = vld [vmem:[#allocation5 + $0x1148] sm:$0xff]
    %v665 = vld [vmem:[#allocation5 + $0x1150] sm:$0xff]
    %v666 = vld [vmem:[#allocation5 + $0x1158] sm:$0xff]
    %v667 = vld [vmem:[#allocation5 + $0x1160] sm:$0xff]
    %v668 = vld [vmem:[#allocation5 + $0x1168] sm:$0xff]
    %v669 = vld [vmem:[#allocation5 + $0x1170] sm:$0xff]
    %v670 = vld [vmem:[#allocation5 + $0x1178] sm:$0xff]
    %v671 = vld [vmem:[#allocation5 + $0x1180] sm:$0xff]
    %v672 = vld [vmem:[#allocation5 + $0x1188] sm:$0xff]
    %v673 = vld [vmem:[#allocation5 + $0x1190] sm:$0xff]
    %v674 = vld [vmem:[#allocation5 + $0x1198] sm:$0xff]
    %v675 = vld [vmem:[#allocation5 + $0x11a0] sm:$0xff]
    %v676 = vld [vmem:[#allocation5 + $0x11a8] sm:$0xff]
    %v677 = vld [vmem:[#allocation5 + $0x11b0] sm:$0xff]
    %v678 = vld [vmem:[#allocation5 + $0x11b8] sm:$0xff]
    %v679 = vld [vmem:[#allocation5 + $0x11c0] sm:$0xff]
    %v680 = vld [vmem:[#allocation5 + $0x11c8] sm:$0xff]
    %v681 = vld [vmem:[#allocation5 + $0x11d0] sm:$0xff]
    %v682 = vld [vmem:[#allocation5 + $0x11d8] sm:$0xff]
    %v683 = vld [vmem:[#allocation5 + $0x11e0] sm:$0xff]
    %v684 = vld [vmem:[#allocation5 + $0x11e8] sm:$0xff]
    %v685 = vld [vmem:[#allocation5 + $0x11f0] sm:$0xff]
    %v686 = vld [vmem:[#allocation5 + $0x11f8] sm:$0xff]
    %v687 = vld [vmem:[#allocation5 + $0x1200] sm:$0xff]
    %v688 = vld [vmem:[#allocation5 + $0x1208] sm:$0xff]
    %v689 = vld [vmem:[#allocation5 + $0x1210] sm:$0xff]
    %v690 = vld [vmem:[#allocation5 + $0x1218] sm:$0xff]
    %v691 = vld [vmem:[#allocation5 + $0x1220] sm:$0xff]
    %v692 = vld [vmem:[#allocation5 + $0x1228] sm:$0xff]
    %v693 = vld [vmem:[#allocation5 + $0x1230] sm:$0xff]
    %v694 = vld [vmem:[#allocation5 + $0x1238] sm:$0xff]
    %v695 = vld [vmem:[#allocation5 + $0x1240] sm:$0xff]
    %v696 = vld [vmem:[#allocation5 + $0x1248] sm:$0xff]
    %v697 = vld [vmem:[#allocation5 + $0x1250] sm:$0xff]
    %v698 = vld [vmem:[#allocation5 + $0x1258] sm:$0xff]
    %v699 = vld [vmem:[#allocation5 + $0x1260] sm:$0xff]
    %v700 = vld [vmem:[#allocation5 + $0x1268] sm:$0xff]
    %v701 = vld [vmem:[#allocation5 + $0x1270] sm:$0xff]
    %v702 = vld [vmem:[#allocation5 + $0x1278] sm:$0xff]
    %v703 = vld [vmem:[#allocation5 + $0x1280] sm:$0xff]
    %v704 = vld [vmem:[#allocation5 + $0x1288] sm:$0xff]
    %v705 = vld [vmem:[#allocation5 + $0x1290] sm:$0xff]
    %v706 = vld [vmem:[#allocation5 + $0x1298] sm:$0xff]
    %v707 = vld [vmem:[#allocation5 + $0x12a0] sm:$0xff]
    %v708 = vld [vmem:[#allocation5 + $0x12a8] sm:$0xff]
    %v709 = vld [vmem:[#allocation5 + $0x12b0] sm:$0xff]
    %v710 = vld [vmem:[#allocation5 + $0x12b8] sm:$0xff]
    %v711 = vld [vmem:[#allocation5 + $0x12c0] sm:$0xff]
    %v712 = vld [vmem:[#allocation5 + $0x12c8] sm:$0xff]
    %v713 = vld [vmem:[#allocation5 + $0x12d0] sm:$0xff]
    %v714 = vld [vmem:[#allocation5 + $0x12d8] sm:$0xff]
    %v715 = vld [vmem:[#allocation5 + $0x12e0] sm:$0xff]
    %v716 = vld [vmem:[#allocation5 + $0x12e8] sm:$0xff]
    %v717 = vld [vmem:[#allocation5 + $0x12f0] sm:$0xff]
    %v718 = vld [vmem:[#allocation5 + $0x12f8] sm:$0xff]
    %v719 = vld [vmem:[#allocation5 + $0x1300] sm:$0xff]
    %v720 = vld [vmem:[#allocation5 + $0x1308] sm:$0xff]
    %v721 = vld [vmem:[#allocation5 + $0x1310] sm:$0xff]
    %v722 = vld [vmem:[#allocation5 + $0x1318] sm:$0xff]
    %v723 = vld [vmem:[#allocation5 + $0x1320] sm:$0xff]
    %v724 = vld [vmem:[#allocation5 + $0x1328] sm:$0xff]
    %v725 = vld [vmem:[#allocation5 + $0x1330] sm:$0xff]
    %v726 = vld [vmem:[#allocation5 + $0x1338] sm:$0xff]
    %v727 = vld [vmem:[#allocation5 + $0x1340] sm:$0xff]
    %v728 = vld [vmem:[#allocation5 + $0x1348] sm:$0xff]
    %v729 = vld [vmem:[#allocation5 + $0x1350] sm:$0xff]
    %v730 = vld [vmem:[#allocation5 + $0x1358] sm:$0xff]
    %v731 = vld [vmem:[#allocation5 + $0x1360] sm:$0xff]
    %v732 = vld [vmem:[#allocation5 + $0x1368] sm:$0xff]
    %v733 = vld [vmem:[#allocation5 + $0x1370] sm:$0xff]
    %v734 = vld [vmem:[#allocation5 + $0x1378] sm:$0xff]
    %v735 = vld [vmem:[#allocation5 + $0x1380] sm:$0xff]
    %v736 = vld [vmem:[#allocation5 + $0x1388] sm:$0xff]
    %v737 = vld [vmem:[#allocation5 + $0x1390] sm:$0xff]
    %v738 = vld [vmem:[#allocation5 + $0x1398] sm:$0xff]
    %v739 = vld [vmem:[#allocation5 + $0x13a0] sm:$0xff]
    %v740 = vld [vmem:[#allocation5 + $0x13a8] sm:$0xff]
    %v741 = vld [vmem:[#allocation5 + $0x13b0] sm:$0xff]
    %v742 = vld [vmem:[#allocation5 + $0x13b8] sm:$0xff]
    %v743 = vld [vmem:[#allocation5 + $0x13c0] sm:$0xff]
    %v744 = vld [vmem:[#allocation5 + $0x13c8] sm:$0xff]
    %v745 = vld [vmem:[#allocation5 + $0x13d0] sm:$0xff]
    %v746 = vld [vmem:[#allocation5 + $0x13d8] sm:$0xff]
    %v747 = vld [vmem:[#allocation5 + $0x13e0] sm:$0xff]
    %v748 = vld [vmem:[#allocation5 + $0x13e8] sm:$0xff]
    %v749 = vld [vmem:[#allocation5 + $0x13f0] sm:$0xff]
    %v750 = vld [vmem:[#allocation5 + $0x13f8] sm:$0xff]
    %v751 = vld [vmem:[#allocation5 + $0x1400] sm:$0xff]
    %v752 = vld [vmem:[#allocation5 + $0x1408] sm:$0xff]
    %v753 = vld [vmem:[#allocation5 + $0x1410] sm:$0xff]
    %v754 = vld [vmem:[#allocation5 + $0x1418] sm:$0xff]
    %v755 = vld [vmem:[#allocation5 + $0x1420] sm:$0xff]
    %v756 = vld [vmem:[#allocation5 + $0x1428] sm:$0xff]
    %v757 = vld [vmem:[#allocation5 + $0x1430] sm:$0xff]
    %v758 = vld [vmem:[#allocation5 + $0x1438] sm:$0xff]
    %v759 = vld [vmem:[#allocation5 + $0x1440] sm:$0xff]
    %v760 = vld [vmem:[#allocation5 + $0x1448] sm:$0xff]
    %v761 = vld [vmem:[#allocation5 + $0x1450] sm:$0xff]
    %v762 = vld [vmem:[#allocation5 + $0x1458] sm:$0xff]
    %v763 = vld [vmem:[#allocation5 + $0x1460] sm:$0xff]
    %v764 = vld [vmem:[#allocation5 + $0x1468] sm:$0xff]
    %v765 = vld [vmem:[#allocation5 + $0x1470] sm:$0xff]
    %v766 = vld [vmem:[#allocation5 + $0x1478] sm:$0xff]
    %v767 = vld [vmem:[#allocation5 + $0x1480] sm:$0xff]
    %v768 = vld [vmem:[#allocation5 + $0x1488] sm:$0xff]
    %v769 = vld [vmem:[#allocation5 + $0x1490] sm:$0xff]
    %v770 = vld [vmem:[#allocation5 + $0x1498] sm:$0xff]
    %v771 = vld [vmem:[#allocation5 + $0x14a0] sm:$0xff]
    %v772 = vld [vmem:[#allocation5 + $0x14a8] sm:$0xff]
    %v773 = vld [vmem:[#allocation5 + $0x14b0] sm:$0xff]
    %v774 = vld [vmem:[#allocation5 + $0x14b8] sm:$0xff]
    %v775 = vld [vmem:[#allocation5 + $0x14c0] sm:$0xff]
    %v776 = vld [vmem:[#allocation5 + $0x14c8] sm:$0xff]
    %v777 = vld [vmem:[#allocation5 + $0x14d0] sm:$0xff]
    %v778 = vld [vmem:[#allocation5 + $0x14d8] sm:$0xff]
    %v779 = vld [vmem:[#allocation5 + $0x14e0] sm:$0xff]
    %v780 = vld [vmem:[#allocation5 + $0x14e8] sm:$0xff]
    %v781 = vld [vmem:[#allocation5 + $0x14f0] sm:$0xff]
    %v782 = vld [vmem:[#allocation5 + $0x14f8] sm:$0xff]
    %v783 = vld [vmem:[#allocation5 + $0x1500] sm:$0xff]
    %v784 = vld [vmem:[#allocation5 + $0x1508] sm:$0xff]
    %v785 = vld [vmem:[#allocation5 + $0x1510] sm:$0xff]
    %v786 = vld [vmem:[#allocation5 + $0x1518] sm:$0xff]
    %v787 = vld [vmem:[#allocation5 + $0x1520] sm:$0xff]
    %v788 = vld [vmem:[#allocation5 + $0x1528] sm:$0xff]
    %v789 = vld [vmem:[#allocation5 + $0x1530] sm:$0xff]
    %v790 = vld [vmem:[#allocation5 + $0x1538] sm:$0xff]
    %v791 = vld [vmem:[#allocation5 + $0x1540] sm:$0xff]
    %v792 = vld [vmem:[#allocation5 + $0x1548] sm:$0xff]
    %v793 = vld [vmem:[#allocation5 + $0x1550] sm:$0xff]
    %v794 = vld [vmem:[#allocation5 + $0x1558] sm:$0xff]
    %v795 = vld [vmem:[#allocation5 + $0x1560] sm:$0xff]
    %v796 = vld [vmem:[#allocation5 + $0x1568] sm:$0xff]
    %v797 = vld [vmem:[#allocation5 + $0x1570] sm:$0xff]
    %v798 = vld [vmem:[#allocation5 + $0x1578] sm:$0xff]
    %v799 = vld [vmem:[#allocation5 + $0x1580] sm:$0xff]
    %v800 = vld [vmem:[#allocation5 + $0x1588] sm:$0xff]
    %v801 = vld [vmem:[#allocation5 + $0x1590] sm:$0xff]
    %v802 = vld [vmem:[#allocation5 + $0x1598] sm:$0xff]
    %v803 = vld [vmem:[#allocation5 + $0x15a0] sm:$0xff]
    %v804 = vld [vmem:[#allocation5 + $0x15a8] sm:$0xff]
    %v805 = vld [vmem:[#allocation5 + $0x15b0] sm:$0xff]
    %v806 = vld [vmem:[#allocation5 + $0x15b8] sm:$0xff]
    %v807 = vld [vmem:[#allocation5 + $0x15c0] sm:$0xff]
    %v808 = vld [vmem:[#allocation5 + $0x15c8] sm:$0xff]
    %v809 = vld [vmem:[#allocation5 + $0x15d0] sm:$0xff]
    %v810 = vld [vmem:[#allocation5 + $0x15d8] sm:$0xff]
    %v811 = vld [vmem:[#allocation5 + $0x15e0] sm:$0xff]
    %v812 = vld [vmem:[#allocation5 + $0x15e8] sm:$0xff]
    %v813 = vld [vmem:[#allocation5 + $0x15f0] sm:$0xff]
    %v814 = vld [vmem:[#allocation5 + $0x15f8] sm:$0xff]
    %v815 = vld [vmem:[#allocation5 + $0x1600] sm:$0xff]
    %v816 = vld [vmem:[#allocation5 + $0x1608] sm:$0xff]
    %v817 = vld [vmem:[#allocation5 + $0x1610] sm:$0xff]
    %v818 = vld [vmem:[#allocation5 + $0x1618] sm:$0xff]
    %v819 = vld [vmem:[#allocation5 + $0x1620] sm:$0xff]
    %v820 = vld [vmem:[#allocation5 + $0x1628] sm:$0xff]
    %v821 = vld [vmem:[#allocation5 + $0x1630] sm:$0xff]
    %v822 = vld [vmem:[#allocation5 + $0x1638] sm:$0xff]
    %v823 = vld [vmem:[#allocation5 + $0x1640] sm:$0xff]
    %v824 = vld [vmem:[#allocation5 + $0x1648] sm:$0xff]
    %v825 = vld [vmem:[#allocation5 + $0x1650] sm:$0xff]
    %v826 = vld [vmem:[#allocation5 + $0x1658] sm:$0xff]
    %v827 = vld [vmem:[#allocation5 + $0x1660] sm:$0xff]
    %v828 = vld [vmem:[#allocation5 + $0x1668] sm:$0xff]
    %v829 = vld [vmem:[#allocation5 + $0x1670] sm:$0xff]
    %v830 = vld [vmem:[#allocation5 + $0x1678] sm:$0xff]
    %v831 = vld [vmem:[#allocation5 + $0x1680] sm:$0xff]
    %v832 = vld [vmem:[#allocation5 + $0x1688] sm:$0xff]
    %v833 = vld [vmem:[#allocation5 + $0x1690] sm:$0xff]
    %v834 = vld [vmem:[#allocation5 + $0x1698] sm:$0xff]
    %v835 = vld [vmem:[#allocation5 + $0x16a0] sm:$0xff]
    %v836 = vld [vmem:[#allocation5 + $0x16a8] sm:$0xff]
    %v837 = vld [vmem:[#allocation5 + $0x16b0] sm:$0xff]
    %v838 = vld [vmem:[#allocation5 + $0x16b8] sm:$0xff]
    %v839 = vld [vmem:[#allocation5 + $0x16c0] sm:$0xff]
    %v840 = vld [vmem:[#allocation5 + $0x16c8] sm:$0xff]
    %v841 = vld [vmem:[#allocation5 + $0x16d0] sm:$0xff]
    %v842 = vld [vmem:[#allocation5 + $0x16d8] sm:$0xff]
    %v843 = vld [vmem:[#allocation5 + $0x16e0] sm:$0xff]
    %v844 = vld [vmem:[#allocation5 + $0x16e8] sm:$0xff]
    %v845 = vld [vmem:[#allocation5 + $0x16f0] sm:$0xff]
    %v846 = vld [vmem:[#allocation5 + $0x16f8] sm:$0xff]
    %v847 = vld [vmem:[#allocation5 + $0x1700] sm:$0xff]
    %v848 = vld [vmem:[#allocation5 + $0x1708] sm:$0xff]
    %v849 = vld [vmem:[#allocation5 + $0x1710] sm:$0xff]
    %v850 = vld [vmem:[#allocation5 + $0x1718] sm:$0xff]
    %v851 = vld [vmem:[#allocation5 + $0x1720] sm:$0xff]
    %v852 = vld [vmem:[#allocation5 + $0x1728] sm:$0xff]
    %v853 = vld [vmem:[#allocation5 + $0x1730] sm:$0xff]
    %v854 = vld [vmem:[#allocation5 + $0x1738] sm:$0xff]
    %v855 = vld [vmem:[#allocation5 + $0x1740] sm:$0xff]
    %v856 = vld [vmem:[#allocation5 + $0x1748] sm:$0xff]
    %v857 = vld [vmem:[#allocation5 + $0x1750] sm:$0xff]
    %v858 = vld [vmem:[#allocation5 + $0x1758] sm:$0xff]
    %v859 = vld [vmem:[#allocation5 + $0x1760] sm:$0xff]
    %v860 = vld [vmem:[#allocation5 + $0x1768] sm:$0xff]
    %v861 = vld [vmem:[#allocation5 + $0x1770] sm:$0xff]
    %v862 = vld [vmem:[#allocation5 + $0x1778] sm:$0xff]
    %v863 = vld [vmem:[#allocation5 + $0x1780] sm:$0xff]
    %v864 = vld [vmem:[#allocation5 + $0x1788] sm:$0xff]
    %v865 = vld [vmem:[#allocation5 + $0x1790] sm:$0xff]
    %v866 = vld [vmem:[#allocation5 + $0x1798] sm:$0xff]
    %v867 = vld [vmem:[#allocation5 + $0x17a0] sm:$0xff]
    %v868 = vld [vmem:[#allocation5 + $0x17a8] sm:$0xff]
    %v869 = vld [vmem:[#allocation5 + $0x17b0] sm:$0xff]
    %v870 = vld [vmem:[#allocation5 + $0x17b8] sm:$0xff]
    %v871 = vld [vmem:[#allocation5 + $0x17c0] sm:$0xff]
    %v872 = vld [vmem:[#allocation5 + $0x17c8] sm:$0xff]
    %v873 = vld [vmem:[#allocation5 + $0x17d0] sm:$0xff]
    %v874 = vld [vmem:[#allocation5 + $0x17d8] sm:$0xff]
    %v875 = vld [vmem:[#allocation5 + $0x17e0] sm:$0xff]
    %v876 = vld [vmem:[#allocation5 + $0x17e8] sm:$0xff]
    %v877 = vld [vmem:[#allocation5 + $0x17f0] sm:$0xff]
    %v878 = vld [vmem:[#allocation5 + $0x17f8] sm:$0xff]
    %v879 = vld [vmem:[#allocation5 + $0x1800] sm:$0xff]
    %v880 = vld [vmem:[#allocation5 + $0x1808] sm:$0xff]
    %v881 = vld [vmem:[#allocation5 + $0x1810] sm:$0xff]
    %v882 = vld [vmem:[#allocation5 + $0x1818] sm:$0xff]
    %v883 = vld [vmem:[#allocation5 + $0x1820] sm:$0xff]
    %v884 = vld [vmem:[#allocation5 + $0x1828] sm:$0xff]
    %v885 = vld [vmem:[#allocation5 + $0x1830] sm:$0xff]
    %v886 = vld [vmem:[#allocation5 + $0x1838] sm:$0xff]
    %v887 = vld [vmem:[#allocation5 + $0x1840] sm:$0xff]
    %v888 = vld [vmem:[#allocation5 + $0x1848] sm:$0xff]
    %v889 = vld [vmem:[#allocation5 + $0x1850] sm:$0xff]
    %v890 = vld [vmem:[#allocation5 + $0x1858] sm:$0xff]
    %v891 = vld [vmem:[#allocation5 + $0x1860] sm:$0xff]
    %v892 = vld [vmem:[#allocation5 + $0x1868] sm:$0xff]
    %v893 = vld [vmem:[#allocation5 + $0x1870] sm:$0xff]
    %v894 = vld [vmem:[#allocation5 + $0x1878] sm:$0xff]
    %v895 = vld [vmem:[#allocation5 + $0x1880] sm:$0xff]
    %v896 = vld [vmem:[#allocation5 + $0x1888] sm:$0xff]
    %v897 = vld [vmem:[#allocation5 + $0x1890] sm:$0xff]
    %v898 = vld [vmem:[#allocation5 + $0x1898] sm:$0xff]
    %v899 = vld [vmem:[#allocation5 + $0x18a0] sm:$0xff]
    %v900 = vld [vmem:[#allocation5 + $0x18a8] sm:$0xff]
    %v901 = vld [vmem:[#allocation5 + $0x18b0] sm:$0xff]
    %v902 = vld [vmem:[#allocation5 + $0x18b8] sm:$0xff]
    %v903 = vld [vmem:[#allocation5 + $0x18c0] sm:$0xff]
    %v904 = vld [vmem:[#allocation5 + $0x18c8] sm:$0xff]
    %v905 = vld [vmem:[#allocation5 + $0x18d0] sm:$0xff]
    %v906 = vld [vmem:[#allocation5 + $0x18d8] sm:$0xff]
    %v907 = vld [vmem:[#allocation5 + $0x18e0] sm:$0xff]
    %v908 = vld [vmem:[#allocation5 + $0x18e8] sm:$0xff]
    %v909 = vld [vmem:[#allocation5 + $0x18f0] sm:$0xff]
    %v910 = vld [vmem:[#allocation5 + $0x18f8] sm:$0xff]
    %v911 = vld [vmem:[#allocation5 + $0x1900] sm:$0xff]
    %v912 = vld [vmem:[#allocation5 + $0x1908] sm:$0xff]
    %v913 = vld [vmem:[#allocation5 + $0x1910] sm:$0xff]
    %v914 = vld [vmem:[#allocation5 + $0x1918] sm:$0xff]
    %v915 = vld [vmem:[#allocation5 + $0x1920] sm:$0xff]
    %v916 = vld [vmem:[#allocation5 + $0x1928] sm:$0xff]
    %v917 = vld [vmem:[#allocation5 + $0x1930] sm:$0xff]
    %v918 = vld [vmem:[#allocation5 + $0x1938] sm:$0xff]
    %v919 = vld [vmem:[#allocation5 + $0x1940] sm:$0xff]
    %v920 = vld [vmem:[#allocation5 + $0x1948] sm:$0xff]
    %v921 = vld [vmem:[#allocation5 + $0x1950] sm:$0xff]
    %v922 = vld [vmem:[#allocation5 + $0x1958] sm:$0xff]
    %v923 = vld [vmem:[#allocation5 + $0x1960] sm:$0xff]
    %v924 = vld [vmem:[#allocation5 + $0x1968] sm:$0xff]
    %v925 = vld [vmem:[#allocation5 + $0x1970] sm:$0xff]
    %v926 = vld [vmem:[#allocation5 + $0x1978] sm:$0xff]
    %v927 = vld [vmem:[#allocation5 + $0x1980] sm:$0xff]
    %v928 = vld [vmem:[#allocation5 + $0x1988] sm:$0xff]
    %v929 = vld [vmem:[#allocation5 + $0x1990] sm:$0xff]
    %v930 = vld [vmem:[#allocation5 + $0x1998] sm:$0xff]
    %v931 = vld [vmem:[#allocation5 + $0x19a0] sm:$0xff]
    %v932 = vld [vmem:[#allocation5 + $0x19a8] sm:$0xff]
    %v933 = vld [vmem:[#allocation5 + $0x19b0] sm:$0xff]
    %v934 = vld [vmem:[#allocation5 + $0x19b8] sm:$0xff]
    %v935 = vld [vmem:[#allocation5 + $0x19c0] sm:$0xff]
    %v936 = vld [vmem:[#allocation5 + $0x19c8] sm:$0xff]
    %v937 = vld [vmem:[#allocation5 + $0x19d0] sm:$0xff]
    %v938 = vld [vmem:[#allocation5 + $0x19d8] sm:$0xff]
    %v939 = vld [vmem:[#allocation5 + $0x19e0] sm:$0xff]
    %v940 = vld [vmem:[#allocation5 + $0x19e8] sm:$0xff]
    %v941 = vld [vmem:[#allocation5 + $0x19f0] sm:$0xff]
    %v942 = vld [vmem:[#allocation5 + $0x19f8] sm:$0xff]
    %v943 = vld [vmem:[#allocation5 + $0x1a00] sm:$0xff]
    %v944 = vld [vmem:[#allocation5 + $0x1a08] sm:$0xff]
    %v945 = vld [vmem:[#allocation5 + $0x1a10] sm:$0xff]
    %v946 = vld [vmem:[#allocation5 + $0x1a18] sm:$0xff]
    %v947 = vld [vmem:[#allocation5 + $0x1a20] sm:$0xff]
    %v948 = vld [vmem:[#allocation5 + $0x1a28] sm:$0xff]
    %v949 = vld [vmem:[#allocation5 + $0x1a30] sm:$0xff]
    %v950 = vld [vmem:[#allocation5 + $0x1a38] sm:$0xff]
    %v951 = vld [vmem:[#allocation5 + $0x1a40] sm:$0xff]
    %v952 = vld [vmem:[#allocation5 + $0x1a48] sm:$0xff]
    %v953 = vld [vmem:[#allocation5 + $0x1a50] sm:$0xff]
    %v954 = vld [vmem:[#allocation5 + $0x1a58] sm:$0xff]
    %v955 = vld [vmem:[#allocation5 + $0x1a60] sm:$0xff]
    %v956 = vld [vmem:[#allocation5 + $0x1a68] sm:$0xff]
    %v957 = vld [vmem:[#allocation5 + $0x1a70] sm:$0xff]
    %v958 = vld [vmem:[#allocation5 + $0x1a78] sm:$0xff]
    %v959 = vld [vmem:[#allocation5 + $0x1a80] sm:$0xff]
    %v960 = vld [vmem:[#allocation5 + $0x1a88] sm:$0xff]
    %v961 = vld [vmem:[#allocation5 + $0x1a90] sm:$0xff]
    %v962 = vld [vmem:[#allocation5 + $0x1a98] sm:$0xff]
    %v963 = vld [vmem:[#allocation5 + $0x1aa0] sm:$0xff]
    %v964 = vld [vmem:[#allocation5 + $0x1aa8] sm:$0xff]
    %v965 = vld [vmem:[#allocation5 + $0x1ab0] sm:$0xff]
    %v966 = vld [vmem:[#allocation5 + $0x1ab8] sm:$0xff]
    %v967 = vld [vmem:[#allocation5 + $0x1ac0] sm:$0xff]
    %v968 = vld [vmem:[#allocation5 + $0x1ac8] sm:$0xff]
    %v969 = vld [vmem:[#allocation5 + $0x1ad0] sm:$0xff]
    %v970 = vld [vmem:[#allocation5 + $0x1ad8] sm:$0xff]
    %v971 = vld [vmem:[#allocation5 + $0x1ae0] sm:$0xff]
    %v972 = vld [vmem:[#allocation5 + $0x1ae8] sm:$0xff]
    %v973 = vld [vmem:[#allocation5 + $0x1af0] sm:$0xff]
    %v974 = vld [vmem:[#allocation5 + $0x1af8] sm:$0xff]
    %v975 = vld [vmem:[#allocation5 + $0x1b00] sm:$0xff]
    %v976 = vld [vmem:[#allocation5 + $0x1b08] sm:$0xff]
    %v977 = vld [vmem:[#allocation5 + $0x1b10] sm:$0xff]
    %v978 = vld [vmem:[#allocation5 + $0x1b18] sm:$0xff]
    %v979 = vld [vmem:[#allocation5 + $0x1b20] sm:$0xff]
    %v980 = vld [vmem:[#allocation5 + $0x1b28] sm:$0xff]
    %v981 = vld [vmem:[#allocation5 + $0x1b30] sm:$0xff]
    %v982 = vld [vmem:[#allocation5 + $0x1b38] sm:$0xff]
    %v983 = vld [vmem:[#allocation5 + $0x1b40] sm:$0xff]
    %v984 = vld [vmem:[#allocation5 + $0x1b48] sm:$0xff]
    %v985 = vld [vmem:[#allocation5 + $0x1b50] sm:$0xff]
    %v986 = vld [vmem:[#allocation5 + $0x1b58] sm:$0xff]
    %v987 = vld [vmem:[#allocation5 + $0x1b60] sm:$0xff]
    %v988 = vld [vmem:[#allocation5 + $0x1b68] sm:$0xff]
    %v989 = vld [vmem:[#allocation5 + $0x1b70] sm:$0xff]
    %v990 = vld [vmem:[#allocation5 + $0x1b78] sm:$0xff]
    %v991 = vld [vmem:[#allocation5 + $0x1b80] sm:$0xff]
    %v992 = vld [vmem:[#allocation5 + $0x1b88] sm:$0xff]
    %v993 = vld [vmem:[#allocation5 + $0x1b90] sm:$0xff]
    %v994 = vld [vmem:[#allocation5 + $0x1b98] sm:$0xff]
    %v995 = vld [vmem:[#allocation5 + $0x1ba0] sm:$0xff]
    %v996 = vld [vmem:[#allocation5 + $0x1ba8] sm:$0xff]
    %v997 = vld [vmem:[#allocation5 + $0x1bb0] sm:$0xff]
    %v998 = vld [vmem:[#allocation5 + $0x1bb8] sm:$0xff]
    %v999 = vld [vmem:[#allocation5 + $0x1bc0] sm:$0xff]
    %v1000 = vld [vmem:[#allocation5 + $0x1bc8] sm:$0xff]
    %v1001 = vld [vmem:[#allocation5 + $0x1bd0] sm:$0xff]
    %v1002 = vld [vmem:[#allocation5 + $0x1bd8] sm:$0xff]
    %v1003 = vld [vmem:[#allocation5 + $0x1be0] sm:$0xff]
    %v1004 = vld [vmem:[#allocation5 + $0x1be8] sm:$0xff]
    %v1005 = vld [vmem:[#allocation5 + $0x1bf0] sm:$0xff]
    %v1006 = vld [vmem:[#allocation5 + $0x1bf8] sm:$0xff]
    %v1007 = vld [vmem:[#allocation5 + $0x1c00] sm:$0xff]
    %v1008 = vld [vmem:[#allocation5 + $0x1c08] sm:$0xff]
    %v1009 = vld [vmem:[#allocation5 + $0x1c10] sm:$0xff]
    %v1010 = vld [vmem:[#allocation5 + $0x1c18] sm:$0xff]
    %v1011 = vld [vmem:[#allocation5 + $0x1c20] sm:$0xff]
    %v1012 = vld [vmem:[#allocation5 + $0x1c28] sm:$0xff]
    %v1013 = vld [vmem:[#allocation5 + $0x1c30] sm:$0xff]
    %v1014 = vld [vmem:[#allocation5 + $0x1c38] sm:$0xff]
    %v1015 = vld [vmem:[#allocation5 + $0x1c40] sm:$0xff]
    %v1016 = vld [vmem:[#allocation5 + $0x1c48] sm:$0xff]
    %v1017 = vld [vmem:[#allocation5 + $0x1c50] sm:$0xff]
    %v1018 = vld [vmem:[#allocation5 + $0x1c58] sm:$0xff]
    %v1019 = vld [vmem:[#allocation5 + $0x1c60] sm:$0xff]
    %v1020 = vld [vmem:[#allocation5 + $0x1c68] sm:$0xff]
    %v1021 = vld [vmem:[#allocation5 + $0x1c70] sm:$0xff]
    %v1022 = vld [vmem:[#allocation5 + $0x1c78] sm:$0xff]
    %v1023 = vld [vmem:[#allocation5 + $0x1c80] sm:$0xff]
    %v1024 = vld [vmem:[#allocation5 + $0x1c88] sm:$0xff]
    %v1025 = vld [vmem:[#allocation5 + $0x1c90] sm:$0xff]
    %v1026 = vld [vmem:[#allocation5 + $0x1c98] sm:$0xff]
    %v1027 = vld [vmem:[#allocation5 + $0x1ca0] sm:$0xff]
    %v1028 = vld [vmem:[#allocation5 + $0x1ca8] sm:$0xff]
    %v1029 = vld [vmem:[#allocation5 + $0x1cb0] sm:$0xff]
    %v1030 = vld [vmem:[#allocation5 + $0x1cb8] sm:$0xff]
    %v1031 = vld [vmem:[#allocation5 + $0x1cc0] sm:$0xff]
    %v1032 = vld [vmem:[#allocation5 + $0x1cc8] sm:$0xff]
    %v1033 = vld [vmem:[#allocation5 + $0x1cd0] sm:$0xff]
    %v1034 = vld [vmem:[#allocation5 + $0x1cd8] sm:$0xff]
    %v1035 = vld [vmem:[#allocation5 + $0x1ce0] sm:$0xff]
    %v1036 = vld [vmem:[#allocation5 + $0x1ce8] sm:$0xff]
    %v1037 = vld [vmem:[#allocation5 + $0x1cf0] sm:$0xff]
    %v1038 = vld [vmem:[#allocation5 + $0x1cf8] sm:$0xff]
    %v1039 = vld [vmem:[#allocation5 + $0x1d00] sm:$0xff]
    %v1040 = vld [vmem:[#allocation5 + $0x1d08] sm:$0xff]
    %v1041 = vld [vmem:[#allocation5 + $0x1d10] sm:$0xff]
    %v1042 = vld [vmem:[#allocation5 + $0x1d18] sm:$0xff]
    %v1043 = vld [vmem:[#allocation5 + $0x1d20] sm:$0xff]
    %v1044 = vld [vmem:[#allocation5 + $0x1d28] sm:$0xff]
    %v1045 = vld [vmem:[#allocation5 + $0x1d30] sm:$0xff]
    %v1046 = vld [vmem:[#allocation5 + $0x1d38] sm:$0xff]
    %v1047 = vld [vmem:[#allocation5 + $0x1d40] sm:$0xff]
    %v1048 = vld [vmem:[#allocation5 + $0x1d48] sm:$0xff]
    %v1049 = vld [vmem:[#allocation5 + $0x1d50] sm:$0xff]
    %v1050 = vld [vmem:[#allocation5 + $0x1d58] sm:$0xff]
    %v1051 = vld [vmem:[#allocation5 + $0x1d60] sm:$0xff]
    %v1052 = vld [vmem:[#allocation5 + $0x1d68] sm:$0xff]
    %v1053 = vld [vmem:[#allocation5 + $0x1d70] sm:$0xff]
    %v1054 = vld [vmem:[#allocation5 + $0x1d78] sm:$0xff]
    %v1055 = vld [vmem:[#allocation5 + $0x1d80] sm:$0xff]
    %v1056 = vld [vmem:[#allocation5 + $0x1d88] sm:$0xff]
    %v1057 = vld [vmem:[#allocation5 + $0x1d90] sm:$0xff]
    %v1058 = vld [vmem:[#allocation5 + $0x1d98] sm:$0xff]
    %v1059 = vld [vmem:[#allocation5 + $0x1da0] sm:$0xff]
    %v1060 = vld [vmem:[#allocation5 + $0x1da8] sm:$0xff]
    %v1061 = vld [vmem:[#allocation5 + $0x1db0] sm:$0xff]
    %v1062 = vld [vmem:[#allocation5 + $0x1db8] sm:$0xff]
    %v1063 = vld [vmem:[#allocation5 + $0x1dc0] sm:$0xff]
    %v1064 = vld [vmem:[#allocation5 + $0x1dc8] sm:$0xff]
    %v1065 = vld [vmem:[#allocation5 + $0x1dd0] sm:$0xff]
    %v1066 = vld [vmem:[#allocation5 + $0x1dd8] sm:$0xff]
    %v1067 = vld [vmem:[#allocation5 + $0x1de0] sm:$0xff]
    %v1068 = vld [vmem:[#allocation5 + $0x1de8] sm:$0xff]
    %v1069 = vld [vmem:[#allocation5 + $0x1df0] sm:$0xff]
    %v1070 = vld [vmem:[#allocation5 + $0x1df8] sm:$0xff]
    %v1071 = vld [vmem:[#allocation5 + $0x1e00] sm:$0xff]
    %v1072 = vld [vmem:[#allocation5 + $0x1e08] sm:$0xff]
    %v1073 = vld [vmem:[#allocation5 + $0x1e10] sm:$0xff]
    %v1074 = vld [vmem:[#allocation5 + $0x1e18] sm:$0xff]
    %v1075 = vld [vmem:[#allocation5 + $0x1e20] sm:$0xff]
    %v1076 = vld [vmem:[#allocation5 + $0x1e28] sm:$0xff]
    %v1077 = vld [vmem:[#allocation5 + $0x1e30] sm:$0xff]
    %v1078 = vld [vmem:[#allocation5 + $0x1e38] sm:$0xff]
    %v1079 = vld [vmem:[#allocation5 + $0x1e40] sm:$0xff]
    %v1080 = vld [vmem:[#allocation5 + $0x1e48] sm:$0xff]
    %v1081 = vld [vmem:[#allocation5 + $0x1e50] sm:$0xff]
    %v1082 = vld [vmem:[#allocation5 + $0x1e58] sm:$0xff]
    %v1083 = vld [vmem:[#allocation5 + $0x1e60] sm:$0xff]
    %v1084 = vld [vmem:[#allocation5 + $0x1e68] sm:$0xff]
    %v1085 = vld [vmem:[#allocation5 + $0x1e70] sm:$0xff]
    %v1086 = vld [vmem:[#allocation5 + $0x1e78] sm:$0xff]
    %v1087 = vld [vmem:[#allocation5 + $0x1e80] sm:$0xff]
    %v1088 = vld [vmem:[#allocation5 + $0x1e88] sm:$0xff]
    %v1089 = vld [vmem:[#allocation5 + $0x1e90] sm:$0xff]
    %v1090 = vld [vmem:[#allocation5 + $0x1e98] sm:$0xff]
    %v1091 = vld [vmem:[#allocation5 + $0x1ea0] sm:$0xff]
    %v1092 = vld [vmem:[#allocation5 + $0x1ea8] sm:$0xff]
    %v1093 = vld [vmem:[#allocation5 + $0x1eb0] sm:$0xff]
    %v1094 = vld [vmem:[#allocation5 + $0x1eb8] sm:$0xff]
    %v1095 = vld [vmem:[#allocation5 + $0x1ec0] sm:$0xff]
    %v1096 = vld [vmem:[#allocation5 + $0x1ec8] sm:$0xff]
    %v1097 = vld [vmem:[#allocation5 + $0x1ed0] sm:$0xff]
    %v1098 = vld [vmem:[#allocation5 + $0x1ed8] sm:$0xff]
    %v1099 = vld [vmem:[#allocation5 + $0x1ee0] sm:$0xff]
    %v1100 = vld [vmem:[#allocation5 + $0x1ee8] sm:$0xff]
    %v1101 = vld [vmem:[#allocation5 + $0x1ef0] sm:$0xff]
    %v1102 = vld [vmem:[#allocation5 + $0x1ef8] sm:$0xff]
    %v1103 = vld [vmem:[#allocation5 + $0x1f00] sm:$0xff]
    %v1104 = vld [vmem:[#allocation5 + $0x1f08] sm:$0xff]
    %v1105 = vld [vmem:[#allocation5 + $0x1f10] sm:$0xff]
    %v1106 = vld [vmem:[#allocation5 + $0x1f18] sm:$0xff]
    %v1107 = vld [vmem:[#allocation5 + $0x1f20] sm:$0xff]
    %v1108 = vld [vmem:[#allocation5 + $0x1f28] sm:$0xff]
    %v1109 = vld [vmem:[#allocation5 + $0x1f30] sm:$0xff]
    %v1110 = vld [vmem:[#allocation5 + $0x1f38] sm:$0xff]
    %v1111 = vld [vmem:[#allocation5 + $0x1f40] sm:$0xff]
    %v1112 = vld [vmem:[#allocation5 + $0x1f48] sm:$0xff]
    %v1113 = vld [vmem:[#allocation5 + $0x1f50] sm:$0xff]
    %v1114 = vld [vmem:[#allocation5 + $0x1f58] sm:$0xff]
    %v1115 = vld [vmem:[#allocation5 + $0x1f60] sm:$0xff]
    %v1116 = vld [vmem:[#allocation5 + $0x1f68] sm:$0xff]
    %v1117 = vld [vmem:[#allocation5 + $0x1f70] sm:$0xff]
    %v1118 = vld [vmem:[#allocation5 + $0x1f78] sm:$0xff]
    %v1119 = vld [vmem:[#allocation5 + $0x1f80] sm:$0xff]
    %v1120 = vld [vmem:[#allocation5 + $0x1f88] sm:$0xff]
    %v1121 = vld [vmem:[#allocation5 + $0x1f90] sm:$0xff]
    %v1122 = vld [vmem:[#allocation5 + $0x1f98] sm:$0xff]
    %v1123 = vld [vmem:[#allocation5 + $0x1fa0] sm:$0xff]
    %v1124 = vld [vmem:[#allocation5 + $0x1fa8] sm:$0xff]
    %v1125 = vld [vmem:[#allocation5 + $0x1fb0] sm:$0xff]
    %v1126 = vld [vmem:[#allocation5 + $0x1fb8] sm:$0xff]
    %v1127 = vld [vmem:[#allocation5 + $0x1fc0] sm:$0xff]
    %v1128 = vld [vmem:[#allocation5 + $0x1fc8] sm:$0xff]
    %v1129 = vld [vmem:[#allocation5 + $0x1fd0] sm:$0xff]
    %v1130 = vld [vmem:[#allocation5 + $0x1fd8] sm:$0xff]
    %v1131 = vld [vmem:[#allocation5 + $0x1fe0] sm:$0xff]
    %v1132 = vld [vmem:[#allocation5 + $0x1fe8] sm:$0xff]
    %v1133 = vld [vmem:[#allocation5 + $0x1ff0] sm:$0xff]
    %v1134 = vld [vmem:[#allocation5 + $0x1ff8] sm:$0xff]
    %v1135 = vld [vmem:[#allocation7] sm:$0xff]
    %v1137 = vperm.slane %v1135, 0
    %v1138 = vperm.slane %v1135, 1
    %v1139 = vperm.slane %v1135, 2
    %v1140 = vperm.slane %v1135, 3
    %v1141 = vperm.slane %v1135, 4
    %v1142 = vperm.slane %v1135, 5
    %v1143 = vperm.slane %v1135, 6
    %v1144 = vperm.slane %v1135, 7
    %v1169 = vunpack.c.l.b16 %v95
    %v1170 = vunpack.c.h.b16 %v95
    %v1171 = vunpack.c.l.b16 %v96
    %v1172 = vunpack.c.h.b16 %v96
    %v1173 = vunpack.c.l.b16 %v97
    %v1174 = vunpack.c.h.b16 %v97
    %v1175 = vunpack.c.l.b16 %v98
    %v1176 = vunpack.c.h.b16 %v98
    %v1177 = vunpack.c.l.b16 %v99
    %v1178 = vunpack.c.h.b16 %v99
    %v1179 = vunpack.c.l.b16 %v100
    %v1180 = vunpack.c.h.b16 %v100
    %v1181 = vunpack.c.l.b16 %v101
    %v1182 = vunpack.c.h.b16 %v101
    %v1183 = vunpack.c.l.b16 %v102
    %v1184 = vunpack.c.h.b16 %v102
    %v1185 = vunpack.c.l.b16 %v103
    %v1186 = vunpack.c.h.b16 %v103
    %v1187 = vunpack.c.l.b16 %v104
    %v1188 = vunpack.c.h.b16 %v104
    %v1189 = vunpack.c.l.b16 %v105
    %v1190 = vunpack.c.h.b16 %v105
    %v1191 = vunpack.c.l.b16 %v106
    %v1192 = vunpack.c.h.b16 %v106
    %v1193 = vunpack.c.l.b16 %v107
    %v1194 = vunpack.c.h.b16 %v107
    %v1195 = vunpack.c.l.b16 %v108
    %v1196 = vunpack.c.h.b16 %v108
    %v1197 = vunpack.c.l.b16 %v109
    %v1198 = vunpack.c.h.b16 %v109
    %v1199 = vunpack.c.l.b16 %v110
    %v1200 = vunpack.c.h.b16 %v110
    %v1201 = vpack.c.b16 %v1185, %v1169
    %v1202 = vpack.c.b16 %v1186, %v1170
    %v1203 = vpack.c.b16 %v1187, %v1171
    %v1204 = vpack.c.b16 %v1188, %v1172
    %v1205 = vpack.c.b16 %v1189, %v1173
    %v1206 = vpack.c.b16 %v1190, %v1174
    %v1207 = vpack.c.b16 %v1191, %v1175
    %v1208 = vpack.c.b16 %v1192, %v1176
    %v1209 = vpack.c.b16 %v1193, %v1177
    %v1210 = vpack.c.b16 %v1194, %v1178
    %v1211 = vpack.c.b16 %v1195, %v1179
    %v1212 = vpack.c.b16 %v1196, %v1180
    %v1213 = vpack.c.b16 %v1197, %v1181
    %v1214 = vpack.c.b16 %v1198, %v1182
    %v1215 = vpack.c.b16 %v1199, %v1183
    %v1216 = vpack.c.b16 %v1200, %v1184
    %v2257 = vunpack.c.l.b16 %v111
    %v2258 = vunpack.c.h.b16 %v111
    %v2259 = vunpack.c.l.b16 %v112
    %v2260 = vunpack.c.h.b16 %v112
    %v2261 = vunpack.c.l.b16 %v113
    %v2262 = vunpack.c.h.b16 %v113
    %v2263 = vunpack.c.l.b16 %v114
    %v2264 = vunpack.c.h.b16 %v114
    %v2265 = vunpack.c.l.b16 %v115
    %v2266 = vunpack.c.h.b16 %v115
    %v2267 = vunpack.c.l.b16 %v116
    %v2268 = vunpack.c.h.b16 %v116
    %v2269 = vunpack.c.l.b16 %v117
    %v2270 = vunpack.c.h.b16 %v117
    %v2271 = vunpack.c.l.b16 %v118
    %v2272 = vunpack.c.h.b16 %v118
    %v2273 = vunpack.c.l.b16 %v119
    %v2274 = vunpack.c.h.b16 %v119
    %v2275 = vunpack.c.l.b16 %v120
    %v2276 = vunpack.c.h.b16 %v120
    %v2277 = vunpack.c.l.b16 %v121
    %v2278 = vunpack.c.h.b16 %v121
    %v2279 = vunpack.c.l.b16 %v122
    %v2280 = vunpack.c.h.b16 %v122
    %v2281 = vunpack.c.l.b16 %v123
    %v2282 = vunpack.c.h.b16 %v123
    %v2283 = vunpack.c.l.b16 %v124
    %v2284 = vunpack.c.h.b16 %v124
    %v2285 = vunpack.c.l.b16 %v125
    %v2286 = vunpack.c.h.b16 %v125
    %v2287 = vunpack.c.l.b16 %v126
    %v2288 = vunpack.c.h.b16 %v126
    %v2289 = vunpack.c.l.b16 %v127
    %v2290 = vunpack.c.h.b16 %v127
    %v2291 = vunpack.c.l.b16 %v128
    %v2292 = vunpack.c.h.b16 %v128
    %v2293 = vunpack.c.l.b16 %v129
    %v2294 = vunpack.c.h.b16 %v129
    %v2295 = vunpack.c.l.b16 %v130
    %v2296 = vunpack.c.h.b16 %v130
    %v2297 = vunpack.c.l.b16 %v131
    %v2298 = vunpack.c.h.b16 %v131
    %v2299 = vunpack.c.l.b16 %v132
    %v2300 = vunpack.c.h.b16 %v132
    %v2301 = vunpack.c.l.b16 %v133
    %v2302 = vunpack.c.h.b16 %v133
    %v2303 = vunpack.c.l.b16 %v134
    %v2304 = vunpack.c.h.b16 %v134
    %v2305 = vunpack.c.l.b16 %v135
    %v2306 = vunpack.c.h.b16 %v135
    %v2307 = vunpack.c.l.b16 %v136
    %v2308 = vunpack.c.h.b16 %v136
    %v2309 = vunpack.c.l.b16 %v137
    %v2310 = vunpack.c.h.b16 %v137
    %v2311 = vunpack.c.l.b16 %v138
    %v2312 = vunpack.c.h.b16 %v138
    %v2313 = vunpack.c.l.b16 %v139
    %v2314 = vunpack.c.h.b16 %v139
    %v2315 = vunpack.c.l.b16 %v140
    %v2316 = vunpack.c.h.b16 %v140
    %v2317 = vunpack.c.l.b16 %v141
    %v2318 = vunpack.c.h.b16 %v141
    %v2319 = vunpack.c.l.b16 %v142
    %v2320 = vunpack.c.h.b16 %v142
    %v2321 = vunpack.c.l.b16 %v143
    %v2322 = vunpack.c.h.b16 %v143
    %v2323 = vunpack.c.l.b16 %v144
    %v2324 = vunpack.c.h.b16 %v144
    %v2325 = vunpack.c.l.b16 %v145
    %v2326 = vunpack.c.h.b16 %v145
    %v2327 = vunpack.c.l.b16 %v146
    %v2328 = vunpack.c.h.b16 %v146
    %v2329 = vunpack.c.l.b16 %v147
    %v2330 = vunpack.c.h.b16 %v147
    %v2331 = vunpack.c.l.b16 %v148
    %v2332 = vunpack.c.h.b16 %v148
    %v2333 = vunpack.c.l.b16 %v149
    %v2334 = vunpack.c.h.b16 %v149
    %v2335 = vunpack.c.l.b16 %v150
    %v2336 = vunpack.c.h.b16 %v150
    %v2337 = vunpack.c.l.b16 %v151
    %v2338 = vunpack.c.h.b16 %v151
    %v2339 = vunpack.c.l.b16 %v152
    %v2340 = vunpack.c.h.b16 %v152
    %v2341 = vunpack.c.l.b16 %v153
    %v2342 = vunpack.c.h.b16 %v153
    %v2343 = vunpack.c.l.b16 %v154
    %v2344 = vunpack.c.h.b16 %v154
    %v2345 = vunpack.c.l.b16 %v155
    %v2346 = vunpack.c.h.b16 %v155
    %v2347 = vunpack.c.l.b16 %v156
    %v2348 = vunpack.c.h.b16 %v156
    %v2349 = vunpack.c.l.b16 %v157
    %v2350 = vunpack.c.h.b16 %v157
    %v2351 = vunpack.c.l.b16 %v158
    %v2352 = vunpack.c.h.b16 %v158
    %v2353 = vunpack.c.l.b16 %v159
    %v2354 = vunpack.c.h.b16 %v159
    %v2355 = vunpack.c.l.b16 %v160
    %v2356 = vunpack.c.h.b16 %v160
    %v2357 = vunpack.c.l.b16 %v161
    %v2358 = vunpack.c.h.b16 %v161
    %v2359 = vunpack.c.l.b16 %v162
    %v2360 = vunpack.c.h.b16 %v162
    %v2361 = vunpack.c.l.b16 %v163
    %v2362 = vunpack.c.h.b16 %v163
    %v2363 = vunpack.c.l.b16 %v164
    %v2364 = vunpack.c.h.b16 %v164
    %v2365 = vunpack.c.l.b16 %v165
    %v2366 = vunpack.c.h.b16 %v165
    %v2367 = vunpack.c.l.b16 %v166
    %v2368 = vunpack.c.h.b16 %v166
    %v2369 = vunpack.c.l.b16 %v167
    %v2370 = vunpack.c.h.b16 %v167
    %v2371 = vunpack.c.l.b16 %v168
    %v2372 = vunpack.c.h.b16 %v168
    %v2373 = vunpack.c.l.b16 %v169
    %v2374 = vunpack.c.h.b16 %v169
    %v2375 = vunpack.c.l.b16 %v170
    %v2376 = vunpack.c.h.b16 %v170
    %v2377 = vunpack.c.l.b16 %v171
    %v2378 = vunpack.c.h.b16 %v171
    %v2379 = vunpack.c.l.b16 %v172
    %v2380 = vunpack.c.h.b16 %v172
    %v2381 = vunpack.c.l.b16 %v173
    %v2382 = vunpack.c.h.b16 %v173
    %v2383 = vunpack.c.l.b16 %v174
    %v2384 = vunpack.c.h.b16 %v174
    %v2385 = vunpack.c.l.b16 %v175
    %v2386 = vunpack.c.h.b16 %v175
    %v2387 = vunpack.c.l.b16 %v176
    %v2388 = vunpack.c.h.b16 %v176
    %v2389 = vunpack.c.l.b16 %v177
    %v2390 = vunpack.c.h.b16 %v177
    %v2391 = vunpack.c.l.b16 %v178
    %v2392 = vunpack.c.h.b16 %v178
    %v2393 = vunpack.c.l.b16 %v179
    %v2394 = vunpack.c.h.b16 %v179
    %v2395 = vunpack.c.l.b16 %v180
    %v2396 = vunpack.c.h.b16 %v180
    %v2397 = vunpack.c.l.b16 %v181
    %v2398 = vunpack.c.h.b16 %v181
    %v2399 = vunpack.c.l.b16 %v182
    %v2400 = vunpack.c.h.b16 %v182
    %v2401 = vunpack.c.l.b16 %v183
    %v2402 = vunpack.c.h.b16 %v183
    %v2403 = vunpack.c.l.b16 %v184
    %v2404 = vunpack.c.h.b16 %v184
    %v2405 = vunpack.c.l.b16 %v185
    %v2406 = vunpack.c.h.b16 %v185
    %v2407 = vunpack.c.l.b16 %v186
    %v2408 = vunpack.c.h.b16 %v186
    %v2409 = vunpack.c.l.b16 %v187
    %v2410 = vunpack.c.h.b16 %v187
    %v2411 = vunpack.c.l.b16 %v188
    %v2412 = vunpack.c.h.b16 %v188
    %v2413 = vunpack.c.l.b16 %v189
    %v2414 = vunpack.c.h.b16 %v189
    %v2415 = vunpack.c.l.b16 %v190
    %v2416 = vunpack.c.h.b16 %v190
    %v2417 = vunpack.c.l.b16 %v191
    %v2418 = vunpack.c.h.b16 %v191
    %v2419 = vunpack.c.l.b16 %v192
    %v2420 = vunpack.c.h.b16 %v192
    %v2421 = vunpack.c.l.b16 %v193
    %v2422 = vunpack.c.h.b16 %v193
    %v2423 = vunpack.c.l.b16 %v194
    %v2424 = vunpack.c.h.b16 %v194
    %v2425 = vunpack.c.l.b16 %v195
    %v2426 = vunpack.c.h.b16 %v195
    %v2427 = vunpack.c.l.b16 %v196
    %v2428 = vunpack.c.h.b16 %v196
    %v2429 = vunpack.c.l.b16 %v197
    %v2430 = vunpack.c.h.b16 %v197
    %v2431 = vunpack.c.l.b16 %v198
    %v2432 = vunpack.c.h.b16 %v198
    %v2433 = vunpack.c.l.b16 %v199
    %v2434 = vunpack.c.h.b16 %v199
    %v2435 = vunpack.c.l.b16 %v200
    %v2436 = vunpack.c.h.b16 %v200
    %v2437 = vunpack.c.l.b16 %v201
    %v2438 = vunpack.c.h.b16 %v201
    %v2439 = vunpack.c.l.b16 %v202
    %v2440 = vunpack.c.h.b16 %v202
    %v2441 = vunpack.c.l.b16 %v203
    %v2442 = vunpack.c.h.b16 %v203
    %v2443 = vunpack.c.l.b16 %v204
    %v2444 = vunpack.c.h.b16 %v204
    %v2445 = vunpack.c.l.b16 %v205
    %v2446 = vunpack.c.h.b16 %v205
    %v2447 = vunpack.c.l.b16 %v206
    %v2448 = vunpack.c.h.b16 %v206
    %v2449 = vunpack.c.l.b16 %v207
    %v2450 = vunpack.c.h.b16 %v207
    %v2451 = vunpack.c.l.b16 %v208
    %v2452 = vunpack.c.h.b16 %v208
    %v2453 = vunpack.c.l.b16 %v209
    %v2454 = vunpack.c.h.b16 %v209
    %v2455 = vunpack.c.l.b16 %v210
    %v2456 = vunpack.c.h.b16 %v210
    %v2457 = vunpack.c.l.b16 %v211
    %v2458 = vunpack.c.h.b16 %v211
    %v2459 = vunpack.c.l.b16 %v212
    %v2460 = vunpack.c.h.b16 %v212
    %v2461 = vunpack.c.l.b16 %v213
    %v2462 = vunpack.c.h.b16 %v213
    %v2463 = vunpack.c.l.b16 %v214
    %v2464 = vunpack.c.h.b16 %v214
    %v2465 = vunpack.c.l.b16 %v215
    %v2466 = vunpack.c.h.b16 %v215
    %v2467 = vunpack.c.l.b16 %v216
    %v2468 = vunpack.c.h.b16 %v216
    %v2469 = vunpack.c.l.b16 %v217
    %v2470 = vunpack.c.h.b16 %v217
    %v2471 = vunpack.c.l.b16 %v218
    %v2472 = vunpack.c.h.b16 %v218
    %v2473 = vunpack.c.l.b16 %v219
    %v2474 = vunpack.c.h.b16 %v219
    %v2475 = vunpack.c.l.b16 %v220
    %v2476 = vunpack.c.h.b16 %v220
    %v2477 = vunpack.c.l.b16 %v221
    %v2478 = vunpack.c.h.b16 %v221
    %v2479 = vunpack.c.l.b16 %v222
    %v2480 = vunpack.c.h.b16 %v222
    %v2481 = vunpack.c.l.b16 %v223
    %v2482 = vunpack.c.h.b16 %v223
    %v2483 = vunpack.c.l.b16 %v224
    %v2484 = vunpack.c.h.b16 %v224
    %v2485 = vunpack.c.l.b16 %v225
    %v2486 = vunpack.c.h.b16 %v225
    %v2487 = vunpack.c.l.b16 %v226
    %v2488 = vunpack.c.h.b16 %v226
    %v2489 = vunpack.c.l.b16 %v227
    %v2490 = vunpack.c.h.b16 %v227
    %v2491 = vunpack.c.l.b16 %v228
    %v2492 = vunpack.c.h.b16 %v228
    %v2493 = vunpack.c.l.b16 %v229
    %v2494 = vunpack.c.h.b16 %v229
    %v2495 = vunpack.c.l.b16 %v230
    %v2496 = vunpack.c.h.b16 %v230
    %v2497 = vunpack.c.l.b16 %v231
    %v2498 = vunpack.c.h.b16 %v231
    %v2499 = vunpack.c.l.b16 %v232
    %v2500 = vunpack.c.h.b16 %v232
    %v2501 = vunpack.c.l.b16 %v233
    %v2502 = vunpack.c.h.b16 %v233
    %v2503 = vunpack.c.l.b16 %v234
    %v2504 = vunpack.c.h.b16 %v234
    %v2505 = vunpack.c.l.b16 %v235
    %v2506 = vunpack.c.h.b16 %v235
    %v2507 = vunpack.c.l.b16 %v236
    %v2508 = vunpack.c.h.b16 %v236
    %v2509 = vunpack.c.l.b16 %v237
    %v2510 = vunpack.c.h.b16 %v237
    %v2511 = vunpack.c.l.b16 %v238
    %v2512 = vunpack.c.h.b16 %v238
    %v2513 = vunpack.c.l.b16 %v239
    %v2514 = vunpack.c.h.b16 %v239
    %v2515 = vunpack.c.l.b16 %v240
    %v2516 = vunpack.c.h.b16 %v240
    %v2517 = vunpack.c.l.b16 %v241
    %v2518 = vunpack.c.h.b16 %v241
    %v2519 = vunpack.c.l.b16 %v242
    %v2520 = vunpack.c.h.b16 %v242
    %v2521 = vunpack.c.l.b16 %v243
    %v2522 = vunpack.c.h.b16 %v243
    %v2523 = vunpack.c.l.b16 %v244
    %v2524 = vunpack.c.h.b16 %v244
    %v2525 = vunpack.c.l.b16 %v245
    %v2526 = vunpack.c.h.b16 %v245
    %v2527 = vunpack.c.l.b16 %v246
    %v2528 = vunpack.c.h.b16 %v246
    %v2529 = vunpack.c.l.b16 %v247
    %v2530 = vunpack.c.h.b16 %v247
    %v2531 = vunpack.c.l.b16 %v248
    %v2532 = vunpack.c.h.b16 %v248
    %v2533 = vunpack.c.l.b16 %v249
    %v2534 = vunpack.c.h.b16 %v249
    %v2535 = vunpack.c.l.b16 %v250
    %v2536 = vunpack.c.h.b16 %v250
    %v2537 = vunpack.c.l.b16 %v251
    %v2538 = vunpack.c.h.b16 %v251
    %v2539 = vunpack.c.l.b16 %v252
    %v2540 = vunpack.c.h.b16 %v252
    %v2541 = vunpack.c.l.b16 %v253
    %v2542 = vunpack.c.h.b16 %v253
    %v2543 = vunpack.c.l.b16 %v254
    %v2544 = vunpack.c.h.b16 %v254
    %v2545 = vunpack.c.l.b16 %v255
    %v2546 = vunpack.c.h.b16 %v255
    %v2547 = vunpack.c.l.b16 %v256
    %v2548 = vunpack.c.h.b16 %v256
    %v2549 = vunpack.c.l.b16 %v257
    %v2550 = vunpack.c.h.b16 %v257
    %v2551 = vunpack.c.l.b16 %v258
    %v2552 = vunpack.c.h.b16 %v258
    %v2553 = vunpack.c.l.b16 %v259
    %v2554 = vunpack.c.h.b16 %v259
    %v2555 = vunpack.c.l.b16 %v260
    %v2556 = vunpack.c.h.b16 %v260
    %v2557 = vunpack.c.l.b16 %v261
    %v2558 = vunpack.c.h.b16 %v261
    %v2559 = vunpack.c.l.b16 %v262
    %v2560 = vunpack.c.h.b16 %v262
    %v2561 = vunpack.c.l.b16 %v263
    %v2562 = vunpack.c.h.b16 %v263
    %v2563 = vunpack.c.l.b16 %v264
    %v2564 = vunpack.c.h.b16 %v264
    %v2565 = vunpack.c.l.b16 %v265
    %v2566 = vunpack.c.h.b16 %v265
    %v2567 = vunpack.c.l.b16 %v266
    %v2568 = vunpack.c.h.b16 %v266
    %v2569 = vunpack.c.l.b16 %v267
    %v2570 = vunpack.c.h.b16 %v267
    %v2571 = vunpack.c.l.b16 %v268
    %v2572 = vunpack.c.h.b16 %v268
    %v2573 = vunpack.c.l.b16 %v269
    %v2574 = vunpack.c.h.b16 %v269
    %v2575 = vunpack.c.l.b16 %v270
    %v2576 = vunpack.c.h.b16 %v270
    %v2577 = vunpack.c.l.b16 %v271
    %v2578 = vunpack.c.h.b16 %v271
    %v2579 = vunpack.c.l.b16 %v272
    %v2580 = vunpack.c.h.b16 %v272
    %v2581 = vunpack.c.l.b16 %v273
    %v2582 = vunpack.c.h.b16 %v273
    %v2583 = vunpack.c.l.b16 %v274
    %v2584 = vunpack.c.h.b16 %v274
    %v2585 = vunpack.c.l.b16 %v275
    %v2586 = vunpack.c.h.b16 %v275
    %v2587 = vunpack.c.l.b16 %v276
    %v2588 = vunpack.c.h.b16 %v276
    %v2589 = vunpack.c.l.b16 %v277
    %v2590 = vunpack.c.h.b16 %v277
    %v2591 = vunpack.c.l.b16 %v278
    %v2592 = vunpack.c.h.b16 %v278
    %v2593 = vunpack.c.l.b16 %v279
    %v2594 = vunpack.c.h.b16 %v279
    %v2595 = vunpack.c.l.b16 %v280
    %v2596 = vunpack.c.h.b16 %v280
    %v2597 = vunpack.c.l.b16 %v281
    %v2598 = vunpack.c.h.b16 %v281
    %v2599 = vunpack.c.l.b16 %v282
    %v2600 = vunpack.c.h.b16 %v282
    %v2601 = vunpack.c.l.b16 %v283
    %v2602 = vunpack.c.h.b16 %v283
    %v2603 = vunpack.c.l.b16 %v284
    %v2604 = vunpack.c.h.b16 %v284
    %v2605 = vunpack.c.l.b16 %v285
    %v2606 = vunpack.c.h.b16 %v285
    %v2607 = vunpack.c.l.b16 %v286
    %v2608 = vunpack.c.h.b16 %v286
    %v2609 = vunpack.c.l.b16 %v287
    %v2610 = vunpack.c.h.b16 %v287
    %v2611 = vunpack.c.l.b16 %v288
    %v2612 = vunpack.c.h.b16 %v288
    %v2613 = vunpack.c.l.b16 %v289
    %v2614 = vunpack.c.h.b16 %v289
    %v2615 = vunpack.c.l.b16 %v290
    %v2616 = vunpack.c.h.b16 %v290
    %v2617 = vunpack.c.l.b16 %v291
    %v2618 = vunpack.c.h.b16 %v291
    %v2619 = vunpack.c.l.b16 %v292
    %v2620 = vunpack.c.h.b16 %v292
    %v2621 = vunpack.c.l.b16 %v293
    %v2622 = vunpack.c.h.b16 %v293
    %v2623 = vunpack.c.l.b16 %v294
    %v2624 = vunpack.c.h.b16 %v294
    %v2625 = vunpack.c.l.b16 %v295
    %v2626 = vunpack.c.h.b16 %v295
    %v2627 = vunpack.c.l.b16 %v296
    %v2628 = vunpack.c.h.b16 %v296
    %v2629 = vunpack.c.l.b16 %v297
    %v2630 = vunpack.c.h.b16 %v297
    %v2631 = vunpack.c.l.b16 %v298
    %v2632 = vunpack.c.h.b16 %v298
    %v2633 = vunpack.c.l.b16 %v299
    %v2634 = vunpack.c.h.b16 %v299
    %v2635 = vunpack.c.l.b16 %v300
    %v2636 = vunpack.c.h.b16 %v300
    %v2637 = vunpack.c.l.b16 %v301
    %v2638 = vunpack.c.h.b16 %v301
    %v2639 = vunpack.c.l.b16 %v302
    %v2640 = vunpack.c.h.b16 %v302
    %v2641 = vunpack.c.l.b16 %v303
    %v2642 = vunpack.c.h.b16 %v303
    %v2643 = vunpack.c.l.b16 %v304
    %v2644 = vunpack.c.h.b16 %v304
    %v2645 = vunpack.c.l.b16 %v305
    %v2646 = vunpack.c.h.b16 %v305
    %v2647 = vunpack.c.l.b16 %v306
    %v2648 = vunpack.c.h.b16 %v306
    %v2649 = vunpack.c.l.b16 %v307
    %v2650 = vunpack.c.h.b16 %v307
    %v2651 = vunpack.c.l.b16 %v308
    %v2652 = vunpack.c.h.b16 %v308
    %v2653 = vunpack.c.l.b16 %v309
    %v2654 = vunpack.c.h.b16 %v309
    %v2655 = vunpack.c.l.b16 %v310
    %v2656 = vunpack.c.h.b16 %v310
    %v2657 = vunpack.c.l.b16 %v311
    %v2658 = vunpack.c.h.b16 %v311
    %v2659 = vunpack.c.l.b16 %v312
    %v2660 = vunpack.c.h.b16 %v312
    %v2661 = vunpack.c.l.b16 %v313
    %v2662 = vunpack.c.h.b16 %v313
    %v2663 = vunpack.c.l.b16 %v314
    %v2664 = vunpack.c.h.b16 %v314
    %v2665 = vunpack.c.l.b16 %v315
    %v2666 = vunpack.c.h.b16 %v315
    %v2667 = vunpack.c.l.b16 %v316
    %v2668 = vunpack.c.h.b16 %v316
    %v2669 = vunpack.c.l.b16 %v317
    %v2670 = vunpack.c.h.b16 %v317
    %v2671 = vunpack.c.l.b16 %v318
    %v2672 = vunpack.c.h.b16 %v318
    %v2673 = vunpack.c.l.b16 %v319
    %v2674 = vunpack.c.h.b16 %v319
    %v2675 = vunpack.c.l.b16 %v320
    %v2676 = vunpack.c.h.b16 %v320
    %v2677 = vunpack.c.l.b16 %v321
    %v2678 = vunpack.c.h.b16 %v321
    %v2679 = vunpack.c.l.b16 %v322
    %v2680 = vunpack.c.h.b16 %v322
    %v2681 = vunpack.c.l.b16 %v323
    %v2682 = vunpack.c.h.b16 %v323
    %v2683 = vunpack.c.l.b16 %v324
    %v2684 = vunpack.c.h.b16 %v324
    %v2685 = vunpack.c.l.b16 %v325
    %v2686 = vunpack.c.h.b16 %v325
    %v2687 = vunpack.c.l.b16 %v326
    %v2688 = vunpack.c.h.b16 %v326
    %v2689 = vunpack.c.l.b16 %v327
    %v2690 = vunpack.c.h.b16 %v327
    %v2691 = vunpack.c.l.b16 %v328
    %v2692 = vunpack.c.h.b16 %v328
    %v2693 = vunpack.c.l.b16 %v329
    %v2694 = vunpack.c.h.b16 %v329
    %v2695 = vunpack.c.l.b16 %v330
    %v2696 = vunpack.c.h.b16 %v330
    %v2697 = vunpack.c.l.b16 %v331
    %v2698 = vunpack.c.h.b16 %v331
    %v2699 = vunpack.c.l.b16 %v332
    %v2700 = vunpack.c.h.b16 %v332
    %v2701 = vunpack.c.l.b16 %v333
    %v2702 = vunpack.c.h.b16 %v333
    %v2703 = vunpack.c.l.b16 %v334
    %v2704 = vunpack.c.h.b16 %v334
    %v2705 = vunpack.c.l.b16 %v335
    %v2706 = vunpack.c.h.b16 %v335
    %v2707 = vunpack.c.l.b16 %v336
    %v2708 = vunpack.c.h.b16 %v336
    %v2709 = vunpack.c.l.b16 %v337
    %v2710 = vunpack.c.h.b16 %v337
    %v2711 = vunpack.c.l.b16 %v338
    %v2712 = vunpack.c.h.b16 %v338
    %v2713 = vunpack.c.l.b16 %v339
    %v2714 = vunpack.c.h.b16 %v339
    %v2715 = vunpack.c.l.b16 %v340
    %v2716 = vunpack.c.h.b16 %v340
    %v2717 = vunpack.c.l.b16 %v341
    %v2718 = vunpack.c.h.b16 %v341
    %v2719 = vunpack.c.l.b16 %v342
    %v2720 = vunpack.c.h.b16 %v342
    %v2721 = vunpack.c.l.b16 %v343
    %v2722 = vunpack.c.h.b16 %v343
    %v2723 = vunpack.c.l.b16 %v344
    %v2724 = vunpack.c.h.b16 %v344
    %v2725 = vunpack.c.l.b16 %v345
    %v2726 = vunpack.c.h.b16 %v345
    %v2727 = vunpack.c.l.b16 %v346
    %v2728 = vunpack.c.h.b16 %v346
    %v2729 = vunpack.c.l.b16 %v347
    %v2730 = vunpack.c.h.b16 %v347
    %v2731 = vunpack.c.l.b16 %v348
    %v2732 = vunpack.c.h.b16 %v348
    %v2733 = vunpack.c.l.b16 %v349
    %v2734 = vunpack.c.h.b16 %v349
    %v2735 = vunpack.c.l.b16 %v350
    %v2736 = vunpack.c.h.b16 %v350
    %v2737 = vunpack.c.l.b16 %v351
    %v2738 = vunpack.c.h.b16 %v351
    %v2739 = vunpack.c.l.b16 %v352
    %v2740 = vunpack.c.h.b16 %v352
    %v2741 = vunpack.c.l.b16 %v353
    %v2742 = vunpack.c.h.b16 %v353
    %v2743 = vunpack.c.l.b16 %v354
    %v2744 = vunpack.c.h.b16 %v354
    %v2745 = vunpack.c.l.b16 %v355
    %v2746 = vunpack.c.h.b16 %v355
    %v2747 = vunpack.c.l.b16 %v356
    %v2748 = vunpack.c.h.b16 %v356
    %v2749 = vunpack.c.l.b16 %v357
    %v2750 = vunpack.c.h.b16 %v357
    %v2751 = vunpack.c.l.b16 %v358
    %v2752 = vunpack.c.h.b16 %v358
    %v2753 = vunpack.c.l.b16 %v359
    %v2754 = vunpack.c.h.b16 %v359
    %v2755 = vunpack.c.l.b16 %v360
    %v2756 = vunpack.c.h.b16 %v360
    %v2757 = vunpack.c.l.b16 %v361
    %v2758 = vunpack.c.h.b16 %v361
    %v2759 = vunpack.c.l.b16 %v362
    %v2760 = vunpack.c.h.b16 %v362
    %v2761 = vunpack.c.l.b16 %v363
    %v2762 = vunpack.c.h.b16 %v363
    %v2763 = vunpack.c.l.b16 %v364
    %v2764 = vunpack.c.h.b16 %v364
    %v2765 = vunpack.c.l.b16 %v365
    %v2766 = vunpack.c.h.b16 %v365
    %v2767 = vunpack.c.l.b16 %v366
    %v2768 = vunpack.c.h.b16 %v366
    %v2769 = vunpack.c.l.b16 %v367
    %v2770 = vunpack.c.h.b16 %v367
    %v2771 = vunpack.c.l.b16 %v368
    %v2772 = vunpack.c.h.b16 %v368
    %v2773 = vunpack.c.l.b16 %v369
    %v2774 = vunpack.c.h.b16 %v369
    %v2775 = vunpack.c.l.b16 %v370
    %v2776 = vunpack.c.h.b16 %v370
    %v2777 = vunpack.c.l.b16 %v371
    %v2778 = vunpack.c.h.b16 %v371
    %v2779 = vunpack.c.l.b16 %v372
    %v2780 = vunpack.c.h.b16 %v372
    %v2781 = vunpack.c.l.b16 %v373
    %v2782 = vunpack.c.h.b16 %v373
    %v2783 = vunpack.c.l.b16 %v374
    %v2784 = vunpack.c.h.b16 %v374
    %v2785 = vunpack.c.l.b16 %v375
    %v2786 = vunpack.c.h.b16 %v375
    %v2787 = vunpack.c.l.b16 %v376
    %v2788 = vunpack.c.h.b16 %v376
    %v2789 = vunpack.c.l.b16 %v377
    %v2790 = vunpack.c.h.b16 %v377
    %v2791 = vunpack.c.l.b16 %v378
    %v2792 = vunpack.c.h.b16 %v378
    %v2793 = vunpack.c.l.b16 %v379
    %v2794 = vunpack.c.h.b16 %v379
    %v2795 = vunpack.c.l.b16 %v380
    %v2796 = vunpack.c.h.b16 %v380
    %v2797 = vunpack.c.l.b16 %v381
    %v2798 = vunpack.c.h.b16 %v381
    %v2799 = vunpack.c.l.b16 %v382
    %v2800 = vunpack.c.h.b16 %v382
    %v2801 = vunpack.c.l.b16 %v383
    %v2802 = vunpack.c.h.b16 %v383
    %v2803 = vunpack.c.l.b16 %v384
    %v2804 = vunpack.c.h.b16 %v384
    %v2805 = vunpack.c.l.b16 %v385
    %v2806 = vunpack.c.h.b16 %v385
    %v2807 = vunpack.c.l.b16 %v386
    %v2808 = vunpack.c.h.b16 %v386
    %v2809 = vunpack.c.l.b16 %v387
    %v2810 = vunpack.c.h.b16 %v387
    %v2811 = vunpack.c.l.b16 %v388
    %v2812 = vunpack.c.h.b16 %v388
    %v2813 = vunpack.c.l.b16 %v389
    %v2814 = vunpack.c.h.b16 %v389
    %v2815 = vunpack.c.l.b16 %v390
    %v2816 = vunpack.c.h.b16 %v390
    %v2817 = vunpack.c.l.b16 %v391
    %v2818 = vunpack.c.h.b16 %v391
    %v2819 = vunpack.c.l.b16 %v392
    %v2820 = vunpack.c.h.b16 %v392
    %v2821 = vunpack.c.l.b16 %v393
    %v2822 = vunpack.c.h.b16 %v393
    %v2823 = vunpack.c.l.b16 %v394
    %v2824 = vunpack.c.h.b16 %v394
    %v2825 = vunpack.c.l.b16 %v395
    %v2826 = vunpack.c.h.b16 %v395
    %v2827 = vunpack.c.l.b16 %v396
    %v2828 = vunpack.c.h.b16 %v396
    %v2829 = vunpack.c.l.b16 %v397
    %v2830 = vunpack.c.h.b16 %v397
    %v2831 = vunpack.c.l.b16 %v398
    %v2832 = vunpack.c.h.b16 %v398
    %v2833 = vunpack.c.l.b16 %v399
    %v2834 = vunpack.c.h.b16 %v399
    %v2835 = vunpack.c.l.b16 %v400
    %v2836 = vunpack.c.h.b16 %v400
    %v2837 = vunpack.c.l.b16 %v401
    %v2838 = vunpack.c.h.b16 %v401
    %v2839 = vunpack.c.l.b16 %v402
    %v2840 = vunpack.c.h.b16 %v402
    %v2841 = vunpack.c.l.b16 %v403
    %v2842 = vunpack.c.h.b16 %v403
    %v2843 = vunpack.c.l.b16 %v404
    %v2844 = vunpack.c.h.b16 %v404
    %v2845 = vunpack.c.l.b16 %v405
    %v2846 = vunpack.c.h.b16 %v405
    %v2847 = vunpack.c.l.b16 %v406
    %v2848 = vunpack.c.h.b16 %v406
    %v2849 = vunpack.c.l.b16 %v407
    %v2850 = vunpack.c.h.b16 %v407
    %v2851 = vunpack.c.l.b16 %v408
    %v2852 = vunpack.c.h.b16 %v408
    %v2853 = vunpack.c.l.b16 %v409
    %v2854 = vunpack.c.h.b16 %v409
    %v2855 = vunpack.c.l.b16 %v410
    %v2856 = vunpack.c.h.b16 %v410
    %v2857 = vunpack.c.l.b16 %v411
    %v2858 = vunpack.c.h.b16 %v411
    %v2859 = vunpack.c.l.b16 %v412
    %v2860 = vunpack.c.h.b16 %v412
    %v2861 = vunpack.c.l.b16 %v413
    %v2862 = vunpack.c.h.b16 %v413
    %v2863 = vunpack.c.l.b16 %v414
    %v2864 = vunpack.c.h.b16 %v414
    %v2865 = vunpack.c.l.b16 %v415
    %v2866 = vunpack.c.h.b16 %v415
    %v2867 = vunpack.c.l.b16 %v416
    %v2868 = vunpack.c.h.b16 %v416
    %v2869 = vunpack.c.l.b16 %v417
    %v2870 = vunpack.c.h.b16 %v417
    %v2871 = vunpack.c.l.b16 %v418
    %v2872 = vunpack.c.h.b16 %v418
    %v2873 = vunpack.c.l.b16 %v419
    %v2874 = vunpack.c.h.b16 %v419
    %v2875 = vunpack.c.l.b16 %v420
    %v2876 = vunpack.c.h.b16 %v420
    %v2877 = vunpack.c.l.b16 %v421
    %v2878 = vunpack.c.h.b16 %v421
    %v2879 = vunpack.c.l.b16 %v422
    %v2880 = vunpack.c.h.b16 %v422
    %v2881 = vunpack.c.l.b16 %v423
    %v2882 = vunpack.c.h.b16 %v423
    %v2883 = vunpack.c.l.b16 %v424
    %v2884 = vunpack.c.h.b16 %v424
    %v2885 = vunpack.c.l.b16 %v425
    %v2886 = vunpack.c.h.b16 %v425
    %v2887 = vunpack.c.l.b16 %v426
    %v2888 = vunpack.c.h.b16 %v426
    %v2889 = vunpack.c.l.b16 %v427
    %v2890 = vunpack.c.h.b16 %v427
    %v2891 = vunpack.c.l.b16 %v428
    %v2892 = vunpack.c.h.b16 %v428
    %v2893 = vunpack.c.l.b16 %v429
    %v2894 = vunpack.c.h.b16 %v429
    %v2895 = vunpack.c.l.b16 %v430
    %v2896 = vunpack.c.h.b16 %v430
    %v2897 = vunpack.c.l.b16 %v431
    %v2898 = vunpack.c.h.b16 %v431
    %v2899 = vunpack.c.l.b16 %v432
    %v2900 = vunpack.c.h.b16 %v432
    %v2901 = vunpack.c.l.b16 %v433
    %v2902 = vunpack.c.h.b16 %v433
    %v2903 = vunpack.c.l.b16 %v434
    %v2904 = vunpack.c.h.b16 %v434
    %v2905 = vunpack.c.l.b16 %v435
    %v2906 = vunpack.c.h.b16 %v435
    %v2907 = vunpack.c.l.b16 %v436
    %v2908 = vunpack.c.h.b16 %v436
    %v2909 = vunpack.c.l.b16 %v437
    %v2910 = vunpack.c.h.b16 %v437
    %v2911 = vunpack.c.l.b16 %v438
    %v2912 = vunpack.c.h.b16 %v438
    %v2913 = vunpack.c.l.b16 %v439
    %v2914 = vunpack.c.h.b16 %v439
    %v2915 = vunpack.c.l.b16 %v440
    %v2916 = vunpack.c.h.b16 %v440
    %v2917 = vunpack.c.l.b16 %v441
    %v2918 = vunpack.c.h.b16 %v441
    %v2919 = vunpack.c.l.b16 %v442
    %v2920 = vunpack.c.h.b16 %v442
    %v2921 = vunpack.c.l.b16 %v443
    %v2922 = vunpack.c.h.b16 %v443
    %v2923 = vunpack.c.l.b16 %v444
    %v2924 = vunpack.c.h.b16 %v444
    %v2925 = vunpack.c.l.b16 %v445
    %v2926 = vunpack.c.h.b16 %v445
    %v2927 = vunpack.c.l.b16 %v446
    %v2928 = vunpack.c.h.b16 %v446
    %v2929 = vunpack.c.l.b16 %v447
    %v2930 = vunpack.c.h.b16 %v447
    %v2931 = vunpack.c.l.b16 %v448
    %v2932 = vunpack.c.h.b16 %v448
    %v2933 = vunpack.c.l.b16 %v449
    %v2934 = vunpack.c.h.b16 %v449
    %v2935 = vunpack.c.l.b16 %v450
    %v2936 = vunpack.c.h.b16 %v450
    %v2937 = vunpack.c.l.b16 %v451
    %v2938 = vunpack.c.h.b16 %v451
    %v2939 = vunpack.c.l.b16 %v452
    %v2940 = vunpack.c.h.b16 %v452
    %v2941 = vunpack.c.l.b16 %v453
    %v2942 = vunpack.c.h.b16 %v453
    %v2943 = vunpack.c.l.b16 %v454
    %v2944 = vunpack.c.h.b16 %v454
    %v2945 = vunpack.c.l.b16 %v455
    %v2946 = vunpack.c.h.b16 %v455
    %v2947 = vunpack.c.l.b16 %v456
    %v2948 = vunpack.c.h.b16 %v456
    %v2949 = vunpack.c.l.b16 %v457
    %v2950 = vunpack.c.h.b16 %v457
    %v2951 = vunpack.c.l.b16 %v458
    %v2952 = vunpack.c.h.b16 %v458
    %v2953 = vunpack.c.l.b16 %v459
    %v2954 = vunpack.c.h.b16 %v459
    %v2955 = vunpack.c.l.b16 %v460
    %v2956 = vunpack.c.h.b16 %v460
    %v2957 = vunpack.c.l.b16 %v461
    %v2958 = vunpack.c.h.b16 %v461
    %v2959 = vunpack.c.l.b16 %v462
    %v2960 = vunpack.c.h.b16 %v462
    %v2961 = vunpack.c.l.b16 %v463
    %v2962 = vunpack.c.h.b16 %v463
    %v2963 = vunpack.c.l.b16 %v464
    %v2964 = vunpack.c.h.b16 %v464
    %v2965 = vunpack.c.l.b16 %v465
    %v2966 = vunpack.c.h.b16 %v465
    %v2967 = vunpack.c.l.b16 %v466
    %v2968 = vunpack.c.h.b16 %v466
    %v2969 = vunpack.c.l.b16 %v467
    %v2970 = vunpack.c.h.b16 %v467
    %v2971 = vunpack.c.l.b16 %v468
    %v2972 = vunpack.c.h.b16 %v468
    %v2973 = vunpack.c.l.b16 %v469
    %v2974 = vunpack.c.h.b16 %v469
    %v2975 = vunpack.c.l.b16 %v470
    %v2976 = vunpack.c.h.b16 %v470
    %v2977 = vunpack.c.l.b16 %v471
    %v2978 = vunpack.c.h.b16 %v471
    %v2979 = vunpack.c.l.b16 %v472
    %v2980 = vunpack.c.h.b16 %v472
    %v2981 = vunpack.c.l.b16 %v473
    %v2982 = vunpack.c.h.b16 %v473
    %v2983 = vunpack.c.l.b16 %v474
    %v2984 = vunpack.c.h.b16 %v474
    %v2985 = vunpack.c.l.b16 %v475
    %v2986 = vunpack.c.h.b16 %v475
    %v2987 = vunpack.c.l.b16 %v476
    %v2988 = vunpack.c.h.b16 %v476
    %v2989 = vunpack.c.l.b16 %v477
    %v2990 = vunpack.c.h.b16 %v477
    %v2991 = vunpack.c.l.b16 %v478
    %v2992 = vunpack.c.h.b16 %v478
    %v2993 = vunpack.c.l.b16 %v479
    %v2994 = vunpack.c.h.b16 %v479
    %v2995 = vunpack.c.l.b16 %v480
    %v2996 = vunpack.c.h.b16 %v480
    %v2997 = vunpack.c.l.b16 %v481
    %v2998 = vunpack.c.h.b16 %v481
    %v2999 = vunpack.c.l.b16 %v482
    %v3000 = vunpack.c.h.b16 %v482
    %v3001 = vunpack.c.l.b16 %v483
    %v3002 = vunpack.c.h.b16 %v483
    %v3003 = vunpack.c.l.b16 %v484
    %v3004 = vunpack.c.h.b16 %v484
    %v3005 = vunpack.c.l.b16 %v485
    %v3006 = vunpack.c.h.b16 %v485
    %v3007 = vunpack.c.l.b16 %v486
    %v3008 = vunpack.c.h.b16 %v486
    %v3009 = vunpack.c.l.b16 %v487
    %v3010 = vunpack.c.h.b16 %v487
    %v3011 = vunpack.c.l.b16 %v488
    %v3012 = vunpack.c.h.b16 %v488
    %v3013 = vunpack.c.l.b16 %v489
    %v3014 = vunpack.c.h.b16 %v489
    %v3015 = vunpack.c.l.b16 %v490
    %v3016 = vunpack.c.h.b16 %v490
    %v3017 = vunpack.c.l.b16 %v491
    %v3018 = vunpack.c.h.b16 %v491
    %v3019 = vunpack.c.l.b16 %v492
    %v3020 = vunpack.c.h.b16 %v492
    %v3021 = vunpack.c.l.b16 %v493
    %v3022 = vunpack.c.h.b16 %v493
    %v3023 = vunpack.c.l.b16 %v494
    %v3024 = vunpack.c.h.b16 %v494
    %v3025 = vunpack.c.l.b16 %v495
    %v3026 = vunpack.c.h.b16 %v495
    %v3027 = vunpack.c.l.b16 %v496
    %v3028 = vunpack.c.h.b16 %v496
    %v3029 = vunpack.c.l.b16 %v497
    %v3030 = vunpack.c.h.b16 %v497
    %v3031 = vunpack.c.l.b16 %v498
    %v3032 = vunpack.c.h.b16 %v498
    %v3033 = vunpack.c.l.b16 %v499
    %v3034 = vunpack.c.h.b16 %v499
    %v3035 = vunpack.c.l.b16 %v500
    %v3036 = vunpack.c.h.b16 %v500
    %v3037 = vunpack.c.l.b16 %v501
    %v3038 = vunpack.c.h.b16 %v501
    %v3039 = vunpack.c.l.b16 %v502
    %v3040 = vunpack.c.h.b16 %v502
    %v3041 = vunpack.c.l.b16 %v503
    %v3042 = vunpack.c.h.b16 %v503
    %v3043 = vunpack.c.l.b16 %v504
    %v3044 = vunpack.c.h.b16 %v504
    %v3045 = vunpack.c.l.b16 %v505
    %v3046 = vunpack.c.h.b16 %v505
    %v3047 = vunpack.c.l.b16 %v506
    %v3048 = vunpack.c.h.b16 %v506
    %v3049 = vunpack.c.l.b16 %v507
    %v3050 = vunpack.c.h.b16 %v507
    %v3051 = vunpack.c.l.b16 %v508
    %v3052 = vunpack.c.h.b16 %v508
    %v3053 = vunpack.c.l.b16 %v509
    %v3054 = vunpack.c.h.b16 %v509
    %v3055 = vunpack.c.l.b16 %v510
    %v3056 = vunpack.c.h.b16 %v510
    %v3057 = vunpack.c.l.b16 %v511
    %v3058 = vunpack.c.h.b16 %v511
    %v3059 = vunpack.c.l.b16 %v512
    %v3060 = vunpack.c.h.b16 %v512
    %v3061 = vunpack.c.l.b16 %v513
    %v3062 = vunpack.c.h.b16 %v513
    %v3063 = vunpack.c.l.b16 %v514
    %v3064 = vunpack.c.h.b16 %v514
    %v3065 = vunpack.c.l.b16 %v515
    %v3066 = vunpack.c.h.b16 %v515
    %v3067 = vunpack.c.l.b16 %v516
    %v3068 = vunpack.c.h.b16 %v516
    %v3069 = vunpack.c.l.b16 %v517
    %v3070 = vunpack.c.h.b16 %v517
    %v3071 = vunpack.c.l.b16 %v518
    %v3072 = vunpack.c.h.b16 %v518
    %v3073 = vunpack.c.l.b16 %v519
    %v3074 = vunpack.c.h.b16 %v519
    %v3075 = vunpack.c.l.b16 %v520
    %v3076 = vunpack.c.h.b16 %v520
    %v3077 = vunpack.c.l.b16 %v521
    %v3078 = vunpack.c.h.b16 %v521
    %v3079 = vunpack.c.l.b16 %v522
    %v3080 = vunpack.c.h.b16 %v522
    %v3081 = vunpack.c.l.b16 %v523
    %v3082 = vunpack.c.h.b16 %v523
    %v3083 = vunpack.c.l.b16 %v524
    %v3084 = vunpack.c.h.b16 %v524
    %v3085 = vunpack.c.l.b16 %v525
    %v3086 = vunpack.c.h.b16 %v525
    %v3087 = vunpack.c.l.b16 %v526
    %v3088 = vunpack.c.h.b16 %v526
    %v3089 = vunpack.c.l.b16 %v527
    %v3090 = vunpack.c.h.b16 %v527
    %v3091 = vunpack.c.l.b16 %v528
    %v3092 = vunpack.c.h.b16 %v528
    %v3093 = vunpack.c.l.b16 %v529
    %v3094 = vunpack.c.h.b16 %v529
    %v3095 = vunpack.c.l.b16 %v530
    %v3096 = vunpack.c.h.b16 %v530
    %v3097 = vunpack.c.l.b16 %v531
    %v3098 = vunpack.c.h.b16 %v531
    %v3099 = vunpack.c.l.b16 %v532
    %v3100 = vunpack.c.h.b16 %v532
    %v3101 = vunpack.c.l.b16 %v533
    %v3102 = vunpack.c.h.b16 %v533
    %v3103 = vunpack.c.l.b16 %v534
    %v3104 = vunpack.c.h.b16 %v534
    %v3105 = vunpack.c.l.b16 %v535
    %v3106 = vunpack.c.h.b16 %v535
    %v3107 = vunpack.c.l.b16 %v536
    %v3108 = vunpack.c.h.b16 %v536
    %v3109 = vunpack.c.l.b16 %v537
    %v3110 = vunpack.c.h.b16 %v537
    %v3111 = vunpack.c.l.b16 %v538
    %v3112 = vunpack.c.h.b16 %v538
    %v3113 = vunpack.c.l.b16 %v539
    %v3114 = vunpack.c.h.b16 %v539
    %v3115 = vunpack.c.l.b16 %v540
    %v3116 = vunpack.c.h.b16 %v540
    %v3117 = vunpack.c.l.b16 %v541
    %v3118 = vunpack.c.h.b16 %v541
    %v3119 = vunpack.c.l.b16 %v542
    %v3120 = vunpack.c.h.b16 %v542
    %v3121 = vunpack.c.l.b16 %v543
    %v3122 = vunpack.c.h.b16 %v543
    %v3123 = vunpack.c.l.b16 %v544
    %v3124 = vunpack.c.h.b16 %v544
    %v3125 = vunpack.c.l.b16 %v545
    %v3126 = vunpack.c.h.b16 %v545
    %v3127 = vunpack.c.l.b16 %v546
    %v3128 = vunpack.c.h.b16 %v546
    %v3129 = vunpack.c.l.b16 %v547
    %v3130 = vunpack.c.h.b16 %v547
    %v3131 = vunpack.c.l.b16 %v548
    %v3132 = vunpack.c.h.b16 %v548
    %v3133 = vunpack.c.l.b16 %v549
    %v3134 = vunpack.c.h.b16 %v549
    %v3135 = vunpack.c.l.b16 %v550
    %v3136 = vunpack.c.h.b16 %v550
    %v3137 = vunpack.c.l.b16 %v551
    %v3138 = vunpack.c.h.b16 %v551
    %v3139 = vunpack.c.l.b16 %v552
    %v3140 = vunpack.c.h.b16 %v552
    %v3141 = vunpack.c.l.b16 %v553
    %v3142 = vunpack.c.h.b16 %v553
    %v3143 = vunpack.c.l.b16 %v554
    %v3144 = vunpack.c.h.b16 %v554
    %v3145 = vunpack.c.l.b16 %v555
    %v3146 = vunpack.c.h.b16 %v555
    %v3147 = vunpack.c.l.b16 %v556
    %v3148 = vunpack.c.h.b16 %v556
    %v3149 = vunpack.c.l.b16 %v557
    %v3150 = vunpack.c.h.b16 %v557
    %v3151 = vunpack.c.l.b16 %v558
    %v3152 = vunpack.c.h.b16 %v558
    %v3153 = vunpack.c.l.b16 %v559
    %v3154 = vunpack.c.h.b16 %v559
    %v3155 = vunpack.c.l.b16 %v560
    %v3156 = vunpack.c.h.b16 %v560
    %v3157 = vunpack.c.l.b16 %v561
    %v3158 = vunpack.c.h.b16 %v561
    %v3159 = vunpack.c.l.b16 %v562
    %v3160 = vunpack.c.h.b16 %v562
    %v3161 = vunpack.c.l.b16 %v563
    %v3162 = vunpack.c.h.b16 %v563
    %v3163 = vunpack.c.l.b16 %v564
    %v3164 = vunpack.c.h.b16 %v564
    %v3165 = vunpack.c.l.b16 %v565
    %v3166 = vunpack.c.h.b16 %v565
    %v3167 = vunpack.c.l.b16 %v566
    %v3168 = vunpack.c.h.b16 %v566
    %v3169 = vunpack.c.l.b16 %v567
    %v3170 = vunpack.c.h.b16 %v567
    %v3171 = vunpack.c.l.b16 %v568
    %v3172 = vunpack.c.h.b16 %v568
    %v3173 = vunpack.c.l.b16 %v569
    %v3174 = vunpack.c.h.b16 %v569
    %v3175 = vunpack.c.l.b16 %v570
    %v3176 = vunpack.c.h.b16 %v570
    %v3177 = vunpack.c.l.b16 %v571
    %v3178 = vunpack.c.h.b16 %v571
    %v3179 = vunpack.c.l.b16 %v572
    %v3180 = vunpack.c.h.b16 %v572
    %v3181 = vunpack.c.l.b16 %v573
    %v3182 = vunpack.c.h.b16 %v573
    %v3183 = vunpack.c.l.b16 %v574
    %v3184 = vunpack.c.h.b16 %v574
    %v3185 = vunpack.c.l.b16 %v575
    %v3186 = vunpack.c.h.b16 %v575
    %v3187 = vunpack.c.l.b16 %v576
    %v3188 = vunpack.c.h.b16 %v576
    %v3189 = vunpack.c.l.b16 %v577
    %v3190 = vunpack.c.h.b16 %v577
    %v3191 = vunpack.c.l.b16 %v578
    %v3192 = vunpack.c.h.b16 %v578
    %v3193 = vunpack.c.l.b16 %v579
    %v3194 = vunpack.c.h.b16 %v579
    %v3195 = vunpack.c.l.b16 %v580
    %v3196 = vunpack.c.h.b16 %v580
    %v3197 = vunpack.c.l.b16 %v581
    %v3198 = vunpack.c.h.b16 %v581
    %v3199 = vunpack.c.l.b16 %v582
    %v3200 = vunpack.c.h.b16 %v582
    %v3201 = vunpack.c.l.b16 %v583
    %v3202 = vunpack.c.h.b16 %v583
    %v3203 = vunpack.c.l.b16 %v584
    %v3204 = vunpack.c.h.b16 %v584
    %v3205 = vunpack.c.l.b16 %v585
    %v3206 = vunpack.c.h.b16 %v585
    %v3207 = vunpack.c.l.b16 %v586
    %v3208 = vunpack.c.h.b16 %v586
    %v3209 = vunpack.c.l.b16 %v587
    %v3210 = vunpack.c.h.b16 %v587
    %v3211 = vunpack.c.l.b16 %v588
    %v3212 = vunpack.c.h.b16 %v588
    %v3213 = vunpack.c.l.b16 %v589
    %v3214 = vunpack.c.h.b16 %v589
    %v3215 = vunpack.c.l.b16 %v590
    %v3216 = vunpack.c.h.b16 %v590
    %v3217 = vunpack.c.l.b16 %v591
    %v3218 = vunpack.c.h.b16 %v591
    %v3219 = vunpack.c.l.b16 %v592
    %v3220 = vunpack.c.h.b16 %v592
    %v3221 = vunpack.c.l.b16 %v593
    %v3222 = vunpack.c.h.b16 %v593
    %v3223 = vunpack.c.l.b16 %v594
    %v3224 = vunpack.c.h.b16 %v594
    %v3225 = vunpack.c.l.b16 %v595
    %v3226 = vunpack.c.h.b16 %v595
    %v3227 = vunpack.c.l.b16 %v596
    %v3228 = vunpack.c.h.b16 %v596
    %v3229 = vunpack.c.l.b16 %v597
    %v3230 = vunpack.c.h.b16 %v597
    %v3231 = vunpack.c.l.b16 %v598
    %v3232 = vunpack.c.h.b16 %v598
    %v3233 = vunpack.c.l.b16 %v599
    %v3234 = vunpack.c.h.b16 %v599
    %v3235 = vunpack.c.l.b16 %v600
    %v3236 = vunpack.c.h.b16 %v600
    %v3237 = vunpack.c.l.b16 %v601
    %v3238 = vunpack.c.h.b16 %v601
    %v3239 = vunpack.c.l.b16 %v602
    %v3240 = vunpack.c.h.b16 %v602
    %v3241 = vunpack.c.l.b16 %v603
    %v3242 = vunpack.c.h.b16 %v603
    %v3243 = vunpack.c.l.b16 %v604
    %v3244 = vunpack.c.h.b16 %v604
    %v3245 = vunpack.c.l.b16 %v605
    %v3246 = vunpack.c.h.b16 %v605
    %v3247 = vunpack.c.l.b16 %v606
    %v3248 = vunpack.c.h.b16 %v606
    %v3249 = vunpack.c.l.b16 %v607
    %v3250 = vunpack.c.h.b16 %v607
    %v3251 = vunpack.c.l.b16 %v608
    %v3252 = vunpack.c.h.b16 %v608
    %v3253 = vunpack.c.l.b16 %v609
    %v3254 = vunpack.c.h.b16 %v609
    %v3255 = vunpack.c.l.b16 %v610
    %v3256 = vunpack.c.h.b16 %v610
    %v3257 = vunpack.c.l.b16 %v611
    %v3258 = vunpack.c.h.b16 %v611
    %v3259 = vunpack.c.l.b16 %v612
    %v3260 = vunpack.c.h.b16 %v612
    %v3261 = vunpack.c.l.b16 %v613
    %v3262 = vunpack.c.h.b16 %v613
    %v3263 = vunpack.c.l.b16 %v614
    %v3264 = vunpack.c.h.b16 %v614
    %v3265 = vunpack.c.l.b16 %v615
    %v3266 = vunpack.c.h.b16 %v615
    %v3267 = vunpack.c.l.b16 %v616
    %v3268 = vunpack.c.h.b16 %v616
    %v3269 = vunpack.c.l.b16 %v617
    %v3270 = vunpack.c.h.b16 %v617
    %v3271 = vunpack.c.l.b16 %v618
    %v3272 = vunpack.c.h.b16 %v618
    %v3273 = vunpack.c.l.b16 %v619
    %v3274 = vunpack.c.h.b16 %v619
    %v3275 = vunpack.c.l.b16 %v620
    %v3276 = vunpack.c.h.b16 %v620
    %v3277 = vunpack.c.l.b16 %v621
    %v3278 = vunpack.c.h.b16 %v621
    %v3279 = vunpack.c.l.b16 %v622
    %v3280 = vunpack.c.h.b16 %v622
    %v3281 = vunpack.c.l.b16 %v623
    %v3282 = vunpack.c.h.b16 %v623
    %v3283 = vunpack.c.l.b16 %v624
    %v3284 = vunpack.c.h.b16 %v624
    %v3285 = vunpack.c.l.b16 %v625
    %v3286 = vunpack.c.h.b16 %v625
    %v3287 = vunpack.c.l.b16 %v626
    %v3288 = vunpack.c.h.b16 %v626
    %v3289 = vunpack.c.l.b16 %v627
    %v3290 = vunpack.c.h.b16 %v627
    %v3291 = vunpack.c.l.b16 %v628
    %v3292 = vunpack.c.h.b16 %v628
    %v3293 = vunpack.c.l.b16 %v629
    %v3294 = vunpack.c.h.b16 %v629
    %v3295 = vunpack.c.l.b16 %v630
    %v3296 = vunpack.c.h.b16 %v630
    %v3297 = vunpack.c.l.b16 %v631
    %v3298 = vunpack.c.h.b16 %v631
    %v3299 = vunpack.c.l.b16 %v632
    %v3300 = vunpack.c.h.b16 %v632
    %v3301 = vunpack.c.l.b16 %v633
    %v3302 = vunpack.c.h.b16 %v633
    %v3303 = vunpack.c.l.b16 %v634
    %v3304 = vunpack.c.h.b16 %v634
    %v3305 = vunpack.c.l.b16 %v635
    %v3306 = vunpack.c.h.b16 %v635
    %v3307 = vunpack.c.l.b16 %v636
    %v3308 = vunpack.c.h.b16 %v636
    %v3309 = vunpack.c.l.b16 %v637
    %v3310 = vunpack.c.h.b16 %v637
    %v3311 = vunpack.c.l.b16 %v638
    %v3312 = vunpack.c.h.b16 %v638
    %v3313 = vunpack.c.l.b16 %v639
    %v3314 = vunpack.c.h.b16 %v639
    %v3315 = vunpack.c.l.b16 %v640
    %v3316 = vunpack.c.h.b16 %v640
    %v3317 = vunpack.c.l.b16 %v641
    %v3318 = vunpack.c.h.b16 %v641
    %v3319 = vunpack.c.l.b16 %v642
    %v3320 = vunpack.c.h.b16 %v642
    %v3321 = vunpack.c.l.b16 %v643
    %v3322 = vunpack.c.h.b16 %v643
    %v3323 = vunpack.c.l.b16 %v644
    %v3324 = vunpack.c.h.b16 %v644
    %v3325 = vunpack.c.l.b16 %v645
    %v3326 = vunpack.c.h.b16 %v645
    %v3327 = vunpack.c.l.b16 %v646
    %v3328 = vunpack.c.h.b16 %v646
    %v3329 = vunpack.c.l.b16 %v647
    %v3330 = vunpack.c.h.b16 %v647
    %v3331 = vunpack.c.l.b16 %v648
    %v3332 = vunpack.c.h.b16 %v648
    %v3333 = vunpack.c.l.b16 %v649
    %v3334 = vunpack.c.h.b16 %v649
    %v3335 = vunpack.c.l.b16 %v650
    %v3336 = vunpack.c.h.b16 %v650
    %v3337 = vunpack.c.l.b16 %v651
    %v3338 = vunpack.c.h.b16 %v651
    %v3339 = vunpack.c.l.b16 %v652
    %v3340 = vunpack.c.h.b16 %v652
    %v3341 = vunpack.c.l.b16 %v653
    %v3342 = vunpack.c.h.b16 %v653
    %v3343 = vunpack.c.l.b16 %v654
    %v3344 = vunpack.c.h.b16 %v654
    %v3345 = vunpack.c.l.b16 %v655
    %v3346 = vunpack.c.h.b16 %v655
    %v3347 = vunpack.c.l.b16 %v656
    %v3348 = vunpack.c.h.b16 %v656
    %v3349 = vunpack.c.l.b16 %v657
    %v3350 = vunpack.c.h.b16 %v657
    %v3351 = vunpack.c.l.b16 %v658
    %v3352 = vunpack.c.h.b16 %v658
    %v3353 = vunpack.c.l.b16 %v659
    %v3354 = vunpack.c.h.b16 %v659
    %v3355 = vunpack.c.l.b16 %v660
    %v3356 = vunpack.c.h.b16 %v660
    %v3357 = vunpack.c.l.b16 %v661
    %v3358 = vunpack.c.h.b16 %v661
    %v3359 = vunpack.c.l.b16 %v662
    %v3360 = vunpack.c.h.b16 %v662
    %v3361 = vunpack.c.l.b16 %v663
    %v3362 = vunpack.c.h.b16 %v663
    %v3363 = vunpack.c.l.b16 %v664
    %v3364 = vunpack.c.h.b16 %v664
    %v3365 = vunpack.c.l.b16 %v665
    %v3366 = vunpack.c.h.b16 %v665
    %v3367 = vunpack.c.l.b16 %v666
    %v3368 = vunpack.c.h.b16 %v666
    %v3369 = vunpack.c.l.b16 %v667
    %v3370 = vunpack.c.h.b16 %v667
    %v3371 = vunpack.c.l.b16 %v668
    %v3372 = vunpack.c.h.b16 %v668
    %v3373 = vunpack.c.l.b16 %v669
    %v3374 = vunpack.c.h.b16 %v669
    %v3375 = vunpack.c.l.b16 %v670
    %v3376 = vunpack.c.h.b16 %v670
    %v3377 = vunpack.c.l.b16 %v671
    %v3378 = vunpack.c.h.b16 %v671
    %v3379 = vunpack.c.l.b16 %v672
    %v3380 = vunpack.c.h.b16 %v672
    %v3381 = vunpack.c.l.b16 %v673
    %v3382 = vunpack.c.h.b16 %v673
    %v3383 = vunpack.c.l.b16 %v674
    %v3384 = vunpack.c.h.b16 %v674
    %v3385 = vunpack.c.l.b16 %v675
    %v3386 = vunpack.c.h.b16 %v675
    %v3387 = vunpack.c.l.b16 %v676
    %v3388 = vunpack.c.h.b16 %v676
    %v3389 = vunpack.c.l.b16 %v677
    %v3390 = vunpack.c.h.b16 %v677
    %v3391 = vunpack.c.l.b16 %v678
    %v3392 = vunpack.c.h.b16 %v678
    %v3393 = vunpack.c.l.b16 %v679
    %v3394 = vunpack.c.h.b16 %v679
    %v3395 = vunpack.c.l.b16 %v680
    %v3396 = vunpack.c.h.b16 %v680
    %v3397 = vunpack.c.l.b16 %v681
    %v3398 = vunpack.c.h.b16 %v681
    %v3399 = vunpack.c.l.b16 %v682
    %v3400 = vunpack.c.h.b16 %v682
    %v3401 = vunpack.c.l.b16 %v683
    %v3402 = vunpack.c.h.b16 %v683
    %v3403 = vunpack.c.l.b16 %v684
    %v3404 = vunpack.c.h.b16 %v684
    %v3405 = vunpack.c.l.b16 %v685
    %v3406 = vunpack.c.h.b16 %v685
    %v3407 = vunpack.c.l.b16 %v686
    %v3408 = vunpack.c.h.b16 %v686
    %v3409 = vunpack.c.l.b16 %v687
    %v3410 = vunpack.c.h.b16 %v687
    %v3411 = vunpack.c.l.b16 %v688
    %v3412 = vunpack.c.h.b16 %v688
    %v3413 = vunpack.c.l.b16 %v689
    %v3414 = vunpack.c.h.b16 %v689
    %v3415 = vunpack.c.l.b16 %v690
    %v3416 = vunpack.c.h.b16 %v690
    %v3417 = vunpack.c.l.b16 %v691
    %v3418 = vunpack.c.h.b16 %v691
    %v3419 = vunpack.c.l.b16 %v692
    %v3420 = vunpack.c.h.b16 %v692
    %v3421 = vunpack.c.l.b16 %v693
    %v3422 = vunpack.c.h.b16 %v693
    %v3423 = vunpack.c.l.b16 %v694
    %v3424 = vunpack.c.h.b16 %v694
    %v3425 = vunpack.c.l.b16 %v695
    %v3426 = vunpack.c.h.b16 %v695
    %v3427 = vunpack.c.l.b16 %v696
    %v3428 = vunpack.c.h.b16 %v696
    %v3429 = vunpack.c.l.b16 %v697
    %v3430 = vunpack.c.h.b16 %v697
    %v3431 = vunpack.c.l.b16 %v698
    %v3432 = vunpack.c.h.b16 %v698
    %v3433 = vunpack.c.l.b16 %v699
    %v3434 = vunpack.c.h.b16 %v699
    %v3435 = vunpack.c.l.b16 %v700
    %v3436 = vunpack.c.h.b16 %v700
    %v3437 = vunpack.c.l.b16 %v701
    %v3438 = vunpack.c.h.b16 %v701
    %v3439 = vunpack.c.l.b16 %v702
    %v3440 = vunpack.c.h.b16 %v702
    %v3441 = vunpack.c.l.b16 %v703
    %v3442 = vunpack.c.h.b16 %v703
    %v3443 = vunpack.c.l.b16 %v704
    %v3444 = vunpack.c.h.b16 %v704
    %v3445 = vunpack.c.l.b16 %v705
    %v3446 = vunpack.c.h.b16 %v705
    %v3447 = vunpack.c.l.b16 %v706
    %v3448 = vunpack.c.h.b16 %v706
    %v3449 = vunpack.c.l.b16 %v707
    %v3450 = vunpack.c.h.b16 %v707
    %v3451 = vunpack.c.l.b16 %v708
    %v3452 = vunpack.c.h.b16 %v708
    %v3453 = vunpack.c.l.b16 %v709
    %v3454 = vunpack.c.h.b16 %v709
    %v3455 = vunpack.c.l.b16 %v710
    %v3456 = vunpack.c.h.b16 %v710
    %v3457 = vunpack.c.l.b16 %v711
    %v3458 = vunpack.c.h.b16 %v711
    %v3459 = vunpack.c.l.b16 %v712
    %v3460 = vunpack.c.h.b16 %v712
    %v3461 = vunpack.c.l.b16 %v713
    %v3462 = vunpack.c.h.b16 %v713
    %v3463 = vunpack.c.l.b16 %v714
    %v3464 = vunpack.c.h.b16 %v714
    %v3465 = vunpack.c.l.b16 %v715
    %v3466 = vunpack.c.h.b16 %v715
    %v3467 = vunpack.c.l.b16 %v716
    %v3468 = vunpack.c.h.b16 %v716
    %v3469 = vunpack.c.l.b16 %v717
    %v3470 = vunpack.c.h.b16 %v717
    %v3471 = vunpack.c.l.b16 %v718
    %v3472 = vunpack.c.h.b16 %v718
    %v3473 = vunpack.c.l.b16 %v719
    %v3474 = vunpack.c.h.b16 %v719
    %v3475 = vunpack.c.l.b16 %v720
    %v3476 = vunpack.c.h.b16 %v720
    %v3477 = vunpack.c.l.b16 %v721
    %v3478 = vunpack.c.h.b16 %v721
    %v3479 = vunpack.c.l.b16 %v722
    %v3480 = vunpack.c.h.b16 %v722
    %v3481 = vunpack.c.l.b16 %v723
    %v3482 = vunpack.c.h.b16 %v723
    %v3483 = vunpack.c.l.b16 %v724
    %v3484 = vunpack.c.h.b16 %v724
    %v3485 = vunpack.c.l.b16 %v725
    %v3486 = vunpack.c.h.b16 %v725
    %v3487 = vunpack.c.l.b16 %v726
    %v3488 = vunpack.c.h.b16 %v726
    %v3489 = vunpack.c.l.b16 %v727
    %v3490 = vunpack.c.h.b16 %v727
    %v3491 = vunpack.c.l.b16 %v728
    %v3492 = vunpack.c.h.b16 %v728
    %v3493 = vunpack.c.l.b16 %v729
    %v3494 = vunpack.c.h.b16 %v729
    %v3495 = vunpack.c.l.b16 %v730
    %v3496 = vunpack.c.h.b16 %v730
    %v3497 = vunpack.c.l.b16 %v731
    %v3498 = vunpack.c.h.b16 %v731
    %v3499 = vunpack.c.l.b16 %v732
    %v3500 = vunpack.c.h.b16 %v732
    %v3501 = vunpack.c.l.b16 %v733
    %v3502 = vunpack.c.h.b16 %v733
    %v3503 = vunpack.c.l.b16 %v734
    %v3504 = vunpack.c.h.b16 %v734
    %v3505 = vunpack.c.l.b16 %v735
    %v3506 = vunpack.c.h.b16 %v735
    %v3507 = vunpack.c.l.b16 %v736
    %v3508 = vunpack.c.h.b16 %v736
    %v3509 = vunpack.c.l.b16 %v737
    %v3510 = vunpack.c.h.b16 %v737
    %v3511 = vunpack.c.l.b16 %v738
    %v3512 = vunpack.c.h.b16 %v738
    %v3513 = vunpack.c.l.b16 %v739
    %v3514 = vunpack.c.h.b16 %v739
    %v3515 = vunpack.c.l.b16 %v740
    %v3516 = vunpack.c.h.b16 %v740
    %v3517 = vunpack.c.l.b16 %v741
    %v3518 = vunpack.c.h.b16 %v741
    %v3519 = vunpack.c.l.b16 %v742
    %v3520 = vunpack.c.h.b16 %v742
    %v3521 = vunpack.c.l.b16 %v743
    %v3522 = vunpack.c.h.b16 %v743
    %v3523 = vunpack.c.l.b16 %v744
    %v3524 = vunpack.c.h.b16 %v744
    %v3525 = vunpack.c.l.b16 %v745
    %v3526 = vunpack.c.h.b16 %v745
    %v3527 = vunpack.c.l.b16 %v746
    %v3528 = vunpack.c.h.b16 %v746
    %v3529 = vunpack.c.l.b16 %v747
    %v3530 = vunpack.c.h.b16 %v747
    %v3531 = vunpack.c.l.b16 %v748
    %v3532 = vunpack.c.h.b16 %v748
    %v3533 = vunpack.c.l.b16 %v749
    %v3534 = vunpack.c.h.b16 %v749
    %v3535 = vunpack.c.l.b16 %v750
    %v3536 = vunpack.c.h.b16 %v750
    %v3537 = vunpack.c.l.b16 %v751
    %v3538 = vunpack.c.h.b16 %v751
    %v3539 = vunpack.c.l.b16 %v752
    %v3540 = vunpack.c.h.b16 %v752
    %v3541 = vunpack.c.l.b16 %v753
    %v3542 = vunpack.c.h.b16 %v753
    %v3543 = vunpack.c.l.b16 %v754
    %v3544 = vunpack.c.h.b16 %v754
    %v3545 = vunpack.c.l.b16 %v755
    %v3546 = vunpack.c.h.b16 %v755
    %v3547 = vunpack.c.l.b16 %v756
    %v3548 = vunpack.c.h.b16 %v756
    %v3549 = vunpack.c.l.b16 %v757
    %v3550 = vunpack.c.h.b16 %v757
    %v3551 = vunpack.c.l.b16 %v758
    %v3552 = vunpack.c.h.b16 %v758
    %v3553 = vunpack.c.l.b16 %v759
    %v3554 = vunpack.c.h.b16 %v759
    %v3555 = vunpack.c.l.b16 %v760
    %v3556 = vunpack.c.h.b16 %v760
    %v3557 = vunpack.c.l.b16 %v761
    %v3558 = vunpack.c.h.b16 %v761
    %v3559 = vunpack.c.l.b16 %v762
    %v3560 = vunpack.c.h.b16 %v762
    %v3561 = vunpack.c.l.b16 %v763
    %v3562 = vunpack.c.h.b16 %v763
    %v3563 = vunpack.c.l.b16 %v764
    %v3564 = vunpack.c.h.b16 %v764
    %v3565 = vunpack.c.l.b16 %v765
    %v3566 = vunpack.c.h.b16 %v765
    %v3567 = vunpack.c.l.b16 %v766
    %v3568 = vunpack.c.h.b16 %v766
    %v3569 = vunpack.c.l.b16 %v767
    %v3570 = vunpack.c.h.b16 %v767
    %v3571 = vunpack.c.l.b16 %v768
    %v3572 = vunpack.c.h.b16 %v768
    %v3573 = vunpack.c.l.b16 %v769
    %v3574 = vunpack.c.h.b16 %v769
    %v3575 = vunpack.c.l.b16 %v770
    %v3576 = vunpack.c.h.b16 %v770
    %v3577 = vunpack.c.l.b16 %v771
    %v3578 = vunpack.c.h.b16 %v771
    %v3579 = vunpack.c.l.b16 %v772
    %v3580 = vunpack.c.h.b16 %v772
    %v3581 = vunpack.c.l.b16 %v773
    %v3582 = vunpack.c.h.b16 %v773
    %v3583 = vunpack.c.l.b16 %v774
    %v3584 = vunpack.c.h.b16 %v774
    %v3585 = vunpack.c.l.b16 %v775
    %v3586 = vunpack.c.h.b16 %v775
    %v3587 = vunpack.c.l.b16 %v776
    %v3588 = vunpack.c.h.b16 %v776
    %v3589 = vunpack.c.l.b16 %v777
    %v3590 = vunpack.c.h.b16 %v777
    %v3591 = vunpack.c.l.b16 %v778
    %v3592 = vunpack.c.h.b16 %v778
    %v3593 = vunpack.c.l.b16 %v779
    %v3594 = vunpack.c.h.b16 %v779
    %v3595 = vunpack.c.l.b16 %v780
    %v3596 = vunpack.c.h.b16 %v780
    %v3597 = vunpack.c.l.b16 %v781
    %v3598 = vunpack.c.h.b16 %v781
    %v3599 = vunpack.c.l.b16 %v782
    %v3600 = vunpack.c.h.b16 %v782
    %v3601 = vunpack.c.l.b16 %v783
    %v3602 = vunpack.c.h.b16 %v783
    %v3603 = vunpack.c.l.b16 %v784
    %v3604 = vunpack.c.h.b16 %v784
    %v3605 = vunpack.c.l.b16 %v785
    %v3606 = vunpack.c.h.b16 %v785
    %v3607 = vunpack.c.l.b16 %v786
    %v3608 = vunpack.c.h.b16 %v786
    %v3609 = vunpack.c.l.b16 %v787
    %v3610 = vunpack.c.h.b16 %v787
    %v3611 = vunpack.c.l.b16 %v788
    %v3612 = vunpack.c.h.b16 %v788
    %v3613 = vunpack.c.l.b16 %v789
    %v3614 = vunpack.c.h.b16 %v789
    %v3615 = vunpack.c.l.b16 %v790
    %v3616 = vunpack.c.h.b16 %v790
    %v3617 = vunpack.c.l.b16 %v791
    %v3618 = vunpack.c.h.b16 %v791
    %v3619 = vunpack.c.l.b16 %v792
    %v3620 = vunpack.c.h.b16 %v792
    %v3621 = vunpack.c.l.b16 %v793
    %v3622 = vunpack.c.h.b16 %v793
    %v3623 = vunpack.c.l.b16 %v794
    %v3624 = vunpack.c.h.b16 %v794
    %v3625 = vunpack.c.l.b16 %v795
    %v3626 = vunpack.c.h.b16 %v795
    %v3627 = vunpack.c.l.b16 %v796
    %v3628 = vunpack.c.h.b16 %v796
    %v3629 = vunpack.c.l.b16 %v797
    %v3630 = vunpack.c.h.b16 %v797
    %v3631 = vunpack.c.l.b16 %v798
    %v3632 = vunpack.c.h.b16 %v798
    %v3633 = vunpack.c.l.b16 %v799
    %v3634 = vunpack.c.h.b16 %v799
    %v3635 = vunpack.c.l.b16 %v800
    %v3636 = vunpack.c.h.b16 %v800
    %v3637 = vunpack.c.l.b16 %v801
    %v3638 = vunpack.c.h.b16 %v801
    %v3639 = vunpack.c.l.b16 %v802
    %v3640 = vunpack.c.h.b16 %v802
    %v3641 = vunpack.c.l.b16 %v803
    %v3642 = vunpack.c.h.b16 %v803
    %v3643 = vunpack.c.l.b16 %v804
    %v3644 = vunpack.c.h.b16 %v804
    %v3645 = vunpack.c.l.b16 %v805
    %v3646 = vunpack.c.h.b16 %v805
    %v3647 = vunpack.c.l.b16 %v806
    %v3648 = vunpack.c.h.b16 %v806
    %v3649 = vunpack.c.l.b16 %v807
    %v3650 = vunpack.c.h.b16 %v807
    %v3651 = vunpack.c.l.b16 %v808
    %v3652 = vunpack.c.h.b16 %v808
    %v3653 = vunpack.c.l.b16 %v809
    %v3654 = vunpack.c.h.b16 %v809
    %v3655 = vunpack.c.l.b16 %v810
    %v3656 = vunpack.c.h.b16 %v810
    %v3657 = vunpack.c.l.b16 %v811
    %v3658 = vunpack.c.h.b16 %v811
    %v3659 = vunpack.c.l.b16 %v812
    %v3660 = vunpack.c.h.b16 %v812
    %v3661 = vunpack.c.l.b16 %v813
    %v3662 = vunpack.c.h.b16 %v813
    %v3663 = vunpack.c.l.b16 %v814
    %v3664 = vunpack.c.h.b16 %v814
    %v3665 = vunpack.c.l.b16 %v815
    %v3666 = vunpack.c.h.b16 %v815
    %v3667 = vunpack.c.l.b16 %v816
    %v3668 = vunpack.c.h.b16 %v816
    %v3669 = vunpack.c.l.b16 %v817
    %v3670 = vunpack.c.h.b16 %v817
    %v3671 = vunpack.c.l.b16 %v818
    %v3672 = vunpack.c.h.b16 %v818
    %v3673 = vunpack.c.l.b16 %v819
    %v3674 = vunpack.c.h.b16 %v819
    %v3675 = vunpack.c.l.b16 %v820
    %v3676 = vunpack.c.h.b16 %v820
    %v3677 = vunpack.c.l.b16 %v821
    %v3678 = vunpack.c.h.b16 %v821
    %v3679 = vunpack.c.l.b16 %v822
    %v3680 = vunpack.c.h.b16 %v822
    %v3681 = vunpack.c.l.b16 %v823
    %v3682 = vunpack.c.h.b16 %v823
    %v3683 = vunpack.c.l.b16 %v824
    %v3684 = vunpack.c.h.b16 %v824
    %v3685 = vunpack.c.l.b16 %v825
    %v3686 = vunpack.c.h.b16 %v825
    %v3687 = vunpack.c.l.b16 %v826
    %v3688 = vunpack.c.h.b16 %v826
    %v3689 = vunpack.c.l.b16 %v827
    %v3690 = vunpack.c.h.b16 %v827
    %v3691 = vunpack.c.l.b16 %v828
    %v3692 = vunpack.c.h.b16 %v828
    %v3693 = vunpack.c.l.b16 %v829
    %v3694 = vunpack.c.h.b16 %v829
    %v3695 = vunpack.c.l.b16 %v830
    %v3696 = vunpack.c.h.b16 %v830
    %v3697 = vunpack.c.l.b16 %v831
    %v3698 = vunpack.c.h.b16 %v831
    %v3699 = vunpack.c.l.b16 %v832
    %v3700 = vunpack.c.h.b16 %v832
    %v3701 = vunpack.c.l.b16 %v833
    %v3702 = vunpack.c.h.b16 %v833
    %v3703 = vunpack.c.l.b16 %v834
    %v3704 = vunpack.c.h.b16 %v834
    %v3705 = vunpack.c.l.b16 %v835
    %v3706 = vunpack.c.h.b16 %v835
    %v3707 = vunpack.c.l.b16 %v836
    %v3708 = vunpack.c.h.b16 %v836
    %v3709 = vunpack.c.l.b16 %v837
    %v3710 = vunpack.c.h.b16 %v837
    %v3711 = vunpack.c.l.b16 %v838
    %v3712 = vunpack.c.h.b16 %v838
    %v3713 = vunpack.c.l.b16 %v839
    %v3714 = vunpack.c.h.b16 %v839
    %v3715 = vunpack.c.l.b16 %v840
    %v3716 = vunpack.c.h.b16 %v840
    %v3717 = vunpack.c.l.b16 %v841
    %v3718 = vunpack.c.h.b16 %v841
    %v3719 = vunpack.c.l.b16 %v842
    %v3720 = vunpack.c.h.b16 %v842
    %v3721 = vunpack.c.l.b16 %v843
    %v3722 = vunpack.c.h.b16 %v843
    %v3723 = vunpack.c.l.b16 %v844
    %v3724 = vunpack.c.h.b16 %v844
    %v3725 = vunpack.c.l.b16 %v845
    %v3726 = vunpack.c.h.b16 %v845
    %v3727 = vunpack.c.l.b16 %v846
    %v3728 = vunpack.c.h.b16 %v846
    %v3729 = vunpack.c.l.b16 %v847
    %v3730 = vunpack.c.h.b16 %v847
    %v3731 = vunpack.c.l.b16 %v848
    %v3732 = vunpack.c.h.b16 %v848
    %v3733 = vunpack.c.l.b16 %v849
    %v3734 = vunpack.c.h.b16 %v849
    %v3735 = vunpack.c.l.b16 %v850
    %v3736 = vunpack.c.h.b16 %v850
    %v3737 = vunpack.c.l.b16 %v851
    %v3738 = vunpack.c.h.b16 %v851
    %v3739 = vunpack.c.l.b16 %v852
    %v3740 = vunpack.c.h.b16 %v852
    %v3741 = vunpack.c.l.b16 %v853
    %v3742 = vunpack.c.h.b16 %v853
    %v3743 = vunpack.c.l.b16 %v854
    %v3744 = vunpack.c.h.b16 %v854
    %v3745 = vunpack.c.l.b16 %v855
    %v3746 = vunpack.c.h.b16 %v855
    %v3747 = vunpack.c.l.b16 %v856
    %v3748 = vunpack.c.h.b16 %v856
    %v3749 = vunpack.c.l.b16 %v857
    %v3750 = vunpack.c.h.b16 %v857
    %v3751 = vunpack.c.l.b16 %v858
    %v3752 = vunpack.c.h.b16 %v858
    %v3753 = vunpack.c.l.b16 %v859
    %v3754 = vunpack.c.h.b16 %v859
    %v3755 = vunpack.c.l.b16 %v860
    %v3756 = vunpack.c.h.b16 %v860
    %v3757 = vunpack.c.l.b16 %v861
    %v3758 = vunpack.c.h.b16 %v861
    %v3759 = vunpack.c.l.b16 %v862
    %v3760 = vunpack.c.h.b16 %v862
    %v3761 = vunpack.c.l.b16 %v863
    %v3762 = vunpack.c.h.b16 %v863
    %v3763 = vunpack.c.l.b16 %v864
    %v3764 = vunpack.c.h.b16 %v864
    %v3765 = vunpack.c.l.b16 %v865
    %v3766 = vunpack.c.h.b16 %v865
    %v3767 = vunpack.c.l.b16 %v866
    %v3768 = vunpack.c.h.b16 %v866
    %v3769 = vunpack.c.l.b16 %v867
    %v3770 = vunpack.c.h.b16 %v867
    %v3771 = vunpack.c.l.b16 %v868
    %v3772 = vunpack.c.h.b16 %v868
    %v3773 = vunpack.c.l.b16 %v869
    %v3774 = vunpack.c.h.b16 %v869
    %v3775 = vunpack.c.l.b16 %v870
    %v3776 = vunpack.c.h.b16 %v870
    %v3777 = vunpack.c.l.b16 %v871
    %v3778 = vunpack.c.h.b16 %v871
    %v3779 = vunpack.c.l.b16 %v872
    %v3780 = vunpack.c.h.b16 %v872
    %v3781 = vunpack.c.l.b16 %v873
    %v3782 = vunpack.c.h.b16 %v873
    %v3783 = vunpack.c.l.b16 %v874
    %v3784 = vunpack.c.h.b16 %v874
    %v3785 = vunpack.c.l.b16 %v875
    %v3786 = vunpack.c.h.b16 %v875
    %v3787 = vunpack.c.l.b16 %v876
    %v3788 = vunpack.c.h.b16 %v876
    %v3789 = vunpack.c.l.b16 %v877
    %v3790 = vunpack.c.h.b16 %v877
    %v3791 = vunpack.c.l.b16 %v878
    %v3792 = vunpack.c.h.b16 %v878
    %v3793 = vunpack.c.l.b16 %v879
    %v3794 = vunpack.c.h.b16 %v879
    %v3795 = vunpack.c.l.b16 %v880
    %v3796 = vunpack.c.h.b16 %v880
    %v3797 = vunpack.c.l.b16 %v881
    %v3798 = vunpack.c.h.b16 %v881
    %v3799 = vunpack.c.l.b16 %v882
    %v3800 = vunpack.c.h.b16 %v882
    %v3801 = vunpack.c.l.b16 %v883
    %v3802 = vunpack.c.h.b16 %v883
    %v3803 = vunpack.c.l.b16 %v884
    %v3804 = vunpack.c.h.b16 %v884
    %v3805 = vunpack.c.l.b16 %v885
    %v3806 = vunpack.c.h.b16 %v885
    %v3807 = vunpack.c.l.b16 %v886
    %v3808 = vunpack.c.h.b16 %v886
    %v3809 = vunpack.c.l.b16 %v887
    %v3810 = vunpack.c.h.b16 %v887
    %v3811 = vunpack.c.l.b16 %v888
    %v3812 = vunpack.c.h.b16 %v888
    %v3813 = vunpack.c.l.b16 %v889
    %v3814 = vunpack.c.h.b16 %v889
    %v3815 = vunpack.c.l.b16 %v890
    %v3816 = vunpack.c.h.b16 %v890
    %v3817 = vunpack.c.l.b16 %v891
    %v3818 = vunpack.c.h.b16 %v891
    %v3819 = vunpack.c.l.b16 %v892
    %v3820 = vunpack.c.h.b16 %v892
    %v3821 = vunpack.c.l.b16 %v893
    %v3822 = vunpack.c.h.b16 %v893
    %v3823 = vunpack.c.l.b16 %v894
    %v3824 = vunpack.c.h.b16 %v894
    %v3825 = vunpack.c.l.b16 %v895
    %v3826 = vunpack.c.h.b16 %v895
    %v3827 = vunpack.c.l.b16 %v896
    %v3828 = vunpack.c.h.b16 %v896
    %v3829 = vunpack.c.l.b16 %v897
    %v3830 = vunpack.c.h.b16 %v897
    %v3831 = vunpack.c.l.b16 %v898
    %v3832 = vunpack.c.h.b16 %v898
    %v3833 = vunpack.c.l.b16 %v899
    %v3834 = vunpack.c.h.b16 %v899
    %v3835 = vunpack.c.l.b16 %v900
    %v3836 = vunpack.c.h.b16 %v900
    %v3837 = vunpack.c.l.b16 %v901
    %v3838 = vunpack.c.h.b16 %v901
    %v3839 = vunpack.c.l.b16 %v902
    %v3840 = vunpack.c.h.b16 %v902
    %v3841 = vunpack.c.l.b16 %v903
    %v3842 = vunpack.c.h.b16 %v903
    %v3843 = vunpack.c.l.b16 %v904
    %v3844 = vunpack.c.h.b16 %v904
    %v3845 = vunpack.c.l.b16 %v905
    %v3846 = vunpack.c.h.b16 %v905
    %v3847 = vunpack.c.l.b16 %v906
    %v3848 = vunpack.c.h.b16 %v906
    %v3849 = vunpack.c.l.b16 %v907
    %v3850 = vunpack.c.h.b16 %v907
    %v3851 = vunpack.c.l.b16 %v908
    %v3852 = vunpack.c.h.b16 %v908
    %v3853 = vunpack.c.l.b16 %v909
    %v3854 = vunpack.c.h.b16 %v909
    %v3855 = vunpack.c.l.b16 %v910
    %v3856 = vunpack.c.h.b16 %v910
    %v3857 = vunpack.c.l.b16 %v911
    %v3858 = vunpack.c.h.b16 %v911
    %v3859 = vunpack.c.l.b16 %v912
    %v3860 = vunpack.c.h.b16 %v912
    %v3861 = vunpack.c.l.b16 %v913
    %v3862 = vunpack.c.h.b16 %v913
    %v3863 = vunpack.c.l.b16 %v914
    %v3864 = vunpack.c.h.b16 %v914
    %v3865 = vunpack.c.l.b16 %v915
    %v3866 = vunpack.c.h.b16 %v915
    %v3867 = vunpack.c.l.b16 %v916
    %v3868 = vunpack.c.h.b16 %v916
    %v3869 = vunpack.c.l.b16 %v917
    %v3870 = vunpack.c.h.b16 %v917
    %v3871 = vunpack.c.l.b16 %v918
    %v3872 = vunpack.c.h.b16 %v918
    %v3873 = vunpack.c.l.b16 %v919
    %v3874 = vunpack.c.h.b16 %v919
    %v3875 = vunpack.c.l.b16 %v920
    %v3876 = vunpack.c.h.b16 %v920
    %v3877 = vunpack.c.l.b16 %v921
    %v3878 = vunpack.c.h.b16 %v921
    %v3879 = vunpack.c.l.b16 %v922
    %v3880 = vunpack.c.h.b16 %v922
    %v3881 = vunpack.c.l.b16 %v923
    %v3882 = vunpack.c.h.b16 %v923
    %v3883 = vunpack.c.l.b16 %v924
    %v3884 = vunpack.c.h.b16 %v924
    %v3885 = vunpack.c.l.b16 %v925
    %v3886 = vunpack.c.h.b16 %v925
    %v3887 = vunpack.c.l.b16 %v926
    %v3888 = vunpack.c.h.b16 %v926
    %v3889 = vunpack.c.l.b16 %v927
    %v3890 = vunpack.c.h.b16 %v927
    %v3891 = vunpack.c.l.b16 %v928
    %v3892 = vunpack.c.h.b16 %v928
    %v3893 = vunpack.c.l.b16 %v929
    %v3894 = vunpack.c.h.b16 %v929
    %v3895 = vunpack.c.l.b16 %v930
    %v3896 = vunpack.c.h.b16 %v930
    %v3897 = vunpack.c.l.b16 %v931
    %v3898 = vunpack.c.h.b16 %v931
    %v3899 = vunpack.c.l.b16 %v932
    %v3900 = vunpack.c.h.b16 %v932
    %v3901 = vunpack.c.l.b16 %v933
    %v3902 = vunpack.c.h.b16 %v933
    %v3903 = vunpack.c.l.b16 %v934
    %v3904 = vunpack.c.h.b16 %v934
    %v3905 = vunpack.c.l.b16 %v935
    %v3906 = vunpack.c.h.b16 %v935
    %v3907 = vunpack.c.l.b16 %v936
    %v3908 = vunpack.c.h.b16 %v936
    %v3909 = vunpack.c.l.b16 %v937
    %v3910 = vunpack.c.h.b16 %v937
    %v3911 = vunpack.c.l.b16 %v938
    %v3912 = vunpack.c.h.b16 %v938
    %v3913 = vunpack.c.l.b16 %v939
    %v3914 = vunpack.c.h.b16 %v939
    %v3915 = vunpack.c.l.b16 %v940
    %v3916 = vunpack.c.h.b16 %v940
    %v3917 = vunpack.c.l.b16 %v941
    %v3918 = vunpack.c.h.b16 %v941
    %v3919 = vunpack.c.l.b16 %v942
    %v3920 = vunpack.c.h.b16 %v942
    %v3921 = vunpack.c.l.b16 %v943
    %v3922 = vunpack.c.h.b16 %v943
    %v3923 = vunpack.c.l.b16 %v944
    %v3924 = vunpack.c.h.b16 %v944
    %v3925 = vunpack.c.l.b16 %v945
    %v3926 = vunpack.c.h.b16 %v945
    %v3927 = vunpack.c.l.b16 %v946
    %v3928 = vunpack.c.h.b16 %v946
    %v3929 = vunpack.c.l.b16 %v947
    %v3930 = vunpack.c.h.b16 %v947
    %v3931 = vunpack.c.l.b16 %v948
    %v3932 = vunpack.c.h.b16 %v948
    %v3933 = vunpack.c.l.b16 %v949
    %v3934 = vunpack.c.h.b16 %v949
    %v3935 = vunpack.c.l.b16 %v950
    %v3936 = vunpack.c.h.b16 %v950
    %v3937 = vunpack.c.l.b16 %v951
    %v3938 = vunpack.c.h.b16 %v951
    %v3939 = vunpack.c.l.b16 %v952
    %v3940 = vunpack.c.h.b16 %v952
    %v3941 = vunpack.c.l.b16 %v953
    %v3942 = vunpack.c.h.b16 %v953
    %v3943 = vunpack.c.l.b16 %v954
    %v3944 = vunpack.c.h.b16 %v954
    %v3945 = vunpack.c.l.b16 %v955
    %v3946 = vunpack.c.h.b16 %v955
    %v3947 = vunpack.c.l.b16 %v956
    %v3948 = vunpack.c.h.b16 %v956
    %v3949 = vunpack.c.l.b16 %v957
    %v3950 = vunpack.c.h.b16 %v957
    %v3951 = vunpack.c.l.b16 %v958
    %v3952 = vunpack.c.h.b16 %v958
    %v3953 = vunpack.c.l.b16 %v959
    %v3954 = vunpack.c.h.b16 %v959
    %v3955 = vunpack.c.l.b16 %v960
    %v3956 = vunpack.c.h.b16 %v960
    %v3957 = vunpack.c.l.b16 %v961
    %v3958 = vunpack.c.h.b16 %v961
    %v3959 = vunpack.c.l.b16 %v962
    %v3960 = vunpack.c.h.b16 %v962
    %v3961 = vunpack.c.l.b16 %v963
    %v3962 = vunpack.c.h.b16 %v963
    %v3963 = vunpack.c.l.b16 %v964
    %v3964 = vunpack.c.h.b16 %v964
    %v3965 = vunpack.c.l.b16 %v965
    %v3966 = vunpack.c.h.b16 %v965
    %v3967 = vunpack.c.l.b16 %v966
    %v3968 = vunpack.c.h.b16 %v966
    %v3969 = vunpack.c.l.b16 %v967
    %v3970 = vunpack.c.h.b16 %v967
    %v3971 = vunpack.c.l.b16 %v968
    %v3972 = vunpack.c.h.b16 %v968
    %v3973 = vunpack.c.l.b16 %v969
    %v3974 = vunpack.c.h.b16 %v969
    %v3975 = vunpack.c.l.b16 %v970
    %v3976 = vunpack.c.h.b16 %v970
    %v3977 = vunpack.c.l.b16 %v971
    %v3978 = vunpack.c.h.b16 %v971
    %v3979 = vunpack.c.l.b16 %v972
    %v3980 = vunpack.c.h.b16 %v972
    %v3981 = vunpack.c.l.b16 %v973
    %v3982 = vunpack.c.h.b16 %v973
    %v3983 = vunpack.c.l.b16 %v974
    %v3984 = vunpack.c.h.b16 %v974
    %v3985 = vunpack.c.l.b16 %v975
    %v3986 = vunpack.c.h.b16 %v975
    %v3987 = vunpack.c.l.b16 %v976
    %v3988 = vunpack.c.h.b16 %v976
    %v3989 = vunpack.c.l.b16 %v977
    %v3990 = vunpack.c.h.b16 %v977
    %v3991 = vunpack.c.l.b16 %v978
    %v3992 = vunpack.c.h.b16 %v978
    %v3993 = vunpack.c.l.b16 %v979
    %v3994 = vunpack.c.h.b16 %v979
    %v3995 = vunpack.c.l.b16 %v980
    %v3996 = vunpack.c.h.b16 %v980
    %v3997 = vunpack.c.l.b16 %v981
    %v3998 = vunpack.c.h.b16 %v981
    %v3999 = vunpack.c.l.b16 %v982
    %v4000 = vunpack.c.h.b16 %v982
    %v4001 = vunpack.c.l.b16 %v983
    %v4002 = vunpack.c.h.b16 %v983
    %v4003 = vunpack.c.l.b16 %v984
    %v4004 = vunpack.c.h.b16 %v984
    %v4005 = vunpack.c.l.b16 %v985
    %v4006 = vunpack.c.h.b16 %v985
    %v4007 = vunpack.c.l.b16 %v986
    %v4008 = vunpack.c.h.b16 %v986
    %v4009 = vunpack.c.l.b16 %v987
    %v4010 = vunpack.c.h.b16 %v987
    %v4011 = vunpack.c.l.b16 %v988
    %v4012 = vunpack.c.h.b16 %v988
    %v4013 = vunpack.c.l.b16 %v989
    %v4014 = vunpack.c.h.b16 %v989
    %v4015 = vunpack.c.l.b16 %v990
    %v4016 = vunpack.c.h.b16 %v990
    %v4017 = vunpack.c.l.b16 %v991
    %v4018 = vunpack.c.h.b16 %v991
    %v4019 = vunpack.c.l.b16 %v992
    %v4020 = vunpack.c.h.b16 %v992
    %v4021 = vunpack.c.l.b16 %v993
    %v4022 = vunpack.c.h.b16 %v993
    %v4023 = vunpack.c.l.b16 %v994
    %v4024 = vunpack.c.h.b16 %v994
    %v4025 = vunpack.c.l.b16 %v995
    %v4026 = vunpack.c.h.b16 %v995
    %v4027 = vunpack.c.l.b16 %v996
    %v4028 = vunpack.c.h.b16 %v996
    %v4029 = vunpack.c.l.b16 %v997
    %v4030 = vunpack.c.h.b16 %v997
    %v4031 = vunpack.c.l.b16 %v998
    %v4032 = vunpack.c.h.b16 %v998
    %v4033 = vunpack.c.l.b16 %v999
    %v4034 = vunpack.c.h.b16 %v999
    %v4035 = vunpack.c.l.b16 %v1000
    %v4036 = vunpack.c.h.b16 %v1000
    %v4037 = vunpack.c.l.b16 %v1001
    %v4038 = vunpack.c.h.b16 %v1001
    %v4039 = vunpack.c.l.b16 %v1002
    %v4040 = vunpack.c.h.b16 %v1002
    %v4041 = vunpack.c.l.b16 %v1003
    %v4042 = vunpack.c.h.b16 %v1003
    %v4043 = vunpack.c.l.b16 %v1004
    %v4044 = vunpack.c.h.b16 %v1004
    %v4045 = vunpack.c.l.b16 %v1005
    %v4046 = vunpack.c.h.b16 %v1005
    %v4047 = vunpack.c.l.b16 %v1006
    %v4048 = vunpack.c.h.b16 %v1006
    %v4049 = vunpack.c.l.b16 %v1007
    %v4050 = vunpack.c.h.b16 %v1007
    %v4051 = vunpack.c.l.b16 %v1008
    %v4052 = vunpack.c.h.b16 %v1008
    %v4053 = vunpack.c.l.b16 %v1009
    %v4054 = vunpack.c.h.b16 %v1009
    %v4055 = vunpack.c.l.b16 %v1010
    %v4056 = vunpack.c.h.b16 %v1010
    %v4057 = vunpack.c.l.b16 %v1011
    %v4058 = vunpack.c.h.b16 %v1011
    %v4059 = vunpack.c.l.b16 %v1012
    %v4060 = vunpack.c.h.b16 %v1012
    %v4061 = vunpack.c.l.b16 %v1013
    %v4062 = vunpack.c.h.b16 %v1013
    %v4063 = vunpack.c.l.b16 %v1014
    %v4064 = vunpack.c.h.b16 %v1014
    %v4065 = vunpack.c.l.b16 %v1015
    %v4066 = vunpack.c.h.b16 %v1015
    %v4067 = vunpack.c.l.b16 %v1016
    %v4068 = vunpack.c.h.b16 %v1016
    %v4069 = vunpack.c.l.b16 %v1017
    %v4070 = vunpack.c.h.b16 %v1017
    %v4071 = vunpack.c.l.b16 %v1018
    %v4072 = vunpack.c.h.b16 %v1018
    %v4073 = vunpack.c.l.b16 %v1019
    %v4074 = vunpack.c.h.b16 %v1019
    %v4075 = vunpack.c.l.b16 %v1020
    %v4076 = vunpack.c.h.b16 %v1020
    %v4077 = vunpack.c.l.b16 %v1021
    %v4078 = vunpack.c.h.b16 %v1021
    %v4079 = vunpack.c.l.b16 %v1022
    %v4080 = vunpack.c.h.b16 %v1022
    %v4081 = vunpack.c.l.b16 %v1023
    %v4082 = vunpack.c.h.b16 %v1023
    %v4083 = vunpack.c.l.b16 %v1024
    %v4084 = vunpack.c.h.b16 %v1024
    %v4085 = vunpack.c.l.b16 %v1025
    %v4086 = vunpack.c.h.b16 %v1025
    %v4087 = vunpack.c.l.b16 %v1026
    %v4088 = vunpack.c.h.b16 %v1026
    %v4089 = vunpack.c.l.b16 %v1027
    %v4090 = vunpack.c.h.b16 %v1027
    %v4091 = vunpack.c.l.b16 %v1028
    %v4092 = vunpack.c.h.b16 %v1028
    %v4093 = vunpack.c.l.b16 %v1029
    %v4094 = vunpack.c.h.b16 %v1029
    %v4095 = vunpack.c.l.b16 %v1030
    %v4096 = vunpack.c.h.b16 %v1030
    %v4097 = vunpack.c.l.b16 %v1031
    %v4098 = vunpack.c.h.b16 %v1031
    %v4099 = vunpack.c.l.b16 %v1032
    %v4100 = vunpack.c.h.b16 %v1032
    %v4101 = vunpack.c.l.b16 %v1033
    %v4102 = vunpack.c.h.b16 %v1033
    %v4103 = vunpack.c.l.b16 %v1034
    %v4104 = vunpack.c.h.b16 %v1034
    %v4105 = vunpack.c.l.b16 %v1035
    %v4106 = vunpack.c.h.b16 %v1035
    %v4107 = vunpack.c.l.b16 %v1036
    %v4108 = vunpack.c.h.b16 %v1036
    %v4109 = vunpack.c.l.b16 %v1037
    %v4110 = vunpack.c.h.b16 %v1037
    %v4111 = vunpack.c.l.b16 %v1038
    %v4112 = vunpack.c.h.b16 %v1038
    %v4113 = vunpack.c.l.b16 %v1039
    %v4114 = vunpack.c.h.b16 %v1039
    %v4115 = vunpack.c.l.b16 %v1040
    %v4116 = vunpack.c.h.b16 %v1040
    %v4117 = vunpack.c.l.b16 %v1041
    %v4118 = vunpack.c.h.b16 %v1041
    %v4119 = vunpack.c.l.b16 %v1042
    %v4120 = vunpack.c.h.b16 %v1042
    %v4121 = vunpack.c.l.b16 %v1043
    %v4122 = vunpack.c.h.b16 %v1043
    %v4123 = vunpack.c.l.b16 %v1044
    %v4124 = vunpack.c.h.b16 %v1044
    %v4125 = vunpack.c.l.b16 %v1045
    %v4126 = vunpack.c.h.b16 %v1045
    %v4127 = vunpack.c.l.b16 %v1046
    %v4128 = vunpack.c.h.b16 %v1046
    %v4129 = vunpack.c.l.b16 %v1047
    %v4130 = vunpack.c.h.b16 %v1047
    %v4131 = vunpack.c.l.b16 %v1048
    %v4132 = vunpack.c.h.b16 %v1048
    %v4133 = vunpack.c.l.b16 %v1049
    %v4134 = vunpack.c.h.b16 %v1049
    %v4135 = vunpack.c.l.b16 %v1050
    %v4136 = vunpack.c.h.b16 %v1050
    %v4137 = vunpack.c.l.b16 %v1051
    %v4138 = vunpack.c.h.b16 %v1051
    %v4139 = vunpack.c.l.b16 %v1052
    %v4140 = vunpack.c.h.b16 %v1052
    %v4141 = vunpack.c.l.b16 %v1053
    %v4142 = vunpack.c.h.b16 %v1053
    %v4143 = vunpack.c.l.b16 %v1054
    %v4144 = vunpack.c.h.b16 %v1054
    %v4145 = vunpack.c.l.b16 %v1055
    %v4146 = vunpack.c.h.b16 %v1055
    %v4147 = vunpack.c.l.b16 %v1056
    %v4148 = vunpack.c.h.b16 %v1056
    %v4149 = vunpack.c.l.b16 %v1057
    %v4150 = vunpack.c.h.b16 %v1057
    %v4151 = vunpack.c.l.b16 %v1058
    %v4152 = vunpack.c.h.b16 %v1058
    %v4153 = vunpack.c.l.b16 %v1059
    %v4154 = vunpack.c.h.b16 %v1059
    %v4155 = vunpack.c.l.b16 %v1060
    %v4156 = vunpack.c.h.b16 %v1060
    %v4157 = vunpack.c.l.b16 %v1061
    %v4158 = vunpack.c.h.b16 %v1061
    %v4159 = vunpack.c.l.b16 %v1062
    %v4160 = vunpack.c.h.b16 %v1062
    %v4161 = vunpack.c.l.b16 %v1063
    %v4162 = vunpack.c.h.b16 %v1063
    %v4163 = vunpack.c.l.b16 %v1064
    %v4164 = vunpack.c.h.b16 %v1064
    %v4165 = vunpack.c.l.b16 %v1065
    %v4166 = vunpack.c.h.b16 %v1065
    %v4167 = vunpack.c.l.b16 %v1066
    %v4168 = vunpack.c.h.b16 %v1066
    %v4169 = vunpack.c.l.b16 %v1067
    %v4170 = vunpack.c.h.b16 %v1067
    %v4171 = vunpack.c.l.b16 %v1068
    %v4172 = vunpack.c.h.b16 %v1068
    %v4173 = vunpack.c.l.b16 %v1069
    %v4174 = vunpack.c.h.b16 %v1069
    %v4175 = vunpack.c.l.b16 %v1070
    %v4176 = vunpack.c.h.b16 %v1070
    %v4177 = vunpack.c.l.b16 %v1071
    %v4178 = vunpack.c.h.b16 %v1071
    %v4179 = vunpack.c.l.b16 %v1072
    %v4180 = vunpack.c.h.b16 %v1072
    %v4181 = vunpack.c.l.b16 %v1073
    %v4182 = vunpack.c.h.b16 %v1073
    %v4183 = vunpack.c.l.b16 %v1074
    %v4184 = vunpack.c.h.b16 %v1074
    %v4185 = vunpack.c.l.b16 %v1075
    %v4186 = vunpack.c.h.b16 %v1075
    %v4187 = vunpack.c.l.b16 %v1076
    %v4188 = vunpack.c.h.b16 %v1076
    %v4189 = vunpack.c.l.b16 %v1077
    %v4190 = vunpack.c.h.b16 %v1077
    %v4191 = vunpack.c.l.b16 %v1078
    %v4192 = vunpack.c.h.b16 %v1078
    %v4193 = vunpack.c.l.b16 %v1079
    %v4194 = vunpack.c.h.b16 %v1079
    %v4195 = vunpack.c.l.b16 %v1080
    %v4196 = vunpack.c.h.b16 %v1080
    %v4197 = vunpack.c.l.b16 %v1081
    %v4198 = vunpack.c.h.b16 %v1081
    %v4199 = vunpack.c.l.b16 %v1082
    %v4200 = vunpack.c.h.b16 %v1082
    %v4201 = vunpack.c.l.b16 %v1083
    %v4202 = vunpack.c.h.b16 %v1083
    %v4203 = vunpack.c.l.b16 %v1084
    %v4204 = vunpack.c.h.b16 %v1084
    %v4205 = vunpack.c.l.b16 %v1085
    %v4206 = vunpack.c.h.b16 %v1085
    %v4207 = vunpack.c.l.b16 %v1086
    %v4208 = vunpack.c.h.b16 %v1086
    %v4209 = vunpack.c.l.b16 %v1087
    %v4210 = vunpack.c.h.b16 %v1087
    %v4211 = vunpack.c.l.b16 %v1088
    %v4212 = vunpack.c.h.b16 %v1088
    %v4213 = vunpack.c.l.b16 %v1089
    %v4214 = vunpack.c.h.b16 %v1089
    %v4215 = vunpack.c.l.b16 %v1090
    %v4216 = vunpack.c.h.b16 %v1090
    %v4217 = vunpack.c.l.b16 %v1091
    %v4218 = vunpack.c.h.b16 %v1091
    %v4219 = vunpack.c.l.b16 %v1092
    %v4220 = vunpack.c.h.b16 %v1092
    %v4221 = vunpack.c.l.b16 %v1093
    %v4222 = vunpack.c.h.b16 %v1093
    %v4223 = vunpack.c.l.b16 %v1094
    %v4224 = vunpack.c.h.b16 %v1094
    %v4225 = vunpack.c.l.b16 %v1095
    %v4226 = vunpack.c.h.b16 %v1095
    %v4227 = vunpack.c.l.b16 %v1096
    %v4228 = vunpack.c.h.b16 %v1096
    %v4229 = vunpack.c.l.b16 %v1097
    %v4230 = vunpack.c.h.b16 %v1097
    %v4231 = vunpack.c.l.b16 %v1098
    %v4232 = vunpack.c.h.b16 %v1098
    %v4233 = vunpack.c.l.b16 %v1099
    %v4234 = vunpack.c.h.b16 %v1099
    %v4235 = vunpack.c.l.b16 %v1100
    %v4236 = vunpack.c.h.b16 %v1100
    %v4237 = vunpack.c.l.b16 %v1101
    %v4238 = vunpack.c.h.b16 %v1101
    %v4239 = vunpack.c.l.b16 %v1102
    %v4240 = vunpack.c.h.b16 %v1102
    %v4241 = vunpack.c.l.b16 %v1103
    %v4242 = vunpack.c.h.b16 %v1103
    %v4243 = vunpack.c.l.b16 %v1104
    %v4244 = vunpack.c.h.b16 %v1104
    %v4245 = vunpack.c.l.b16 %v1105
    %v4246 = vunpack.c.h.b16 %v1105
    %v4247 = vunpack.c.l.b16 %v1106
    %v4248 = vunpack.c.h.b16 %v1106
    %v4249 = vunpack.c.l.b16 %v1107
    %v4250 = vunpack.c.h.b16 %v1107
    %v4251 = vunpack.c.l.b16 %v1108
    %v4252 = vunpack.c.h.b16 %v1108
    %v4253 = vunpack.c.l.b16 %v1109
    %v4254 = vunpack.c.h.b16 %v1109
    %v4255 = vunpack.c.l.b16 %v1110
    %v4256 = vunpack.c.h.b16 %v1110
    %v4257 = vunpack.c.l.b16 %v1111
    %v4258 = vunpack.c.h.b16 %v1111
    %v4259 = vunpack.c.l.b16 %v1112
    %v4260 = vunpack.c.h.b16 %v1112
    %v4261 = vunpack.c.l.b16 %v1113
    %v4262 = vunpack.c.h.b16 %v1113
    %v4263 = vunpack.c.l.b16 %v1114
    %v4264 = vunpack.c.h.b16 %v1114
    %v4265 = vunpack.c.l.b16 %v1115
    %v4266 = vunpack.c.h.b16 %v1115
    %v4267 = vunpack.c.l.b16 %v1116
    %v4268 = vunpack.c.h.b16 %v1116
    %v4269 = vunpack.c.l.b16 %v1117
    %v4270 = vunpack.c.h.b16 %v1117
    %v4271 = vunpack.c.l.b16 %v1118
    %v4272 = vunpack.c.h.b16 %v1118
    %v4273 = vunpack.c.l.b16 %v1119
    %v4274 = vunpack.c.h.b16 %v1119
    %v4275 = vunpack.c.l.b16 %v1120
    %v4276 = vunpack.c.h.b16 %v1120
    %v4277 = vunpack.c.l.b16 %v1121
    %v4278 = vunpack.c.h.b16 %v1121
    %v4279 = vunpack.c.l.b16 %v1122
    %v4280 = vunpack.c.h.b16 %v1122
    %v4281 = vunpack.c.l.b16 %v1123
    %v4282 = vunpack.c.h.b16 %v1123
    %v4283 = vunpack.c.l.b16 %v1124
    %v4284 = vunpack.c.h.b16 %v1124
    %v4285 = vunpack.c.l.b16 %v1125
    %v4286 = vunpack.c.h.b16 %v1125
    %v4287 = vunpack.c.l.b16 %v1126
    %v4288 = vunpack.c.h.b16 %v1126
    %v4289 = vunpack.c.l.b16 %v1127
    %v4290 = vunpack.c.h.b16 %v1127
    %v4291 = vunpack.c.l.b16 %v1128
    %v4292 = vunpack.c.h.b16 %v1128
    %v4293 = vunpack.c.l.b16 %v1129
    %v4294 = vunpack.c.h.b16 %v1129
    %v4295 = vunpack.c.l.b16 %v1130
    %v4296 = vunpack.c.h.b16 %v1130
    %v4297 = vunpack.c.l.b16 %v1131
    %v4298 = vunpack.c.h.b16 %v1131
    %v4299 = vunpack.c.l.b16 %v1132
    %v4300 = vunpack.c.h.b16 %v1132
    %v4301 = vunpack.c.l.b16 %v1133
    %v4302 = vunpack.c.h.b16 %v1133
    %v4303 = vunpack.c.l.b16 %v1134
    %v4304 = vunpack.c.h.b16 %v1134
    %v4305 = vpack.c.b16 %v2265, %v2257
    %v4306 = vpack.c.b16 %v2266, %v2258
    %v4307 = vpack.c.b16 %v2267, %v2259
    %v4308 = vpack.c.b16 %v2268, %v2260
    %v4309 = vpack.c.b16 %v2269, %v2261
    %v4310 = vpack.c.b16 %v2270, %v2262
    %v4311 = vpack.c.b16 %v2271, %v2263
    %v4312 = vpack.c.b16 %v2272, %v2264
    %v4313 = vpack.c.b16 %v2281, %v2273
    %v4314 = vpack.c.b16 %v2282, %v2274
    %v4315 = vpack.c.b16 %v2283, %v2275
    %v4316 = vpack.c.b16 %v2284, %v2276
    %v4317 = vpack.c.b16 %v2285, %v2277
    %v4318 = vpack.c.b16 %v2286, %v2278
    %v4319 = vpack.c.b16 %v2287, %v2279
    %v4320 = vpack.c.b16 %v2288, %v2280
    %v4321 = vpack.c.b16 %v2297, %v2289
    %v4322 = vpack.c.b16 %v2298, %v2290
    %v4323 = vpack.c.b16 %v2299, %v2291
    %v4324 = vpack.c.b16 %v2300, %v2292
    %v4325 = vpack.c.b16 %v2301, %v2293
    %v4326 = vpack.c.b16 %v2302, %v2294
    %v4327 = vpack.c.b16 %v2303, %v2295
    %v4328 = vpack.c.b16 %v2304, %v2296
    %v4329 = vpack.c.b16 %v2313, %v2305
    %v4330 = vpack.c.b16 %v2314, %v2306
    %v4331 = vpack.c.b16 %v2315, %v2307
    %v4332 = vpack.c.b16 %v2316, %v2308
    %v4333 = vpack.c.b16 %v2317, %v2309
    %v4334 = vpack.c.b16 %v2318, %v2310
    %v4335 = vpack.c.b16 %v2319, %v2311
    %v4336 = vpack.c.b16 %v2320, %v2312
    %v4337 = vpack.c.b16 %v2329, %v2321
    %v4338 = vpack.c.b16 %v2330, %v2322
    %v4339 = vpack.c.b16 %v2331, %v2323
    %v4340 = vpack.c.b16 %v2332, %v2324
    %v4341 = vpack.c.b16 %v2333, %v2325
    %v4342 = vpack.c.b16 %v2334, %v2326
    %v4343 = vpack.c.b16 %v2335, %v2327
    %v4344 = vpack.c.b16 %v2336, %v2328
    %v4345 = vpack.c.b16 %v2345, %v2337
    %v4346 = vpack.c.b16 %v2346, %v2338
    %v4347 = vpack.c.b16 %v2347, %v2339
    %v4348 = vpack.c.b16 %v2348, %v2340
    %v4349 = vpack.c.b16 %v2349, %v2341
    %v4350 = vpack.c.b16 %v2350, %v2342
    %v4351 = vpack.c.b16 %v2351, %v2343
    %v4352 = vpack.c.b16 %v2352, %v2344
    %v4353 = vpack.c.b16 %v2361, %v2353
    %v4354 = vpack.c.b16 %v2362, %v2354
    %v4355 = vpack.c.b16 %v2363, %v2355
    %v4356 = vpack.c.b16 %v2364, %v2356
    %v4357 = vpack.c.b16 %v2365, %v2357
    %v4358 = vpack.c.b16 %v2366, %v2358
    %v4359 = vpack.c.b16 %v2367, %v2359
    %v4360 = vpack.c.b16 %v2368, %v2360
    %v4361 = vpack.c.b16 %v2377, %v2369
    %v4362 = vpack.c.b16 %v2378, %v2370
    %v4363 = vpack.c.b16 %v2379, %v2371
    %v4364 = vpack.c.b16 %v2380, %v2372
    %v4365 = vpack.c.b16 %v2381, %v2373
    %v4366 = vpack.c.b16 %v2382, %v2374
    %v4367 = vpack.c.b16 %v2383, %v2375
    %v4368 = vpack.c.b16 %v2384, %v2376
    %v4369 = vpack.c.b16 %v2393, %v2385
    %v4370 = vpack.c.b16 %v2394, %v2386
    %v4371 = vpack.c.b16 %v2395, %v2387
    %v4372 = vpack.c.b16 %v2396, %v2388
    %v4373 = vpack.c.b16 %v2397, %v2389
    %v4374 = vpack.c.b16 %v2398, %v2390
    %v4375 = vpack.c.b16 %v2399, %v2391
    %v4376 = vpack.c.b16 %v2400, %v2392
    %v4377 = vpack.c.b16 %v2409, %v2401
    %v4378 = vpack.c.b16 %v2410, %v2402
    %v4379 = vpack.c.b16 %v2411, %v2403
    %v4380 = vpack.c.b16 %v2412, %v2404
    %v4381 = vpack.c.b16 %v2413, %v2405
    %v4382 = vpack.c.b16 %v2414, %v2406
    %v4383 = vpack.c.b16 %v2415, %v2407
    %v4384 = vpack.c.b16 %v2416, %v2408
    %v4385 = vpack.c.b16 %v2425, %v2417
    %v4386 = vpack.c.b16 %v2426, %v2418
    %v4387 = vpack.c.b16 %v2427, %v2419
    %v4388 = vpack.c.b16 %v2428, %v2420
    %v4389 = vpack.c.b16 %v2429, %v2421
    %v4390 = vpack.c.b16 %v2430, %v2422
    %v4391 = vpack.c.b16 %v2431, %v2423
    %v4392 = vpack.c.b16 %v2432, %v2424
    %v4393 = vpack.c.b16 %v2441, %v2433
    %v4394 = vpack.c.b16 %v2442, %v2434
    %v4395 = vpack.c.b16 %v2443, %v2435
    %v4396 = vpack.c.b16 %v2444, %v2436
    %v4397 = vpack.c.b16 %v2445, %v2437
    %v4398 = vpack.c.b16 %v2446, %v2438
    %v4399 = vpack.c.b16 %v2447, %v2439
    %v4400 = vpack.c.b16 %v2448, %v2440
    %v4401 = vpack.c.b16 %v2457, %v2449
    %v4402 = vpack.c.b16 %v2458, %v2450
    %v4403 = vpack.c.b16 %v2459, %v2451
    %v4404 = vpack.c.b16 %v2460, %v2452
    %v4405 = vpack.c.b16 %v2461, %v2453
    %v4406 = vpack.c.b16 %v2462, %v2454
    %v4407 = vpack.c.b16 %v2463, %v2455
    %v4408 = vpack.c.b16 %v2464, %v2456
    %v4409 = vpack.c.b16 %v2473, %v2465
    %v4410 = vpack.c.b16 %v2474, %v2466
    %v4411 = vpack.c.b16 %v2475, %v2467
    %v4412 = vpack.c.b16 %v2476, %v2468
    %v4413 = vpack.c.b16 %v2477, %v2469
    %v4414 = vpack.c.b16 %v2478, %v2470
    %v4415 = vpack.c.b16 %v2479, %v2471
    %v4416 = vpack.c.b16 %v2480, %v2472
    %v4417 = vpack.c.b16 %v2489, %v2481
    %v4418 = vpack.c.b16 %v2490, %v2482
    %v4419 = vpack.c.b16 %v2491, %v2483
    %v4420 = vpack.c.b16 %v2492, %v2484
    %v4421 = vpack.c.b16 %v2493, %v2485
    %v4422 = vpack.c.b16 %v2494, %v2486
    %v4423 = vpack.c.b16 %v2495, %v2487
    %v4424 = vpack.c.b16 %v2496, %v2488
    %v4425 = vpack.c.b16 %v2505, %v2497
    %v4426 = vpack.c.b16 %v2506, %v2498
    %v4427 = vpack.c.b16 %v2507, %v2499
    %v4428 = vpack.c.b16 %v2508, %v2500
    %v4429 = vpack.c.b16 %v2509, %v2501
    %v4430 = vpack.c.b16 %v2510, %v2502
    %v4431 = vpack.c.b16 %v2511, %v2503
    %v4432 = vpack.c.b16 %v2512, %v2504
    %v4433 = vpack.c.b16 %v2521, %v2513
    %v4434 = vpack.c.b16 %v2522, %v2514
    %v4435 = vpack.c.b16 %v2523, %v2515
    %v4436 = vpack.c.b16 %v2524, %v2516
    %v4437 = vpack.c.b16 %v2525, %v2517
    %v4438 = vpack.c.b16 %v2526, %v2518
    %v4439 = vpack.c.b16 %v2527, %v2519
    %v4440 = vpack.c.b16 %v2528, %v2520
    %v4441 = vpack.c.b16 %v2537, %v2529
    %v4442 = vpack.c.b16 %v2538, %v2530
    %v4443 = vpack.c.b16 %v2539, %v2531
    %v4444 = vpack.c.b16 %v2540, %v2532
    %v4445 = vpack.c.b16 %v2541, %v2533
    %v4446 = vpack.c.b16 %v2542, %v2534
    %v4447 = vpack.c.b16 %v2543, %v2535
    %v4448 = vpack.c.b16 %v2544, %v2536
    %v4449 = vpack.c.b16 %v2553, %v2545
    %v4450 = vpack.c.b16 %v2554, %v2546
    %v4451 = vpack.c.b16 %v2555, %v2547
    %v4452 = vpack.c.b16 %v2556, %v2548
    %v4453 = vpack.c.b16 %v2557, %v2549
    %v4454 = vpack.c.b16 %v2558, %v2550
    %v4455 = vpack.c.b16 %v2559, %v2551
    %v4456 = vpack.c.b16 %v2560, %v2552
    %v4457 = vpack.c.b16 %v2569, %v2561
    %v4458 = vpack.c.b16 %v2570, %v2562
    %v4459 = vpack.c.b16 %v2571, %v2563
    %v4460 = vpack.c.b16 %v2572, %v2564
    %v4461 = vpack.c.b16 %v2573, %v2565
    %v4462 = vpack.c.b16 %v2574, %v2566
    %v4463 = vpack.c.b16 %v2575, %v2567
    %v4464 = vpack.c.b16 %v2576, %v2568
    %v4465 = vpack.c.b16 %v2585, %v2577
    %v4466 = vpack.c.b16 %v2586, %v2578
    %v4467 = vpack.c.b16 %v2587, %v2579
    %v4468 = vpack.c.b16 %v2588, %v2580
    %v4469 = vpack.c.b16 %v2589, %v2581
    %v4470 = vpack.c.b16 %v2590, %v2582
    %v4471 = vpack.c.b16 %v2591, %v2583
    %v4472 = vpack.c.b16 %v2592, %v2584
    %v4473 = vpack.c.b16 %v2601, %v2593
    %v4474 = vpack.c.b16 %v2602, %v2594
    %v4475 = vpack.c.b16 %v2603, %v2595
    %v4476 = vpack.c.b16 %v2604, %v2596
    %v4477 = vpack.c.b16 %v2605, %v2597
    %v4478 = vpack.c.b16 %v2606, %v2598
    %v4479 = vpack.c.b16 %v2607, %v2599
    %v4480 = vpack.c.b16 %v2608, %v2600
    %v4481 = vpack.c.b16 %v2617, %v2609
    %v4482 = vpack.c.b16 %v2618, %v2610
    %v4483 = vpack.c.b16 %v2619, %v2611
    %v4484 = vpack.c.b16 %v2620, %v2612
    %v4485 = vpack.c.b16 %v2621, %v2613
    %v4486 = vpack.c.b16 %v2622, %v2614
    %v4487 = vpack.c.b16 %v2623, %v2615
    %v4488 = vpack.c.b16 %v2624, %v2616
    %v4489 = vpack.c.b16 %v2633, %v2625
    %v4490 = vpack.c.b16 %v2634, %v2626
    %v4491 = vpack.c.b16 %v2635, %v2627
    %v4492 = vpack.c.b16 %v2636, %v2628
    %v4493 = vpack.c.b16 %v2637, %v2629
    %v4494 = vpack.c.b16 %v2638, %v2630
    %v4495 = vpack.c.b16 %v2639, %v2631
    %v4496 = vpack.c.b16 %v2640, %v2632
    %v4497 = vpack.c.b16 %v2649, %v2641
    %v4498 = vpack.c.b16 %v2650, %v2642
    %v4499 = vpack.c.b16 %v2651, %v2643
    %v4500 = vpack.c.b16 %v2652, %v2644
    %v4501 = vpack.c.b16 %v2653, %v2645
    %v4502 = vpack.c.b16 %v2654, %v2646
    %v4503 = vpack.c.b16 %v2655, %v2647
    %v4504 = vpack.c.b16 %v2656, %v2648
    %v4505 = vpack.c.b16 %v2665, %v2657
    %v4506 = vpack.c.b16 %v2666, %v2658
    %v4507 = vpack.c.b16 %v2667, %v2659
    %v4508 = vpack.c.b16 %v2668, %v2660
    %v4509 = vpack.c.b16 %v2669, %v2661
    %v4510 = vpack.c.b16 %v2670, %v2662
    %v4511 = vpack.c.b16 %v2671, %v2663
    %v4512 = vpack.c.b16 %v2672, %v2664
    %v4513 = vpack.c.b16 %v2681, %v2673
    %v4514 = vpack.c.b16 %v2682, %v2674
    %v4515 = vpack.c.b16 %v2683, %v2675
    %v4516 = vpack.c.b16 %v2684, %v2676
    %v4517 = vpack.c.b16 %v2685, %v2677
    %v4518 = vpack.c.b16 %v2686, %v2678
    %v4519 = vpack.c.b16 %v2687, %v2679
    %v4520 = vpack.c.b16 %v2688, %v2680
    %v4521 = vpack.c.b16 %v2697, %v2689
    %v4522 = vpack.c.b16 %v2698, %v2690
    %v4523 = vpack.c.b16 %v2699, %v2691
    %v4524 = vpack.c.b16 %v2700, %v2692
    %v4525 = vpack.c.b16 %v2701, %v2693
    %v4526 = vpack.c.b16 %v2702, %v2694
    %v4527 = vpack.c.b16 %v2703, %v2695
    %v4528 = vpack.c.b16 %v2704, %v2696
    %v4529 = vpack.c.b16 %v2713, %v2705
    %v4530 = vpack.c.b16 %v2714, %v2706
    %v4531 = vpack.c.b16 %v2715, %v2707
    %v4532 = vpack.c.b16 %v2716, %v2708
    %v4533 = vpack.c.b16 %v2717, %v2709
    %v4534 = vpack.c.b16 %v2718, %v2710
    %v4535 = vpack.c.b16 %v2719, %v2711
    %v4536 = vpack.c.b16 %v2720, %v2712
    %v4537 = vpack.c.b16 %v2729, %v2721
    %v4538 = vpack.c.b16 %v2730, %v2722
    %v4539 = vpack.c.b16 %v2731, %v2723
    %v4540 = vpack.c.b16 %v2732, %v2724
    %v4541 = vpack.c.b16 %v2733, %v2725
    %v4542 = vpack.c.b16 %v2734, %v2726
    %v4543 = vpack.c.b16 %v2735, %v2727
    %v4544 = vpack.c.b16 %v2736, %v2728
    %v4545 = vpack.c.b16 %v2745, %v2737
    %v4546 = vpack.c.b16 %v2746, %v2738
    %v4547 = vpack.c.b16 %v2747, %v2739
    %v4548 = vpack.c.b16 %v2748, %v2740
    %v4549 = vpack.c.b16 %v2749, %v2741
    %v4550 = vpack.c.b16 %v2750, %v2742
    %v4551 = vpack.c.b16 %v2751, %v2743
    %v4552 = vpack.c.b16 %v2752, %v2744
    %v4553 = vpack.c.b16 %v2761, %v2753
    %v4554 = vpack.c.b16 %v2762, %v2754
    %v4555 = vpack.c.b16 %v2763, %v2755
    %v4556 = vpack.c.b16 %v2764, %v2756
    %v4557 = vpack.c.b16 %v2765, %v2757
    %v4558 = vpack.c.b16 %v2766, %v2758
    %v4559 = vpack.c.b16 %v2767, %v2759
    %v4560 = vpack.c.b16 %v2768, %v2760
    %v4561 = vpack.c.b16 %v2777, %v2769
    %v4562 = vpack.c.b16 %v2778, %v2770
    %v4563 = vpack.c.b16 %v2779, %v2771
    %v4564 = vpack.c.b16 %v2780, %v2772
    %v4565 = vpack.c.b16 %v2781, %v2773
    %v4566 = vpack.c.b16 %v2782, %v2774
    %v4567 = vpack.c.b16 %v2783, %v2775
    %v4568 = vpack.c.b16 %v2784, %v2776
    %v4569 = vpack.c.b16 %v2793, %v2785
    %v4570 = vpack.c.b16 %v2794, %v2786
    %v4571 = vpack.c.b16 %v2795, %v2787
    %v4572 = vpack.c.b16 %v2796, %v2788
    %v4573 = vpack.c.b16 %v2797, %v2789
    %v4574 = vpack.c.b16 %v2798, %v2790
    %v4575 = vpack.c.b16 %v2799, %v2791
    %v4576 = vpack.c.b16 %v2800, %v2792
    %v4577 = vpack.c.b16 %v2809, %v2801
    %v4578 = vpack.c.b16 %v2810, %v2802
    %v4579 = vpack.c.b16 %v2811, %v2803
    %v4580 = vpack.c.b16 %v2812, %v2804
    %v4581 = vpack.c.b16 %v2813, %v2805
    %v4582 = vpack.c.b16 %v2814, %v2806
    %v4583 = vpack.c.b16 %v2815, %v2807
    %v4584 = vpack.c.b16 %v2816, %v2808
    %v4585 = vpack.c.b16 %v2825, %v2817
    %v4586 = vpack.c.b16 %v2826, %v2818
    %v4587 = vpack.c.b16 %v2827, %v2819
    %v4588 = vpack.c.b16 %v2828, %v2820
    %v4589 = vpack.c.b16 %v2829, %v2821
    %v4590 = vpack.c.b16 %v2830, %v2822
    %v4591 = vpack.c.b16 %v2831, %v2823
    %v4592 = vpack.c.b16 %v2832, %v2824
    %v4593 = vpack.c.b16 %v2841, %v2833
    %v4594 = vpack.c.b16 %v2842, %v2834
    %v4595 = vpack.c.b16 %v2843, %v2835
    %v4596 = vpack.c.b16 %v2844, %v2836
    %v4597 = vpack.c.b16 %v2845, %v2837
    %v4598 = vpack.c.b16 %v2846, %v2838
    %v4599 = vpack.c.b16 %v2847, %v2839
    %v4600 = vpack.c.b16 %v2848, %v2840
    %v4601 = vpack.c.b16 %v2857, %v2849
    %v4602 = vpack.c.b16 %v2858, %v2850
    %v4603 = vpack.c.b16 %v2859, %v2851
    %v4604 = vpack.c.b16 %v2860, %v2852
    %v4605 = vpack.c.b16 %v2861, %v2853
    %v4606 = vpack.c.b16 %v2862, %v2854
    %v4607 = vpack.c.b16 %v2863, %v2855
    %v4608 = vpack.c.b16 %v2864, %v2856
    %v4609 = vpack.c.b16 %v2873, %v2865
    %v4610 = vpack.c.b16 %v2874, %v2866
    %v4611 = vpack.c.b16 %v2875, %v2867
    %v4612 = vpack.c.b16 %v2876, %v2868
    %v4613 = vpack.c.b16 %v2877, %v2869
    %v4614 = vpack.c.b16 %v2878, %v2870
    %v4615 = vpack.c.b16 %v2879, %v2871
    %v4616 = vpack.c.b16 %v2880, %v2872
    %v4617 = vpack.c.b16 %v2889, %v2881
    %v4618 = vpack.c.b16 %v2890, %v2882
    %v4619 = vpack.c.b16 %v2891, %v2883
    %v4620 = vpack.c.b16 %v2892, %v2884
    %v4621 = vpack.c.b16 %v2893, %v2885
    %v4622 = vpack.c.b16 %v2894, %v2886
    %v4623 = vpack.c.b16 %v2895, %v2887
    %v4624 = vpack.c.b16 %v2896, %v2888
    %v4625 = vpack.c.b16 %v2905, %v2897
    %v4626 = vpack.c.b16 %v2906, %v2898
    %v4627 = vpack.c.b16 %v2907, %v2899
    %v4628 = vpack.c.b16 %v2908, %v2900
    %v4629 = vpack.c.b16 %v2909, %v2901
    %v4630 = vpack.c.b16 %v2910, %v2902
    %v4631 = vpack.c.b16 %v2911, %v2903
    %v4632 = vpack.c.b16 %v2912, %v2904
    %v4633 = vpack.c.b16 %v2921, %v2913
    %v4634 = vpack.c.b16 %v2922, %v2914
    %v4635 = vpack.c.b16 %v2923, %v2915
    %v4636 = vpack.c.b16 %v2924, %v2916
    %v4637 = vpack.c.b16 %v2925, %v2917
    %v4638 = vpack.c.b16 %v2926, %v2918
    %v4639 = vpack.c.b16 %v2927, %v2919
    %v4640 = vpack.c.b16 %v2928, %v2920
    %v4641 = vpack.c.b16 %v2937, %v2929
    %v4642 = vpack.c.b16 %v2938, %v2930
    %v4643 = vpack.c.b16 %v2939, %v2931
    %v4644 = vpack.c.b16 %v2940, %v2932
    %v4645 = vpack.c.b16 %v2941, %v2933
    %v4646 = vpack.c.b16 %v2942, %v2934
    %v4647 = vpack.c.b16 %v2943, %v2935
    %v4648 = vpack.c.b16 %v2944, %v2936
    %v4649 = vpack.c.b16 %v2953, %v2945
    %v4650 = vpack.c.b16 %v2954, %v2946
    %v4651 = vpack.c.b16 %v2955, %v2947
    %v4652 = vpack.c.b16 %v2956, %v2948
    %v4653 = vpack.c.b16 %v2957, %v2949
    %v4654 = vpack.c.b16 %v2958, %v2950
    %v4655 = vpack.c.b16 %v2959, %v2951
    %v4656 = vpack.c.b16 %v2960, %v2952
    %v4657 = vpack.c.b16 %v2969, %v2961
    %v4658 = vpack.c.b16 %v2970, %v2962
    %v4659 = vpack.c.b16 %v2971, %v2963
    %v4660 = vpack.c.b16 %v2972, %v2964
    %v4661 = vpack.c.b16 %v2973, %v2965
    %v4662 = vpack.c.b16 %v2974, %v2966
    %v4663 = vpack.c.b16 %v2975, %v2967
    %v4664 = vpack.c.b16 %v2976, %v2968
    %v4665 = vpack.c.b16 %v2985, %v2977
    %v4666 = vpack.c.b16 %v2986, %v2978
    %v4667 = vpack.c.b16 %v2987, %v2979
    %v4668 = vpack.c.b16 %v2988, %v2980
    %v4669 = vpack.c.b16 %v2989, %v2981
    %v4670 = vpack.c.b16 %v2990, %v2982
    %v4671 = vpack.c.b16 %v2991, %v2983
    %v4672 = vpack.c.b16 %v2992, %v2984
    %v4673 = vpack.c.b16 %v3001, %v2993
    %v4674 = vpack.c.b16 %v3002, %v2994
    %v4675 = vpack.c.b16 %v3003, %v2995
    %v4676 = vpack.c.b16 %v3004, %v2996
    %v4677 = vpack.c.b16 %v3005, %v2997
    %v4678 = vpack.c.b16 %v3006, %v2998
    %v4679 = vpack.c.b16 %v3007, %v2999
    %v4680 = vpack.c.b16 %v3008, %v3000
    %v4681 = vpack.c.b16 %v3017, %v3009
    %v4682 = vpack.c.b16 %v3018, %v3010
    %v4683 = vpack.c.b16 %v3019, %v3011
    %v4684 = vpack.c.b16 %v3020, %v3012
    %v4685 = vpack.c.b16 %v3021, %v3013
    %v4686 = vpack.c.b16 %v3022, %v3014
    %v4687 = vpack.c.b16 %v3023, %v3015
    %v4688 = vpack.c.b16 %v3024, %v3016
    %v4689 = vpack.c.b16 %v3033, %v3025
    %v4690 = vpack.c.b16 %v3034, %v3026
    %v4691 = vpack.c.b16 %v3035, %v3027
    %v4692 = vpack.c.b16 %v3036, %v3028
    %v4693 = vpack.c.b16 %v3037, %v3029
    %v4694 = vpack.c.b16 %v3038, %v3030
    %v4695 = vpack.c.b16 %v3039, %v3031
    %v4696 = vpack.c.b16 %v3040, %v3032
    %v4697 = vpack.c.b16 %v3049, %v3041
    %v4698 = vpack.c.b16 %v3050, %v3042
    %v4699 = vpack.c.b16 %v3051, %v3043
    %v4700 = vpack.c.b16 %v3052, %v3044
    %v4701 = vpack.c.b16 %v3053, %v3045
    %v4702 = vpack.c.b16 %v3054, %v3046
    %v4703 = vpack.c.b16 %v3055, %v3047
    %v4704 = vpack.c.b16 %v3056, %v3048
    %v4705 = vpack.c.b16 %v3065, %v3057
    %v4706 = vpack.c.b16 %v3066, %v3058
    %v4707 = vpack.c.b16 %v3067, %v3059
    %v4708 = vpack.c.b16 %v3068, %v3060
    %v4709 = vpack.c.b16 %v3069, %v3061
    %v4710 = vpack.c.b16 %v3070, %v3062
    %v4711 = vpack.c.b16 %v3071, %v3063
    %v4712 = vpack.c.b16 %v3072, %v3064
    %v4713 = vpack.c.b16 %v3081, %v3073
    %v4714 = vpack.c.b16 %v3082, %v3074
    %v4715 = vpack.c.b16 %v3083, %v3075
    %v4716 = vpack.c.b16 %v3084, %v3076
    %v4717 = vpack.c.b16 %v3085, %v3077
    %v4718 = vpack.c.b16 %v3086, %v3078
    %v4719 = vpack.c.b16 %v3087, %v3079
    %v4720 = vpack.c.b16 %v3088, %v3080
    %v4721 = vpack.c.b16 %v3097, %v3089
    %v4722 = vpack.c.b16 %v3098, %v3090
    %v4723 = vpack.c.b16 %v3099, %v3091
    %v4724 = vpack.c.b16 %v3100, %v3092
    %v4725 = vpack.c.b16 %v3101, %v3093
    %v4726 = vpack.c.b16 %v3102, %v3094
    %v4727 = vpack.c.b16 %v3103, %v3095
    %v4728 = vpack.c.b16 %v3104, %v3096
    %v4729 = vpack.c.b16 %v3113, %v3105
    %v4730 = vpack.c.b16 %v3114, %v3106
    %v4731 = vpack.c.b16 %v3115, %v3107
    %v4732 = vpack.c.b16 %v3116, %v3108
    %v4733 = vpack.c.b16 %v3117, %v3109
    %v4734 = vpack.c.b16 %v3118, %v3110
    %v4735 = vpack.c.b16 %v3119, %v3111
    %v4736 = vpack.c.b16 %v3120, %v3112
    %v4737 = vpack.c.b16 %v3129, %v3121
    %v4738 = vpack.c.b16 %v3130, %v3122
    %v4739 = vpack.c.b16 %v3131, %v3123
    %v4740 = vpack.c.b16 %v3132, %v3124
    %v4741 = vpack.c.b16 %v3133, %v3125
    %v4742 = vpack.c.b16 %v3134, %v3126
    %v4743 = vpack.c.b16 %v3135, %v3127
    %v4744 = vpack.c.b16 %v3136, %v3128
    %v4745 = vpack.c.b16 %v3145, %v3137
    %v4746 = vpack.c.b16 %v3146, %v3138
    %v4747 = vpack.c.b16 %v3147, %v3139
    %v4748 = vpack.c.b16 %v3148, %v3140
    %v4749 = vpack.c.b16 %v3149, %v3141
    %v4750 = vpack.c.b16 %v3150, %v3142
    %v4751 = vpack.c.b16 %v3151, %v3143
    %v4752 = vpack.c.b16 %v3152, %v3144
    %v4753 = vpack.c.b16 %v3161, %v3153
    %v4754 = vpack.c.b16 %v3162, %v3154
    %v4755 = vpack.c.b16 %v3163, %v3155
    %v4756 = vpack.c.b16 %v3164, %v3156
    %v4757 = vpack.c.b16 %v3165, %v3157
    %v4758 = vpack.c.b16 %v3166, %v3158
    %v4759 = vpack.c.b16 %v3167, %v3159
    %v4760 = vpack.c.b16 %v3168, %v3160
    %v4761 = vpack.c.b16 %v3177, %v3169
    %v4762 = vpack.c.b16 %v3178, %v3170
    %v4763 = vpack.c.b16 %v3179, %v3171
    %v4764 = vpack.c.b16 %v3180, %v3172
    %v4765 = vpack.c.b16 %v3181, %v3173
    %v4766 = vpack.c.b16 %v3182, %v3174
    %v4767 = vpack.c.b16 %v3183, %v3175
    %v4768 = vpack.c.b16 %v3184, %v3176
    %v4769 = vpack.c.b16 %v3193, %v3185
    %v4770 = vpack.c.b16 %v3194, %v3186
    %v4771 = vpack.c.b16 %v3195, %v3187
    %v4772 = vpack.c.b16 %v3196, %v3188
    %v4773 = vpack.c.b16 %v3197, %v3189
    %v4774 = vpack.c.b16 %v3198, %v3190
    %v4775 = vpack.c.b16 %v3199, %v3191
    %v4776 = vpack.c.b16 %v3200, %v3192
    %v4777 = vpack.c.b16 %v3209, %v3201
    %v4778 = vpack.c.b16 %v3210, %v3202
    %v4779 = vpack.c.b16 %v3211, %v3203
    %v4780 = vpack.c.b16 %v3212, %v3204
    %v4781 = vpack.c.b16 %v3213, %v3205
    %v4782 = vpack.c.b16 %v3214, %v3206
    %v4783 = vpack.c.b16 %v3215, %v3207
    %v4784 = vpack.c.b16 %v3216, %v3208
    %v4785 = vpack.c.b16 %v3225, %v3217
    %v4786 = vpack.c.b16 %v3226, %v3218
    %v4787 = vpack.c.b16 %v3227, %v3219
    %v4788 = vpack.c.b16 %v3228, %v3220
    %v4789 = vpack.c.b16 %v3229, %v3221
    %v4790 = vpack.c.b16 %v3230, %v3222
    %v4791 = vpack.c.b16 %v3231, %v3223
    %v4792 = vpack.c.b16 %v3232, %v3224
    %v4793 = vpack.c.b16 %v3241, %v3233
    %v4794 = vpack.c.b16 %v3242, %v3234
    %v4795 = vpack.c.b16 %v3243, %v3235
    %v4796 = vpack.c.b16 %v3244, %v3236
    %v4797 = vpack.c.b16 %v3245, %v3237
    %v4798 = vpack.c.b16 %v3246, %v3238
    %v4799 = vpack.c.b16 %v3247, %v3239
    %v4800 = vpack.c.b16 %v3248, %v3240
    %v4801 = vpack.c.b16 %v3257, %v3249
    %v4802 = vpack.c.b16 %v3258, %v3250
    %v4803 = vpack.c.b16 %v3259, %v3251
    %v4804 = vpack.c.b16 %v3260, %v3252
    %v4805 = vpack.c.b16 %v3261, %v3253
    %v4806 = vpack.c.b16 %v3262, %v3254
    %v4807 = vpack.c.b16 %v3263, %v3255
    %v4808 = vpack.c.b16 %v3264, %v3256
    %v4809 = vpack.c.b16 %v3273, %v3265
    %v4810 = vpack.c.b16 %v3274, %v3266
    %v4811 = vpack.c.b16 %v3275, %v3267
    %v4812 = vpack.c.b16 %v3276, %v3268
    %v4813 = vpack.c.b16 %v3277, %v3269
    %v4814 = vpack.c.b16 %v3278, %v3270
    %v4815 = vpack.c.b16 %v3279, %v3271
    %v4816 = vpack.c.b16 %v3280, %v3272
    %v4817 = vpack.c.b16 %v3289, %v3281
    %v4818 = vpack.c.b16 %v3290, %v3282
    %v4819 = vpack.c.b16 %v3291, %v3283
    %v4820 = vpack.c.b16 %v3292, %v3284
    %v4821 = vpack.c.b16 %v3293, %v3285
    %v4822 = vpack.c.b16 %v3294, %v3286
    %v4823 = vpack.c.b16 %v3295, %v3287
    %v4824 = vpack.c.b16 %v3296, %v3288
    %v4825 = vpack.c.b16 %v3305, %v3297
    %v4826 = vpack.c.b16 %v3306, %v3298
    %v4827 = vpack.c.b16 %v3307, %v3299
    %v4828 = vpack.c.b16 %v3308, %v3300
    %v4829 = vpack.c.b16 %v3309, %v3301
    %v4830 = vpack.c.b16 %v3310, %v3302
    %v4831 = vpack.c.b16 %v3311, %v3303
    %v4832 = vpack.c.b16 %v3312, %v3304
    %v4833 = vpack.c.b16 %v3321, %v3313
    %v4834 = vpack.c.b16 %v3322, %v3314
    %v4835 = vpack.c.b16 %v3323, %v3315
    %v4836 = vpack.c.b16 %v3324, %v3316
    %v4837 = vpack.c.b16 %v3325, %v3317
    %v4838 = vpack.c.b16 %v3326, %v3318
    %v4839 = vpack.c.b16 %v3327, %v3319
    %v4840 = vpack.c.b16 %v3328, %v3320
    %v4841 = vpack.c.b16 %v3337, %v3329
    %v4842 = vpack.c.b16 %v3338, %v3330
    %v4843 = vpack.c.b16 %v3339, %v3331
    %v4844 = vpack.c.b16 %v3340, %v3332
    %v4845 = vpack.c.b16 %v3341, %v3333
    %v4846 = vpack.c.b16 %v3342, %v3334
    %v4847 = vpack.c.b16 %v3343, %v3335
    %v4848 = vpack.c.b16 %v3344, %v3336
    %v4849 = vpack.c.b16 %v3353, %v3345
    %v4850 = vpack.c.b16 %v3354, %v3346
    %v4851 = vpack.c.b16 %v3355, %v3347
    %v4852 = vpack.c.b16 %v3356, %v3348
    %v4853 = vpack.c.b16 %v3357, %v3349
    %v4854 = vpack.c.b16 %v3358, %v3350
    %v4855 = vpack.c.b16 %v3359, %v3351
    %v4856 = vpack.c.b16 %v3360, %v3352
    %v4857 = vpack.c.b16 %v3369, %v3361
    %v4858 = vpack.c.b16 %v3370, %v3362
    %v4859 = vpack.c.b16 %v3371, %v3363
    %v4860 = vpack.c.b16 %v3372, %v3364
    %v4861 = vpack.c.b16 %v3373, %v3365
    %v4862 = vpack.c.b16 %v3374, %v3366
    %v4863 = vpack.c.b16 %v3375, %v3367
    %v4864 = vpack.c.b16 %v3376, %v3368
    %v4865 = vpack.c.b16 %v3385, %v3377
    %v4866 = vpack.c.b16 %v3386, %v3378
    %v4867 = vpack.c.b16 %v3387, %v3379
    %v4868 = vpack.c.b16 %v3388, %v3380
    %v4869 = vpack.c.b16 %v3389, %v3381
    %v4870 = vpack.c.b16 %v3390, %v3382
    %v4871 = vpack.c.b16 %v3391, %v3383
    %v4872 = vpack.c.b16 %v3392, %v3384
    %v4873 = vpack.c.b16 %v3401, %v3393
    %v4874 = vpack.c.b16 %v3402, %v3394
    %v4875 = vpack.c.b16 %v3403, %v3395
    %v4876 = vpack.c.b16 %v3404, %v3396
    %v4877 = vpack.c.b16 %v3405, %v3397
    %v4878 = vpack.c.b16 %v3406, %v3398
    %v4879 = vpack.c.b16 %v3407, %v3399
    %v4880 = vpack.c.b16 %v3408, %v3400
    %v4881 = vpack.c.b16 %v3417, %v3409
    %v4882 = vpack.c.b16 %v3418, %v3410
    %v4883 = vpack.c.b16 %v3419, %v3411
    %v4884 = vpack.c.b16 %v3420, %v3412
    %v4885 = vpack.c.b16 %v3421, %v3413
    %v4886 = vpack.c.b16 %v3422, %v3414
    %v4887 = vpack.c.b16 %v3423, %v3415
    %v4888 = vpack.c.b16 %v3424, %v3416
    %v4889 = vpack.c.b16 %v3433, %v3425
    %v4890 = vpack.c.b16 %v3434, %v3426
    %v4891 = vpack.c.b16 %v3435, %v3427
    %v4892 = vpack.c.b16 %v3436, %v3428
    %v4893 = vpack.c.b16 %v3437, %v3429
    %v4894 = vpack.c.b16 %v3438, %v3430
    %v4895 = vpack.c.b16 %v3439, %v3431
    %v4896 = vpack.c.b16 %v3440, %v3432
    %v4897 = vpack.c.b16 %v3449, %v3441
    %v4898 = vpack.c.b16 %v3450, %v3442
    %v4899 = vpack.c.b16 %v3451, %v3443
    %v4900 = vpack.c.b16 %v3452, %v3444
    %v4901 = vpack.c.b16 %v3453, %v3445
    %v4902 = vpack.c.b16 %v3454, %v3446
    %v4903 = vpack.c.b16 %v3455, %v3447
    %v4904 = vpack.c.b16 %v3456, %v3448
    %v4905 = vpack.c.b16 %v3465, %v3457
    %v4906 = vpack.c.b16 %v3466, %v3458
    %v4907 = vpack.c.b16 %v3467, %v3459
    %v4908 = vpack.c.b16 %v3468, %v3460
    %v4909 = vpack.c.b16 %v3469, %v3461
    %v4910 = vpack.c.b16 %v3470, %v3462
    %v4911 = vpack.c.b16 %v3471, %v3463
    %v4912 = vpack.c.b16 %v3472, %v3464
    %v4913 = vpack.c.b16 %v3481, %v3473
    %v4914 = vpack.c.b16 %v3482, %v3474
    %v4915 = vpack.c.b16 %v3483, %v3475
    %v4916 = vpack.c.b16 %v3484, %v3476
    %v4917 = vpack.c.b16 %v3485, %v3477
    %v4918 = vpack.c.b16 %v3486, %v3478
    %v4919 = vpack.c.b16 %v3487, %v3479
    %v4920 = vpack.c.b16 %v3488, %v3480
    %v4921 = vpack.c.b16 %v3497, %v3489
    %v4922 = vpack.c.b16 %v3498, %v3490
    %v4923 = vpack.c.b16 %v3499, %v3491
    %v4924 = vpack.c.b16 %v3500, %v3492
    %v4925 = vpack.c.b16 %v3501, %v3493
    %v4926 = vpack.c.b16 %v3502, %v3494
    %v4927 = vpack.c.b16 %v3503, %v3495
    %v4928 = vpack.c.b16 %v3504, %v3496
    %v4929 = vpack.c.b16 %v3513, %v3505
    %v4930 = vpack.c.b16 %v3514, %v3506
    %v4931 = vpack.c.b16 %v3515, %v3507
    %v4932 = vpack.c.b16 %v3516, %v3508
    %v4933 = vpack.c.b16 %v3517, %v3509
    %v4934 = vpack.c.b16 %v3518, %v3510
    %v4935 = vpack.c.b16 %v3519, %v3511
    %v4936 = vpack.c.b16 %v3520, %v3512
    %v4937 = vpack.c.b16 %v3529, %v3521
    %v4938 = vpack.c.b16 %v3530, %v3522
    %v4939 = vpack.c.b16 %v3531, %v3523
    %v4940 = vpack.c.b16 %v3532, %v3524
    %v4941 = vpack.c.b16 %v3533, %v3525
    %v4942 = vpack.c.b16 %v3534, %v3526
    %v4943 = vpack.c.b16 %v3535, %v3527
    %v4944 = vpack.c.b16 %v3536, %v3528
    %v4945 = vpack.c.b16 %v3545, %v3537
    %v4946 = vpack.c.b16 %v3546, %v3538
    %v4947 = vpack.c.b16 %v3547, %v3539
    %v4948 = vpack.c.b16 %v3548, %v3540
    %v4949 = vpack.c.b16 %v3549, %v3541
    %v4950 = vpack.c.b16 %v3550, %v3542
    %v4951 = vpack.c.b16 %v3551, %v3543
    %v4952 = vpack.c.b16 %v3552, %v3544
    %v4953 = vpack.c.b16 %v3561, %v3553
    %v4954 = vpack.c.b16 %v3562, %v3554
    %v4955 = vpack.c.b16 %v3563, %v3555
    %v4956 = vpack.c.b16 %v3564, %v3556
    %v4957 = vpack.c.b16 %v3565, %v3557
    %v4958 = vpack.c.b16 %v3566, %v3558
    %v4959 = vpack.c.b16 %v3567, %v3559
    %v4960 = vpack.c.b16 %v3568, %v3560
    %v4961 = vpack.c.b16 %v3577, %v3569
    %v4962 = vpack.c.b16 %v3578, %v3570
    %v4963 = vpack.c.b16 %v3579, %v3571
    %v4964 = vpack.c.b16 %v3580, %v3572
    %v4965 = vpack.c.b16 %v3581, %v3573
    %v4966 = vpack.c.b16 %v3582, %v3574
    %v4967 = vpack.c.b16 %v3583, %v3575
    %v4968 = vpack.c.b16 %v3584, %v3576
    %v4969 = vpack.c.b16 %v3593, %v3585
    %v4970 = vpack.c.b16 %v3594, %v3586
    %v4971 = vpack.c.b16 %v3595, %v3587
    %v4972 = vpack.c.b16 %v3596, %v3588
    %v4973 = vpack.c.b16 %v3597, %v3589
    %v4974 = vpack.c.b16 %v3598, %v3590
    %v4975 = vpack.c.b16 %v3599, %v3591
    %v4976 = vpack.c.b16 %v3600, %v3592
    %v4977 = vpack.c.b16 %v3609, %v3601
    %v4978 = vpack.c.b16 %v3610, %v3602
    %v4979 = vpack.c.b16 %v3611, %v3603
    %v4980 = vpack.c.b16 %v3612, %v3604
    %v4981 = vpack.c.b16 %v3613, %v3605
    %v4982 = vpack.c.b16 %v3614, %v3606
    %v4983 = vpack.c.b16 %v3615, %v3607
    %v4984 = vpack.c.b16 %v3616, %v3608
    %v4985 = vpack.c.b16 %v3625, %v3617
    %v4986 = vpack.c.b16 %v3626, %v3618
    %v4987 = vpack.c.b16 %v3627, %v3619
    %v4988 = vpack.c.b16 %v3628, %v3620
    %v4989 = vpack.c.b16 %v3629, %v3621
    %v4990 = vpack.c.b16 %v3630, %v3622
    %v4991 = vpack.c.b16 %v3631, %v3623
    %v4992 = vpack.c.b16 %v3632, %v3624
    %v4993 = vpack.c.b16 %v3641, %v3633
    %v4994 = vpack.c.b16 %v3642, %v3634
    %v4995 = vpack.c.b16 %v3643, %v3635
    %v4996 = vpack.c.b16 %v3644, %v3636
    %v4997 = vpack.c.b16 %v3645, %v3637
    %v4998 = vpack.c.b16 %v3646, %v3638
    %v4999 = vpack.c.b16 %v3647, %v3639
    %v5000 = vpack.c.b16 %v3648, %v3640
    %v5001 = vpack.c.b16 %v3657, %v3649
    %v5002 = vpack.c.b16 %v3658, %v3650
    %v5003 = vpack.c.b16 %v3659, %v3651
    %v5004 = vpack.c.b16 %v3660, %v3652
    %v5005 = vpack.c.b16 %v3661, %v3653
    %v5006 = vpack.c.b16 %v3662, %v3654
    %v5007 = vpack.c.b16 %v3663, %v3655
    %v5008 = vpack.c.b16 %v3664, %v3656
    %v5009 = vpack.c.b16 %v3673, %v3665
    %v5010 = vpack.c.b16 %v3674, %v3666
    %v5011 = vpack.c.b16 %v3675, %v3667
    %v5012 = vpack.c.b16 %v3676, %v3668
    %v5013 = vpack.c.b16 %v3677, %v3669
    %v5014 = vpack.c.b16 %v3678, %v3670
    %v5015 = vpack.c.b16 %v3679, %v3671
    %v5016 = vpack.c.b16 %v3680, %v3672
    %v5017 = vpack.c.b16 %v3689, %v3681
    %v5018 = vpack.c.b16 %v3690, %v3682
    %v5019 = vpack.c.b16 %v3691, %v3683
    %v5020 = vpack.c.b16 %v3692, %v3684
    %v5021 = vpack.c.b16 %v3693, %v3685
    %v5022 = vpack.c.b16 %v3694, %v3686
    %v5023 = vpack.c.b16 %v3695, %v3687
    %v5024 = vpack.c.b16 %v3696, %v3688
    %v5025 = vpack.c.b16 %v3705, %v3697
    %v5026 = vpack.c.b16 %v3706, %v3698
    %v5027 = vpack.c.b16 %v3707, %v3699
    %v5028 = vpack.c.b16 %v3708, %v3700
    %v5029 = vpack.c.b16 %v3709, %v3701
    %v5030 = vpack.c.b16 %v3710, %v3702
    %v5031 = vpack.c.b16 %v3711, %v3703
    %v5032 = vpack.c.b16 %v3712, %v3704
    %v5033 = vpack.c.b16 %v3721, %v3713
    %v5034 = vpack.c.b16 %v3722, %v3714
    %v5035 = vpack.c.b16 %v3723, %v3715
    %v5036 = vpack.c.b16 %v3724, %v3716
    %v5037 = vpack.c.b16 %v3725, %v3717
    %v5038 = vpack.c.b16 %v3726, %v3718
    %v5039 = vpack.c.b16 %v3727, %v3719
    %v5040 = vpack.c.b16 %v3728, %v3720
    %v5041 = vpack.c.b16 %v3737, %v3729
    %v5042 = vpack.c.b16 %v3738, %v3730
    %v5043 = vpack.c.b16 %v3739, %v3731
    %v5044 = vpack.c.b16 %v3740, %v3732
    %v5045 = vpack.c.b16 %v3741, %v3733
    %v5046 = vpack.c.b16 %v3742, %v3734
    %v5047 = vpack.c.b16 %v3743, %v3735
    %v5048 = vpack.c.b16 %v3744, %v3736
    %v5049 = vpack.c.b16 %v3753, %v3745
    %v5050 = vpack.c.b16 %v3754, %v3746
    %v5051 = vpack.c.b16 %v3755, %v3747
    %v5052 = vpack.c.b16 %v3756, %v3748
    %v5053 = vpack.c.b16 %v3757, %v3749
    %v5054 = vpack.c.b16 %v3758, %v3750
    %v5055 = vpack.c.b16 %v3759, %v3751
    %v5056 = vpack.c.b16 %v3760, %v3752
    %v5057 = vpack.c.b16 %v3769, %v3761
    %v5058 = vpack.c.b16 %v3770, %v3762
    %v5059 = vpack.c.b16 %v3771, %v3763
    %v5060 = vpack.c.b16 %v3772, %v3764
    %v5061 = vpack.c.b16 %v3773, %v3765
    %v5062 = vpack.c.b16 %v3774, %v3766
    %v5063 = vpack.c.b16 %v3775, %v3767
    %v5064 = vpack.c.b16 %v3776, %v3768
    %v5065 = vpack.c.b16 %v3785, %v3777
    %v5066 = vpack.c.b16 %v3786, %v3778
    %v5067 = vpack.c.b16 %v3787, %v3779
    %v5068 = vpack.c.b16 %v3788, %v3780
    %v5069 = vpack.c.b16 %v3789, %v3781
    %v5070 = vpack.c.b16 %v3790, %v3782
    %v5071 = vpack.c.b16 %v3791, %v3783
    %v5072 = vpack.c.b16 %v3792, %v3784
    %v5073 = vpack.c.b16 %v3801, %v3793
    %v5074 = vpack.c.b16 %v3802, %v3794
    %v5075 = vpack.c.b16 %v3803, %v3795
    %v5076 = vpack.c.b16 %v3804, %v3796
    %v5077 = vpack.c.b16 %v3805, %v3797
    %v5078 = vpack.c.b16 %v3806, %v3798
    %v5079 = vpack.c.b16 %v3807, %v3799
    %v5080 = vpack.c.b16 %v3808, %v3800
    %v5081 = vpack.c.b16 %v3817, %v3809
    %v5082 = vpack.c.b16 %v3818, %v3810
    %v5083 = vpack.c.b16 %v3819, %v3811
    %v5084 = vpack.c.b16 %v3820, %v3812
    %v5085 = vpack.c.b16 %v3821, %v3813
    %v5086 = vpack.c.b16 %v3822, %v3814
    %v5087 = vpack.c.b16 %v3823, %v3815
    %v5088 = vpack.c.b16 %v3824, %v3816
    %v5089 = vpack.c.b16 %v3833, %v3825
    %v5090 = vpack.c.b16 %v3834, %v3826
    %v5091 = vpack.c.b16 %v3835, %v3827
    %v5092 = vpack.c.b16 %v3836, %v3828
    %v5093 = vpack.c.b16 %v3837, %v3829
    %v5094 = vpack.c.b16 %v3838, %v3830
    %v5095 = vpack.c.b16 %v3839, %v3831
    %v5096 = vpack.c.b16 %v3840, %v3832
    %v5097 = vpack.c.b16 %v3849, %v3841
    %v5098 = vpack.c.b16 %v3850, %v3842
    %v5099 = vpack.c.b16 %v3851, %v3843
    %v5100 = vpack.c.b16 %v3852, %v3844
    %v5101 = vpack.c.b16 %v3853, %v3845
    %v5102 = vpack.c.b16 %v3854, %v3846
    %v5103 = vpack.c.b16 %v3855, %v3847
    %v5104 = vpack.c.b16 %v3856, %v3848
    %v5105 = vpack.c.b16 %v3865, %v3857
    %v5106 = vpack.c.b16 %v3866, %v3858
    %v5107 = vpack.c.b16 %v3867, %v3859
    %v5108 = vpack.c.b16 %v3868, %v3860
    %v5109 = vpack.c.b16 %v3869, %v3861
    %v5110 = vpack.c.b16 %v3870, %v3862
    %v5111 = vpack.c.b16 %v3871, %v3863
    %v5112 = vpack.c.b16 %v3872, %v3864
    %v5113 = vpack.c.b16 %v3881, %v3873
    %v5114 = vpack.c.b16 %v3882, %v3874
    %v5115 = vpack.c.b16 %v3883, %v3875
    %v5116 = vpack.c.b16 %v3884, %v3876
    %v5117 = vpack.c.b16 %v3885, %v3877
    %v5118 = vpack.c.b16 %v3886, %v3878
    %v5119 = vpack.c.b16 %v3887, %v3879
    %v5120 = vpack.c.b16 %v3888, %v3880
    %v5121 = vpack.c.b16 %v3897, %v3889
    %v5122 = vpack.c.b16 %v3898, %v3890
    %v5123 = vpack.c.b16 %v3899, %v3891
    %v5124 = vpack.c.b16 %v3900, %v3892
    %v5125 = vpack.c.b16 %v3901, %v3893
    %v5126 = vpack.c.b16 %v3902, %v3894
    %v5127 = vpack.c.b16 %v3903, %v3895
    %v5128 = vpack.c.b16 %v3904, %v3896
    %v5129 = vpack.c.b16 %v3913, %v3905
    %v5130 = vpack.c.b16 %v3914, %v3906
    %v5131 = vpack.c.b16 %v3915, %v3907
    %v5132 = vpack.c.b16 %v3916, %v3908
    %v5133 = vpack.c.b16 %v3917, %v3909
    %v5134 = vpack.c.b16 %v3918, %v3910
    %v5135 = vpack.c.b16 %v3919, %v3911
    %v5136 = vpack.c.b16 %v3920, %v3912
    %v5137 = vpack.c.b16 %v3929, %v3921
    %v5138 = vpack.c.b16 %v3930, %v3922
    %v5139 = vpack.c.b16 %v3931, %v3923
    %v5140 = vpack.c.b16 %v3932, %v3924
    %v5141 = vpack.c.b16 %v3933, %v3925
    %v5142 = vpack.c.b16 %v3934, %v3926
    %v5143 = vpack.c.b16 %v3935, %v3927
    %v5144 = vpack.c.b16 %v3936, %v3928
    %v5145 = vpack.c.b16 %v3945, %v3937
    %v5146 = vpack.c.b16 %v3946, %v3938
    %v5147 = vpack.c.b16 %v3947, %v3939
    %v5148 = vpack.c.b16 %v3948, %v3940
    %v5149 = vpack.c.b16 %v3949, %v3941
    %v5150 = vpack.c.b16 %v3950, %v3942
    %v5151 = vpack.c.b16 %v3951, %v3943
    %v5152 = vpack.c.b16 %v3952, %v3944
    %v5153 = vpack.c.b16 %v3961, %v3953
    %v5154 = vpack.c.b16 %v3962, %v3954
    %v5155 = vpack.c.b16 %v3963, %v3955
    %v5156 = vpack.c.b16 %v3964, %v3956
    %v5157 = vpack.c.b16 %v3965, %v3957
    %v5158 = vpack.c.b16 %v3966, %v3958
    %v5159 = vpack.c.b16 %v3967, %v3959
    %v5160 = vpack.c.b16 %v3968, %v3960
    %v5161 = vpack.c.b16 %v3977, %v3969
    %v5162 = vpack.c.b16 %v3978, %v3970
    %v5163 = vpack.c.b16 %v3979, %v3971
    %v5164 = vpack.c.b16 %v3980, %v3972
    %v5165 = vpack.c.b16 %v3981, %v3973
    %v5166 = vpack.c.b16 %v3982, %v3974
    %v5167 = vpack.c.b16 %v3983, %v3975
    %v5168 = vpack.c.b16 %v3984, %v3976
    %v5169 = vpack.c.b16 %v3993, %v3985
    %v5170 = vpack.c.b16 %v3994, %v3986
    %v5171 = vpack.c.b16 %v3995, %v3987
    %v5172 = vpack.c.b16 %v3996, %v3988
    %v5173 = vpack.c.b16 %v3997, %v3989
    %v5174 = vpack.c.b16 %v3998, %v3990
    %v5175 = vpack.c.b16 %v3999, %v3991
    %v5176 = vpack.c.b16 %v4000, %v3992
    %v5177 = vpack.c.b16 %v4009, %v4001
    %v5178 = vpack.c.b16 %v4010, %v4002
    %v5179 = vpack.c.b16 %v4011, %v4003
    %v5180 = vpack.c.b16 %v4012, %v4004
    %v5181 = vpack.c.b16 %v4013, %v4005
    %v5182 = vpack.c.b16 %v4014, %v4006
    %v5183 = vpack.c.b16 %v4015, %v4007
    %v5184 = vpack.c.b16 %v4016, %v4008
    %v5185 = vpack.c.b16 %v4025, %v4017
    %v5186 = vpack.c.b16 %v4026, %v4018
    %v5187 = vpack.c.b16 %v4027, %v4019
    %v5188 = vpack.c.b16 %v4028, %v4020
    %v5189 = vpack.c.b16 %v4029, %v4021
    %v5190 = vpack.c.b16 %v4030, %v4022
    %v5191 = vpack.c.b16 %v4031, %v4023
    %v5192 = vpack.c.b16 %v4032, %v4024
    %v5193 = vpack.c.b16 %v4041, %v4033
    %v5194 = vpack.c.b16 %v4042, %v4034
    %v5195 = vpack.c.b16 %v4043, %v4035
    %v5196 = vpack.c.b16 %v4044, %v4036
    %v5197 = vpack.c.b16 %v4045, %v4037
    %v5198 = vpack.c.b16 %v4046, %v4038
    %v5199 = vpack.c.b16 %v4047, %v4039
    %v5200 = vpack.c.b16 %v4048, %v4040
    %v5201 = vpack.c.b16 %v4057, %v4049
    %v5202 = vpack.c.b16 %v4058, %v4050
    %v5203 = vpack.c.b16 %v4059, %v4051
    %v5204 = vpack.c.b16 %v4060, %v4052
    %v5205 = vpack.c.b16 %v4061, %v4053
    %v5206 = vpack.c.b16 %v4062, %v4054
    %v5207 = vpack.c.b16 %v4063, %v4055
    %v5208 = vpack.c.b16 %v4064, %v4056
    %v5209 = vpack.c.b16 %v4073, %v4065
    %v5210 = vpack.c.b16 %v4074, %v4066
    %v5211 = vpack.c.b16 %v4075, %v4067
    %v5212 = vpack.c.b16 %v4076, %v4068
    %v5213 = vpack.c.b16 %v4077, %v4069
    %v5214 = vpack.c.b16 %v4078, %v4070
    %v5215 = vpack.c.b16 %v4079, %v4071
    %v5216 = vpack.c.b16 %v4080, %v4072
    %v5217 = vpack.c.b16 %v4089, %v4081
    %v5218 = vpack.c.b16 %v4090, %v4082
    %v5219 = vpack.c.b16 %v4091, %v4083
    %v5220 = vpack.c.b16 %v4092, %v4084
    %v5221 = vpack.c.b16 %v4093, %v4085
    %v5222 = vpack.c.b16 %v4094, %v4086
    %v5223 = vpack.c.b16 %v4095, %v4087
    %v5224 = vpack.c.b16 %v4096, %v4088
    %v5225 = vpack.c.b16 %v4105, %v4097
    %v5226 = vpack.c.b16 %v4106, %v4098
    %v5227 = vpack.c.b16 %v4107, %v4099
    %v5228 = vpack.c.b16 %v4108, %v4100
    %v5229 = vpack.c.b16 %v4109, %v4101
    %v5230 = vpack.c.b16 %v4110, %v4102
    %v5231 = vpack.c.b16 %v4111, %v4103
    %v5232 = vpack.c.b16 %v4112, %v4104
    %v5233 = vpack.c.b16 %v4121, %v4113
    %v5234 = vpack.c.b16 %v4122, %v4114
    %v5235 = vpack.c.b16 %v4123, %v4115
    %v5236 = vpack.c.b16 %v4124, %v4116
    %v5237 = vpack.c.b16 %v4125, %v4117
    %v5238 = vpack.c.b16 %v4126, %v4118
    %v5239 = vpack.c.b16 %v4127, %v4119
    %v5240 = vpack.c.b16 %v4128, %v4120
    %v5241 = vpack.c.b16 %v4137, %v4129
    %v5242 = vpack.c.b16 %v4138, %v4130
    %v5243 = vpack.c.b16 %v4139, %v4131
    %v5244 = vpack.c.b16 %v4140, %v4132
    %v5245 = vpack.c.b16 %v4141, %v4133
    %v5246 = vpack.c.b16 %v4142, %v4134
    %v5247 = vpack.c.b16 %v4143, %v4135
    %v5248 = vpack.c.b16 %v4144, %v4136
    %v5249 = vpack.c.b16 %v4153, %v4145
    %v5250 = vpack.c.b16 %v4154, %v4146
    %v5251 = vpack.c.b16 %v4155, %v4147
    %v5252 = vpack.c.b16 %v4156, %v4148
    %v5253 = vpack.c.b16 %v4157, %v4149
    %v5254 = vpack.c.b16 %v4158, %v4150
    %v5255 = vpack.c.b16 %v4159, %v4151
    %v5256 = vpack.c.b16 %v4160, %v4152
    %v5257 = vpack.c.b16 %v4169, %v4161
    %v5258 = vpack.c.b16 %v4170, %v4162
    %v5259 = vpack.c.b16 %v4171, %v4163
    %v5260 = vpack.c.b16 %v4172, %v4164
    %v5261 = vpack.c.b16 %v4173, %v4165
    %v5262 = vpack.c.b16 %v4174, %v4166
    %v5263 = vpack.c.b16 %v4175, %v4167
    %v5264 = vpack.c.b16 %v4176, %v4168
    %v5265 = vpack.c.b16 %v4185, %v4177
    %v5266 = vpack.c.b16 %v4186, %v4178
    %v5267 = vpack.c.b16 %v4187, %v4179
    %v5268 = vpack.c.b16 %v4188, %v4180
    %v5269 = vpack.c.b16 %v4189, %v4181
    %v5270 = vpack.c.b16 %v4190, %v4182
    %v5271 = vpack.c.b16 %v4191, %v4183
    %v5272 = vpack.c.b16 %v4192, %v4184
    %v5273 = vpack.c.b16 %v4201, %v4193
    %v5274 = vpack.c.b16 %v4202, %v4194
    %v5275 = vpack.c.b16 %v4203, %v4195
    %v5276 = vpack.c.b16 %v4204, %v4196
    %v5277 = vpack.c.b16 %v4205, %v4197
    %v5278 = vpack.c.b16 %v4206, %v4198
    %v5279 = vpack.c.b16 %v4207, %v4199
    %v5280 = vpack.c.b16 %v4208, %v4200
    %v5281 = vpack.c.b16 %v4217, %v4209
    %v5282 = vpack.c.b16 %v4218, %v4210
    %v5283 = vpack.c.b16 %v4219, %v4211
    %v5284 = vpack.c.b16 %v4220, %v4212
    %v5285 = vpack.c.b16 %v4221, %v4213
    %v5286 = vpack.c.b16 %v4222, %v4214
    %v5287 = vpack.c.b16 %v4223, %v4215
    %v5288 = vpack.c.b16 %v4224, %v4216
    %v5289 = vpack.c.b16 %v4233, %v4225
    %v5290 = vpack.c.b16 %v4234, %v4226
    %v5291 = vpack.c.b16 %v4235, %v4227
    %v5292 = vpack.c.b16 %v4236, %v4228
    %v5293 = vpack.c.b16 %v4237, %v4229
    %v5294 = vpack.c.b16 %v4238, %v4230
    %v5295 = vpack.c.b16 %v4239, %v4231
    %v5296 = vpack.c.b16 %v4240, %v4232
    %v5297 = vpack.c.b16 %v4249, %v4241
    %v5298 = vpack.c.b16 %v4250, %v4242
    %v5299 = vpack.c.b16 %v4251, %v4243
    %v5300 = vpack.c.b16 %v4252, %v4244
    %v5301 = vpack.c.b16 %v4253, %v4245
    %v5302 = vpack.c.b16 %v4254, %v4246
    %v5303 = vpack.c.b16 %v4255, %v4247
    %v5304 = vpack.c.b16 %v4256, %v4248
    %v5305 = vpack.c.b16 %v4265, %v4257
    %v5306 = vpack.c.b16 %v4266, %v4258
    %v5307 = vpack.c.b16 %v4267, %v4259
    %v5308 = vpack.c.b16 %v4268, %v4260
    %v5309 = vpack.c.b16 %v4269, %v4261
    %v5310 = vpack.c.b16 %v4270, %v4262
    %v5311 = vpack.c.b16 %v4271, %v4263
    %v5312 = vpack.c.b16 %v4272, %v4264
    %v5313 = vpack.c.b16 %v4281, %v4273
    %v5314 = vpack.c.b16 %v4282, %v4274
    %v5315 = vpack.c.b16 %v4283, %v4275
    %v5316 = vpack.c.b16 %v4284, %v4276
    %v5317 = vpack.c.b16 %v4285, %v4277
    %v5318 = vpack.c.b16 %v4286, %v4278
    %v5319 = vpack.c.b16 %v4287, %v4279
    %v5320 = vpack.c.b16 %v4288, %v4280
    %v5321 = vpack.c.b16 %v4297, %v4289
    %v5322 = vpack.c.b16 %v4298, %v4290
    %v5323 = vpack.c.b16 %v4299, %v4291
    %v5324 = vpack.c.b16 %v4300, %v4292
    %v5325 = vpack.c.b16 %v4301, %v4293
    %v5326 = vpack.c.b16 %v4302, %v4294
    %v5327 = vpack.c.b16 %v4303, %v4295
    %v5328 = vpack.c.b16 %v4304, %v4296
    %6353 = vmatpush.bf16.msra.mxu0 %v4361
    %6354 = vmatpush.bf16.msra.mxu0 %v4353
    %6355 = vmatpush.bf16.msra.mxu0 %v4345
    %6356 = vmatpush.bf16.msra.mxu0 %v4337
    %6357 = vmatpush.bf16.msra.mxu0 %v4329
    %6358 = vmatpush.bf16.msra.mxu0 %v4321
    %6359 = vmatpush.bf16.msra.mxu0 %v4313
    %6360 = vmatpush.bf16.msra.mxu0 %v4305
    %6361 = vmatmul.bf16.gmra.mxu0 %v1201
    %v6362 = vpop.f32.mrf.mxu0
    %v6363 = vadd.f32 %v1137, %v6362
    %v6364 = vpop.f32.mrf.mxu0
    %v6365 = vadd.f32 %v1137, %v6364
    %6366 = vdwg.mxu0
    %6367 = vmatpush.bf16.msra.mxu0 %v4425
    %6368 = vmatpush.bf16.msra.mxu0 %v4417
    %6369 = vmatpush.bf16.msra.mxu0 %v4409
    %6370 = vmatpush.bf16.msra.mxu0 %v4401
    %6371 = vmatpush.bf16.msra.mxu0 %v4393
    %6372 = vmatpush.bf16.msra.mxu0 %v4385
    %6373 = vmatpush.bf16.msra.mxu0 %v4377
    %6374 = vmatpush.bf16.msra.mxu0 %v4369
    %6375 = vmatmul.bf16.gmra.mxu0 %v1202
    %v6376 = vpop.f32.mrf.mxu0
    %v6377 = vadd.f32 %v6363, %v6376
    %v6378 = vpop.f32.mrf.mxu0
    %v6379 = vadd.f32 %v6365, %v6378
    %6380 = vdwg.mxu0
    %6381 = vmatpush.bf16.msra.mxu0 %v4489
    %6382 = vmatpush.bf16.msra.mxu0 %v4481
    %6383 = vmatpush.bf16.msra.mxu0 %v4473
    %6384 = vmatpush.bf16.msra.mxu0 %v4465
    %6385 = vmatpush.bf16.msra.mxu0 %v4457
    %6386 = vmatpush.bf16.msra.mxu0 %v4449
    %6387 = vmatpush.bf16.msra.mxu0 %v4441
    %6388 = vmatpush.bf16.msra.mxu0 %v4433
    %6389 = vmatmul.bf16.gmra.mxu0 %v1203
    %v6390 = vpop.f32.mrf.mxu0
    %v6391 = vadd.f32 %v6377, %v6390
    %v6392 = vpop.f32.mrf.mxu0
    %v6393 = vadd.f32 %v6379, %v6392
    %6394 = vdwg.mxu0
    %6395 = vmatpush.bf16.msra.mxu0 %v4553
    %6396 = vmatpush.bf16.msra.mxu0 %v4545
    %6397 = vmatpush.bf16.msra.mxu0 %v4537
    %6398 = vmatpush.bf16.msra.mxu0 %v4529
    %6399 = vmatpush.bf16.msra.mxu0 %v4521
    %6400 = vmatpush.bf16.msra.mxu0 %v4513
    %6401 = vmatpush.bf16.msra.mxu0 %v4505
    %6402 = vmatpush.bf16.msra.mxu0 %v4497
    %6403 = vmatmul.bf16.gmra.mxu0 %v1204
    %v6404 = vpop.f32.mrf.mxu0
    %v6405 = vadd.f32 %v6391, %v6404
    %v6406 = vpop.f32.mrf.mxu0
    %v6407 = vadd.f32 %v6393, %v6406
    %6408 = vdwg.mxu0
    %6409 = vmatpush.bf16.msra.mxu0 %v4617
    %6410 = vmatpush.bf16.msra.mxu0 %v4609
    %6411 = vmatpush.bf16.msra.mxu0 %v4601
    %6412 = vmatpush.bf16.msra.mxu0 %v4593
    %6413 = vmatpush.bf16.msra.mxu0 %v4585
    %6414 = vmatpush.bf16.msra.mxu0 %v4577
    %6415 = vmatpush.bf16.msra.mxu0 %v4569
    %6416 = vmatpush.bf16.msra.mxu0 %v4561
    %6417 = vmatmul.bf16.gmra.mxu0 %v1205
    %v6418 = vpop.f32.mrf.mxu0
    %v6419 = vadd.f32 %v6405, %v6418
    %v6420 = vpop.f32.mrf.mxu0
    %v6421 = vadd.f32 %v6407, %v6420
    %6422 = vdwg.mxu0
    %6423 = vmatpush.bf16.msra.mxu0 %v4681
    %6424 = vmatpush.bf16.msra.mxu0 %v4673
    %6425 = vmatpush.bf16.msra.mxu0 %v4665
    %6426 = vmatpush.bf16.msra.mxu0 %v4657
    %6427 = vmatpush.bf16.msra.mxu0 %v4649
    %6428 = vmatpush.bf16.msra.mxu0 %v4641
    %6429 = vmatpush.bf16.msra.mxu0 %v4633
    %6430 = vmatpush.bf16.msra.mxu0 %v4625
    %6431 = vmatmul.bf16.gmra.mxu0 %v1206
    %v6432 = vpop.f32.mrf.mxu0
    %v6433 = vadd.f32 %v6419, %v6432
    %v6434 = vpop.f32.mrf.mxu0
    %v6435 = vadd.f32 %v6421, %v6434
    %6436 = vdwg.mxu0
    %6437 = vmatpush.bf16.msra.mxu0 %v4745
    %6438 = vmatpush.bf16.msra.mxu0 %v4737
    %6439 = vmatpush.bf16.msra.mxu0 %v4729
    %6440 = vmatpush.bf16.msra.mxu0 %v4721
    %6441 = vmatpush.bf16.msra.mxu0 %v4713
    %6442 = vmatpush.bf16.msra.mxu0 %v4705
    %6443 = vmatpush.bf16.msra.mxu0 %v4697
    %6444 = vmatpush.bf16.msra.mxu0 %v4689
    %6445 = vmatmul.bf16.gmra.mxu0 %v1207
    %v6446 = vpop.f32.mrf.mxu0
    %v6447 = vadd.f32 %v6433, %v6446
    %v6448 = vpop.f32.mrf.mxu0
    %v6449 = vadd.f32 %v6435, %v6448
    %6450 = vdwg.mxu0
    %6451 = vmatpush.bf16.msra.mxu0 %v4809
    %6452 = vmatpush.bf16.msra.mxu0 %v4801
    %6453 = vmatpush.bf16.msra.mxu0 %v4793
    %6454 = vmatpush.bf16.msra.mxu0 %v4785
    %6455 = vmatpush.bf16.msra.mxu0 %v4777
    %6456 = vmatpush.bf16.msra.mxu0 %v4769
    %6457 = vmatpush.bf16.msra.mxu0 %v4761
    %6458 = vmatpush.bf16.msra.mxu0 %v4753
    %6459 = vmatmul.bf16.gmra.mxu0 %v1208
    %v6460 = vpop.f32.mrf.mxu0
    %v6461 = vadd.f32 %v6447, %v6460
    %v6462 = vpop.f32.mrf.mxu0
    %v6463 = vadd.f32 %v6449, %v6462
    %6464 = vdwg.mxu0
    %6465 = vmatpush.bf16.msra.mxu0 %v4873
    %6466 = vmatpush.bf16.msra.mxu0 %v4865
    %6467 = vmatpush.bf16.msra.mxu0 %v4857
    %6468 = vmatpush.bf16.msra.mxu0 %v4849
    %6469 = vmatpush.bf16.msra.mxu0 %v4841
    %6470 = vmatpush.bf16.msra.mxu0 %v4833
    %6471 = vmatpush.bf16.msra.mxu0 %v4825
    %6472 = vmatpush.bf16.msra.mxu0 %v4817
    %6473 = vmatmul.bf16.gmra.mxu0 %v1209
    %v6474 = vpop.f32.mrf.mxu0
    %v6475 = vadd.f32 %v6461, %v6474
    %v6476 = vpop.f32.mrf.mxu0
    %v6477 = vadd.f32 %v6463, %v6476
    %6478 = vdwg.mxu0
    %6479 = vmatpush.bf16.msra.mxu0 %v4937
    %6480 = vmatpush.bf16.msra.mxu0 %v4929
    %6481 = vmatpush.bf16.msra.mxu0 %v4921
    %6482 = vmatpush.bf16.msra.mxu0 %v4913
    %6483 = vmatpush.bf16.msra.mxu0 %v4905
    %6484 = vmatpush.bf16.msra.mxu0 %v4897
    %6485 = vmatpush.bf16.msra.mxu0 %v4889
    %6486 = vmatpush.bf16.msra.mxu0 %v4881
    %6487 = vmatmul.bf16.gmra.mxu0 %v1210
    %v6488 = vpop.f32.mrf.mxu0
    %v6489 = vadd.f32 %v6475, %v6488
    %v6490 = vpop.f32.mrf.mxu0
    %v6491 = vadd.f32 %v6477, %v6490
    %6492 = vdwg.mxu0
    %6493 = vmatpush.bf16.msra.mxu0 %v5001
    %6494 = vmatpush.bf16.msra.mxu0 %v4993
    %6495 = vmatpush.bf16.msra.mxu0 %v4985
    %6496 = vmatpush.bf16.msra.mxu0 %v4977
    %6497 = vmatpush.bf16.msra.mxu0 %v4969
    %6498 = vmatpush.bf16.msra.mxu0 %v4961
    %6499 = vmatpush.bf16.msra.mxu0 %v4953
    %6500 = vmatpush.bf16.msra.mxu0 %v4945
    %6501 = vmatmul.bf16.gmra.mxu0 %v1211
    %v6502 = vpop.f32.mrf.mxu0
    %v6503 = vadd.f32 %v6489, %v6502
    %v6504 = vpop.f32.mrf.mxu0
    %v6505 = vadd.f32 %v6491, %v6504
    %6506 = vdwg.mxu0
    %6507 = vmatpush.bf16.msra.mxu0 %v5065
    %6508 = vmatpush.bf16.msra.mxu0 %v5057
    %6509 = vmatpush.bf16.msra.mxu0 %v5049
    %6510 = vmatpush.bf16.msra.mxu0 %v5041
    %6511 = vmatpush.bf16.msra.mxu0 %v5033
    %6512 = vmatpush.bf16.msra.mxu0 %v5025
    %6513 = vmatpush.bf16.msra.mxu0 %v5017
    %6514 = vmatpush.bf16.msra.mxu0 %v5009
    %6515 = vmatmul.bf16.gmra.mxu0 %v1212
    %v6516 = vpop.f32.mrf.mxu0
    %v6517 = vadd.f32 %v6503, %v6516
    %v6518 = vpop.f32.mrf.mxu0
    %v6519 = vadd.f32 %v6505, %v6518
    %6520 = vdwg.mxu0
    %6521 = vmatpush.bf16.msra.mxu0 %v5129
    %6522 = vmatpush.bf16.msra.mxu0 %v5121
    %6523 = vmatpush.bf16.msra.mxu0 %v5113
    %6524 = vmatpush.bf16.msra.mxu0 %v5105
    %6525 = vmatpush.bf16.msra.mxu0 %v5097
    %6526 = vmatpush.bf16.msra.mxu0 %v5089
    %6527 = vmatpush.bf16.msra.mxu0 %v5081
    %6528 = vmatpush.bf16.msra.mxu0 %v5073
    %6529 = vmatmul.bf16.gmra.mxu0 %v1213
    %v6530 = vpop.f32.mrf.mxu0
    %v6531 = vadd.f32 %v6517, %v6530
    %v6532 = vpop.f32.mrf.mxu0
    %v6533 = vadd.f32 %v6519, %v6532
    %6534 = vdwg.mxu0
    %6535 = vmatpush.bf16.msra.mxu0 %v5193
    %6536 = vmatpush.bf16.msra.mxu0 %v5185
    %6537 = vmatpush.bf16.msra.mxu0 %v5177
    %6538 = vmatpush.bf16.msra.mxu0 %v5169
    %6539 = vmatpush.bf16.msra.mxu0 %v5161
    %6540 = vmatpush.bf16.msra.mxu0 %v5153
    %6541 = vmatpush.bf16.msra.mxu0 %v5145
    %6542 = vmatpush.bf16.msra.mxu0 %v5137
    %6543 = vmatmul.bf16.gmra.mxu0 %v1214
    %v6544 = vpop.f32.mrf.mxu0
    %v6545 = vadd.f32 %v6531, %v6544
    %v6546 = vpop.f32.mrf.mxu0
    %v6547 = vadd.f32 %v6533, %v6546
    %6548 = vdwg.mxu0
    %6549 = vmatpush.bf16.msra.mxu0 %v5257
    %6550 = vmatpush.bf16.msra.mxu0 %v5249
    %6551 = vmatpush.bf16.msra.mxu0 %v5241
    %6552 = vmatpush.bf16.msra.mxu0 %v5233
    %6553 = vmatpush.bf16.msra.mxu0 %v5225
    %6554 = vmatpush.bf16.msra.mxu0 %v5217
    %6555 = vmatpush.bf16.msra.mxu0 %v5209
    %6556 = vmatpush.bf16.msra.mxu0 %v5201
    %6557 = vmatmul.bf16.gmra.mxu0 %v1215
    %v6558 = vpop.f32.mrf.mxu0
    %v6559 = vadd.f32 %v6545, %v6558
    %v6560 = vpop.f32.mrf.mxu0
    %v6561 = vadd.f32 %v6547, %v6560
    %6562 = vdwg.mxu0
    %6563 = vmatpush.bf16.msra.mxu0 %v5321
    %6564 = vmatpush.bf16.msra.mxu0 %v5313
    %6565 = vmatpush.bf16.msra.mxu0 %v5305
    %6566 = vmatpush.bf16.msra.mxu0 %v5297
    %6567 = vmatpush.bf16.msra.mxu0 %v5289
    %6568 = vmatpush.bf16.msra.mxu0 %v5281
    %6569 = vmatpush.bf16.msra.mxu0 %v5273
    %6570 = vmatpush.bf16.msra.mxu0 %v5265
    %6571 = vmatmul.bf16.gmra.mxu0 %v1216
    %v6572 = vpop.f32.mrf.mxu0
    %v6573 = vadd.f32 %v6559, %v6572
    %v6574 = vpop.f32.mrf.mxu0
    %v6575 = vadd.f32 %v6561, %v6574
    %6576 = vdwg.mxu0
    %6577 = vmatpush.bf16.msra.mxu0 %v4362
    %6578 = vmatpush.bf16.msra.mxu0 %v4354
    %6579 = vmatpush.bf16.msra.mxu0 %v4346
    %6580 = vmatpush.bf16.msra.mxu0 %v4338
    %6581 = vmatpush.bf16.msra.mxu0 %v4330
    %6582 = vmatpush.bf16.msra.mxu0 %v4322
    %6583 = vmatpush.bf16.msra.mxu0 %v4314
    %6584 = vmatpush.bf16.msra.mxu0 %v4306
    %6585 = vmatmul.bf16.gmra.mxu0 %v1201
    %v6586 = vpop.f32.mrf.mxu0
    %v6587 = vadd.f32 %v1138, %v6586
    %v6588 = vpop.f32.mrf.mxu0
    %v6589 = vadd.f32 %v1138, %v6588
    %6590 = vdwg.mxu0
    %6591 = vmatpush.bf16.msra.mxu0 %v4426
    %6592 = vmatpush.bf16.msra.mxu0 %v4418
    %6593 = vmatpush.bf16.msra.mxu0 %v4410
    %6594 = vmatpush.bf16.msra.mxu0 %v4402
    %6595 = vmatpush.bf16.msra.mxu0 %v4394
    %6596 = vmatpush.bf16.msra.mxu0 %v4386
    %6597 = vmatpush.bf16.msra.mxu0 %v4378
    %6598 = vmatpush.bf16.msra.mxu0 %v4370
    %6599 = vmatmul.bf16.gmra.mxu0 %v1202
    %v6600 = vpop.f32.mrf.mxu0
    %v6601 = vadd.f32 %v6587, %v6600
    %v6602 = vpop.f32.mrf.mxu0
    %v6603 = vadd.f32 %v6589, %v6602
    %6604 = vdwg.mxu0
    %6605 = vmatpush.bf16.msra.mxu0 %v4490
    %6606 = vmatpush.bf16.msra.mxu0 %v4482
    %6607 = vmatpush.bf16.msra.mxu0 %v4474
    %6608 = vmatpush.bf16.msra.mxu0 %v4466
    %6609 = vmatpush.bf16.msra.mxu0 %v4458
    %6610 = vmatpush.bf16.msra.mxu0 %v4450
    %6611 = vmatpush.bf16.msra.mxu0 %v4442
    %6612 = vmatpush.bf16.msra.mxu0 %v4434
    %6613 = vmatmul.bf16.gmra.mxu0 %v1203
    %v6614 = vpop.f32.mrf.mxu0
    %v6615 = vadd.f32 %v6601, %v6614
    %v6616 = vpop.f32.mrf.mxu0
    %v6617 = vadd.f32 %v6603, %v6616
    %6618 = vdwg.mxu0
    %6619 = vmatpush.bf16.msra.mxu0 %v4554
    %6620 = vmatpush.bf16.msra.mxu0 %v4546
    %6621 = vmatpush.bf16.msra.mxu0 %v4538
    %6622 = vmatpush.bf16.msra.mxu0 %v4530
    %6623 = vmatpush.bf16.msra.mxu0 %v4522
    %6624 = vmatpush.bf16.msra.mxu0 %v4514
    %6625 = vmatpush.bf16.msra.mxu0 %v4506
    %6626 = vmatpush.bf16.msra.mxu0 %v4498
    %6627 = vmatmul.bf16.gmra.mxu0 %v1204
    %v6628 = vpop.f32.mrf.mxu0
    %v6629 = vadd.f32 %v6615, %v6628
    %v6630 = vpop.f32.mrf.mxu0
    %v6631 = vadd.f32 %v6617, %v6630
    %6632 = vdwg.mxu0
    %6633 = vmatpush.bf16.msra.mxu0 %v4618
    %6634 = vmatpush.bf16.msra.mxu0 %v4610
    %6635 = vmatpush.bf16.msra.mxu0 %v4602
    %6636 = vmatpush.bf16.msra.mxu0 %v4594
    %6637 = vmatpush.bf16.msra.mxu0 %v4586
    %6638 = vmatpush.bf16.msra.mxu0 %v4578
    %6639 = vmatpush.bf16.msra.mxu0 %v4570
    %6640 = vmatpush.bf16.msra.mxu0 %v4562
    %6641 = vmatmul.bf16.gmra.mxu0 %v1205
    %v6642 = vpop.f32.mrf.mxu0
    %v6643 = vadd.f32 %v6629, %v6642
    %v6644 = vpop.f32.mrf.mxu0
    %v6645 = vadd.f32 %v6631, %v6644
    %6646 = vdwg.mxu0
    %6647 = vmatpush.bf16.msra.mxu0 %v4682
    %6648 = vmatpush.bf16.msra.mxu0 %v4674
    %6649 = vmatpush.bf16.msra.mxu0 %v4666
    %6650 = vmatpush.bf16.msra.mxu0 %v4658
    %6651 = vmatpush.bf16.msra.mxu0 %v4650
    %6652 = vmatpush.bf16.msra.mxu0 %v4642
    %6653 = vmatpush.bf16.msra.mxu0 %v4634
    %6654 = vmatpush.bf16.msra.mxu0 %v4626
    %6655 = vmatmul.bf16.gmra.mxu0 %v1206
    %v6656 = vpop.f32.mrf.mxu0
    %v6657 = vadd.f32 %v6643, %v6656
    %v6658 = vpop.f32.mrf.mxu0
    %v6659 = vadd.f32 %v6645, %v6658
    %6660 = vdwg.mxu0
    %6661 = vmatpush.bf16.msra.mxu0 %v4746
    %6662 = vmatpush.bf16.msra.mxu0 %v4738
    %6663 = vmatpush.bf16.msra.mxu0 %v4730
    %6664 = vmatpush.bf16.msra.mxu0 %v4722
    %6665 = vmatpush.bf16.msra.mxu0 %v4714
    %6666 = vmatpush.bf16.msra.mxu0 %v4706
    %6667 = vmatpush.bf16.msra.mxu0 %v4698
    %6668 = vmatpush.bf16.msra.mxu0 %v4690
    %6669 = vmatmul.bf16.gmra.mxu0 %v1207
    %v6670 = vpop.f32.mrf.mxu0
    %v6671 = vadd.f32 %v6657, %v6670
    %v6672 = vpop.f32.mrf.mxu0
    %v6673 = vadd.f32 %v6659, %v6672
    %6674 = vdwg.mxu0
    %6675 = vmatpush.bf16.msra.mxu0 %v4810
    %6676 = vmatpush.bf16.msra.mxu0 %v4802
    %6677 = vmatpush.bf16.msra.mxu0 %v4794
    %6678 = vmatpush.bf16.msra.mxu0 %v4786
    %6679 = vmatpush.bf16.msra.mxu0 %v4778
    %6680 = vmatpush.bf16.msra.mxu0 %v4770
    %6681 = vmatpush.bf16.msra.mxu0 %v4762
    %6682 = vmatpush.bf16.msra.mxu0 %v4754
    %6683 = vmatmul.bf16.gmra.mxu0 %v1208
    %v6684 = vpop.f32.mrf.mxu0
    %v6685 = vadd.f32 %v6671, %v6684
    %v6686 = vpop.f32.mrf.mxu0
    %v6687 = vadd.f32 %v6673, %v6686
    %6688 = vdwg.mxu0
    %6689 = vmatpush.bf16.msra.mxu0 %v4874
    %6690 = vmatpush.bf16.msra.mxu0 %v4866
    %6691 = vmatpush.bf16.msra.mxu0 %v4858
    %6692 = vmatpush.bf16.msra.mxu0 %v4850
    %6693 = vmatpush.bf16.msra.mxu0 %v4842
    %6694 = vmatpush.bf16.msra.mxu0 %v4834
    %6695 = vmatpush.bf16.msra.mxu0 %v4826
    %6696 = vmatpush.bf16.msra.mxu0 %v4818
    %6697 = vmatmul.bf16.gmra.mxu0 %v1209
    %v6698 = vpop.f32.mrf.mxu0
    %v6699 = vadd.f32 %v6685, %v6698
    %v6700 = vpop.f32.mrf.mxu0
    %v6701 = vadd.f32 %v6687, %v6700
    %6702 = vdwg.mxu0
    %6703 = vmatpush.bf16.msra.mxu0 %v4938
    %6704 = vmatpush.bf16.msra.mxu0 %v4930
    %6705 = vmatpush.bf16.msra.mxu0 %v4922
    %6706 = vmatpush.bf16.msra.mxu0 %v4914
    %6707 = vmatpush.bf16.msra.mxu0 %v4906
    %6708 = vmatpush.bf16.msra.mxu0 %v4898
    %6709 = vmatpush.bf16.msra.mxu0 %v4890
    %6710 = vmatpush.bf16.msra.mxu0 %v4882
    %6711 = vmatmul.bf16.gmra.mxu0 %v1210
    %v6712 = vpop.f32.mrf.mxu0
    %v6713 = vadd.f32 %v6699, %v6712
    %v6714 = vpop.f32.mrf.mxu0
    %v6715 = vadd.f32 %v6701, %v6714
    %6716 = vdwg.mxu0
    %6717 = vmatpush.bf16.msra.mxu0 %v5002
    %6718 = vmatpush.bf16.msra.mxu0 %v4994
    %6719 = vmatpush.bf16.msra.mxu0 %v4986
    %6720 = vmatpush.bf16.msra.mxu0 %v4978
    %6721 = vmatpush.bf16.msra.mxu0 %v4970
    %6722 = vmatpush.bf16.msra.mxu0 %v4962
    %6723 = vmatpush.bf16.msra.mxu0 %v4954
    %6724 = vmatpush.bf16.msra.mxu0 %v4946
    %6725 = vmatmul.bf16.gmra.mxu0 %v1211
    %v6726 = vpop.f32.mrf.mxu0
    %v6727 = vadd.f32 %v6713, %v6726
    %v6728 = vpop.f32.mrf.mxu0
    %v6729 = vadd.f32 %v6715, %v6728
    %6730 = vdwg.mxu0
    %6731 = vmatpush.bf16.msra.mxu0 %v5066
    %6732 = vmatpush.bf16.msra.mxu0 %v5058
    %6733 = vmatpush.bf16.msra.mxu0 %v5050
    %6734 = vmatpush.bf16.msra.mxu0 %v5042
    %6735 = vmatpush.bf16.msra.mxu0 %v5034
    %6736 = vmatpush.bf16.msra.mxu0 %v5026
    %6737 = vmatpush.bf16.msra.mxu0 %v5018
    %6738 = vmatpush.bf16.msra.mxu0 %v5010
    %6739 = vmatmul.bf16.gmra.mxu0 %v1212
    %v6740 = vpop.f32.mrf.mxu0
    %v6741 = vadd.f32 %v6727, %v6740
    %v6742 = vpop.f32.mrf.mxu0
    %v6743 = vadd.f32 %v6729, %v6742
    %6744 = vdwg.mxu0
    %6745 = vmatpush.bf16.msra.mxu0 %v5130
    %6746 = vmatpush.bf16.msra.mxu0 %v5122
    %6747 = vmatpush.bf16.msra.mxu0 %v5114
    %6748 = vmatpush.bf16.msra.mxu0 %v5106
    %6749 = vmatpush.bf16.msra.mxu0 %v5098
    %6750 = vmatpush.bf16.msra.mxu0 %v5090
    %6751 = vmatpush.bf16.msra.mxu0 %v5082
    %6752 = vmatpush.bf16.msra.mxu0 %v5074
    %6753 = vmatmul.bf16.gmra.mxu0 %v1213
    %v6754 = vpop.f32.mrf.mxu0
    %v6755 = vadd.f32 %v6741, %v6754
    %v6756 = vpop.f32.mrf.mxu0
    %v6757 = vadd.f32 %v6743, %v6756
    %6758 = vdwg.mxu0
    %6759 = vmatpush.bf16.msra.mxu0 %v5194
    %6760 = vmatpush.bf16.msra.mxu0 %v5186
    %6761 = vmatpush.bf16.msra.mxu0 %v5178
    %6762 = vmatpush.bf16.msra.mxu0 %v5170
    %6763 = vmatpush.bf16.msra.mxu0 %v5162
    %6764 = vmatpush.bf16.msra.mxu0 %v5154
    %6765 = vmatpush.bf16.msra.mxu0 %v5146
    %6766 = vmatpush.bf16.msra.mxu0 %v5138
    %6767 = vmatmul.bf16.gmra.mxu0 %v1214
    %v6768 = vpop.f32.mrf.mxu0
    %v6769 = vadd.f32 %v6755, %v6768
    %v6770 = vpop.f32.mrf.mxu0
    %v6771 = vadd.f32 %v6757, %v6770
    %6772 = vdwg.mxu0
    %6773 = vmatpush.bf16.msra.mxu0 %v5258
    %6774 = vmatpush.bf16.msra.mxu0 %v5250
    %6775 = vmatpush.bf16.msra.mxu0 %v5242
    %6776 = vmatpush.bf16.msra.mxu0 %v5234
    %6777 = vmatpush.bf16.msra.mxu0 %v5226
    %6778 = vmatpush.bf16.msra.mxu0 %v5218
    %6779 = vmatpush.bf16.msra.mxu0 %v5210
    %6780 = vmatpush.bf16.msra.mxu0 %v5202
    %6781 = vmatmul.bf16.gmra.mxu0 %v1215
    %v6782 = vpop.f32.mrf.mxu0
    %v6783 = vadd.f32 %v6769, %v6782
    %v6784 = vpop.f32.mrf.mxu0
    %v6785 = vadd.f32 %v6771, %v6784
    %6786 = vdwg.mxu0
    %6787 = vmatpush.bf16.msra.mxu0 %v5322
    %6788 = vmatpush.bf16.msra.mxu0 %v5314
    %6789 = vmatpush.bf16.msra.mxu0 %v5306
    %6790 = vmatpush.bf16.msra.mxu0 %v5298
    %6791 = vmatpush.bf16.msra.mxu0 %v5290
    %6792 = vmatpush.bf16.msra.mxu0 %v5282
    %6793 = vmatpush.bf16.msra.mxu0 %v5274
    %6794 = vmatpush.bf16.msra.mxu0 %v5266
    %6795 = vmatmul.bf16.gmra.mxu0 %v1216
    %v6796 = vpop.f32.mrf.mxu0
    %v6797 = vadd.f32 %v6783, %v6796
    %v6798 = vpop.f32.mrf.mxu0
    %v6799 = vadd.f32 %v6785, %v6798
    %6800 = vdwg.mxu0
    %6801 = vmatpush.bf16.msra.mxu0 %v4363
    %6802 = vmatpush.bf16.msra.mxu0 %v4355
    %6803 = vmatpush.bf16.msra.mxu0 %v4347
    %6804 = vmatpush.bf16.msra.mxu0 %v4339
    %6805 = vmatpush.bf16.msra.mxu0 %v4331
    %6806 = vmatpush.bf16.msra.mxu0 %v4323
    %6807 = vmatpush.bf16.msra.mxu0 %v4315
    %6808 = vmatpush.bf16.msra.mxu0 %v4307
    %6809 = vmatmul.bf16.gmra.mxu0 %v1201
    %v6810 = vpop.f32.mrf.mxu0
    %v6811 = vadd.f32 %v1139, %v6810
    %v6812 = vpop.f32.mrf.mxu0
    %v6813 = vadd.f32 %v1139, %v6812
    %6814 = vdwg.mxu0
    %6815 = vmatpush.bf16.msra.mxu0 %v4427
    %6816 = vmatpush.bf16.msra.mxu0 %v4419
    %6817 = vmatpush.bf16.msra.mxu0 %v4411
    %6818 = vmatpush.bf16.msra.mxu0 %v4403
    %6819 = vmatpush.bf16.msra.mxu0 %v4395
    %6820 = vmatpush.bf16.msra.mxu0 %v4387
    %6821 = vmatpush.bf16.msra.mxu0 %v4379
    %6822 = vmatpush.bf16.msra.mxu0 %v4371
    %6823 = vmatmul.bf16.gmra.mxu0 %v1202
    %v6824 = vpop.f32.mrf.mxu0
    %v6825 = vadd.f32 %v6811, %v6824
    %v6826 = vpop.f32.mrf.mxu0
    %v6827 = vadd.f32 %v6813, %v6826
    %6828 = vdwg.mxu0
    %6829 = vmatpush.bf16.msra.mxu0 %v4491
    %6830 = vmatpush.bf16.msra.mxu0 %v4483
    %6831 = vmatpush.bf16.msra.mxu0 %v4475
    %6832 = vmatpush.bf16.msra.mxu0 %v4467
    %6833 = vmatpush.bf16.msra.mxu0 %v4459
    %6834 = vmatpush.bf16.msra.mxu0 %v4451
    %6835 = vmatpush.bf16.msra.mxu0 %v4443
    %6836 = vmatpush.bf16.msra.mxu0 %v4435
    %6837 = vmatmul.bf16.gmra.mxu0 %v1203
    %v6838 = vpop.f32.mrf.mxu0
    %v6839 = vadd.f32 %v6825, %v6838
    %v6840 = vpop.f32.mrf.mxu0
    %v6841 = vadd.f32 %v6827, %v6840
    %6842 = vdwg.mxu0
    %6843 = vmatpush.bf16.msra.mxu0 %v4555
    %6844 = vmatpush.bf16.msra.mxu0 %v4547
    %6845 = vmatpush.bf16.msra.mxu0 %v4539
    %6846 = vmatpush.bf16.msra.mxu0 %v4531
    %6847 = vmatpush.bf16.msra.mxu0 %v4523
    %6848 = vmatpush.bf16.msra.mxu0 %v4515
    %6849 = vmatpush.bf16.msra.mxu0 %v4507
    %6850 = vmatpush.bf16.msra.mxu0 %v4499
    %6851 = vmatmul.bf16.gmra.mxu0 %v1204
    %v6852 = vpop.f32.mrf.mxu0
    %v6853 = vadd.f32 %v6839, %v6852
    %v6854 = vpop.f32.mrf.mxu0
    %v6855 = vadd.f32 %v6841, %v6854
    %6856 = vdwg.mxu0
    %6857 = vmatpush.bf16.msra.mxu0 %v4619
    %6858 = vmatpush.bf16.msra.mxu0 %v4611
    %6859 = vmatpush.bf16.msra.mxu0 %v4603
    %6860 = vmatpush.bf16.msra.mxu0 %v4595
    %6861 = vmatpush.bf16.msra.mxu0 %v4587
    %6862 = vmatpush.bf16.msra.mxu0 %v4579
    %6863 = vmatpush.bf16.msra.mxu0 %v4571
    %6864 = vmatpush.bf16.msra.mxu0 %v4563
    %6865 = vmatmul.bf16.gmra.mxu0 %v1205
    %v6866 = vpop.f32.mrf.mxu0
    %v6867 = vadd.f32 %v6853, %v6866
    %v6868 = vpop.f32.mrf.mxu0
    %v6869 = vadd.f32 %v6855, %v6868
    %6870 = vdwg.mxu0
    %6871 = vmatpush.bf16.msra.mxu0 %v4683
    %6872 = vmatpush.bf16.msra.mxu0 %v4675
    %6873 = vmatpush.bf16.msra.mxu0 %v4667
    %6874 = vmatpush.bf16.msra.mxu0 %v4659
    %6875 = vmatpush.bf16.msra.mxu0 %v4651
    %6876 = vmatpush.bf16.msra.mxu0 %v4643
    %6877 = vmatpush.bf16.msra.mxu0 %v4635
    %6878 = vmatpush.bf16.msra.mxu0 %v4627
    %6879 = vmatmul.bf16.gmra.mxu0 %v1206
    %v6880 = vpop.f32.mrf.mxu0
    %v6881 = vadd.f32 %v6867, %v6880
    %v6882 = vpop.f32.mrf.mxu0
    %v6883 = vadd.f32 %v6869, %v6882
    %6884 = vdwg.mxu0
    %6885 = vmatpush.bf16.msra.mxu0 %v4747
    %6886 = vmatpush.bf16.msra.mxu0 %v4739
    %6887 = vmatpush.bf16.msra.mxu0 %v4731
    %6888 = vmatpush.bf16.msra.mxu0 %v4723
    %6889 = vmatpush.bf16.msra.mxu0 %v4715
    %6890 = vmatpush.bf16.msra.mxu0 %v4707
    %6891 = vmatpush.bf16.msra.mxu0 %v4699
    %6892 = vmatpush.bf16.msra.mxu0 %v4691
    %6893 = vmatmul.bf16.gmra.mxu0 %v1207
    %v6894 = vpop.f32.mrf.mxu0
    %v6895 = vadd.f32 %v6881, %v6894
    %v6896 = vpop.f32.mrf.mxu0
    %v6897 = vadd.f32 %v6883, %v6896
    %6898 = vdwg.mxu0
    %6899 = vmatpush.bf16.msra.mxu0 %v4811
    %6900 = vmatpush.bf16.msra.mxu0 %v4803
    %6901 = vmatpush.bf16.msra.mxu0 %v4795
    %6902 = vmatpush.bf16.msra.mxu0 %v4787
    %6903 = vmatpush.bf16.msra.mxu0 %v4779
    %6904 = vmatpush.bf16.msra.mxu0 %v4771
    %6905 = vmatpush.bf16.msra.mxu0 %v4763
    %6906 = vmatpush.bf16.msra.mxu0 %v4755
    %6907 = vmatmul.bf16.gmra.mxu0 %v1208
    %v6908 = vpop.f32.mrf.mxu0
    %v6909 = vadd.f32 %v6895, %v6908
    %v6910 = vpop.f32.mrf.mxu0
    %v6911 = vadd.f32 %v6897, %v6910
    %6912 = vdwg.mxu0
    %6913 = vmatpush.bf16.msra.mxu0 %v4875
    %6914 = vmatpush.bf16.msra.mxu0 %v4867
    %6915 = vmatpush.bf16.msra.mxu0 %v4859
    %6916 = vmatpush.bf16.msra.mxu0 %v4851
    %6917 = vmatpush.bf16.msra.mxu0 %v4843
    %6918 = vmatpush.bf16.msra.mxu0 %v4835
    %6919 = vmatpush.bf16.msra.mxu0 %v4827
    %6920 = vmatpush.bf16.msra.mxu0 %v4819
    %6921 = vmatmul.bf16.gmra.mxu0 %v1209
    %v6922 = vpop.f32.mrf.mxu0
    %v6923 = vadd.f32 %v6909, %v6922
    %v6924 = vpop.f32.mrf.mxu0
    %v6925 = vadd.f32 %v6911, %v6924
    %6926 = vdwg.mxu0
    %6927 = vmatpush.bf16.msra.mxu0 %v4939
    %6928 = vmatpush.bf16.msra.mxu0 %v4931
    %6929 = vmatpush.bf16.msra.mxu0 %v4923
    %6930 = vmatpush.bf16.msra.mxu0 %v4915
    %6931 = vmatpush.bf16.msra.mxu0 %v4907
    %6932 = vmatpush.bf16.msra.mxu0 %v4899
    %6933 = vmatpush.bf16.msra.mxu0 %v4891
    %6934 = vmatpush.bf16.msra.mxu0 %v4883
    %6935 = vmatmul.bf16.gmra.mxu0 %v1210
    %v6936 = vpop.f32.mrf.mxu0
    %v6937 = vadd.f32 %v6923, %v6936
    %v6938 = vpop.f32.mrf.mxu0
    %v6939 = vadd.f32 %v6925, %v6938
    %6940 = vdwg.mxu0
    %6941 = vmatpush.bf16.msra.mxu0 %v5003
    %6942 = vmatpush.bf16.msra.mxu0 %v4995
    %6943 = vmatpush.bf16.msra.mxu0 %v4987
    %6944 = vmatpush.bf16.msra.mxu0 %v4979
    %6945 = vmatpush.bf16.msra.mxu0 %v4971
    %6946 = vmatpush.bf16.msra.mxu0 %v4963
    %6947 = vmatpush.bf16.msra.mxu0 %v4955
    %6948 = vmatpush.bf16.msra.mxu0 %v4947
    %6949 = vmatmul.bf16.gmra.mxu0 %v1211
    %v6950 = vpop.f32.mrf.mxu0
    %v6951 = vadd.f32 %v6937, %v6950
    %v6952 = vpop.f32.mrf.mxu0
    %v6953 = vadd.f32 %v6939, %v6952
    %6954 = vdwg.mxu0
    %6955 = vmatpush.bf16.msra.mxu0 %v5067
    %6956 = vmatpush.bf16.msra.mxu0 %v5059
    %6957 = vmatpush.bf16.msra.mxu0 %v5051
    %6958 = vmatpush.bf16.msra.mxu0 %v5043
    %6959 = vmatpush.bf16.msra.mxu0 %v5035
    %6960 = vmatpush.bf16.msra.mxu0 %v5027
    %6961 = vmatpush.bf16.msra.mxu0 %v5019
    %6962 = vmatpush.bf16.msra.mxu0 %v5011
    %6963 = vmatmul.bf16.gmra.mxu0 %v1212
    %v6964 = vpop.f32.mrf.mxu0
    %v6965 = vadd.f32 %v6951, %v6964
    %v6966 = vpop.f32.mrf.mxu0
    %v6967 = vadd.f32 %v6953, %v6966
    %6968 = vdwg.mxu0
    %6969 = vmatpush.bf16.msra.mxu0 %v5131
    %6970 = vmatpush.bf16.msra.mxu0 %v5123
    %6971 = vmatpush.bf16.msra.mxu0 %v5115
    %6972 = vmatpush.bf16.msra.mxu0 %v5107
    %6973 = vmatpush.bf16.msra.mxu0 %v5099
    %6974 = vmatpush.bf16.msra.mxu0 %v5091
    %6975 = vmatpush.bf16.msra.mxu0 %v5083
    %6976 = vmatpush.bf16.msra.mxu0 %v5075
    %6977 = vmatmul.bf16.gmra.mxu0 %v1213
    %v6978 = vpop.f32.mrf.mxu0
    %v6979 = vadd.f32 %v6965, %v6978
    %v6980 = vpop.f32.mrf.mxu0
    %v6981 = vadd.f32 %v6967, %v6980
    %6982 = vdwg.mxu0
    %6983 = vmatpush.bf16.msra.mxu0 %v5195
    %6984 = vmatpush.bf16.msra.mxu0 %v5187
    %6985 = vmatpush.bf16.msra.mxu0 %v5179
    %6986 = vmatpush.bf16.msra.mxu0 %v5171
    %6987 = vmatpush.bf16.msra.mxu0 %v5163
    %6988 = vmatpush.bf16.msra.mxu0 %v5155
    %6989 = vmatpush.bf16.msra.mxu0 %v5147
    %6990 = vmatpush.bf16.msra.mxu0 %v5139
    %6991 = vmatmul.bf16.gmra.mxu0 %v1214
    %v6992 = vpop.f32.mrf.mxu0
    %v6993 = vadd.f32 %v6979, %v6992
    %v6994 = vpop.f32.mrf.mxu0
    %v6995 = vadd.f32 %v6981, %v6994
    %6996 = vdwg.mxu0
    %6997 = vmatpush.bf16.msra.mxu0 %v5259
    %6998 = vmatpush.bf16.msra.mxu0 %v5251
    %6999 = vmatpush.bf16.msra.mxu0 %v5243
    %7000 = vmatpush.bf16.msra.mxu0 %v5235
    %7001 = vmatpush.bf16.msra.mxu0 %v5227
    %7002 = vmatpush.bf16.msra.mxu0 %v5219
    %7003 = vmatpush.bf16.msra.mxu0 %v5211
    %7004 = vmatpush.bf16.msra.mxu0 %v5203
    %7005 = vmatmul.bf16.gmra.mxu0 %v1215
    %v7006 = vpop.f32.mrf.mxu0
    %v7007 = vadd.f32 %v6993, %v7006
    %v7008 = vpop.f32.mrf.mxu0
    %v7009 = vadd.f32 %v6995, %v7008
    %7010 = vdwg.mxu0
    %7011 = vmatpush.bf16.msra.mxu0 %v5323
    %7012 = vmatpush.bf16.msra.mxu0 %v5315
    %7013 = vmatpush.bf16.msra.mxu0 %v5307
    %7014 = vmatpush.bf16.msra.mxu0 %v5299
    %7015 = vmatpush.bf16.msra.mxu0 %v5291
    %7016 = vmatpush.bf16.msra.mxu0 %v5283
    %7017 = vmatpush.bf16.msra.mxu0 %v5275
    %7018 = vmatpush.bf16.msra.mxu0 %v5267
    %7019 = vmatmul.bf16.gmra.mxu0 %v1216
    %v7020 = vpop.f32.mrf.mxu0
    %v7021 = vadd.f32 %v7007, %v7020
    %v7022 = vpop.f32.mrf.mxu0
    %v7023 = vadd.f32 %v7009, %v7022
    %7024 = vdwg.mxu0
    %7025 = vmatpush.bf16.msra.mxu0 %v4364
    %7026 = vmatpush.bf16.msra.mxu0 %v4356
    %7027 = vmatpush.bf16.msra.mxu0 %v4348
    %7028 = vmatpush.bf16.msra.mxu0 %v4340
    %7029 = vmatpush.bf16.msra.mxu0 %v4332
    %7030 = vmatpush.bf16.msra.mxu0 %v4324
    %7031 = vmatpush.bf16.msra.mxu0 %v4316
    %7032 = vmatpush.bf16.msra.mxu0 %v4308
    %7033 = vmatmul.bf16.gmra.mxu0 %v1201
    %v7034 = vpop.f32.mrf.mxu0
    %v7035 = vadd.f32 %v1140, %v7034
    %v7036 = vpop.f32.mrf.mxu0
    %v7037 = vadd.f32 %v1140, %v7036
    %7038 = vdwg.mxu0
    %7039 = vmatpush.bf16.msra.mxu0 %v4428
    %7040 = vmatpush.bf16.msra.mxu0 %v4420
    %7041 = vmatpush.bf16.msra.mxu0 %v4412
    %7042 = vmatpush.bf16.msra.mxu0 %v4404
    %7043 = vmatpush.bf16.msra.mxu0 %v4396
    %7044 = vmatpush.bf16.msra.mxu0 %v4388
    %7045 = vmatpush.bf16.msra.mxu0 %v4380
    %7046 = vmatpush.bf16.msra.mxu0 %v4372
    %7047 = vmatmul.bf16.gmra.mxu0 %v1202
    %v7048 = vpop.f32.mrf.mxu0
    %v7049 = vadd.f32 %v7035, %v7048
    %v7050 = vpop.f32.mrf.mxu0
    %v7051 = vadd.f32 %v7037, %v7050
    %7052 = vdwg.mxu0
    %7053 = vmatpush.bf16.msra.mxu0 %v4492
    %7054 = vmatpush.bf16.msra.mxu0 %v4484
    %7055 = vmatpush.bf16.msra.mxu0 %v4476
    %7056 = vmatpush.bf16.msra.mxu0 %v4468
    %7057 = vmatpush.bf16.msra.mxu0 %v4460
    %7058 = vmatpush.bf16.msra.mxu0 %v4452
    %7059 = vmatpush.bf16.msra.mxu0 %v4444
    %7060 = vmatpush.bf16.msra.mxu0 %v4436
    %7061 = vmatmul.bf16.gmra.mxu0 %v1203
    %v7062 = vpop.f32.mrf.mxu0
    %v7063 = vadd.f32 %v7049, %v7062
    %v7064 = vpop.f32.mrf.mxu0
    %v7065 = vadd.f32 %v7051, %v7064
    %7066 = vdwg.mxu0
    %7067 = vmatpush.bf16.msra.mxu0 %v4556
    %7068 = vmatpush.bf16.msra.mxu0 %v4548
    %7069 = vmatpush.bf16.msra.mxu0 %v4540
    %7070 = vmatpush.bf16.msra.mxu0 %v4532
    %7071 = vmatpush.bf16.msra.mxu0 %v4524
    %7072 = vmatpush.bf16.msra.mxu0 %v4516
    %7073 = vmatpush.bf16.msra.mxu0 %v4508
    %7074 = vmatpush.bf16.msra.mxu0 %v4500
    %7075 = vmatmul.bf16.gmra.mxu0 %v1204
    %v7076 = vpop.f32.mrf.mxu0
    %v7077 = vadd.f32 %v7063, %v7076
    %v7078 = vpop.f32.mrf.mxu0
    %v7079 = vadd.f32 %v7065, %v7078
    %7080 = vdwg.mxu0
    %7081 = vmatpush.bf16.msra.mxu0 %v4620
    %7082 = vmatpush.bf16.msra.mxu0 %v4612
    %7083 = vmatpush.bf16.msra.mxu0 %v4604
    %7084 = vmatpush.bf16.msra.mxu0 %v4596
    %7085 = vmatpush.bf16.msra.mxu0 %v4588
    %7086 = vmatpush.bf16.msra.mxu0 %v4580
    %7087 = vmatpush.bf16.msra.mxu0 %v4572
    %7088 = vmatpush.bf16.msra.mxu0 %v4564
    %7089 = vmatmul.bf16.gmra.mxu0 %v1205
    %v7090 = vpop.f32.mrf.mxu0
    %v7091 = vadd.f32 %v7077, %v7090
    %v7092 = vpop.f32.mrf.mxu0
    %v7093 = vadd.f32 %v7079, %v7092
    %7094 = vdwg.mxu0
    %7095 = vmatpush.bf16.msra.mxu0 %v4684
    %7096 = vmatpush.bf16.msra.mxu0 %v4676
    %7097 = vmatpush.bf16.msra.mxu0 %v4668
    %7098 = vmatpush.bf16.msra.mxu0 %v4660
    %7099 = vmatpush.bf16.msra.mxu0 %v4652
    %7100 = vmatpush.bf16.msra.mxu0 %v4644
    %7101 = vmatpush.bf16.msra.mxu0 %v4636
    %7102 = vmatpush.bf16.msra.mxu0 %v4628
    %7103 = vmatmul.bf16.gmra.mxu0 %v1206
    %v7104 = vpop.f32.mrf.mxu0
    %v7105 = vadd.f32 %v7091, %v7104
    %v7106 = vpop.f32.mrf.mxu0
    %v7107 = vadd.f32 %v7093, %v7106
    %7108 = vdwg.mxu0
    %7109 = vmatpush.bf16.msra.mxu0 %v4748
    %7110 = vmatpush.bf16.msra.mxu0 %v4740
    %7111 = vmatpush.bf16.msra.mxu0 %v4732
    %7112 = vmatpush.bf16.msra.mxu0 %v4724
    %7113 = vmatpush.bf16.msra.mxu0 %v4716
    %7114 = vmatpush.bf16.msra.mxu0 %v4708
    %7115 = vmatpush.bf16.msra.mxu0 %v4700
    %7116 = vmatpush.bf16.msra.mxu0 %v4692
    %7117 = vmatmul.bf16.gmra.mxu0 %v1207
    %v7118 = vpop.f32.mrf.mxu0
    %v7119 = vadd.f32 %v7105, %v7118
    %v7120 = vpop.f32.mrf.mxu0
    %v7121 = vadd.f32 %v7107, %v7120
    %7122 = vdwg.mxu0
    %7123 = vmatpush.bf16.msra.mxu0 %v4812
    %7124 = vmatpush.bf16.msra.mxu0 %v4804
    %7125 = vmatpush.bf16.msra.mxu0 %v4796
    %7126 = vmatpush.bf16.msra.mxu0 %v4788
    %7127 = vmatpush.bf16.msra.mxu0 %v4780
    %7128 = vmatpush.bf16.msra.mxu0 %v4772
    %7129 = vmatpush.bf16.msra.mxu0 %v4764
    %7130 = vmatpush.bf16.msra.mxu0 %v4756
    %7131 = vmatmul.bf16.gmra.mxu0 %v1208
    %v7132 = vpop.f32.mrf.mxu0
    %v7133 = vadd.f32 %v7119, %v7132
    %v7134 = vpop.f32.mrf.mxu0
    %v7135 = vadd.f32 %v7121, %v7134
    %7136 = vdwg.mxu0
    %7137 = vmatpush.bf16.msra.mxu0 %v4876
    %7138 = vmatpush.bf16.msra.mxu0 %v4868
    %7139 = vmatpush.bf16.msra.mxu0 %v4860
    %7140 = vmatpush.bf16.msra.mxu0 %v4852
    %7141 = vmatpush.bf16.msra.mxu0 %v4844
    %7142 = vmatpush.bf16.msra.mxu0 %v4836
    %7143 = vmatpush.bf16.msra.mxu0 %v4828
    %7144 = vmatpush.bf16.msra.mxu0 %v4820
    %7145 = vmatmul.bf16.gmra.mxu0 %v1209
    %v7146 = vpop.f32.mrf.mxu0
    %v7147 = vadd.f32 %v7133, %v7146
    %v7148 = vpop.f32.mrf.mxu0
    %v7149 = vadd.f32 %v7135, %v7148
    %7150 = vdwg.mxu0
    %7151 = vmatpush.bf16.msra.mxu0 %v4940
    %7152 = vmatpush.bf16.msra.mxu0 %v4932
    %7153 = vmatpush.bf16.msra.mxu0 %v4924
    %7154 = vmatpush.bf16.msra.mxu0 %v4916
    %7155 = vmatpush.bf16.msra.mxu0 %v4908
    %7156 = vmatpush.bf16.msra.mxu0 %v4900
    %7157 = vmatpush.bf16.msra.mxu0 %v4892
    %7158 = vmatpush.bf16.msra.mxu0 %v4884
    %7159 = vmatmul.bf16.gmra.mxu0 %v1210
    %v7160 = vpop.f32.mrf.mxu0
    %v7161 = vadd.f32 %v7147, %v7160
    %v7162 = vpop.f32.mrf.mxu0
    %v7163 = vadd.f32 %v7149, %v7162
    %7164 = vdwg.mxu0
    %7165 = vmatpush.bf16.msra.mxu0 %v5004
    %7166 = vmatpush.bf16.msra.mxu0 %v4996
    %7167 = vmatpush.bf16.msra.mxu0 %v4988
    %7168 = vmatpush.bf16.msra.mxu0 %v4980
    %7169 = vmatpush.bf16.msra.mxu0 %v4972
    %7170 = vmatpush.bf16.msra.mxu0 %v4964
    %7171 = vmatpush.bf16.msra.mxu0 %v4956
    %7172 = vmatpush.bf16.msra.mxu0 %v4948
    %7173 = vmatmul.bf16.gmra.mxu0 %v1211
    %v7174 = vpop.f32.mrf.mxu0
    %v7175 = vadd.f32 %v7161, %v7174
    %v7176 = vpop.f32.mrf.mxu0
    %v7177 = vadd.f32 %v7163, %v7176
    %7178 = vdwg.mxu0
    %7179 = vmatpush.bf16.msra.mxu0 %v5068
    %7180 = vmatpush.bf16.msra.mxu0 %v5060
    %7181 = vmatpush.bf16.msra.mxu0 %v5052
    %7182 = vmatpush.bf16.msra.mxu0 %v5044
    %7183 = vmatpush.bf16.msra.mxu0 %v5036
    %7184 = vmatpush.bf16.msra.mxu0 %v5028
    %7185 = vmatpush.bf16.msra.mxu0 %v5020
    %7186 = vmatpush.bf16.msra.mxu0 %v5012
    %7187 = vmatmul.bf16.gmra.mxu0 %v1212
    %v7188 = vpop.f32.mrf.mxu0
    %v7189 = vadd.f32 %v7175, %v7188
    %v7190 = vpop.f32.mrf.mxu0
    %v7191 = vadd.f32 %v7177, %v7190
    %7192 = vdwg.mxu0
    %7193 = vmatpush.bf16.msra.mxu0 %v5132
    %7194 = vmatpush.bf16.msra.mxu0 %v5124
    %7195 = vmatpush.bf16.msra.mxu0 %v5116
    %7196 = vmatpush.bf16.msra.mxu0 %v5108
    %7197 = vmatpush.bf16.msra.mxu0 %v5100
    %7198 = vmatpush.bf16.msra.mxu0 %v5092
    %7199 = vmatpush.bf16.msra.mxu0 %v5084
    %7200 = vmatpush.bf16.msra.mxu0 %v5076
    %7201 = vmatmul.bf16.gmra.mxu0 %v1213
    %v7202 = vpop.f32.mrf.mxu0
    %v7203 = vadd.f32 %v7189, %v7202
    %v7204 = vpop.f32.mrf.mxu0
    %v7205 = vadd.f32 %v7191, %v7204
    %7206 = vdwg.mxu0
    %7207 = vmatpush.bf16.msra.mxu0 %v5196
    %7208 = vmatpush.bf16.msra.mxu0 %v5188
    %7209 = vmatpush.bf16.msra.mxu0 %v5180
    %7210 = vmatpush.bf16.msra.mxu0 %v5172
    %7211 = vmatpush.bf16.msra.mxu0 %v5164
    %7212 = vmatpush.bf16.msra.mxu0 %v5156
    %7213 = vmatpush.bf16.msra.mxu0 %v5148
    %7214 = vmatpush.bf16.msra.mxu0 %v5140
    %7215 = vmatmul.bf16.gmra.mxu0 %v1214
    %v7216 = vpop.f32.mrf.mxu0
    %v7217 = vadd.f32 %v7203, %v7216
    %v7218 = vpop.f32.mrf.mxu0
    %v7219 = vadd.f32 %v7205, %v7218
    %7220 = vdwg.mxu0
    %7221 = vmatpush.bf16.msra.mxu0 %v5260
    %7222 = vmatpush.bf16.msra.mxu0 %v5252
    %7223 = vmatpush.bf16.msra.mxu0 %v5244
    %7224 = vmatpush.bf16.msra.mxu0 %v5236
    %7225 = vmatpush.bf16.msra.mxu0 %v5228
    %7226 = vmatpush.bf16.msra.mxu0 %v5220
    %7227 = vmatpush.bf16.msra.mxu0 %v5212
    %7228 = vmatpush.bf16.msra.mxu0 %v5204
    %7229 = vmatmul.bf16.gmra.mxu0 %v1215
    %v7230 = vpop.f32.mrf.mxu0
    %v7231 = vadd.f32 %v7217, %v7230
    %v7232 = vpop.f32.mrf.mxu0
    %v7233 = vadd.f32 %v7219, %v7232
    %7234 = vdwg.mxu0
    %7235 = vmatpush.bf16.msra.mxu0 %v5324
    %7236 = vmatpush.bf16.msra.mxu0 %v5316
    %7237 = vmatpush.bf16.msra.mxu0 %v5308
    %7238 = vmatpush.bf16.msra.mxu0 %v5300
    %7239 = vmatpush.bf16.msra.mxu0 %v5292
    %7240 = vmatpush.bf16.msra.mxu0 %v5284
    %7241 = vmatpush.bf16.msra.mxu0 %v5276
    %7242 = vmatpush.bf16.msra.mxu0 %v5268
    %7243 = vmatmul.bf16.gmra.mxu0 %v1216
    %v7244 = vpop.f32.mrf.mxu0
    %v7245 = vadd.f32 %v7231, %v7244
    %v7246 = vpop.f32.mrf.mxu0
    %v7247 = vadd.f32 %v7233, %v7246
    %7248 = vdwg.mxu0
    %7249 = vmatpush.bf16.msra.mxu0 %v4365
    %7250 = vmatpush.bf16.msra.mxu0 %v4357
    %7251 = vmatpush.bf16.msra.mxu0 %v4349
    %7252 = vmatpush.bf16.msra.mxu0 %v4341
    %7253 = vmatpush.bf16.msra.mxu0 %v4333
    %7254 = vmatpush.bf16.msra.mxu0 %v4325
    %7255 = vmatpush.bf16.msra.mxu0 %v4317
    %7256 = vmatpush.bf16.msra.mxu0 %v4309
    %7257 = vmatmul.bf16.gmra.mxu0 %v1201
    %v7258 = vpop.f32.mrf.mxu0
    %v7259 = vadd.f32 %v1141, %v7258
    %v7260 = vpop.f32.mrf.mxu0
    %v7261 = vadd.f32 %v1141, %v7260
    %7262 = vdwg.mxu0
    %7263 = vmatpush.bf16.msra.mxu0 %v4429
    %7264 = vmatpush.bf16.msra.mxu0 %v4421
    %7265 = vmatpush.bf16.msra.mxu0 %v4413
    %7266 = vmatpush.bf16.msra.mxu0 %v4405
    %7267 = vmatpush.bf16.msra.mxu0 %v4397
    %7268 = vmatpush.bf16.msra.mxu0 %v4389
    %7269 = vmatpush.bf16.msra.mxu0 %v4381
    %7270 = vmatpush.bf16.msra.mxu0 %v4373
    %7271 = vmatmul.bf16.gmra.mxu0 %v1202
    %v7272 = vpop.f32.mrf.mxu0
    %v7273 = vadd.f32 %v7259, %v7272
    %v7274 = vpop.f32.mrf.mxu0
    %v7275 = vadd.f32 %v7261, %v7274
    %7276 = vdwg.mxu0
    %7277 = vmatpush.bf16.msra.mxu0 %v4493
    %7278 = vmatpush.bf16.msra.mxu0 %v4485
    %7279 = vmatpush.bf16.msra.mxu0 %v4477
    %7280 = vmatpush.bf16.msra.mxu0 %v4469
    %7281 = vmatpush.bf16.msra.mxu0 %v4461
    %7282 = vmatpush.bf16.msra.mxu0 %v4453
    %7283 = vmatpush.bf16.msra.mxu0 %v4445
    %7284 = vmatpush.bf16.msra.mxu0 %v4437
    %7285 = vmatmul.bf16.gmra.mxu0 %v1203
    %v7286 = vpop.f32.mrf.mxu0
    %v7287 = vadd.f32 %v7273, %v7286
    %v7288 = vpop.f32.mrf.mxu0
    %v7289 = vadd.f32 %v7275, %v7288
    %7290 = vdwg.mxu0
    %7291 = vmatpush.bf16.msra.mxu0 %v4557
    %7292 = vmatpush.bf16.msra.mxu0 %v4549
    %7293 = vmatpush.bf16.msra.mxu0 %v4541
    %7294 = vmatpush.bf16.msra.mxu0 %v4533
    %7295 = vmatpush.bf16.msra.mxu0 %v4525
    %7296 = vmatpush.bf16.msra.mxu0 %v4517
    %7297 = vmatpush.bf16.msra.mxu0 %v4509
    %7298 = vmatpush.bf16.msra.mxu0 %v4501
    %7299 = vmatmul.bf16.gmra.mxu0 %v1204
    %v7300 = vpop.f32.mrf.mxu0
    %v7301 = vadd.f32 %v7287, %v7300
    %v7302 = vpop.f32.mrf.mxu0
    %v7303 = vadd.f32 %v7289, %v7302
    %7304 = vdwg.mxu0
    %7305 = vmatpush.bf16.msra.mxu0 %v4621
    %7306 = vmatpush.bf16.msra.mxu0 %v4613
    %7307 = vmatpush.bf16.msra.mxu0 %v4605
    %7308 = vmatpush.bf16.msra.mxu0 %v4597
    %7309 = vmatpush.bf16.msra.mxu0 %v4589
    %7310 = vmatpush.bf16.msra.mxu0 %v4581
    %7311 = vmatpush.bf16.msra.mxu0 %v4573
    %7312 = vmatpush.bf16.msra.mxu0 %v4565
    %7313 = vmatmul.bf16.gmra.mxu0 %v1205
    %v7314 = vpop.f32.mrf.mxu0
    %v7315 = vadd.f32 %v7301, %v7314
    %v7316 = vpop.f32.mrf.mxu0
    %v7317 = vadd.f32 %v7303, %v7316
    %7318 = vdwg.mxu0
    %7319 = vmatpush.bf16.msra.mxu0 %v4685
    %7320 = vmatpush.bf16.msra.mxu0 %v4677
    %7321 = vmatpush.bf16.msra.mxu0 %v4669
    %7322 = vmatpush.bf16.msra.mxu0 %v4661
    %7323 = vmatpush.bf16.msra.mxu0 %v4653
    %7324 = vmatpush.bf16.msra.mxu0 %v4645
    %7325 = vmatpush.bf16.msra.mxu0 %v4637
    %7326 = vmatpush.bf16.msra.mxu0 %v4629
    %7327 = vmatmul.bf16.gmra.mxu0 %v1206
    %v7328 = vpop.f32.mrf.mxu0
    %v7329 = vadd.f32 %v7315, %v7328
    %v7330 = vpop.f32.mrf.mxu0
    %v7331 = vadd.f32 %v7317, %v7330
    %7332 = vdwg.mxu0
    %7333 = vmatpush.bf16.msra.mxu0 %v4749
    %7334 = vmatpush.bf16.msra.mxu0 %v4741
    %7335 = vmatpush.bf16.msra.mxu0 %v4733
    %7336 = vmatpush.bf16.msra.mxu0 %v4725
    %7337 = vmatpush.bf16.msra.mxu0 %v4717
    %7338 = vmatpush.bf16.msra.mxu0 %v4709
    %7339 = vmatpush.bf16.msra.mxu0 %v4701
    %7340 = vmatpush.bf16.msra.mxu0 %v4693
    %7341 = vmatmul.bf16.gmra.mxu0 %v1207
    %v7342 = vpop.f32.mrf.mxu0
    %v7343 = vadd.f32 %v7329, %v7342
    %v7344 = vpop.f32.mrf.mxu0
    %v7345 = vadd.f32 %v7331, %v7344
    %7346 = vdwg.mxu0
    %7347 = vmatpush.bf16.msra.mxu0 %v4813
    %7348 = vmatpush.bf16.msra.mxu0 %v4805
    %7349 = vmatpush.bf16.msra.mxu0 %v4797
    %7350 = vmatpush.bf16.msra.mxu0 %v4789
    %7351 = vmatpush.bf16.msra.mxu0 %v4781
    %7352 = vmatpush.bf16.msra.mxu0 %v4773
    %7353 = vmatpush.bf16.msra.mxu0 %v4765
    %7354 = vmatpush.bf16.msra.mxu0 %v4757
    %7355 = vmatmul.bf16.gmra.mxu0 %v1208
    %v7356 = vpop.f32.mrf.mxu0
    %v7357 = vadd.f32 %v7343, %v7356
    %v7358 = vpop.f32.mrf.mxu0
    %v7359 = vadd.f32 %v7345, %v7358
    %7360 = vdwg.mxu0
    %7361 = vmatpush.bf16.msra.mxu0 %v4877
    %7362 = vmatpush.bf16.msra.mxu0 %v4869
    %7363 = vmatpush.bf16.msra.mxu0 %v4861
    %7364 = vmatpush.bf16.msra.mxu0 %v4853
    %7365 = vmatpush.bf16.msra.mxu0 %v4845
    %7366 = vmatpush.bf16.msra.mxu0 %v4837
    %7367 = vmatpush.bf16.msra.mxu0 %v4829
    %7368 = vmatpush.bf16.msra.mxu0 %v4821
    %7369 = vmatmul.bf16.gmra.mxu0 %v1209
    %v7370 = vpop.f32.mrf.mxu0
    %v7371 = vadd.f32 %v7357, %v7370
    %v7372 = vpop.f32.mrf.mxu0
    %v7373 = vadd.f32 %v7359, %v7372
    %7374 = vdwg.mxu0
    %7375 = vmatpush.bf16.msra.mxu0 %v4941
    %7376 = vmatpush.bf16.msra.mxu0 %v4933
    %7377 = vmatpush.bf16.msra.mxu0 %v4925
    %7378 = vmatpush.bf16.msra.mxu0 %v4917
    %7379 = vmatpush.bf16.msra.mxu0 %v4909
    %7380 = vmatpush.bf16.msra.mxu0 %v4901
    %7381 = vmatpush.bf16.msra.mxu0 %v4893
    %7382 = vmatpush.bf16.msra.mxu0 %v4885
    %7383 = vmatmul.bf16.gmra.mxu0 %v1210
    %v7384 = vpop.f32.mrf.mxu0
    %v7385 = vadd.f32 %v7371, %v7384
    %v7386 = vpop.f32.mrf.mxu0
    %v7387 = vadd.f32 %v7373, %v7386
    %7388 = vdwg.mxu0
    %7389 = vmatpush.bf16.msra.mxu0 %v5005
    %7390 = vmatpush.bf16.msra.mxu0 %v4997
    %7391 = vmatpush.bf16.msra.mxu0 %v4989
    %7392 = vmatpush.bf16.msra.mxu0 %v4981
    %7393 = vmatpush.bf16.msra.mxu0 %v4973
    %7394 = vmatpush.bf16.msra.mxu0 %v4965
    %7395 = vmatpush.bf16.msra.mxu0 %v4957
    %7396 = vmatpush.bf16.msra.mxu0 %v4949
    %7397 = vmatmul.bf16.gmra.mxu0 %v1211
    %v7398 = vpop.f32.mrf.mxu0
    %v7399 = vadd.f32 %v7385, %v7398
    %v7400 = vpop.f32.mrf.mxu0
    %v7401 = vadd.f32 %v7387, %v7400
    %7402 = vdwg.mxu0
    %7403 = vmatpush.bf16.msra.mxu0 %v5069
    %7404 = vmatpush.bf16.msra.mxu0 %v5061
    %7405 = vmatpush.bf16.msra.mxu0 %v5053
    %7406 = vmatpush.bf16.msra.mxu0 %v5045
    %7407 = vmatpush.bf16.msra.mxu0 %v5037
    %7408 = vmatpush.bf16.msra.mxu0 %v5029
    %7409 = vmatpush.bf16.msra.mxu0 %v5021
    %7410 = vmatpush.bf16.msra.mxu0 %v5013
    %7411 = vmatmul.bf16.gmra.mxu0 %v1212
    %v7412 = vpop.f32.mrf.mxu0
    %v7413 = vadd.f32 %v7399, %v7412
    %v7414 = vpop.f32.mrf.mxu0
    %v7415 = vadd.f32 %v7401, %v7414
    %7416 = vdwg.mxu0
    %7417 = vmatpush.bf16.msra.mxu0 %v5133
    %7418 = vmatpush.bf16.msra.mxu0 %v5125
    %7419 = vmatpush.bf16.msra.mxu0 %v5117
    %7420 = vmatpush.bf16.msra.mxu0 %v5109
    %7421 = vmatpush.bf16.msra.mxu0 %v5101
    %7422 = vmatpush.bf16.msra.mxu0 %v5093
    %7423 = vmatpush.bf16.msra.mxu0 %v5085
    %7424 = vmatpush.bf16.msra.mxu0 %v5077
    %7425 = vmatmul.bf16.gmra.mxu0 %v1213
    %v7426 = vpop.f32.mrf.mxu0
    %v7427 = vadd.f32 %v7413, %v7426
    %v7428 = vpop.f32.mrf.mxu0
    %v7429 = vadd.f32 %v7415, %v7428
    %7430 = vdwg.mxu0
    %7431 = vmatpush.bf16.msra.mxu0 %v5197
    %7432 = vmatpush.bf16.msra.mxu0 %v5189
    %7433 = vmatpush.bf16.msra.mxu0 %v5181
    %7434 = vmatpush.bf16.msra.mxu0 %v5173
    %7435 = vmatpush.bf16.msra.mxu0 %v5165
    %7436 = vmatpush.bf16.msra.mxu0 %v5157
    %7437 = vmatpush.bf16.msra.mxu0 %v5149
    %7438 = vmatpush.bf16.msra.mxu0 %v5141
    %7439 = vmatmul.bf16.gmra.mxu0 %v1214
    %v7440 = vpop.f32.mrf.mxu0
    %v7441 = vadd.f32 %v7427, %v7440
    %v7442 = vpop.f32.mrf.mxu0
    %v7443 = vadd.f32 %v7429, %v7442
    %7444 = vdwg.mxu0
    %7445 = vmatpush.bf16.msra.mxu0 %v5261
    %7446 = vmatpush.bf16.msra.mxu0 %v5253
    %7447 = vmatpush.bf16.msra.mxu0 %v5245
    %7448 = vmatpush.bf16.msra.mxu0 %v5237
    %7449 = vmatpush.bf16.msra.mxu0 %v5229
    %7450 = vmatpush.bf16.msra.mxu0 %v5221
    %7451 = vmatpush.bf16.msra.mxu0 %v5213
    %7452 = vmatpush.bf16.msra.mxu0 %v5205
    %7453 = vmatmul.bf16.gmra.mxu0 %v1215
    %v7454 = vpop.f32.mrf.mxu0
    %v7455 = vadd.f32 %v7441, %v7454
    %v7456 = vpop.f32.mrf.mxu0
    %v7457 = vadd.f32 %v7443, %v7456
    %7458 = vdwg.mxu0
    %7459 = vmatpush.bf16.msra.mxu0 %v5325
    %7460 = vmatpush.bf16.msra.mxu0 %v5317
    %7461 = vmatpush.bf16.msra.mxu0 %v5309
    %7462 = vmatpush.bf16.msra.mxu0 %v5301
    %7463 = vmatpush.bf16.msra.mxu0 %v5293
    %7464 = vmatpush.bf16.msra.mxu0 %v5285
    %7465 = vmatpush.bf16.msra.mxu0 %v5277
    %7466 = vmatpush.bf16.msra.mxu0 %v5269
    %7467 = vmatmul.bf16.gmra.mxu0 %v1216
    %v7468 = vpop.f32.mrf.mxu0
    %v7469 = vadd.f32 %v7455, %v7468
    %v7470 = vpop.f32.mrf.mxu0
    %v7471 = vadd.f32 %v7457, %v7470
    %7472 = vdwg.mxu0
    %7473 = vmatpush.bf16.msra.mxu0 %v4366
    %7474 = vmatpush.bf16.msra.mxu0 %v4358
    %7475 = vmatpush.bf16.msra.mxu0 %v4350
    %7476 = vmatpush.bf16.msra.mxu0 %v4342
    %7477 = vmatpush.bf16.msra.mxu0 %v4334
    %7478 = vmatpush.bf16.msra.mxu0 %v4326
    %7479 = vmatpush.bf16.msra.mxu0 %v4318
    %7480 = vmatpush.bf16.msra.mxu0 %v4310
    %7481 = vmatmul.bf16.gmra.mxu0 %v1201
    %v7482 = vpop.f32.mrf.mxu0
    %v7483 = vadd.f32 %v1142, %v7482
    %v7484 = vpop.f32.mrf.mxu0
    %v7485 = vadd.f32 %v1142, %v7484
    %7486 = vdwg.mxu0
    %7487 = vmatpush.bf16.msra.mxu0 %v4430
    %7488 = vmatpush.bf16.msra.mxu0 %v4422
    %7489 = vmatpush.bf16.msra.mxu0 %v4414
    %7490 = vmatpush.bf16.msra.mxu0 %v4406
    %7491 = vmatpush.bf16.msra.mxu0 %v4398
    %7492 = vmatpush.bf16.msra.mxu0 %v4390
    %7493 = vmatpush.bf16.msra.mxu0 %v4382
    %7494 = vmatpush.bf16.msra.mxu0 %v4374
    %7495 = vmatmul.bf16.gmra.mxu0 %v1202
    %v7496 = vpop.f32.mrf.mxu0
    %v7497 = vadd.f32 %v7483, %v7496
    %v7498 = vpop.f32.mrf.mxu0
    %v7499 = vadd.f32 %v7485, %v7498
    %7500 = vdwg.mxu0
    %7501 = vmatpush.bf16.msra.mxu0 %v4494
    %7502 = vmatpush.bf16.msra.mxu0 %v4486
    %7503 = vmatpush.bf16.msra.mxu0 %v4478
    %7504 = vmatpush.bf16.msra.mxu0 %v4470
    %7505 = vmatpush.bf16.msra.mxu0 %v4462
    %7506 = vmatpush.bf16.msra.mxu0 %v4454
    %7507 = vmatpush.bf16.msra.mxu0 %v4446
    %7508 = vmatpush.bf16.msra.mxu0 %v4438
    %7509 = vmatmul.bf16.gmra.mxu0 %v1203
    %v7510 = vpop.f32.mrf.mxu0
    %v7511 = vadd.f32 %v7497, %v7510
    %v7512 = vpop.f32.mrf.mxu0
    %v7513 = vadd.f32 %v7499, %v7512
    %7514 = vdwg.mxu0
    %7515 = vmatpush.bf16.msra.mxu0 %v4558
    %7516 = vmatpush.bf16.msra.mxu0 %v4550
    %7517 = vmatpush.bf16.msra.mxu0 %v4542
    %7518 = vmatpush.bf16.msra.mxu0 %v4534
    %7519 = vmatpush.bf16.msra.mxu0 %v4526
    %7520 = vmatpush.bf16.msra.mxu0 %v4518
    %7521 = vmatpush.bf16.msra.mxu0 %v4510
    %7522 = vmatpush.bf16.msra.mxu0 %v4502
    %7523 = vmatmul.bf16.gmra.mxu0 %v1204
    %v7524 = vpop.f32.mrf.mxu0
    %v7525 = vadd.f32 %v7511, %v7524
    %v7526 = vpop.f32.mrf.mxu0
    %v7527 = vadd.f32 %v7513, %v7526
    %7528 = vdwg.mxu0
    %7529 = vmatpush.bf16.msra.mxu0 %v4622
    %7530 = vmatpush.bf16.msra.mxu0 %v4614
    %7531 = vmatpush.bf16.msra.mxu0 %v4606
    %7532 = vmatpush.bf16.msra.mxu0 %v4598
    %7533 = vmatpush.bf16.msra.mxu0 %v4590
    %7534 = vmatpush.bf16.msra.mxu0 %v4582
    %7535 = vmatpush.bf16.msra.mxu0 %v4574
    %7536 = vmatpush.bf16.msra.mxu0 %v4566
    %7537 = vmatmul.bf16.gmra.mxu0 %v1205
    %v7538 = vpop.f32.mrf.mxu0
    %v7539 = vadd.f32 %v7525, %v7538
    %v7540 = vpop.f32.mrf.mxu0
    %v7541 = vadd.f32 %v7527, %v7540
    %7542 = vdwg.mxu0
    %7543 = vmatpush.bf16.msra.mxu0 %v4686
    %7544 = vmatpush.bf16.msra.mxu0 %v4678
    %7545 = vmatpush.bf16.msra.mxu0 %v4670
    %7546 = vmatpush.bf16.msra.mxu0 %v4662
    %7547 = vmatpush.bf16.msra.mxu0 %v4654
    %7548 = vmatpush.bf16.msra.mxu0 %v4646
    %7549 = vmatpush.bf16.msra.mxu0 %v4638
    %7550 = vmatpush.bf16.msra.mxu0 %v4630
    %7551 = vmatmul.bf16.gmra.mxu0 %v1206
    %v7552 = vpop.f32.mrf.mxu0
    %v7553 = vadd.f32 %v7539, %v7552
    %v7554 = vpop.f32.mrf.mxu0
    %v7555 = vadd.f32 %v7541, %v7554
    %7556 = vdwg.mxu0
    %7557 = vmatpush.bf16.msra.mxu0 %v4750
    %7558 = vmatpush.bf16.msra.mxu0 %v4742
    %7559 = vmatpush.bf16.msra.mxu0 %v4734
    %7560 = vmatpush.bf16.msra.mxu0 %v4726
    %7561 = vmatpush.bf16.msra.mxu0 %v4718
    %7562 = vmatpush.bf16.msra.mxu0 %v4710
    %7563 = vmatpush.bf16.msra.mxu0 %v4702
    %7564 = vmatpush.bf16.msra.mxu0 %v4694
    %7565 = vmatmul.bf16.gmra.mxu0 %v1207
    %v7566 = vpop.f32.mrf.mxu0
    %v7567 = vadd.f32 %v7553, %v7566
    %v7568 = vpop.f32.mrf.mxu0
    %v7569 = vadd.f32 %v7555, %v7568
    %7570 = vdwg.mxu0
    %7571 = vmatpush.bf16.msra.mxu0 %v4814
    %7572 = vmatpush.bf16.msra.mxu0 %v4806
    %7573 = vmatpush.bf16.msra.mxu0 %v4798
    %7574 = vmatpush.bf16.msra.mxu0 %v4790
    %7575 = vmatpush.bf16.msra.mxu0 %v4782
    %7576 = vmatpush.bf16.msra.mxu0 %v4774
    %7577 = vmatpush.bf16.msra.mxu0 %v4766
    %7578 = vmatpush.bf16.msra.mxu0 %v4758
    %7579 = vmatmul.bf16.gmra.mxu0 %v1208
    %v7580 = vpop.f32.mrf.mxu0
    %v7581 = vadd.f32 %v7567, %v7580
    %v7582 = vpop.f32.mrf.mxu0
    %v7583 = vadd.f32 %v7569, %v7582
    %7584 = vdwg.mxu0
    %7585 = vmatpush.bf16.msra.mxu0 %v4878
    %7586 = vmatpush.bf16.msra.mxu0 %v4870
    %7587 = vmatpush.bf16.msra.mxu0 %v4862
    %7588 = vmatpush.bf16.msra.mxu0 %v4854
    %7589 = vmatpush.bf16.msra.mxu0 %v4846
    %7590 = vmatpush.bf16.msra.mxu0 %v4838
    %7591 = vmatpush.bf16.msra.mxu0 %v4830
    %7592 = vmatpush.bf16.msra.mxu0 %v4822
    %7593 = vmatmul.bf16.gmra.mxu0 %v1209
    %v7594 = vpop.f32.mrf.mxu0
    %v7595 = vadd.f32 %v7581, %v7594
    %v7596 = vpop.f32.mrf.mxu0
    %v7597 = vadd.f32 %v7583, %v7596
    %7598 = vdwg.mxu0
    %7599 = vmatpush.bf16.msra.mxu0 %v4942
    %7600 = vmatpush.bf16.msra.mxu0 %v4934
    %7601 = vmatpush.bf16.msra.mxu0 %v4926
    %7602 = vmatpush.bf16.msra.mxu0 %v4918
    %7603 = vmatpush.bf16.msra.mxu0 %v4910
    %7604 = vmatpush.bf16.msra.mxu0 %v4902
    %7605 = vmatpush.bf16.msra.mxu0 %v4894
    %7606 = vmatpush.bf16.msra.mxu0 %v4886
    %7607 = vmatmul.bf16.gmra.mxu0 %v1210
    %v7608 = vpop.f32.mrf.mxu0
    %v7609 = vadd.f32 %v7595, %v7608
    %v7610 = vpop.f32.mrf.mxu0
    %v7611 = vadd.f32 %v7597, %v7610
    %7612 = vdwg.mxu0
    %7613 = vmatpush.bf16.msra.mxu0 %v5006
    %7614 = vmatpush.bf16.msra.mxu0 %v4998
    %7615 = vmatpush.bf16.msra.mxu0 %v4990
    %7616 = vmatpush.bf16.msra.mxu0 %v4982
    %7617 = vmatpush.bf16.msra.mxu0 %v4974
    %7618 = vmatpush.bf16.msra.mxu0 %v4966
    %7619 = vmatpush.bf16.msra.mxu0 %v4958
    %7620 = vmatpush.bf16.msra.mxu0 %v4950
    %7621 = vmatmul.bf16.gmra.mxu0 %v1211
    %v7622 = vpop.f32.mrf.mxu0
    %v7623 = vadd.f32 %v7609, %v7622
    %v7624 = vpop.f32.mrf.mxu0
    %v7625 = vadd.f32 %v7611, %v7624
    %7626 = vdwg.mxu0
    %7627 = vmatpush.bf16.msra.mxu0 %v5070
    %7628 = vmatpush.bf16.msra.mxu0 %v5062
    %7629 = vmatpush.bf16.msra.mxu0 %v5054
    %7630 = vmatpush.bf16.msra.mxu0 %v5046
    %7631 = vmatpush.bf16.msra.mxu0 %v5038
    %7632 = vmatpush.bf16.msra.mxu0 %v5030
    %7633 = vmatpush.bf16.msra.mxu0 %v5022
    %7634 = vmatpush.bf16.msra.mxu0 %v5014
    %7635 = vmatmul.bf16.gmra.mxu0 %v1212
    %v7636 = vpop.f32.mrf.mxu0
    %v7637 = vadd.f32 %v7623, %v7636
    %v7638 = vpop.f32.mrf.mxu0
    %v7639 = vadd.f32 %v7625, %v7638
    %7640 = vdwg.mxu0
    %7641 = vmatpush.bf16.msra.mxu0 %v5134
    %7642 = vmatpush.bf16.msra.mxu0 %v5126
    %7643 = vmatpush.bf16.msra.mxu0 %v5118
    %7644 = vmatpush.bf16.msra.mxu0 %v5110
    %7645 = vmatpush.bf16.msra.mxu0 %v5102
    %7646 = vmatpush.bf16.msra.mxu0 %v5094
    %7647 = vmatpush.bf16.msra.mxu0 %v5086
    %7648 = vmatpush.bf16.msra.mxu0 %v5078
    %7649 = vmatmul.bf16.gmra.mxu0 %v1213
    %v7650 = vpop.f32.mrf.mxu0
    %v7651 = vadd.f32 %v7637, %v7650
    %v7652 = vpop.f32.mrf.mxu0
    %v7653 = vadd.f32 %v7639, %v7652
    %7654 = vdwg.mxu0
    %7655 = vmatpush.bf16.msra.mxu0 %v5198
    %7656 = vmatpush.bf16.msra.mxu0 %v5190
    %7657 = vmatpush.bf16.msra.mxu0 %v5182
    %7658 = vmatpush.bf16.msra.mxu0 %v5174
    %7659 = vmatpush.bf16.msra.mxu0 %v5166
    %7660 = vmatpush.bf16.msra.mxu0 %v5158
    %7661 = vmatpush.bf16.msra.mxu0 %v5150
    %7662 = vmatpush.bf16.msra.mxu0 %v5142
    %7663 = vmatmul.bf16.gmra.mxu0 %v1214
    %v7664 = vpop.f32.mrf.mxu0
    %v7665 = vadd.f32 %v7651, %v7664
    %v7666 = vpop.f32.mrf.mxu0
    %v7667 = vadd.f32 %v7653, %v7666
    %7668 = vdwg.mxu0
    %7669 = vmatpush.bf16.msra.mxu0 %v5262
    %7670 = vmatpush.bf16.msra.mxu0 %v5254
    %7671 = vmatpush.bf16.msra.mxu0 %v5246
    %7672 = vmatpush.bf16.msra.mxu0 %v5238
    %7673 = vmatpush.bf16.msra.mxu0 %v5230
    %7674 = vmatpush.bf16.msra.mxu0 %v5222
    %7675 = vmatpush.bf16.msra.mxu0 %v5214
    %7676 = vmatpush.bf16.msra.mxu0 %v5206
    %7677 = vmatmul.bf16.gmra.mxu0 %v1215
    %v7678 = vpop.f32.mrf.mxu0
    %v7679 = vadd.f32 %v7665, %v7678
    %v7680 = vpop.f32.mrf.mxu0
    %v7681 = vadd.f32 %v7667, %v7680
    %7682 = vdwg.mxu0
    %7683 = vmatpush.bf16.msra.mxu0 %v5326
    %7684 = vmatpush.bf16.msra.mxu0 %v5318
    %7685 = vmatpush.bf16.msra.mxu0 %v5310
    %7686 = vmatpush.bf16.msra.mxu0 %v5302
    %7687 = vmatpush.bf16.msra.mxu0 %v5294
    %7688 = vmatpush.bf16.msra.mxu0 %v5286
    %7689 = vmatpush.bf16.msra.mxu0 %v5278
    %7690 = vmatpush.bf16.msra.mxu0 %v5270
    %7691 = vmatmul.bf16.gmra.mxu0 %v1216
    %v7692 = vpop.f32.mrf.mxu0
    %v7693 = vadd.f32 %v7679, %v7692
    %v7694 = vpop.f32.mrf.mxu0
    %v7695 = vadd.f32 %v7681, %v7694
    %7696 = vdwg.mxu0
    %7697 = vmatpush.bf16.msra.mxu0 %v4367
    %7698 = vmatpush.bf16.msra.mxu0 %v4359
    %7699 = vmatpush.bf16.msra.mxu0 %v4351
    %7700 = vmatpush.bf16.msra.mxu0 %v4343
    %7701 = vmatpush.bf16.msra.mxu0 %v4335
    %7702 = vmatpush.bf16.msra.mxu0 %v4327
    %7703 = vmatpush.bf16.msra.mxu0 %v4319
    %7704 = vmatpush.bf16.msra.mxu0 %v4311
    %7705 = vmatmul.bf16.gmra.mxu0 %v1201
    %v7706 = vpop.f32.mrf.mxu0
    %v7707 = vadd.f32 %v1143, %v7706
    %v7708 = vpop.f32.mrf.mxu0
    %v7709 = vadd.f32 %v1143, %v7708
    %7710 = vdwg.mxu0
    %7711 = vmatpush.bf16.msra.mxu0 %v4431
    %7712 = vmatpush.bf16.msra.mxu0 %v4423
    %7713 = vmatpush.bf16.msra.mxu0 %v4415
    %7714 = vmatpush.bf16.msra.mxu0 %v4407
    %7715 = vmatpush.bf16.msra.mxu0 %v4399
    %7716 = vmatpush.bf16.msra.mxu0 %v4391
    %7717 = vmatpush.bf16.msra.mxu0 %v4383
    %7718 = vmatpush.bf16.msra.mxu0 %v4375
    %7719 = vmatmul.bf16.gmra.mxu0 %v1202
    %v7720 = vpop.f32.mrf.mxu0
    %v7721 = vadd.f32 %v7707, %v7720
    %v7722 = vpop.f32.mrf.mxu0
    %v7723 = vadd.f32 %v7709, %v7722
    %7724 = vdwg.mxu0
    %7725 = vmatpush.bf16.msra.mxu0 %v4495
    %7726 = vmatpush.bf16.msra.mxu0 %v4487
    %7727 = vmatpush.bf16.msra.mxu0 %v4479
    %7728 = vmatpush.bf16.msra.mxu0 %v4471
    %7729 = vmatpush.bf16.msra.mxu0 %v4463
    %7730 = vmatpush.bf16.msra.mxu0 %v4455
    %7731 = vmatpush.bf16.msra.mxu0 %v4447
    %7732 = vmatpush.bf16.msra.mxu0 %v4439
    %7733 = vmatmul.bf16.gmra.mxu0 %v1203
    %v7734 = vpop.f32.mrf.mxu0
    %v7735 = vadd.f32 %v7721, %v7734
    %v7736 = vpop.f32.mrf.mxu0
    %v7737 = vadd.f32 %v7723, %v7736
    %7738 = vdwg.mxu0
    %7739 = vmatpush.bf16.msra.mxu0 %v4559
    %7740 = vmatpush.bf16.msra.mxu0 %v4551
    %7741 = vmatpush.bf16.msra.mxu0 %v4543
    %7742 = vmatpush.bf16.msra.mxu0 %v4535
    %7743 = vmatpush.bf16.msra.mxu0 %v4527
    %7744 = vmatpush.bf16.msra.mxu0 %v4519
    %7745 = vmatpush.bf16.msra.mxu0 %v4511
    %7746 = vmatpush.bf16.msra.mxu0 %v4503
    %7747 = vmatmul.bf16.gmra.mxu0 %v1204
    %v7748 = vpop.f32.mrf.mxu0
    %v7749 = vadd.f32 %v7735, %v7748
    %v7750 = vpop.f32.mrf.mxu0
    %v7751 = vadd.f32 %v7737, %v7750
    %7752 = vdwg.mxu0
    %7753 = vmatpush.bf16.msra.mxu0 %v4623
    %7754 = vmatpush.bf16.msra.mxu0 %v4615
    %7755 = vmatpush.bf16.msra.mxu0 %v4607
    %7756 = vmatpush.bf16.msra.mxu0 %v4599
    %7757 = vmatpush.bf16.msra.mxu0 %v4591
    %7758 = vmatpush.bf16.msra.mxu0 %v4583
    %7759 = vmatpush.bf16.msra.mxu0 %v4575
    %7760 = vmatpush.bf16.msra.mxu0 %v4567
    %7761 = vmatmul.bf16.gmra.mxu0 %v1205
    %v7762 = vpop.f32.mrf.mxu0
    %v7763 = vadd.f32 %v7749, %v7762
    %v7764 = vpop.f32.mrf.mxu0
    %v7765 = vadd.f32 %v7751, %v7764
    %7766 = vdwg.mxu0
    %7767 = vmatpush.bf16.msra.mxu0 %v4687
    %7768 = vmatpush.bf16.msra.mxu0 %v4679
    %7769 = vmatpush.bf16.msra.mxu0 %v4671
    %7770 = vmatpush.bf16.msra.mxu0 %v4663
    %7771 = vmatpush.bf16.msra.mxu0 %v4655
    %7772 = vmatpush.bf16.msra.mxu0 %v4647
    %7773 = vmatpush.bf16.msra.mxu0 %v4639
    %7774 = vmatpush.bf16.msra.mxu0 %v4631
    %7775 = vmatmul.bf16.gmra.mxu0 %v1206
    %v7776 = vpop.f32.mrf.mxu0
    %v7777 = vadd.f32 %v7763, %v7776
    %v7778 = vpop.f32.mrf.mxu0
    %v7779 = vadd.f32 %v7765, %v7778
    %7780 = vdwg.mxu0
    %7781 = vmatpush.bf16.msra.mxu0 %v4751
    %7782 = vmatpush.bf16.msra.mxu0 %v4743
    %7783 = vmatpush.bf16.msra.mxu0 %v4735
    %7784 = vmatpush.bf16.msra.mxu0 %v4727
    %7785 = vmatpush.bf16.msra.mxu0 %v4719
    %7786 = vmatpush.bf16.msra.mxu0 %v4711
    %7787 = vmatpush.bf16.msra.mxu0 %v4703
    %7788 = vmatpush.bf16.msra.mxu0 %v4695
    %7789 = vmatmul.bf16.gmra.mxu0 %v1207
    %v7790 = vpop.f32.mrf.mxu0
    %v7791 = vadd.f32 %v7777, %v7790
    %v7792 = vpop.f32.mrf.mxu0
    %v7793 = vadd.f32 %v7779, %v7792
    %7794 = vdwg.mxu0
    %7795 = vmatpush.bf16.msra.mxu0 %v4815
    %7796 = vmatpush.bf16.msra.mxu0 %v4807
    %7797 = vmatpush.bf16.msra.mxu0 %v4799
    %7798 = vmatpush.bf16.msra.mxu0 %v4791
    %7799 = vmatpush.bf16.msra.mxu0 %v4783
    %7800 = vmatpush.bf16.msra.mxu0 %v4775
    %7801 = vmatpush.bf16.msra.mxu0 %v4767
    %7802 = vmatpush.bf16.msra.mxu0 %v4759
    %7803 = vmatmul.bf16.gmra.mxu0 %v1208
    %v7804 = vpop.f32.mrf.mxu0
    %v7805 = vadd.f32 %v7791, %v7804
    %v7806 = vpop.f32.mrf.mxu0
    %v7807 = vadd.f32 %v7793, %v7806
    %7808 = vdwg.mxu0
    %7809 = vmatpush.bf16.msra.mxu0 %v4879
    %7810 = vmatpush.bf16.msra.mxu0 %v4871
    %7811 = vmatpush.bf16.msra.mxu0 %v4863
    %7812 = vmatpush.bf16.msra.mxu0 %v4855
    %7813 = vmatpush.bf16.msra.mxu0 %v4847
    %7814 = vmatpush.bf16.msra.mxu0 %v4839
    %7815 = vmatpush.bf16.msra.mxu0 %v4831
    %7816 = vmatpush.bf16.msra.mxu0 %v4823
    %7817 = vmatmul.bf16.gmra.mxu0 %v1209
    %v7818 = vpop.f32.mrf.mxu0
    %v7819 = vadd.f32 %v7805, %v7818
    %v7820 = vpop.f32.mrf.mxu0
    %v7821 = vadd.f32 %v7807, %v7820
    %7822 = vdwg.mxu0
    %7823 = vmatpush.bf16.msra.mxu0 %v4943
    %7824 = vmatpush.bf16.msra.mxu0 %v4935
    %7825 = vmatpush.bf16.msra.mxu0 %v4927
    %7826 = vmatpush.bf16.msra.mxu0 %v4919
    %7827 = vmatpush.bf16.msra.mxu0 %v4911
    %7828 = vmatpush.bf16.msra.mxu0 %v4903
    %7829 = vmatpush.bf16.msra.mxu0 %v4895
    %7830 = vmatpush.bf16.msra.mxu0 %v4887
    %7831 = vmatmul.bf16.gmra.mxu0 %v1210
    %v7832 = vpop.f32.mrf.mxu0
    %v7833 = vadd.f32 %v7819, %v7832
    %v7834 = vpop.f32.mrf.mxu0
    %v7835 = vadd.f32 %v7821, %v7834
    %7836 = vdwg.mxu0
    %7837 = vmatpush.bf16.msra.mxu0 %v5007
    %7838 = vmatpush.bf16.msra.mxu0 %v4999
    %7839 = vmatpush.bf16.msra.mxu0 %v4991
    %7840 = vmatpush.bf16.msra.mxu0 %v4983
    %7841 = vmatpush.bf16.msra.mxu0 %v4975
    %7842 = vmatpush.bf16.msra.mxu0 %v4967
    %7843 = vmatpush.bf16.msra.mxu0 %v4959
    %7844 = vmatpush.bf16.msra.mxu0 %v4951
    %7845 = vmatmul.bf16.gmra.mxu0 %v1211
    %v7846 = vpop.f32.mrf.mxu0
    %v7847 = vadd.f32 %v7833, %v7846
    %v7848 = vpop.f32.mrf.mxu0
    %v7849 = vadd.f32 %v7835, %v7848
    %7850 = vdwg.mxu0
    %7851 = vmatpush.bf16.msra.mxu0 %v5071
    %7852 = vmatpush.bf16.msra.mxu0 %v5063
    %7853 = vmatpush.bf16.msra.mxu0 %v5055
    %7854 = vmatpush.bf16.msra.mxu0 %v5047
    %7855 = vmatpush.bf16.msra.mxu0 %v5039
    %7856 = vmatpush.bf16.msra.mxu0 %v5031
    %7857 = vmatpush.bf16.msra.mxu0 %v5023
    %7858 = vmatpush.bf16.msra.mxu0 %v5015
    %7859 = vmatmul.bf16.gmra.mxu0 %v1212
    %v7860 = vpop.f32.mrf.mxu0
    %v7861 = vadd.f32 %v7847, %v7860
    %v7862 = vpop.f32.mrf.mxu0
    %v7863 = vadd.f32 %v7849, %v7862
    %7864 = vdwg.mxu0
    %7865 = vmatpush.bf16.msra.mxu0 %v5135
    %7866 = vmatpush.bf16.msra.mxu0 %v5127
    %7867 = vmatpush.bf16.msra.mxu0 %v5119
    %7868 = vmatpush.bf16.msra.mxu0 %v5111
    %7869 = vmatpush.bf16.msra.mxu0 %v5103
    %7870 = vmatpush.bf16.msra.mxu0 %v5095
    %7871 = vmatpush.bf16.msra.mxu0 %v5087
    %7872 = vmatpush.bf16.msra.mxu0 %v5079
    %7873 = vmatmul.bf16.gmra.mxu0 %v1213
    %v7874 = vpop.f32.mrf.mxu0
    %v7875 = vadd.f32 %v7861, %v7874
    %v7876 = vpop.f32.mrf.mxu0
    %v7877 = vadd.f32 %v7863, %v7876
    %7878 = vdwg.mxu0
    %7879 = vmatpush.bf16.msra.mxu0 %v5199
    %7880 = vmatpush.bf16.msra.mxu0 %v5191
    %7881 = vmatpush.bf16.msra.mxu0 %v5183
    %7882 = vmatpush.bf16.msra.mxu0 %v5175
    %7883 = vmatpush.bf16.msra.mxu0 %v5167
    %7884 = vmatpush.bf16.msra.mxu0 %v5159
    %7885 = vmatpush.bf16.msra.mxu0 %v5151
    %7886 = vmatpush.bf16.msra.mxu0 %v5143
    %7887 = vmatmul.bf16.gmra.mxu0 %v1214
    %v7888 = vpop.f32.mrf.mxu0
    %v7889 = vadd.f32 %v7875, %v7888
    %v7890 = vpop.f32.mrf.mxu0
    %v7891 = vadd.f32 %v7877, %v7890
    %7892 = vdwg.mxu0
    %7893 = vmatpush.bf16.msra.mxu0 %v5263
    %7894 = vmatpush.bf16.msra.mxu0 %v5255
    %7895 = vmatpush.bf16.msra.mxu0 %v5247
    %7896 = vmatpush.bf16.msra.mxu0 %v5239
    %7897 = vmatpush.bf16.msra.mxu0 %v5231
    %7898 = vmatpush.bf16.msra.mxu0 %v5223
    %7899 = vmatpush.bf16.msra.mxu0 %v5215
    %7900 = vmatpush.bf16.msra.mxu0 %v5207
    %7901 = vmatmul.bf16.gmra.mxu0 %v1215
    %v7902 = vpop.f32.mrf.mxu0
    %v7903 = vadd.f32 %v7889, %v7902
    %v7904 = vpop.f32.mrf.mxu0
    %v7905 = vadd.f32 %v7891, %v7904
    %7906 = vdwg.mxu0
    %7907 = vmatpush.bf16.msra.mxu0 %v5327
    %7908 = vmatpush.bf16.msra.mxu0 %v5319
    %7909 = vmatpush.bf16.msra.mxu0 %v5311
    %7910 = vmatpush.bf16.msra.mxu0 %v5303
    %7911 = vmatpush.bf16.msra.mxu0 %v5295
    %7912 = vmatpush.bf16.msra.mxu0 %v5287
    %7913 = vmatpush.bf16.msra.mxu0 %v5279
    %7914 = vmatpush.bf16.msra.mxu0 %v5271
    %7915 = vmatmul.bf16.gmra.mxu0 %v1216
    %v7916 = vpop.f32.mrf.mxu0
    %v7917 = vadd.f32 %v7903, %v7916
    %v7918 = vpop.f32.mrf.mxu0
    %v7919 = vadd.f32 %v7905, %v7918
    %7920 = vdwg.mxu0
    %7921 = vmatpush.bf16.msra.mxu0 %v4368
    %7922 = vmatpush.bf16.msra.mxu0 %v4360
    %7923 = vmatpush.bf16.msra.mxu0 %v4352
    %7924 = vmatpush.bf16.msra.mxu0 %v4344
    %7925 = vmatpush.bf16.msra.mxu0 %v4336
    %7926 = vmatpush.bf16.msra.mxu0 %v4328
    %7927 = vmatpush.bf16.msra.mxu0 %v4320
    %7928 = vmatpush.bf16.msra.mxu0 %v4312
    %7929 = vmatmul.bf16.gmra.mxu0 %v1201
    %v7930 = vpop.f32.mrf.mxu0
    %v7931 = vadd.f32 %v1144, %v7930
    %v7932 = vpop.f32.mrf.mxu0
    %v7933 = vadd.f32 %v1144, %v7932
    %7934 = vdwg.mxu0
    %7935 = vmatpush.bf16.msra.mxu0 %v4432
    %7936 = vmatpush.bf16.msra.mxu0 %v4424
    %7937 = vmatpush.bf16.msra.mxu0 %v4416
    %7938 = vmatpush.bf16.msra.mxu0 %v4408
    %7939 = vmatpush.bf16.msra.mxu0 %v4400
    %7940 = vmatpush.bf16.msra.mxu0 %v4392
    %7941 = vmatpush.bf16.msra.mxu0 %v4384
    %7942 = vmatpush.bf16.msra.mxu0 %v4376
    %7943 = vmatmul.bf16.gmra.mxu0 %v1202
    %v7944 = vpop.f32.mrf.mxu0
    %v7945 = vadd.f32 %v7931, %v7944
    %v7946 = vpop.f32.mrf.mxu0
    %v7947 = vadd.f32 %v7933, %v7946
    %7948 = vdwg.mxu0
    %7949 = vmatpush.bf16.msra.mxu0 %v4496
    %7950 = vmatpush.bf16.msra.mxu0 %v4488
    %7951 = vmatpush.bf16.msra.mxu0 %v4480
    %7952 = vmatpush.bf16.msra.mxu0 %v4472
    %7953 = vmatpush.bf16.msra.mxu0 %v4464
    %7954 = vmatpush.bf16.msra.mxu0 %v4456
    %7955 = vmatpush.bf16.msra.mxu0 %v4448
    %7956 = vmatpush.bf16.msra.mxu0 %v4440
    %7957 = vmatmul.bf16.gmra.mxu0 %v1203
    %v7958 = vpop.f32.mrf.mxu0
    %v7959 = vadd.f32 %v7945, %v7958
    %v7960 = vpop.f32.mrf.mxu0
    %v7961 = vadd.f32 %v7947, %v7960
    %7962 = vdwg.mxu0
    %7963 = vmatpush.bf16.msra.mxu0 %v4560
    %7964 = vmatpush.bf16.msra.mxu0 %v4552
    %7965 = vmatpush.bf16.msra.mxu0 %v4544
    %7966 = vmatpush.bf16.msra.mxu0 %v4536
    %7967 = vmatpush.bf16.msra.mxu0 %v4528
    %7968 = vmatpush.bf16.msra.mxu0 %v4520
    %7969 = vmatpush.bf16.msra.mxu0 %v4512
    %7970 = vmatpush.bf16.msra.mxu0 %v4504
    %7971 = vmatmul.bf16.gmra.mxu0 %v1204
    %v7972 = vpop.f32.mrf.mxu0
    %v7973 = vadd.f32 %v7959, %v7972
    %v7974 = vpop.f32.mrf.mxu0
    %v7975 = vadd.f32 %v7961, %v7974
    %7976 = vdwg.mxu0
    %7977 = vmatpush.bf16.msra.mxu0 %v4624
    %7978 = vmatpush.bf16.msra.mxu0 %v4616
    %7979 = vmatpush.bf16.msra.mxu0 %v4608
    %7980 = vmatpush.bf16.msra.mxu0 %v4600
    %7981 = vmatpush.bf16.msra.mxu0 %v4592
    %7982 = vmatpush.bf16.msra.mxu0 %v4584
    %7983 = vmatpush.bf16.msra.mxu0 %v4576
    %7984 = vmatpush.bf16.msra.mxu0 %v4568
    %7985 = vmatmul.bf16.gmra.mxu0 %v1205
    %v7986 = vpop.f32.mrf.mxu0
    %v7987 = vadd.f32 %v7973, %v7986
    %v7988 = vpop.f32.mrf.mxu0
    %v7989 = vadd.f32 %v7975, %v7988
    %7990 = vdwg.mxu0
    %7991 = vmatpush.bf16.msra.mxu0 %v4688
    %7992 = vmatpush.bf16.msra.mxu0 %v4680
    %7993 = vmatpush.bf16.msra.mxu0 %v4672
    %7994 = vmatpush.bf16.msra.mxu0 %v4664
    %7995 = vmatpush.bf16.msra.mxu0 %v4656
    %7996 = vmatpush.bf16.msra.mxu0 %v4648
    %7997 = vmatpush.bf16.msra.mxu0 %v4640
    %7998 = vmatpush.bf16.msra.mxu0 %v4632
    %7999 = vmatmul.bf16.gmra.mxu0 %v1206
    %v8000 = vpop.f32.mrf.mxu0
    %v8001 = vadd.f32 %v7987, %v8000
    %v8002 = vpop.f32.mrf.mxu0
    %v8003 = vadd.f32 %v7989, %v8002
    %8004 = vdwg.mxu0
    %8005 = vmatpush.bf16.msra.mxu0 %v4752
    %8006 = vmatpush.bf16.msra.mxu0 %v4744
    %8007 = vmatpush.bf16.msra.mxu0 %v4736
    %8008 = vmatpush.bf16.msra.mxu0 %v4728
    %8009 = vmatpush.bf16.msra.mxu0 %v4720
    %8010 = vmatpush.bf16.msra.mxu0 %v4712
    %8011 = vmatpush.bf16.msra.mxu0 %v4704
    %8012 = vmatpush.bf16.msra.mxu0 %v4696
    %8013 = vmatmul.bf16.gmra.mxu0 %v1207
    %v8014 = vpop.f32.mrf.mxu0
    %v8015 = vadd.f32 %v8001, %v8014
    %v8016 = vpop.f32.mrf.mxu0
    %v8017 = vadd.f32 %v8003, %v8016
    %8018 = vdwg.mxu0
    %8019 = vmatpush.bf16.msra.mxu0 %v4816
    %8020 = vmatpush.bf16.msra.mxu0 %v4808
    %8021 = vmatpush.bf16.msra.mxu0 %v4800
    %8022 = vmatpush.bf16.msra.mxu0 %v4792
    %8023 = vmatpush.bf16.msra.mxu0 %v4784
    %8024 = vmatpush.bf16.msra.mxu0 %v4776
    %8025 = vmatpush.bf16.msra.mxu0 %v4768
    %8026 = vmatpush.bf16.msra.mxu0 %v4760
    %8027 = vmatmul.bf16.gmra.mxu0 %v1208
    %v8028 = vpop.f32.mrf.mxu0
    %v8029 = vadd.f32 %v8015, %v8028
    %v8030 = vpop.f32.mrf.mxu0
    %v8031 = vadd.f32 %v8017, %v8030
    %8032 = vdwg.mxu0
    %8033 = vmatpush.bf16.msra.mxu0 %v4880
    %8034 = vmatpush.bf16.msra.mxu0 %v4872
    %8035 = vmatpush.bf16.msra.mxu0 %v4864
    %8036 = vmatpush.bf16.msra.mxu0 %v4856
    %8037 = vmatpush.bf16.msra.mxu0 %v4848
    %8038 = vmatpush.bf16.msra.mxu0 %v4840
    %8039 = vmatpush.bf16.msra.mxu0 %v4832
    %8040 = vmatpush.bf16.msra.mxu0 %v4824
    %8041 = vmatmul.bf16.gmra.mxu0 %v1209
    %v8042 = vpop.f32.mrf.mxu0
    %v8043 = vadd.f32 %v8029, %v8042
    %v8044 = vpop.f32.mrf.mxu0
    %v8045 = vadd.f32 %v8031, %v8044
    %8046 = vdwg.mxu0
    %8047 = vmatpush.bf16.msra.mxu0 %v4944
    %8048 = vmatpush.bf16.msra.mxu0 %v4936
    %8049 = vmatpush.bf16.msra.mxu0 %v4928
    %8050 = vmatpush.bf16.msra.mxu0 %v4920
    %8051 = vmatpush.bf16.msra.mxu0 %v4912
    %8052 = vmatpush.bf16.msra.mxu0 %v4904
    %8053 = vmatpush.bf16.msra.mxu0 %v4896
    %8054 = vmatpush.bf16.msra.mxu0 %v4888
    %8055 = vmatmul.bf16.gmra.mxu0 %v1210
    %v8056 = vpop.f32.mrf.mxu0
    %v8057 = vadd.f32 %v8043, %v8056
    %v8058 = vpop.f32.mrf.mxu0
    %v8059 = vadd.f32 %v8045, %v8058
    %8060 = vdwg.mxu0
    %8061 = vmatpush.bf16.msra.mxu0 %v5008
    %8062 = vmatpush.bf16.msra.mxu0 %v5000
    %8063 = vmatpush.bf16.msra.mxu0 %v4992
    %8064 = vmatpush.bf16.msra.mxu0 %v4984
    %8065 = vmatpush.bf16.msra.mxu0 %v4976
    %8066 = vmatpush.bf16.msra.mxu0 %v4968
    %8067 = vmatpush.bf16.msra.mxu0 %v4960
    %8068 = vmatpush.bf16.msra.mxu0 %v4952
    %8069 = vmatmul.bf16.gmra.mxu0 %v1211
    %v8070 = vpop.f32.mrf.mxu0
    %v8071 = vadd.f32 %v8057, %v8070
    %v8072 = vpop.f32.mrf.mxu0
    %v8073 = vadd.f32 %v8059, %v8072
    %8074 = vdwg.mxu0
    %8075 = vmatpush.bf16.msra.mxu0 %v5072
    %8076 = vmatpush.bf16.msra.mxu0 %v5064
    %8077 = vmatpush.bf16.msra.mxu0 %v5056
    %8078 = vmatpush.bf16.msra.mxu0 %v5048
    %8079 = vmatpush.bf16.msra.mxu0 %v5040
    %8080 = vmatpush.bf16.msra.mxu0 %v5032
    %8081 = vmatpush.bf16.msra.mxu0 %v5024
    %8082 = vmatpush.bf16.msra.mxu0 %v5016
    %8083 = vmatmul.bf16.gmra.mxu0 %v1212
    %v8084 = vpop.f32.mrf.mxu0
    %v8085 = vadd.f32 %v8071, %v8084
    %v8086 = vpop.f32.mrf.mxu0
    %v8087 = vadd.f32 %v8073, %v8086
    %8088 = vdwg.mxu0
    %8089 = vmatpush.bf16.msra.mxu0 %v5136
    %8090 = vmatpush.bf16.msra.mxu0 %v5128
    %8091 = vmatpush.bf16.msra.mxu0 %v5120
    %8092 = vmatpush.bf16.msra.mxu0 %v5112
    %8093 = vmatpush.bf16.msra.mxu0 %v5104
    %8094 = vmatpush.bf16.msra.mxu0 %v5096
    %8095 = vmatpush.bf16.msra.mxu0 %v5088
    %8096 = vmatpush.bf16.msra.mxu0 %v5080
    %8097 = vmatmul.bf16.gmra.mxu0 %v1213
    %v8098 = vpop.f32.mrf.mxu0
    %v8099 = vadd.f32 %v8085, %v8098
    %v8100 = vpop.f32.mrf.mxu0
    %v8101 = vadd.f32 %v8087, %v8100
    %8102 = vdwg.mxu0
    %8103 = vmatpush.bf16.msra.mxu0 %v5200
    %8104 = vmatpush.bf16.msra.mxu0 %v5192
    %8105 = vmatpush.bf16.msra.mxu0 %v5184
    %8106 = vmatpush.bf16.msra.mxu0 %v5176
    %8107 = vmatpush.bf16.msra.mxu0 %v5168
    %8108 = vmatpush.bf16.msra.mxu0 %v5160
    %8109 = vmatpush.bf16.msra.mxu0 %v5152
    %8110 = vmatpush.bf16.msra.mxu0 %v5144
    %8111 = vmatmul.bf16.gmra.mxu0 %v1214
    %v8112 = vpop.f32.mrf.mxu0
    %v8113 = vadd.f32 %v8099, %v8112
    %v8114 = vpop.f32.mrf.mxu0
    %v8115 = vadd.f32 %v8101, %v8114
    %8116 = vdwg.mxu0
    %8117 = vmatpush.bf16.msra.mxu0 %v5264
    %8118 = vmatpush.bf16.msra.mxu0 %v5256
    %8119 = vmatpush.bf16.msra.mxu0 %v5248
    %8120 = vmatpush.bf16.msra.mxu0 %v5240
    %8121 = vmatpush.bf16.msra.mxu0 %v5232
    %8122 = vmatpush.bf16.msra.mxu0 %v5224
    %8123 = vmatpush.bf16.msra.mxu0 %v5216
    %8124 = vmatpush.bf16.msra.mxu0 %v5208
    %8125 = vmatmul.bf16.gmra.mxu0 %v1215
    %v8126 = vpop.f32.mrf.mxu0
    %v8127 = vadd.f32 %v8113, %v8126
    %v8128 = vpop.f32.mrf.mxu0
    %v8129 = vadd.f32 %v8115, %v8128
    %8130 = vdwg.mxu0
    %8131 = vmatpush.bf16.msra.mxu0 %v5328
    %8132 = vmatpush.bf16.msra.mxu0 %v5320
    %8133 = vmatpush.bf16.msra.mxu0 %v5312
    %8134 = vmatpush.bf16.msra.mxu0 %v5304
    %8135 = vmatpush.bf16.msra.mxu0 %v5296
    %8136 = vmatpush.bf16.msra.mxu0 %v5288
    %8137 = vmatpush.bf16.msra.mxu0 %v5280
    %8138 = vmatpush.bf16.msra.mxu0 %v5272
    %8139 = vmatmul.bf16.gmra.mxu0 %v1216
    %v8140 = vpop.f32.mrf.mxu0
    %v8141 = vadd.f32 %v8127, %v8140
    %v8142 = vpop.f32.mrf.mxu0
    %v8143 = vadd.f32 %v8129, %v8142
    %8144 = vdwg.mxu0
    %v8145 = vmax.f32 %v6573, 0.0
    %v8146 = vmax.f32 %v6797, 0.0
    %v8147 = vmax.f32 %v7021, 0.0
    %v8148 = vmax.f32 %v7245, 0.0
    %v8149 = vmax.f32 %v7469, 0.0
    %v8150 = vmax.f32 %v7693, 0.0
    %v8151 = vmax.f32 %v7917, 0.0
    %v8152 = vmax.f32 %v8141, 0.0
    %v8153 = vmax.f32 %v6575, 0.0
    %v8154 = vmax.f32 %v6799, 0.0
    %v8155 = vmax.f32 %v7023, 0.0
    %v8156 = vmax.f32 %v7247, 0.0
    %v8157 = vmax.f32 %v7471, 0.0
    %v8158 = vmax.f32 %v7695, 0.0
    %v8159 = vmax.f32 %v7919, 0.0
    %v8160 = vmax.f32 %v8143, 0.0
    %v8161 = vpack.c.bf16 %v8153, %v8145
    %v8162 = vpack.c.bf16 %v8154, %v8146
    %v8163 = vpack.c.bf16 %v8155, %v8147
    %v8164 = vpack.c.bf16 %v8156, %v8148
    %v8165 = vpack.c.bf16 %v8157, %v8149
    %v8166 = vpack.c.bf16 %v8158, %v8150
    %v8167 = vpack.c.bf16 %v8159, %v8151
    %v8168 = vpack.c.bf16 %v8160, %v8152
    %v8169 = vld [vmem:[#allocation8] sm:$0xff]
    %v8170 = vld [vmem:[#allocation8 + $0x8] sm:$0xff]
    %v8171 = vld [vmem:[#allocation8 + $0x10] sm:$0xf]
    %v8172 = vld [vmem:[#allocation8 + $0x14] sm:$0xff]
    %v8173 = vld [vmem:[#allocation8 + $0x1c] sm:$0xff]
    %v8174 = vld [vmem:[#allocation8 + $0x24] sm:$0xf]
    %v8175 = vld [vmem:[#allocation8 + $0x28] sm:$0xff]
    %v8176 = vld [vmem:[#allocation8 + $0x30] sm:$0xff]
    %v8177 = vld [vmem:[#allocation8 + $0x38] sm:$0xf]
    %v8178 = vld [vmem:[#allocation8 + $0x3c] sm:$0xff]
    %v8179 = vld [vmem:[#allocation8 + $0x44] sm:$0xff]
    %v8180 = vld [vmem:[#allocation8 + $0x4c] sm:$0xf]
    %v8181 = vld [vmem:[#allocation8 + $0x50] sm:$0xff]
    %v8182 = vld [vmem:[#allocation8 + $0x58] sm:$0xff]
    %v8183 = vld [vmem:[#allocation8 + $0x60] sm:$0xf]
    %v8184 = vld [vmem:[#allocation8 + $0x64] sm:$0xff]
    %v8185 = vld [vmem:[#allocation8 + $0x6c] sm:$0xff]
    %v8186 = vld [vmem:[#allocation8 + $0x74] sm:$0xf]
    %v8187 = vld [vmem:[#allocation8 + $0x78] sm:$0xff]
    %v8188 = vld [vmem:[#allocation8 + $0x80] sm:$0xff]
    %v8189 = vld [vmem:[#allocation8 + $0x88] sm:$0xf]
    %v8190 = vld [vmem:[#allocation8 + $0x8c] sm:$0xff]
    %v8191 = vld [vmem:[#allocation8 + $0x94] sm:$0xff]
    %v8192 = vld [vmem:[#allocation8 + $0x9c] sm:$0xf]
    %v8193 = vld [vmem:[#allocation8 + $0xa0] sm:$0xff]
    %v8194 = vld [vmem:[#allocation8 + $0xa8] sm:$0xff]
    %v8195 = vld [vmem:[#allocation8 + $0xb0] sm:$0xf]
    %v8196 = vld [vmem:[#allocation8 + $0xb4] sm:$0xff]
    %v8197 = vld [vmem:[#allocation8 + $0xbc] sm:$0xff]
    %v8198 = vld [vmem:[#allocation8 + $0xc4] sm:$0xf]
    %v8199 = vld [vmem:[#allocation8 + $0xc8] sm:$0xff]
    %v8200 = vld [vmem:[#allocation8 + $0xd0] sm:$0xff]
    %v8201 = vld [vmem:[#allocation8 + $0xd8] sm:$0xf]
    %v8202 = vld [vmem:[#allocation8 + $0xdc] sm:$0xff]
    %v8203 = vld [vmem:[#allocation8 + $0xe4] sm:$0xff]
    %v8204 = vld [vmem:[#allocation8 + $0xec] sm:$0xf]
    %v8205 = vld [vmem:[#allocation8 + $0xf0] sm:$0xff]
    %v8206 = vld [vmem:[#allocation8 + $0xf8] sm:$0xff]
    %v8207 = vld [vmem:[#allocation8 + $0x100] sm:$0xf]
    %v8208 = vld [vmem:[#allocation8 + $0x104] sm:$0xff]
    %v8209 = vld [vmem:[#allocation8 + $0x10c] sm:$0xff]
    %v8210 = vld [vmem:[#allocation8 + $0x114] sm:$0xf]
    %v8211 = vld [vmem:[#allocation8 + $0x118] sm:$0xff]
    %v8212 = vld [vmem:[#allocation8 + $0x120] sm:$0xff]
    %v8213 = vld [vmem:[#allocation8 + $0x128] sm:$0xf]
    %v8214 = vld [vmem:[#allocation8 + $0x12c] sm:$0xff]
    %v8215 = vld [vmem:[#allocation8 + $0x134] sm:$0xff]
    %v8216 = vld [vmem:[#allocation8 + $0x13c] sm:$0xf]
    %v8217 = vld [vmem:[#allocation8 + $0x140] sm:$0xff]
    %v8218 = vld [vmem:[#allocation8 + $0x148] sm:$0xff]
    %v8219 = vld [vmem:[#allocation8 + $0x150] sm:$0xf]
    %v8220 = vld [vmem:[#allocation8 + $0x154] sm:$0xff]
    %v8221 = vld [vmem:[#allocation8 + $0x15c] sm:$0xff]
    %v8222 = vld [vmem:[#allocation8 + $0x164] sm:$0xf]
    %v8223 = vld [vmem:[#allocation8 + $0x168] sm:$0xff]
    %v8224 = vld [vmem:[#allocation8 + $0x170] sm:$0xff]
    %v8225 = vld [vmem:[#allocation8 + $0x178] sm:$0xf]
    %v8226 = vld [vmem:[#allocation8 + $0x17c] sm:$0xff]
    %v8227 = vld [vmem:[#allocation8 + $0x184] sm:$0xff]
    %v8228 = vld [vmem:[#allocation8 + $0x18c] sm:$0xf]
    %v8229 = vld [vmem:[#allocation8 + $0x190] sm:$0xff]
    %v8230 = vld [vmem:[#allocation8 + $0x198] sm:$0xff]
    %v8231 = vld [vmem:[#allocation8 + $0x1a0] sm:$0xf]
    %v8232 = vld [vmem:[#allocation8 + $0x1a4] sm:$0xff]
    %v8233 = vld [vmem:[#allocation8 + $0x1ac] sm:$0xff]
    %v8234 = vld [vmem:[#allocation8 + $0x1b4] sm:$0xf]
    %v8235 = vld [vmem:[#allocation8 + $0x1b8] sm:$0xff]
    %v8236 = vld [vmem:[#allocation8 + $0x1c0] sm:$0xff]
    %v8237 = vld [vmem:[#allocation8 + $0x1c8] sm:$0xf]
    %v8238 = vld [vmem:[#allocation8 + $0x1cc] sm:$0xff]
    %v8239 = vld [vmem:[#allocation8 + $0x1d4] sm:$0xff]
    %v8240 = vld [vmem:[#allocation8 + $0x1dc] sm:$0xf]
    %v8241 = vld [vmem:[#allocation8 + $0x1e0] sm:$0xff]
    %v8242 = vld [vmem:[#allocation8 + $0x1e8] sm:$0xff]
    %v8243 = vld [vmem:[#allocation8 + $0x1f0] sm:$0xf]
    %v8244 = vld [vmem:[#allocation8 + $0x1f4] sm:$0xff]
    %v8245 = vld [vmem:[#allocation8 + $0x1fc] sm:$0xff]
    %v8246 = vld [vmem:[#allocation8 + $0x204] sm:$0xf]
    %v8247 = vld [vmem:[#allocation8 + $0x208] sm:$0xff]
    %v8248 = vld [vmem:[#allocation8 + $0x210] sm:$0xff]
    %v8249 = vld [vmem:[#allocation8 + $0x218] sm:$0xf]
    %v8250 = vld [vmem:[#allocation8 + $0x21c] sm:$0xff]
    %v8251 = vld [vmem:[#allocation8 + $0x224] sm:$0xff]
    %v8252 = vld [vmem:[#allocation8 + $0x22c] sm:$0xf]
    %v8253 = vld [vmem:[#allocation8 + $0x230] sm:$0xff]
    %v8254 = vld [vmem:[#allocation8 + $0x238] sm:$0xff]
    %v8255 = vld [vmem:[#allocation8 + $0x240] sm:$0xf]
    %v8256 = vld [vmem:[#allocation8 + $0x244] sm:$0xff]
    %v8257 = vld [vmem:[#allocation8 + $0x24c] sm:$0xff]
    %v8258 = vld [vmem:[#allocation8 + $0x254] sm:$0xf]
    %v8259 = vld [vmem:[#allocation8 + $0x258] sm:$0xff]
    %v8260 = vld [vmem:[#allocation8 + $0x260] sm:$0xff]
    %v8261 = vld [vmem:[#allocation8 + $0x268] sm:$0xf]
    %v8262 = vld [vmem:[#allocation8 + $0x26c] sm:$0xff]
    %v8263 = vld [vmem:[#allocation8 + $0x274] sm:$0xff]
    %v8264 = vld [vmem:[#allocation8 + $0x27c] sm:$0xf]
    %v8265 = vld [vmem:[#allocation8 + $0x280] sm:$0xff]
    %v8266 = vld [vmem:[#allocation8 + $0x288] sm:$0xff]
    %v8267 = vld [vmem:[#allocation8 + $0x290] sm:$0xf]
    %v8268 = vld [vmem:[#allocation8 + $0x294] sm:$0xff]
    %v8269 = vld [vmem:[#allocation8 + $0x29c] sm:$0xff]
    %v8270 = vld [vmem:[#allocation8 + $0x2a4] sm:$0xf]
    %v8271 = vld [vmem:[#allocation8 + $0x2a8] sm:$0xff]
    %v8272 = vld [vmem:[#allocation8 + $0x2b0] sm:$0xff]
    %v8273 = vld [vmem:[#allocation8 + $0x2b8] sm:$0xf]
    %v8274 = vld [vmem:[#allocation8 + $0x2bc] sm:$0xff]
    %v8275 = vld [vmem:[#allocation8 + $0x2c4] sm:$0xff]
    %v8276 = vld [vmem:[#allocation8 + $0x2cc] sm:$0xf]
    %v8277 = vld [vmem:[#allocation8 + $0x2d0] sm:$0xff]
    %v8278 = vld [vmem:[#allocation8 + $0x2d8] sm:$0xff]
    %v8279 = vld [vmem:[#allocation8 + $0x2e0] sm:$0xf]
    %v8280 = vld [vmem:[#allocation8 + $0x2e4] sm:$0xff]
    %v8281 = vld [vmem:[#allocation8 + $0x2ec] sm:$0xff]
    %v8282 = vld [vmem:[#allocation8 + $0x2f4] sm:$0xf]
    %v8283 = vld [vmem:[#allocation8 + $0x2f8] sm:$0xff]
    %v8284 = vld [vmem:[#allocation8 + $0x300] sm:$0xff]
    %v8285 = vld [vmem:[#allocation8 + $0x308] sm:$0xf]
    %v8286 = vld [vmem:[#allocation8 + $0x30c] sm:$0xff]
    %v8287 = vld [vmem:[#allocation8 + $0x314] sm:$0xff]
    %v8288 = vld [vmem:[#allocation8 + $0x31c] sm:$0xf]
    %v8289 = vld [vmem:[#allocation8 + $0x320] sm:$0xff]
    %v8290 = vld [vmem:[#allocation8 + $0x328] sm:$0xff]
    %v8291 = vld [vmem:[#allocation8 + $0x330] sm:$0xf]
    %v8292 = vld [vmem:[#allocation8 + $0x334] sm:$0xff]
    %v8293 = vld [vmem:[#allocation8 + $0x33c] sm:$0xff]
    %v8294 = vld [vmem:[#allocation8 + $0x344] sm:$0xf]
    %v8295 = vld [vmem:[#allocation8 + $0x348] sm:$0xff]
    %v8296 = vld [vmem:[#allocation8 + $0x350] sm:$0xff]
    %v8297 = vld [vmem:[#allocation8 + $0x358] sm:$0xf]
    %v8298 = vld [vmem:[#allocation8 + $0x35c] sm:$0xff]
    %v8299 = vld [vmem:[#allocation8 + $0x364] sm:$0xff]
    %v8300 = vld [vmem:[#allocation8 + $0x36c] sm:$0xf]
    %v8301 = vld [vmem:[#allocation8 + $0x370] sm:$0xff]
    %v8302 = vld [vmem:[#allocation8 + $0x378] sm:$0xff]
    %v8303 = vld [vmem:[#allocation8 + $0x380] sm:$0xf]
    %v8304 = vld [vmem:[#allocation8 + $0x384] sm:$0xff]
    %v8305 = vld [vmem:[#allocation8 + $0x38c] sm:$0xff]
    %v8306 = vld [vmem:[#allocation8 + $0x394] sm:$0xf]
    %v8307 = vld [vmem:[#allocation8 + $0x398] sm:$0xff]
    %v8308 = vld [vmem:[#allocation8 + $0x3a0] sm:$0xff]
    %v8309 = vld [vmem:[#allocation8 + $0x3a8] sm:$0xf]
    %v8310 = vld [vmem:[#allocation8 + $0x3ac] sm:$0xff]
    %v8311 = vld [vmem:[#allocation8 + $0x3b4] sm:$0xff]
    %v8312 = vld [vmem:[#allocation8 + $0x3bc] sm:$0xf]
    %v8313 = vld [vmem:[#allocation8 + $0x3c0] sm:$0xff]
    %v8314 = vld [vmem:[#allocation8 + $0x3c8] sm:$0xff]
    %v8315 = vld [vmem:[#allocation8 + $0x3d0] sm:$0xf]
    %v8316 = vld [vmem:[#allocation8 + $0x3d4] sm:$0xff]
    %v8317 = vld [vmem:[#allocation8 + $0x3dc] sm:$0xff]
    %v8318 = vld [vmem:[#allocation8 + $0x3e4] sm:$0xf]
    %v8319 = vld [vmem:[#allocation8 + $0x3e8] sm:$0xff]
    %v8320 = vld [vmem:[#allocation8 + $0x3f0] sm:$0xff]
    %v8321 = vld [vmem:[#allocation8 + $0x3f8] sm:$0xf]
    %v8322 = vld [vmem:[#allocation8 + $0x3fc] sm:$0xff]
    %v8323 = vld [vmem:[#allocation8 + $0x404] sm:$0xff]
    %v8324 = vld [vmem:[#allocation8 + $0x40c] sm:$0xf]
    %v8325 = vld [vmem:[#allocation8 + $0x410] sm:$0xff]
    %v8326 = vld [vmem:[#allocation8 + $0x418] sm:$0xff]
    %v8327 = vld [vmem:[#allocation8 + $0x420] sm:$0xf]
    %v8328 = vld [vmem:[#allocation8 + $0x424] sm:$0xff]
    %v8329 = vld [vmem:[#allocation8 + $0x42c] sm:$0xff]
    %v8330 = vld [vmem:[#allocation8 + $0x434] sm:$0xf]
    %v8331 = vld [vmem:[#allocation8 + $0x438] sm:$0xff]
    %v8332 = vld [vmem:[#allocation8 + $0x440] sm:$0xff]
    %v8333 = vld [vmem:[#allocation8 + $0x448] sm:$0xf]
    %v8334 = vld [vmem:[#allocation8 + $0x44c] sm:$0xff]
    %v8335 = vld [vmem:[#allocation8 + $0x454] sm:$0xff]
    %v8336 = vld [vmem:[#allocation8 + $0x45c] sm:$0xf]
    %v8337 = vld [vmem:[#allocation8 + $0x460] sm:$0xff]
    %v8338 = vld [vmem:[#allocation8 + $0x468] sm:$0xff]
    %v8339 = vld [vmem:[#allocation8 + $0x470] sm:$0xf]
    %v8340 = vld [vmem:[#allocation8 + $0x474] sm:$0xff]
    %v8341 = vld [vmem:[#allocation8 + $0x47c] sm:$0xff]
    %v8342 = vld [vmem:[#allocation8 + $0x484] sm:$0xf]
    %v8343 = vld [vmem:[#allocation8 + $0x488] sm:$0xff]
    %v8344 = vld [vmem:[#allocation8 + $0x490] sm:$0xff]
    %v8345 = vld [vmem:[#allocation8 + $0x498] sm:$0xf]
    %v8346 = vld [vmem:[#allocation8 + $0x49c] sm:$0xff]
    %v8347 = vld [vmem:[#allocation8 + $0x4a4] sm:$0xff]
    %v8348 = vld [vmem:[#allocation8 + $0x4ac] sm:$0xf]
    %v8349 = vld [vmem:[#allocation8 + $0x4b0] sm:$0xff]
    %v8350 = vld [vmem:[#allocation8 + $0x4b8] sm:$0xff]
    %v8351 = vld [vmem:[#allocation8 + $0x4c0] sm:$0xf]
    %v8352 = vld [vmem:[#allocation8 + $0x4c4] sm:$0xff]
    %v8353 = vld [vmem:[#allocation8 + $0x4cc] sm:$0xff]
    %v8354 = vld [vmem:[#allocation8 + $0x4d4] sm:$0xf]
    %v8355 = vld [vmem:[#allocation8 + $0x4d8] sm:$0xff]
    %v8356 = vld [vmem:[#allocation8 + $0x4e0] sm:$0xff]
    %v8357 = vld [vmem:[#allocation8 + $0x4e8] sm:$0xf]
    %v8358 = vld [vmem:[#allocation8 + $0x4ec] sm:$0xff]
    %v8359 = vld [vmem:[#allocation8 + $0x4f4] sm:$0xff]
    %v8360 = vld [vmem:[#allocation8 + $0x4fc] sm:$0xf]
    %v8361 = vld [vmem:[#allocation8 + $0x500] sm:$0xff]
    %v8362 = vld [vmem:[#allocation8 + $0x508] sm:$0xff]
    %v8363 = vld [vmem:[#allocation8 + $0x510] sm:$0xf]
    %v8364 = vld [vmem:[#allocation8 + $0x514] sm:$0xff]
    %v8365 = vld [vmem:[#allocation8 + $0x51c] sm:$0xff]
    %v8366 = vld [vmem:[#allocation8 + $0x524] sm:$0xf]
    %v8367 = vld [vmem:[#allocation8 + $0x528] sm:$0xff]
    %v8368 = vld [vmem:[#allocation8 + $0x530] sm:$0xff]
    %v8369 = vld [vmem:[#allocation8 + $0x538] sm:$0xf]
    %v8370 = vld [vmem:[#allocation8 + $0x53c] sm:$0xff]
    %v8371 = vld [vmem:[#allocation8 + $0x544] sm:$0xff]
    %v8372 = vld [vmem:[#allocation8 + $0x54c] sm:$0xf]
    %v8373 = vld [vmem:[#allocation8 + $0x550] sm:$0xff]
    %v8374 = vld [vmem:[#allocation8 + $0x558] sm:$0xff]
    %v8375 = vld [vmem:[#allocation8 + $0x560] sm:$0xf]
    %v8376 = vld [vmem:[#allocation8 + $0x564] sm:$0xff]
    %v8377 = vld [vmem:[#allocation8 + $0x56c] sm:$0xff]
    %v8378 = vld [vmem:[#allocation8 + $0x574] sm:$0xf]
    %v8379 = vld [vmem:[#allocation8 + $0x578] sm:$0xff]
    %v8380 = vld [vmem:[#allocation8 + $0x580] sm:$0xff]
    %v8381 = vld [vmem:[#allocation8 + $0x588] sm:$0xf]
    %v8382 = vld [vmem:[#allocation8 + $0x58c] sm:$0xff]
    %v8383 = vld [vmem:[#allocation8 + $0x594] sm:$0xff]
    %v8384 = vld [vmem:[#allocation8 + $0x59c] sm:$0xf]
    %v8385 = vld [vmem:[#allocation8 + $0x5a0] sm:$0xff]
    %v8386 = vld [vmem:[#allocation8 + $0x5a8] sm:$0xff]
    %v8387 = vld [vmem:[#allocation8 + $0x5b0] sm:$0xf]
    %v8388 = vld [vmem:[#allocation8 + $0x5b4] sm:$0xff]
    %v8389 = vld [vmem:[#allocation8 + $0x5bc] sm:$0xff]
    %v8390 = vld [vmem:[#allocation8 + $0x5c4] sm:$0xf]
    %v8391 = vld [vmem:[#allocation8 + $0x5c8] sm:$0xff]
    %v8392 = vld [vmem:[#allocation8 + $0x5d0] sm:$0xff]
    %v8393 = vld [vmem:[#allocation8 + $0x5d8] sm:$0xf]
    %v8394 = vld [vmem:[#allocation8 + $0x5dc] sm:$0xff]
    %v8395 = vld [vmem:[#allocation8 + $0x5e4] sm:$0xff]
    %v8396 = vld [vmem:[#allocation8 + $0x5ec] sm:$0xf]
    %v8397 = vld [vmem:[#allocation8 + $0x5f0] sm:$0xff]
    %v8398 = vld [vmem:[#allocation8 + $0x5f8] sm:$0xff]
    %v8399 = vld [vmem:[#allocation8 + $0x600] sm:$0xf]
    %v8400 = vld [vmem:[#allocation8 + $0x604] sm:$0xff]
    %v8401 = vld [vmem:[#allocation8 + $0x60c] sm:$0xff]
    %v8402 = vld [vmem:[#allocation8 + $0x614] sm:$0xf]
    %v8403 = vld [vmem:[#allocation8 + $0x618] sm:$0xff]
    %v8404 = vld [vmem:[#allocation8 + $0x620] sm:$0xff]
    %v8405 = vld [vmem:[#allocation8 + $0x628] sm:$0xf]
    %v8406 = vld [vmem:[#allocation8 + $0x62c] sm:$0xff]
    %v8407 = vld [vmem:[#allocation8 + $0x634] sm:$0xff]
    %v8408 = vld [vmem:[#allocation8 + $0x63c] sm:$0xf]
    %v8409 = vld [vmem:[#allocation8 + $0x640] sm:$0xff]
    %v8410 = vld [vmem:[#allocation8 + $0x648] sm:$0xff]
    %v8411 = vld [vmem:[#allocation8 + $0x650] sm:$0xf]
    %v8412 = vld [vmem:[#allocation8 + $0x654] sm:$0xff]
    %v8413 = vld [vmem:[#allocation8 + $0x65c] sm:$0xff]
    %v8414 = vld [vmem:[#allocation8 + $0x664] sm:$0xf]
    %v8415 = vld [vmem:[#allocation8 + $0x668] sm:$0xff]
    %v8416 = vld [vmem:[#allocation8 + $0x670] sm:$0xff]
    %v8417 = vld [vmem:[#allocation8 + $0x678] sm:$0xf]
    %v8418 = vld [vmem:[#allocation8 + $0x67c] sm:$0xff]
    %v8419 = vld [vmem:[#allocation8 + $0x684] sm:$0xff]
    %v8420 = vld [vmem:[#allocation8 + $0x68c] sm:$0xf]
    %v8421 = vld [vmem:[#allocation8 + $0x690] sm:$0xff]
    %v8422 = vld [vmem:[#allocation8 + $0x698] sm:$0xff]
    %v8423 = vld [vmem:[#allocation8 + $0x6a0] sm:$0xf]
    %v8424 = vld [vmem:[#allocation8 + $0x6a4] sm:$0xff]
    %v8425 = vld [vmem:[#allocation8 + $0x6ac] sm:$0xff]
    %v8426 = vld [vmem:[#allocation8 + $0x6b4] sm:$0xf]
    %v8427 = vld [vmem:[#allocation8 + $0x6b8] sm:$0xff]
    %v8428 = vld [vmem:[#allocation8 + $0x6c0] sm:$0xff]
    %v8429 = vld [vmem:[#allocation8 + $0x6c8] sm:$0xf]
    %v8430 = vld [vmem:[#allocation8 + $0x6cc] sm:$0xff]
    %v8431 = vld [vmem:[#allocation8 + $0x6d4] sm:$0xff]
    %v8432 = vld [vmem:[#allocation8 + $0x6dc] sm:$0xf]
    %v8433 = vld [vmem:[#allocation8 + $0x6e0] sm:$0xff]
    %v8434 = vld [vmem:[#allocation8 + $0x6e8] sm:$0xff]
    %v8435 = vld [vmem:[#allocation8 + $0x6f0] sm:$0xf]
    %v8436 = vld [vmem:[#allocation8 + $0x6f4] sm:$0xff]
    %v8437 = vld [vmem:[#allocation8 + $0x6fc] sm:$0xff]
    %v8438 = vld [vmem:[#allocation8 + $0x704] sm:$0xf]
    %v8439 = vld [vmem:[#allocation8 + $0x708] sm:$0xff]
    %v8440 = vld [vmem:[#allocation8 + $0x710] sm:$0xff]
    %v8441 = vld [vmem:[#allocation8 + $0x718] sm:$0xf]
    %v8442 = vld [vmem:[#allocation8 + $0x71c] sm:$0xff]
    %v8443 = vld [vmem:[#allocation8 + $0x724] sm:$0xff]
    %v8444 = vld [vmem:[#allocation8 + $0x72c] sm:$0xf]
    %v8445 = vld [vmem:[#allocation8 + $0x730] sm:$0xff]
    %v8446 = vld [vmem:[#allocation8 + $0x738] sm:$0xff]
    %v8447 = vld [vmem:[#allocation8 + $0x740] sm:$0xf]
    %v8448 = vld [vmem:[#allocation8 + $0x744] sm:$0xff]
    %v8449 = vld [vmem:[#allocation8 + $0x74c] sm:$0xff]
    %v8450 = vld [vmem:[#allocation8 + $0x754] sm:$0xf]
    %v8451 = vld [vmem:[#allocation8 + $0x758] sm:$0xff]
    %v8452 = vld [vmem:[#allocation8 + $0x760] sm:$0xff]
    %v8453 = vld [vmem:[#allocation8 + $0x768] sm:$0xf]
    %v8454 = vld [vmem:[#allocation8 + $0x76c] sm:$0xff]
    %v8455 = vld [vmem:[#allocation8 + $0x774] sm:$0xff]
    %v8456 = vld [vmem:[#allocation8 + $0x77c] sm:$0xf]
    %v8457 = vld [vmem:[#allocation8 + $0x780] sm:$0xff]
    %v8458 = vld [vmem:[#allocation8 + $0x788] sm:$0xff]
    %v8459 = vld [vmem:[#allocation8 + $0x790] sm:$0xf]
    %v8460 = vld [vmem:[#allocation8 + $0x794] sm:$0xff]
    %v8461 = vld [vmem:[#allocation8 + $0x79c] sm:$0xff]
    %v8462 = vld [vmem:[#allocation8 + $0x7a4] sm:$0xf]
    %v8463 = vld [vmem:[#allocation8 + $0x7a8] sm:$0xff]
    %v8464 = vld [vmem:[#allocation8 + $0x7b0] sm:$0xff]
    %v8465 = vld [vmem:[#allocation8 + $0x7b8] sm:$0xf]
    %v8466 = vld [vmem:[#allocation8 + $0x7bc] sm:$0xff]
    %v8467 = vld [vmem:[#allocation8 + $0x7c4] sm:$0xff]
    %v8468 = vld [vmem:[#allocation8 + $0x7cc] sm:$0xf]
    %v8469 = vld [vmem:[#allocation8 + $0x7d0] sm:$0xff]
    %v8470 = vld [vmem:[#allocation8 + $0x7d8] sm:$0xff]
    %v8471 = vld [vmem:[#allocation8 + $0x7e0] sm:$0xf]
    %v8472 = vld [vmem:[#allocation8 + $0x7e4] sm:$0xff]
    %v8473 = vld [vmem:[#allocation8 + $0x7ec] sm:$0xff]
    %v8474 = vld [vmem:[#allocation8 + $0x7f4] sm:$0xf]
    %v8475 = vld [vmem:[#allocation8 + $0x7f8] sm:$0xff]
    %v8476 = vld [vmem:[#allocation8 + $0x800] sm:$0xff]
    %v8477 = vld [vmem:[#allocation8 + $0x808] sm:$0xf]
    %v8478 = vld [vmem:[#allocation8 + $0x80c] sm:$0xff]
    %v8479 = vld [vmem:[#allocation8 + $0x814] sm:$0xff]
    %v8480 = vld [vmem:[#allocation8 + $0x81c] sm:$0xf]
    %v8481 = vld [vmem:[#allocation8 + $0x820] sm:$0xff]
    %v8482 = vld [vmem:[#allocation8 + $0x828] sm:$0xff]
    %v8483 = vld [vmem:[#allocation8 + $0x830] sm:$0xf]
    %v8484 = vld [vmem:[#allocation8 + $0x834] sm:$0xff]
    %v8485 = vld [vmem:[#allocation8 + $0x83c] sm:$0xff]
    %v8486 = vld [vmem:[#allocation8 + $0x844] sm:$0xf]
    %v8487 = vld [vmem:[#allocation8 + $0x848] sm:$0xff]
    %v8488 = vld [vmem:[#allocation8 + $0x850] sm:$0xff]
    %v8489 = vld [vmem:[#allocation8 + $0x858] sm:$0xf]
    %v8490 = vld [vmem:[#allocation8 + $0x85c] sm:$0xff]
    %v8491 = vld [vmem:[#allocation8 + $0x864] sm:$0xff]
    %v8492 = vld [vmem:[#allocation8 + $0x86c] sm:$0xf]
    %v8493 = vld [vmem:[#allocation8 + $0x870] sm:$0xff]
    %v8494 = vld [vmem:[#allocation8 + $0x878] sm:$0xff]
    %v8495 = vld [vmem:[#allocation8 + $0x880] sm:$0xf]
    %v8496 = vld [vmem:[#allocation8 + $0x884] sm:$0xff]
    %v8497 = vld [vmem:[#allocation8 + $0x88c] sm:$0xff]
    %v8498 = vld [vmem:[#allocation8 + $0x894] sm:$0xf]
    %v8499 = vld [vmem:[#allocation8 + $0x898] sm:$0xff]
    %v8500 = vld [vmem:[#allocation8 + $0x8a0] sm:$0xff]
    %v8501 = vld [vmem:[#allocation8 + $0x8a8] sm:$0xf]
    %v8502 = vld [vmem:[#allocation8 + $0x8ac] sm:$0xff]
    %v8503 = vld [vmem:[#allocation8 + $0x8b4] sm:$0xff]
    %v8504 = vld [vmem:[#allocation8 + $0x8bc] sm:$0xf]
    %v8505 = vld [vmem:[#allocation8 + $0x8c0] sm:$0xff]
    %v8506 = vld [vmem:[#allocation8 + $0x8c8] sm:$0xff]
    %v8507 = vld [vmem:[#allocation8 + $0x8d0] sm:$0xf]
    %v8508 = vld [vmem:[#allocation8 + $0x8d4] sm:$0xff]
    %v8509 = vld [vmem:[#allocation8 + $0x8dc] sm:$0xff]
    %v8510 = vld [vmem:[#allocation8 + $0x8e4] sm:$0xf]
    %v8511 = vld [vmem:[#allocation8 + $0x8e8] sm:$0xff]
    %v8512 = vld [vmem:[#allocation8 + $0x8f0] sm:$0xff]
    %v8513 = vld [vmem:[#allocation8 + $0x8f8] sm:$0xf]
    %v8514 = vld [vmem:[#allocation8 + $0x8fc] sm:$0xff]
    %v8515 = vld [vmem:[#allocation8 + $0x904] sm:$0xff]
    %v8516 = vld [vmem:[#allocation8 + $0x90c] sm:$0xf]
    %v8517 = vld [vmem:[#allocation8 + $0x910] sm:$0xff]
    %v8518 = vld [vmem:[#allocation8 + $0x918] sm:$0xff]
    %v8519 = vld [vmem:[#allocation8 + $0x920] sm:$0xf]
    %v8520 = vld [vmem:[#allocation8 + $0x924] sm:$0xff]
    %v8521 = vld [vmem:[#allocation8 + $0x92c] sm:$0xff]
    %v8522 = vld [vmem:[#allocation8 + $0x934] sm:$0xf]
    %v8523 = vld [vmem:[#allocation8 + $0x938] sm:$0xff]
    %v8524 = vld [vmem:[#allocation8 + $0x940] sm:$0xff]
    %v8525 = vld [vmem:[#allocation8 + $0x948] sm:$0xf]
    %v8526 = vld [vmem:[#allocation8 + $0x94c] sm:$0xff]
    %v8527 = vld [vmem:[#allocation8 + $0x954] sm:$0xff]
    %v8528 = vld [vmem:[#allocation8 + $0x95c] sm:$0xf]
    %v8529 = vld [vmem:[#allocation8 + $0x960] sm:$0xff]
    %v8530 = vld [vmem:[#allocation8 + $0x968] sm:$0xff]
    %v8531 = vld [vmem:[#allocation8 + $0x970] sm:$0xf]
    %v8532 = vld [vmem:[#allocation8 + $0x974] sm:$0xff]
    %v8533 = vld [vmem:[#allocation8 + $0x97c] sm:$0xff]
    %v8534 = vld [vmem:[#allocation8 + $0x984] sm:$0xf]
    %v8535 = vld [vmem:[#allocation8 + $0x988] sm:$0xff]
    %v8536 = vld [vmem:[#allocation8 + $0x990] sm:$0xff]
    %v8537 = vld [vmem:[#allocation8 + $0x998] sm:$0xf]
    %v8538 = vld [vmem:[#allocation8 + $0x99c] sm:$0xff]
    %v8539 = vld [vmem:[#allocation8 + $0x9a4] sm:$0xff]
    %v8540 = vld [vmem:[#allocation8 + $0x9ac] sm:$0xf]
    %v8541 = vld [vmem:[#allocation8 + $0x9b0] sm:$0xff]
    %v8542 = vld [vmem:[#allocation8 + $0x9b8] sm:$0xff]
    %v8543 = vld [vmem:[#allocation8 + $0x9c0] sm:$0xf]
    %v8544 = vld [vmem:[#allocation8 + $0x9c4] sm:$0xff]
    %v8545 = vld [vmem:[#allocation8 + $0x9cc] sm:$0xff]
    %v8546 = vld [vmem:[#allocation8 + $0x9d4] sm:$0xf]
    %v8547 = vld [vmem:[#allocation8 + $0x9d8] sm:$0xff]
    %v8548 = vld [vmem:[#allocation8 + $0x9e0] sm:$0xff]
    %v8549 = vld [vmem:[#allocation8 + $0x9e8] sm:$0xf]
    %v8550 = vld [vmem:[#allocation8 + $0x9ec] sm:$0xff]
    %v8551 = vld [vmem:[#allocation8 + $0x9f4] sm:$0xff]
    %v8552 = vld [vmem:[#allocation8 + $0x9fc] sm:$0xf]
    %v8553 = vld [vmem:[#allocation10] sm:$0x1f]
    %v8555 = vperm.slane %v8553, 0
    %v8556 = vperm.slane %v8553, 1
    %v8557 = vperm.slane %v8553, 2
    %v8558 = vperm.slane %v8553, 3
    %v8559 = vperm.slane %v8553, 4
    %v8949 = vunpack.c.l.b16 %v8169
    %v8950 = vunpack.c.h.b16 %v8169
    %v8951 = vunpack.c.l.b16 %v8170
    %v8952 = vunpack.c.h.b16 %v8170
    %v8953 = vunpack.c.l.b16 %v8171
    %v8954 = vunpack.c.l.b16 %v8172
    %v8955 = vunpack.c.h.b16 %v8172
    %v8956 = vunpack.c.l.b16 %v8173
    %v8957 = vunpack.c.h.b16 %v8173
    %v8958 = vunpack.c.l.b16 %v8174
    %v8959 = vunpack.c.l.b16 %v8175
    %v8960 = vunpack.c.h.b16 %v8175
    %v8961 = vunpack.c.l.b16 %v8176
    %v8962 = vunpack.c.h.b16 %v8176
    %v8963 = vunpack.c.l.b16 %v8177
    %v8964 = vunpack.c.l.b16 %v8178
    %v8965 = vunpack.c.h.b16 %v8178
    %v8966 = vunpack.c.l.b16 %v8179
    %v8967 = vunpack.c.h.b16 %v8179
    %v8968 = vunpack.c.l.b16 %v8180
    %v8969 = vunpack.c.l.b16 %v8181
    %v8970 = vunpack.c.h.b16 %v8181
    %v8971 = vunpack.c.l.b16 %v8182
    %v8972 = vunpack.c.h.b16 %v8182
    %v8973 = vunpack.c.l.b16 %v8183
    %v8974 = vunpack.c.l.b16 %v8184
    %v8975 = vunpack.c.h.b16 %v8184
    %v8976 = vunpack.c.l.b16 %v8185
    %v8977 = vunpack.c.h.b16 %v8185
    %v8978 = vunpack.c.l.b16 %v8186
    %v8979 = vunpack.c.l.b16 %v8187
    %v8980 = vunpack.c.h.b16 %v8187
    %v8981 = vunpack.c.l.b16 %v8188
    %v8982 = vunpack.c.h.b16 %v8188
    %v8983 = vunpack.c.l.b16 %v8189
    %v8984 = vunpack.c.l.b16 %v8190
    %v8985 = vunpack.c.h.b16 %v8190
    %v8986 = vunpack.c.l.b16 %v8191
    %v8987 = vunpack.c.h.b16 %v8191
    %v8988 = vunpack.c.l.b16 %v8192
    %v8989 = vunpack.c.l.b16 %v8193
    %v8990 = vunpack.c.h.b16 %v8193
    %v8991 = vunpack.c.l.b16 %v8194
    %v8992 = vunpack.c.h.b16 %v8194
    %v8993 = vunpack.c.l.b16 %v8195
    %v8994 = vunpack.c.l.b16 %v8196
    %v8995 = vunpack.c.h.b16 %v8196
    %v8996 = vunpack.c.l.b16 %v8197
    %v8997 = vunpack.c.h.b16 %v8197
    %v8998 = vunpack.c.l.b16 %v8198
    %v8999 = vunpack.c.l.b16 %v8199
    %v9000 = vunpack.c.h.b16 %v8199
    %v9001 = vunpack.c.l.b16 %v8200
    %v9002 = vunpack.c.h.b16 %v8200
    %v9003 = vunpack.c.l.b16 %v8201
    %v9004 = vunpack.c.l.b16 %v8202
    %v9005 = vunpack.c.h.b16 %v8202
    %v9006 = vunpack.c.l.b16 %v8203
    %v9007 = vunpack.c.h.b16 %v8203
    %v9008 = vunpack.c.l.b16 %v8204
    %v9009 = vunpack.c.l.b16 %v8205
    %v9010 = vunpack.c.h.b16 %v8205
    %v9011 = vunpack.c.l.b16 %v8206
    %v9012 = vunpack.c.h.b16 %v8206
    %v9013 = vunpack.c.l.b16 %v8207
    %v9014 = vunpack.c.l.b16 %v8208
    %v9015 = vunpack.c.h.b16 %v8208
    %v9016 = vunpack.c.l.b16 %v8209
    %v9017 = vunpack.c.h.b16 %v8209
    %v9018 = vunpack.c.l.b16 %v8210
    %v9019 = vunpack.c.l.b16 %v8211
    %v9020 = vunpack.c.h.b16 %v8211
    %v9021 = vunpack.c.l.b16 %v8212
    %v9022 = vunpack.c.h.b16 %v8212
    %v9023 = vunpack.c.l.b16 %v8213
    %v9024 = vunpack.c.l.b16 %v8214
    %v9025 = vunpack.c.h.b16 %v8214
    %v9026 = vunpack.c.l.b16 %v8215
    %v9027 = vunpack.c.h.b16 %v8215
    %v9028 = vunpack.c.l.b16 %v8216
    %v9029 = vunpack.c.l.b16 %v8217
    %v9030 = vunpack.c.h.b16 %v8217
    %v9031 = vunpack.c.l.b16 %v8218
    %v9032 = vunpack.c.h.b16 %v8218
    %v9033 = vunpack.c.l.b16 %v8219
    %v9034 = vunpack.c.l.b16 %v8220
    %v9035 = vunpack.c.h.b16 %v8220
    %v9036 = vunpack.c.l.b16 %v8221
    %v9037 = vunpack.c.h.b16 %v8221
    %v9038 = vunpack.c.l.b16 %v8222
    %v9039 = vunpack.c.l.b16 %v8223
    %v9040 = vunpack.c.h.b16 %v8223
    %v9041 = vunpack.c.l.b16 %v8224
    %v9042 = vunpack.c.h.b16 %v8224
    %v9043 = vunpack.c.l.b16 %v8225
    %v9044 = vunpack.c.l.b16 %v8226
    %v9045 = vunpack.c.h.b16 %v8226
    %v9046 = vunpack.c.l.b16 %v8227
    %v9047 = vunpack.c.h.b16 %v8227
    %v9048 = vunpack.c.l.b16 %v8228
    %v9049 = vunpack.c.l.b16 %v8229
    %v9050 = vunpack.c.h.b16 %v8229
    %v9051 = vunpack.c.l.b16 %v8230
    %v9052 = vunpack.c.h.b16 %v8230
    %v9053 = vunpack.c.l.b16 %v8231
    %v9054 = vunpack.c.l.b16 %v8232
    %v9055 = vunpack.c.h.b16 %v8232
    %v9056 = vunpack.c.l.b16 %v8233
    %v9057 = vunpack.c.h.b16 %v8233
    %v9058 = vunpack.c.l.b16 %v8234
    %v9059 = vunpack.c.l.b16 %v8235
    %v9060 = vunpack.c.h.b16 %v8235
    %v9061 = vunpack.c.l.b16 %v8236
    %v9062 = vunpack.c.h.b16 %v8236
    %v9063 = vunpack.c.l.b16 %v8237
    %v9064 = vunpack.c.l.b16 %v8238
    %v9065 = vunpack.c.h.b16 %v8238
    %v9066 = vunpack.c.l.b16 %v8239
    %v9067 = vunpack.c.h.b16 %v8239
    %v9068 = vunpack.c.l.b16 %v8240
    %v9069 = vunpack.c.l.b16 %v8241
    %v9070 = vunpack.c.h.b16 %v8241
    %v9071 = vunpack.c.l.b16 %v8242
    %v9072 = vunpack.c.h.b16 %v8242
    %v9073 = vunpack.c.l.b16 %v8243
    %v9074 = vunpack.c.l.b16 %v8244
    %v9075 = vunpack.c.h.b16 %v8244
    %v9076 = vunpack.c.l.b16 %v8245
    %v9077 = vunpack.c.h.b16 %v8245
    %v9078 = vunpack.c.l.b16 %v8246
    %v9079 = vunpack.c.l.b16 %v8247
    %v9080 = vunpack.c.h.b16 %v8247
    %v9081 = vunpack.c.l.b16 %v8248
    %v9082 = vunpack.c.h.b16 %v8248
    %v9083 = vunpack.c.l.b16 %v8249
    %v9084 = vunpack.c.l.b16 %v8250
    %v9085 = vunpack.c.h.b16 %v8250
    %v9086 = vunpack.c.l.b16 %v8251
    %v9087 = vunpack.c.h.b16 %v8251
    %v9088 = vunpack.c.l.b16 %v8252
    %v9089 = vunpack.c.l.b16 %v8253
    %v9090 = vunpack.c.h.b16 %v8253
    %v9091 = vunpack.c.l.b16 %v8254
    %v9092 = vunpack.c.h.b16 %v8254
    %v9093 = vunpack.c.l.b16 %v8255
    %v9094 = vunpack.c.l.b16 %v8256
    %v9095 = vunpack.c.h.b16 %v8256
    %v9096 = vunpack.c.l.b16 %v8257
    %v9097 = vunpack.c.h.b16 %v8257
    %v9098 = vunpack.c.l.b16 %v8258
    %v9099 = vunpack.c.l.b16 %v8259
    %v9100 = vunpack.c.h.b16 %v8259
    %v9101 = vunpack.c.l.b16 %v8260
    %v9102 = vunpack.c.h.b16 %v8260
    %v9103 = vunpack.c.l.b16 %v8261
    %v9104 = vunpack.c.l.b16 %v8262
    %v9105 = vunpack.c.h.b16 %v8262
    %v9106 = vunpack.c.l.b16 %v8263
    %v9107 = vunpack.c.h.b16 %v8263
    %v9108 = vunpack.c.l.b16 %v8264
    %v9109 = vunpack.c.l.b16 %v8265
    %v9110 = vunpack.c.h.b16 %v8265
    %v9111 = vunpack.c.l.b16 %v8266
    %v9112 = vunpack.c.h.b16 %v8266
    %v9113 = vunpack.c.l.b16 %v8267
    %v9114 = vunpack.c.l.b16 %v8268
    %v9115 = vunpack.c.h.b16 %v8268
    %v9116 = vunpack.c.l.b16 %v8269
    %v9117 = vunpack.c.h.b16 %v8269
    %v9118 = vunpack.c.l.b16 %v8270
    %v9119 = vunpack.c.l.b16 %v8271
    %v9120 = vunpack.c.h.b16 %v8271
    %v9121 = vunpack.c.l.b16 %v8272
    %v9122 = vunpack.c.h.b16 %v8272
    %v9123 = vunpack.c.l.b16 %v8273
    %v9124 = vunpack.c.l.b16 %v8274
    %v9125 = vunpack.c.h.b16 %v8274
    %v9126 = vunpack.c.l.b16 %v8275
    %v9127 = vunpack.c.h.b16 %v8275
    %v9128 = vunpack.c.l.b16 %v8276
    %v9129 = vunpack.c.l.b16 %v8277
    %v9130 = vunpack.c.h.b16 %v8277
    %v9131 = vunpack.c.l.b16 %v8278
    %v9132 = vunpack.c.h.b16 %v8278
    %v9133 = vunpack.c.l.b16 %v8279
    %v9134 = vunpack.c.l.b16 %v8280
    %v9135 = vunpack.c.h.b16 %v8280
    %v9136 = vunpack.c.l.b16 %v8281
    %v9137 = vunpack.c.h.b16 %v8281
    %v9138 = vunpack.c.l.b16 %v8282
    %v9139 = vunpack.c.l.b16 %v8283
    %v9140 = vunpack.c.h.b16 %v8283
    %v9141 = vunpack.c.l.b16 %v8284
    %v9142 = vunpack.c.h.b16 %v8284
    %v9143 = vunpack.c.l.b16 %v8285
    %v9144 = vunpack.c.l.b16 %v8286
    %v9145 = vunpack.c.h.b16 %v8286
    %v9146 = vunpack.c.l.b16 %v8287
    %v9147 = vunpack.c.h.b16 %v8287
    %v9148 = vunpack.c.l.b16 %v8288
    %v9149 = vunpack.c.l.b16 %v8289
    %v9150 = vunpack.c.h.b16 %v8289
    %v9151 = vunpack.c.l.b16 %v8290
    %v9152 = vunpack.c.h.b16 %v8290
    %v9153 = vunpack.c.l.b16 %v8291
    %v9154 = vunpack.c.l.b16 %v8292
    %v9155 = vunpack.c.h.b16 %v8292
    %v9156 = vunpack.c.l.b16 %v8293
    %v9157 = vunpack.c.h.b16 %v8293
    %v9158 = vunpack.c.l.b16 %v8294
    %v9159 = vunpack.c.l.b16 %v8295
    %v9160 = vunpack.c.h.b16 %v8295
    %v9161 = vunpack.c.l.b16 %v8296
    %v9162 = vunpack.c.h.b16 %v8296
    %v9163 = vunpack.c.l.b16 %v8297
    %v9164 = vunpack.c.l.b16 %v8298
    %v9165 = vunpack.c.h.b16 %v8298
    %v9166 = vunpack.c.l.b16 %v8299
    %v9167 = vunpack.c.h.b16 %v8299
    %v9168 = vunpack.c.l.b16 %v8300
    %v9169 = vunpack.c.l.b16 %v8301
    %v9170 = vunpack.c.h.b16 %v8301
    %v9171 = vunpack.c.l.b16 %v8302
    %v9172 = vunpack.c.h.b16 %v8302
    %v9173 = vunpack.c.l.b16 %v8303
    %v9174 = vunpack.c.l.b16 %v8304
    %v9175 = vunpack.c.h.b16 %v8304
    %v9176 = vunpack.c.l.b16 %v8305
    %v9177 = vunpack.c.h.b16 %v8305
    %v9178 = vunpack.c.l.b16 %v8306
    %v9179 = vunpack.c.l.b16 %v8307
    %v9180 = vunpack.c.h.b16 %v8307
    %v9181 = vunpack.c.l.b16 %v8308
    %v9182 = vunpack.c.h.b16 %v8308
    %v9183 = vunpack.c.l.b16 %v8309
    %v9184 = vunpack.c.l.b16 %v8310
    %v9185 = vunpack.c.h.b16 %v8310
    %v9186 = vunpack.c.l.b16 %v8311
    %v9187 = vunpack.c.h.b16 %v8311
    %v9188 = vunpack.c.l.b16 %v8312
    %v9189 = vunpack.c.l.b16 %v8313
    %v9190 = vunpack.c.h.b16 %v8313
    %v9191 = vunpack.c.l.b16 %v8314
    %v9192 = vunpack.c.h.b16 %v8314
    %v9193 = vunpack.c.l.b16 %v8315
    %v9194 = vunpack.c.l.b16 %v8316
    %v9195 = vunpack.c.h.b16 %v8316
    %v9196 = vunpack.c.l.b16 %v8317
    %v9197 = vunpack.c.h.b16 %v8317
    %v9198 = vunpack.c.l.b16 %v8318
    %v9199 = vunpack.c.l.b16 %v8319
    %v9200 = vunpack.c.h.b16 %v8319
    %v9201 = vunpack.c.l.b16 %v8320
    %v9202 = vunpack.c.h.b16 %v8320
    %v9203 = vunpack.c.l.b16 %v8321
    %v9204 = vunpack.c.l.b16 %v8322
    %v9205 = vunpack.c.h.b16 %v8322
    %v9206 = vunpack.c.l.b16 %v8323
    %v9207 = vunpack.c.h.b16 %v8323
    %v9208 = vunpack.c.l.b16 %v8324
    %v9209 = vunpack.c.l.b16 %v8325
    %v9210 = vunpack.c.h.b16 %v8325
    %v9211 = vunpack.c.l.b16 %v8326
    %v9212 = vunpack.c.h.b16 %v8326
    %v9213 = vunpack.c.l.b16 %v8327
    %v9214 = vunpack.c.l.b16 %v8328
    %v9215 = vunpack.c.h.b16 %v8328
    %v9216 = vunpack.c.l.b16 %v8329
    %v9217 = vunpack.c.h.b16 %v8329
    %v9218 = vunpack.c.l.b16 %v8330
    %v9219 = vunpack.c.l.b16 %v8331
    %v9220 = vunpack.c.h.b16 %v8331
    %v9221 = vunpack.c.l.b16 %v8332
    %v9222 = vunpack.c.h.b16 %v8332
    %v9223 = vunpack.c.l.b16 %v8333
    %v9224 = vunpack.c.l.b16 %v8334
    %v9225 = vunpack.c.h.b16 %v8334
    %v9226 = vunpack.c.l.b16 %v8335
    %v9227 = vunpack.c.h.b16 %v8335
    %v9228 = vunpack.c.l.b16 %v8336
    %v9229 = vunpack.c.l.b16 %v8337
    %v9230 = vunpack.c.h.b16 %v8337
    %v9231 = vunpack.c.l.b16 %v8338
    %v9232 = vunpack.c.h.b16 %v8338
    %v9233 = vunpack.c.l.b16 %v8339
    %v9234 = vunpack.c.l.b16 %v8340
    %v9235 = vunpack.c.h.b16 %v8340
    %v9236 = vunpack.c.l.b16 %v8341
    %v9237 = vunpack.c.h.b16 %v8341
    %v9238 = vunpack.c.l.b16 %v8342
    %v9239 = vunpack.c.l.b16 %v8343
    %v9240 = vunpack.c.h.b16 %v8343
    %v9241 = vunpack.c.l.b16 %v8344
    %v9242 = vunpack.c.h.b16 %v8344
    %v9243 = vunpack.c.l.b16 %v8345
    %v9244 = vunpack.c.l.b16 %v8346
    %v9245 = vunpack.c.h.b16 %v8346
    %v9246 = vunpack.c.l.b16 %v8347
    %v9247 = vunpack.c.h.b16 %v8347
    %v9248 = vunpack.c.l.b16 %v8348
    %v9249 = vunpack.c.l.b16 %v8349
    %v9250 = vunpack.c.h.b16 %v8349
    %v9251 = vunpack.c.l.b16 %v8350
    %v9252 = vunpack.c.h.b16 %v8350
    %v9253 = vunpack.c.l.b16 %v8351
    %v9254 = vunpack.c.l.b16 %v8352
    %v9255 = vunpack.c.h.b16 %v8352
    %v9256 = vunpack.c.l.b16 %v8353
    %v9257 = vunpack.c.h.b16 %v8353
    %v9258 = vunpack.c.l.b16 %v8354
    %v9259 = vunpack.c.l.b16 %v8355
    %v9260 = vunpack.c.h.b16 %v8355
    %v9261 = vunpack.c.l.b16 %v8356
    %v9262 = vunpack.c.h.b16 %v8356
    %v9263 = vunpack.c.l.b16 %v8357
    %v9264 = vunpack.c.l.b16 %v8358
    %v9265 = vunpack.c.h.b16 %v8358
    %v9266 = vunpack.c.l.b16 %v8359
    %v9267 = vunpack.c.h.b16 %v8359
    %v9268 = vunpack.c.l.b16 %v8360
    %v9269 = vunpack.c.l.b16 %v8361
    %v9270 = vunpack.c.h.b16 %v8361
    %v9271 = vunpack.c.l.b16 %v8362
    %v9272 = vunpack.c.h.b16 %v8362
    %v9273 = vunpack.c.l.b16 %v8363
    %v9274 = vunpack.c.l.b16 %v8364
    %v9275 = vunpack.c.h.b16 %v8364
    %v9276 = vunpack.c.l.b16 %v8365
    %v9277 = vunpack.c.h.b16 %v8365
    %v9278 = vunpack.c.l.b16 %v8366
    %v9279 = vunpack.c.l.b16 %v8367
    %v9280 = vunpack.c.h.b16 %v8367
    %v9281 = vunpack.c.l.b16 %v8368
    %v9282 = vunpack.c.h.b16 %v8368
    %v9283 = vunpack.c.l.b16 %v8369
    %v9284 = vunpack.c.l.b16 %v8370
    %v9285 = vunpack.c.h.b16 %v8370
    %v9286 = vunpack.c.l.b16 %v8371
    %v9287 = vunpack.c.h.b16 %v8371
    %v9288 = vunpack.c.l.b16 %v8372
    %v9289 = vunpack.c.l.b16 %v8373
    %v9290 = vunpack.c.h.b16 %v8373
    %v9291 = vunpack.c.l.b16 %v8374
    %v9292 = vunpack.c.h.b16 %v8374
    %v9293 = vunpack.c.l.b16 %v8375
    %v9294 = vunpack.c.l.b16 %v8376
    %v9295 = vunpack.c.h.b16 %v8376
    %v9296 = vunpack.c.l.b16 %v8377
    %v9297 = vunpack.c.h.b16 %v8377
    %v9298 = vunpack.c.l.b16 %v8378
    %v9299 = vunpack.c.l.b16 %v8379
    %v9300 = vunpack.c.h.b16 %v8379
    %v9301 = vunpack.c.l.b16 %v8380
    %v9302 = vunpack.c.h.b16 %v8380
    %v9303 = vunpack.c.l.b16 %v8381
    %v9304 = vunpack.c.l.b16 %v8382
    %v9305 = vunpack.c.h.b16 %v8382
    %v9306 = vunpack.c.l.b16 %v8383
    %v9307 = vunpack.c.h.b16 %v8383
    %v9308 = vunpack.c.l.b16 %v8384
    %v9309 = vunpack.c.l.b16 %v8385
    %v9310 = vunpack.c.h.b16 %v8385
    %v9311 = vunpack.c.l.b16 %v8386
    %v9312 = vunpack.c.h.b16 %v8386
    %v9313 = vunpack.c.l.b16 %v8387
    %v9314 = vunpack.c.l.b16 %v8388
    %v9315 = vunpack.c.h.b16 %v8388
    %v9316 = vunpack.c.l.b16 %v8389
    %v9317 = vunpack.c.h.b16 %v8389
    %v9318 = vunpack.c.l.b16 %v8390
    %v9319 = vunpack.c.l.b16 %v8391
    %v9320 = vunpack.c.h.b16 %v8391
    %v9321 = vunpack.c.l.b16 %v8392
    %v9322 = vunpack.c.h.b16 %v8392
    %v9323 = vunpack.c.l.b16 %v8393
    %v9324 = vunpack.c.l.b16 %v8394
    %v9325 = vunpack.c.h.b16 %v8394
    %v9326 = vunpack.c.l.b16 %v8395
    %v9327 = vunpack.c.h.b16 %v8395
    %v9328 = vunpack.c.l.b16 %v8396
    %v9329 = vunpack.c.l.b16 %v8397
    %v9330 = vunpack.c.h.b16 %v8397
    %v9331 = vunpack.c.l.b16 %v8398
    %v9332 = vunpack.c.h.b16 %v8398
    %v9333 = vunpack.c.l.b16 %v8399
    %v9334 = vunpack.c.l.b16 %v8400
    %v9335 = vunpack.c.h.b16 %v8400
    %v9336 = vunpack.c.l.b16 %v8401
    %v9337 = vunpack.c.h.b16 %v8401
    %v9338 = vunpack.c.l.b16 %v8402
    %v9339 = vunpack.c.l.b16 %v8403
    %v9340 = vunpack.c.h.b16 %v8403
    %v9341 = vunpack.c.l.b16 %v8404
    %v9342 = vunpack.c.h.b16 %v8404
    %v9343 = vunpack.c.l.b16 %v8405
    %v9344 = vunpack.c.l.b16 %v8406
    %v9345 = vunpack.c.h.b16 %v8406
    %v9346 = vunpack.c.l.b16 %v8407
    %v9347 = vunpack.c.h.b16 %v8407
    %v9348 = vunpack.c.l.b16 %v8408
    %v9349 = vunpack.c.l.b16 %v8409
    %v9350 = vunpack.c.h.b16 %v8409
    %v9351 = vunpack.c.l.b16 %v8410
    %v9352 = vunpack.c.h.b16 %v8410
    %v9353 = vunpack.c.l.b16 %v8411
    %v9354 = vunpack.c.l.b16 %v8412
    %v9355 = vunpack.c.h.b16 %v8412
    %v9356 = vunpack.c.l.b16 %v8413
    %v9357 = vunpack.c.h.b16 %v8413
    %v9358 = vunpack.c.l.b16 %v8414
    %v9359 = vunpack.c.l.b16 %v8415
    %v9360 = vunpack.c.h.b16 %v8415
    %v9361 = vunpack.c.l.b16 %v8416
    %v9362 = vunpack.c.h.b16 %v8416
    %v9363 = vunpack.c.l.b16 %v8417
    %v9364 = vunpack.c.l.b16 %v8418
    %v9365 = vunpack.c.h.b16 %v8418
    %v9366 = vunpack.c.l.b16 %v8419
    %v9367 = vunpack.c.h.b16 %v8419
    %v9368 = vunpack.c.l.b16 %v8420
    %v9369 = vunpack.c.l.b16 %v8421
    %v9370 = vunpack.c.h.b16 %v8421
    %v9371 = vunpack.c.l.b16 %v8422
    %v9372 = vunpack.c.h.b16 %v8422
    %v9373 = vunpack.c.l.b16 %v8423
    %v9374 = vunpack.c.l.b16 %v8424
    %v9375 = vunpack.c.h.b16 %v8424
    %v9376 = vunpack.c.l.b16 %v8425
    %v9377 = vunpack.c.h.b16 %v8425
    %v9378 = vunpack.c.l.b16 %v8426
    %v9379 = vunpack.c.l.b16 %v8427
    %v9380 = vunpack.c.h.b16 %v8427
    %v9381 = vunpack.c.l.b16 %v8428
    %v9382 = vunpack.c.h.b16 %v8428
    %v9383 = vunpack.c.l.b16 %v8429
    %v9384 = vunpack.c.l.b16 %v8430
    %v9385 = vunpack.c.h.b16 %v8430
    %v9386 = vunpack.c.l.b16 %v8431
    %v9387 = vunpack.c.h.b16 %v8431
    %v9388 = vunpack.c.l.b16 %v8432
    %v9389 = vunpack.c.l.b16 %v8433
    %v9390 = vunpack.c.h.b16 %v8433
    %v9391 = vunpack.c.l.b16 %v8434
    %v9392 = vunpack.c.h.b16 %v8434
    %v9393 = vunpack.c.l.b16 %v8435
    %v9394 = vunpack.c.l.b16 %v8436
    %v9395 = vunpack.c.h.b16 %v8436
    %v9396 = vunpack.c.l.b16 %v8437
    %v9397 = vunpack.c.h.b16 %v8437
    %v9398 = vunpack.c.l.b16 %v8438
    %v9399 = vunpack.c.l.b16 %v8439
    %v9400 = vunpack.c.h.b16 %v8439
    %v9401 = vunpack.c.l.b16 %v8440
    %v9402 = vunpack.c.h.b16 %v8440
    %v9403 = vunpack.c.l.b16 %v8441
    %v9404 = vunpack.c.l.b16 %v8442
    %v9405 = vunpack.c.h.b16 %v8442
    %v9406 = vunpack.c.l.b16 %v8443
    %v9407 = vunpack.c.h.b16 %v8443
    %v9408 = vunpack.c.l.b16 %v8444
    %v9409 = vunpack.c.l.b16 %v8445
    %v9410 = vunpack.c.h.b16 %v8445
    %v9411 = vunpack.c.l.b16 %v8446
    %v9412 = vunpack.c.h.b16 %v8446
    %v9413 = vunpack.c.l.b16 %v8447
    %v9414 = vunpack.c.l.b16 %v8448
    %v9415 = vunpack.c.h.b16 %v8448
    %v9416 = vunpack.c.l.b16 %v8449
    %v9417 = vunpack.c.h.b16 %v8449
    %v9418 = vunpack.c.l.b16 %v8450
    %v9419 = vunpack.c.l.b16 %v8451
    %v9420 = vunpack.c.h.b16 %v8451
    %v9421 = vunpack.c.l.b16 %v8452
    %v9422 = vunpack.c.h.b16 %v8452
    %v9423 = vunpack.c.l.b16 %v8453
    %v9424 = vunpack.c.l.b16 %v8454
    %v9425 = vunpack.c.h.b16 %v8454
    %v9426 = vunpack.c.l.b16 %v8455
    %v9427 = vunpack.c.h.b16 %v8455
    %v9428 = vunpack.c.l.b16 %v8456
    %v9429 = vunpack.c.l.b16 %v8457
    %v9430 = vunpack.c.h.b16 %v8457
    %v9431 = vunpack.c.l.b16 %v8458
    %v9432 = vunpack.c.h.b16 %v8458
    %v9433 = vunpack.c.l.b16 %v8459
    %v9434 = vunpack.c.l.b16 %v8460
    %v9435 = vunpack.c.h.b16 %v8460
    %v9436 = vunpack.c.l.b16 %v8461
    %v9437 = vunpack.c.h.b16 %v8461
    %v9438 = vunpack.c.l.b16 %v8462
    %v9439 = vunpack.c.l.b16 %v8463
    %v9440 = vunpack.c.h.b16 %v8463
    %v9441 = vunpack.c.l.b16 %v8464
    %v9442 = vunpack.c.h.b16 %v8464
    %v9443 = vunpack.c.l.b16 %v8465
    %v9444 = vunpack.c.l.b16 %v8466
    %v9445 = vunpack.c.h.b16 %v8466
    %v9446 = vunpack.c.l.b16 %v8467
    %v9447 = vunpack.c.h.b16 %v8467
    %v9448 = vunpack.c.l.b16 %v8468
    %v9449 = vunpack.c.l.b16 %v8469
    %v9450 = vunpack.c.h.b16 %v8469
    %v9451 = vunpack.c.l.b16 %v8470
    %v9452 = vunpack.c.h.b16 %v8470
    %v9453 = vunpack.c.l.b16 %v8471
    %v9454 = vunpack.c.l.b16 %v8472
    %v9455 = vunpack.c.h.b16 %v8472
    %v9456 = vunpack.c.l.b16 %v8473
    %v9457 = vunpack.c.h.b16 %v8473
    %v9458 = vunpack.c.l.b16 %v8474
    %v9459 = vunpack.c.l.b16 %v8475
    %v9460 = vunpack.c.h.b16 %v8475
    %v9461 = vunpack.c.l.b16 %v8476
    %v9462 = vunpack.c.h.b16 %v8476
    %v9463 = vunpack.c.l.b16 %v8477
    %v9464 = vunpack.c.l.b16 %v8478
    %v9465 = vunpack.c.h.b16 %v8478
    %v9466 = vunpack.c.l.b16 %v8479
    %v9467 = vunpack.c.h.b16 %v8479
    %v9468 = vunpack.c.l.b16 %v8480
    %v9469 = vunpack.c.l.b16 %v8481
    %v9470 = vunpack.c.h.b16 %v8481
    %v9471 = vunpack.c.l.b16 %v8482
    %v9472 = vunpack.c.h.b16 %v8482
    %v9473 = vunpack.c.l.b16 %v8483
    %v9474 = vunpack.c.l.b16 %v8484
    %v9475 = vunpack.c.h.b16 %v8484
    %v9476 = vunpack.c.l.b16 %v8485
    %v9477 = vunpack.c.h.b16 %v8485
    %v9478 = vunpack.c.l.b16 %v8486
    %v9479 = vunpack.c.l.b16 %v8487
    %v9480 = vunpack.c.h.b16 %v8487
    %v9481 = vunpack.c.l.b16 %v8488
    %v9482 = vunpack.c.h.b16 %v8488
    %v9483 = vunpack.c.l.b16 %v8489
    %v9484 = vunpack.c.l.b16 %v8490
    %v9485 = vunpack.c.h.b16 %v8490
    %v9486 = vunpack.c.l.b16 %v8491
    %v9487 = vunpack.c.h.b16 %v8491
    %v9488 = vunpack.c.l.b16 %v8492
    %v9489 = vunpack.c.l.b16 %v8493
    %v9490 = vunpack.c.h.b16 %v8493
    %v9491 = vunpack.c.l.b16 %v8494
    %v9492 = vunpack.c.h.b16 %v8494
    %v9493 = vunpack.c.l.b16 %v8495
    %v9494 = vunpack.c.l.b16 %v8496
    %v9495 = vunpack.c.h.b16 %v8496
    %v9496 = vunpack.c.l.b16 %v8497
    %v9497 = vunpack.c.h.b16 %v8497
    %v9498 = vunpack.c.l.b16 %v8498
    %v9499 = vunpack.c.l.b16 %v8499
    %v9500 = vunpack.c.h.b16 %v8499
    %v9501 = vunpack.c.l.b16 %v8500
    %v9502 = vunpack.c.h.b16 %v8500
    %v9503 = vunpack.c.l.b16 %v8501
    %v9504 = vunpack.c.l.b16 %v8502
    %v9505 = vunpack.c.h.b16 %v8502
    %v9506 = vunpack.c.l.b16 %v8503
    %v9507 = vunpack.c.h.b16 %v8503
    %v9508 = vunpack.c.l.b16 %v8504
    %v9509 = vunpack.c.l.b16 %v8505
    %v9510 = vunpack.c.h.b16 %v8505
    %v9511 = vunpack.c.l.b16 %v8506
    %v9512 = vunpack.c.h.b16 %v8506
    %v9513 = vunpack.c.l.b16 %v8507
    %v9514 = vunpack.c.l.b16 %v8508
    %v9515 = vunpack.c.h.b16 %v8508
    %v9516 = vunpack.c.l.b16 %v8509
    %v9517 = vunpack.c.h.b16 %v8509
    %v9518 = vunpack.c.l.b16 %v8510
    %v9519 = vunpack.c.l.b16 %v8511
    %v9520 = vunpack.c.h.b16 %v8511
    %v9521 = vunpack.c.l.b16 %v8512
    %v9522 = vunpack.c.h.b16 %v8512
    %v9523 = vunpack.c.l.b16 %v8513
    %v9524 = vunpack.c.l.b16 %v8514
    %v9525 = vunpack.c.h.b16 %v8514
    %v9526 = vunpack.c.l.b16 %v8515
    %v9527 = vunpack.c.h.b16 %v8515
    %v9528 = vunpack.c.l.b16 %v8516
    %v9529 = vunpack.c.l.b16 %v8517
    %v9530 = vunpack.c.h.b16 %v8517
    %v9531 = vunpack.c.l.b16 %v8518
    %v9532 = vunpack.c.h.b16 %v8518
    %v9533 = vunpack.c.l.b16 %v8519
    %v9534 = vunpack.c.l.b16 %v8520
    %v9535 = vunpack.c.h.b16 %v8520
    %v9536 = vunpack.c.l.b16 %v8521
    %v9537 = vunpack.c.h.b16 %v8521
    %v9538 = vunpack.c.l.b16 %v8522
    %v9539 = vunpack.c.l.b16 %v8523
    %v9540 = vunpack.c.h.b16 %v8523
    %v9541 = vunpack.c.l.b16 %v8524
    %v9542 = vunpack.c.h.b16 %v8524
    %v9543 = vunpack.c.l.b16 %v8525
    %v9544 = vunpack.c.l.b16 %v8526
    %v9545 = vunpack.c.h.b16 %v8526
    %v9546 = vunpack.c.l.b16 %v8527
    %v9547 = vunpack.c.h.b16 %v8527
    %v9548 = vunpack.c.l.b16 %v8528
    %v9549 = vunpack.c.l.b16 %v8529
    %v9550 = vunpack.c.h.b16 %v8529
    %v9551 = vunpack.c.l.b16 %v8530
    %v9552 = vunpack.c.h.b16 %v8530
    %v9553 = vunpack.c.l.b16 %v8531
    %v9554 = vunpack.c.l.b16 %v8532
    %v9555 = vunpack.c.h.b16 %v8532
    %v9556 = vunpack.c.l.b16 %v8533
    %v9557 = vunpack.c.h.b16 %v8533
    %v9558 = vunpack.c.l.b16 %v8534
    %v9559 = vunpack.c.l.b16 %v8535
    %v9560 = vunpack.c.h.b16 %v8535
    %v9561 = vunpack.c.l.b16 %v8536
    %v9562 = vunpack.c.h.b16 %v8536
    %v9563 = vunpack.c.l.b16 %v8537
    %v9564 = vunpack.c.l.b16 %v8538
    %v9565 = vunpack.c.h.b16 %v8538
    %v9566 = vunpack.c.l.b16 %v8539
    %v9567 = vunpack.c.h.b16 %v8539
    %v9568 = vunpack.c.l.b16 %v8540
    %v9569 = vunpack.c.l.b16 %v8541
    %v9570 = vunpack.c.h.b16 %v8541
    %v9571 = vunpack.c.l.b16 %v8542
    %v9572 = vunpack.c.h.b16 %v8542
    %v9573 = vunpack.c.l.b16 %v8543
    %v9574 = vunpack.c.l.b16 %v8544
    %v9575 = vunpack.c.h.b16 %v8544
    %v9576 = vunpack.c.l.b16 %v8545
    %v9577 = vunpack.c.h.b16 %v8545
    %v9578 = vunpack.c.l.b16 %v8546
    %v9579 = vunpack.c.l.b16 %v8547
    %v9580 = vunpack.c.h.b16 %v8547
    %v9581 = vunpack.c.l.b16 %v8548
    %v9582 = vunpack.c.h.b16 %v8548
    %v9583 = vunpack.c.l.b16 %v8549
    %v9584 = vunpack.c.l.b16 %v8550
    %v9585 = vunpack.c.h.b16 %v8550
    %v9586 = vunpack.c.l.b16 %v8551
    %v9587 = vunpack.c.h.b16 %v8551
    %v9588 = vunpack.c.l.b16 %v8552
    %v9589 = vpack.c.b16 %v8954, %v8949
    %v9590 = vpack.c.b16 %v8955, %v8950
    %v9591 = vpack.c.b16 %v8956, %v8951
    %v9592 = vpack.c.b16 %v8957, %v8952
    %v9593 = vpack.c.b16 %v8958, %v8953
    %v9594 = vpack.c.b16 %v8964, %v8959
    %v9595 = vpack.c.b16 %v8965, %v8960
    %v9596 = vpack.c.b16 %v8966, %v8961
    %v9597 = vpack.c.b16 %v8967, %v8962
    %v9598 = vpack.c.b16 %v8968, %v8963
    %v9599 = vpack.c.b16 %v8974, %v8969
    %v9600 = vpack.c.b16 %v8975, %v8970
    %v9601 = vpack.c.b16 %v8976, %v8971
    %v9602 = vpack.c.b16 %v8977, %v8972
    %v9603 = vpack.c.b16 %v8978, %v8973
    %v9604 = vpack.c.b16 %v8984, %v8979
    %v9605 = vpack.c.b16 %v8985, %v8980
    %v9606 = vpack.c.b16 %v8986, %v8981
    %v9607 = vpack.c.b16 %v8987, %v8982
    %v9608 = vpack.c.b16 %v8988, %v8983
    %v9609 = vpack.c.b16 %v8994, %v8989
    %v9610 = vpack.c.b16 %v8995, %v8990
    %v9611 = vpack.c.b16 %v8996, %v8991
    %v9612 = vpack.c.b16 %v8997, %v8992
    %v9613 = vpack.c.b16 %v8998, %v8993
    %v9614 = vpack.c.b16 %v9004, %v8999
    %v9615 = vpack.c.b16 %v9005, %v9000
    %v9616 = vpack.c.b16 %v9006, %v9001
    %v9617 = vpack.c.b16 %v9007, %v9002
    %v9618 = vpack.c.b16 %v9008, %v9003
    %v9619 = vpack.c.b16 %v9014, %v9009
    %v9620 = vpack.c.b16 %v9015, %v9010
    %v9621 = vpack.c.b16 %v9016, %v9011
    %v9622 = vpack.c.b16 %v9017, %v9012
    %v9623 = vpack.c.b16 %v9018, %v9013
    %v9624 = vpack.c.b16 %v9024, %v9019
    %v9625 = vpack.c.b16 %v9025, %v9020
    %v9626 = vpack.c.b16 %v9026, %v9021
    %v9627 = vpack.c.b16 %v9027, %v9022
    %v9628 = vpack.c.b16 %v9028, %v9023
    %v9629 = vpack.c.b16 %v9034, %v9029
    %v9630 = vpack.c.b16 %v9035, %v9030
    %v9631 = vpack.c.b16 %v9036, %v9031
    %v9632 = vpack.c.b16 %v9037, %v9032
    %v9633 = vpack.c.b16 %v9038, %v9033
    %v9634 = vpack.c.b16 %v9044, %v9039
    %v9635 = vpack.c.b16 %v9045, %v9040
    %v9636 = vpack.c.b16 %v9046, %v9041
    %v9637 = vpack.c.b16 %v9047, %v9042
    %v9638 = vpack.c.b16 %v9048, %v9043
    %v9639 = vpack.c.b16 %v9054, %v9049
    %v9640 = vpack.c.b16 %v9055, %v9050
    %v9641 = vpack.c.b16 %v9056, %v9051
    %v9642 = vpack.c.b16 %v9057, %v9052
    %v9643 = vpack.c.b16 %v9058, %v9053
    %v9644 = vpack.c.b16 %v9064, %v9059
    %v9645 = vpack.c.b16 %v9065, %v9060
    %v9646 = vpack.c.b16 %v9066, %v9061
    %v9647 = vpack.c.b16 %v9067, %v9062
    %v9648 = vpack.c.b16 %v9068, %v9063
    %v9649 = vpack.c.b16 %v9074, %v9069
    %v9650 = vpack.c.b16 %v9075, %v9070
    %v9651 = vpack.c.b16 %v9076, %v9071
    %v9652 = vpack.c.b16 %v9077, %v9072
    %v9653 = vpack.c.b16 %v9078, %v9073
    %v9654 = vpack.c.b16 %v9084, %v9079
    %v9655 = vpack.c.b16 %v9085, %v9080
    %v9656 = vpack.c.b16 %v9086, %v9081
    %v9657 = vpack.c.b16 %v9087, %v9082
    %v9658 = vpack.c.b16 %v9088, %v9083
    %v9659 = vpack.c.b16 %v9094, %v9089
    %v9660 = vpack.c.b16 %v9095, %v9090
    %v9661 = vpack.c.b16 %v9096, %v9091
    %v9662 = vpack.c.b16 %v9097, %v9092
    %v9663 = vpack.c.b16 %v9098, %v9093
    %v9664 = vpack.c.b16 %v9104, %v9099
    %v9665 = vpack.c.b16 %v9105, %v9100
    %v9666 = vpack.c.b16 %v9106, %v9101
    %v9667 = vpack.c.b16 %v9107, %v9102
    %v9668 = vpack.c.b16 %v9108, %v9103
    %v9669 = vpack.c.b16 %v9114, %v9109
    %v9670 = vpack.c.b16 %v9115, %v9110
    %v9671 = vpack.c.b16 %v9116, %v9111
    %v9672 = vpack.c.b16 %v9117, %v9112
    %v9673 = vpack.c.b16 %v9118, %v9113
    %v9674 = vpack.c.b16 %v9124, %v9119
    %v9675 = vpack.c.b16 %v9125, %v9120
    %v9676 = vpack.c.b16 %v9126, %v9121
    %v9677 = vpack.c.b16 %v9127, %v9122
    %v9678 = vpack.c.b16 %v9128, %v9123
    %v9679 = vpack.c.b16 %v9134, %v9129
    %v9680 = vpack.c.b16 %v9135, %v9130
    %v9681 = vpack.c.b16 %v9136, %v9131
    %v9682 = vpack.c.b16 %v9137, %v9132
    %v9683 = vpack.c.b16 %v9138, %v9133
    %v9684 = vpack.c.b16 %v9144, %v9139
    %v9685 = vpack.c.b16 %v9145, %v9140
    %v9686 = vpack.c.b16 %v9146, %v9141
    %v9687 = vpack.c.b16 %v9147, %v9142
    %v9688 = vpack.c.b16 %v9148, %v9143
    %v9689 = vpack.c.b16 %v9154, %v9149
    %v9690 = vpack.c.b16 %v9155, %v9150
    %v9691 = vpack.c.b16 %v9156, %v9151
    %v9692 = vpack.c.b16 %v9157, %v9152
    %v9693 = vpack.c.b16 %v9158, %v9153
    %v9694 = vpack.c.b16 %v9164, %v9159
    %v9695 = vpack.c.b16 %v9165, %v9160
    %v9696 = vpack.c.b16 %v9166, %v9161
    %v9697 = vpack.c.b16 %v9167, %v9162
    %v9698 = vpack.c.b16 %v9168, %v9163
    %v9699 = vpack.c.b16 %v9174, %v9169
    %v9700 = vpack.c.b16 %v9175, %v9170
    %v9701 = vpack.c.b16 %v9176, %v9171
    %v9702 = vpack.c.b16 %v9177, %v9172
    %v9703 = vpack.c.b16 %v9178, %v9173
    %v9704 = vpack.c.b16 %v9184, %v9179
    %v9705 = vpack.c.b16 %v9185, %v9180
    %v9706 = vpack.c.b16 %v9186, %v9181
    %v9707 = vpack.c.b16 %v9187, %v9182
    %v9708 = vpack.c.b16 %v9188, %v9183
    %v9709 = vpack.c.b16 %v9194, %v9189
    %v9710 = vpack.c.b16 %v9195, %v9190
    %v9711 = vpack.c.b16 %v9196, %v9191
    %v9712 = vpack.c.b16 %v9197, %v9192
    %v9713 = vpack.c.b16 %v9198, %v9193
    %v9714 = vpack.c.b16 %v9204, %v9199
    %v9715 = vpack.c.b16 %v9205, %v9200
    %v9716 = vpack.c.b16 %v9206, %v9201
    %v9717 = vpack.c.b16 %v9207, %v9202
    %v9718 = vpack.c.b16 %v9208, %v9203
    %v9719 = vpack.c.b16 %v9214, %v9209
    %v9720 = vpack.c.b16 %v9215, %v9210
    %v9721 = vpack.c.b16 %v9216, %v9211
    %v9722 = vpack.c.b16 %v9217, %v9212
    %v9723 = vpack.c.b16 %v9218, %v9213
    %v9724 = vpack.c.b16 %v9224, %v9219
    %v9725 = vpack.c.b16 %v9225, %v9220
    %v9726 = vpack.c.b16 %v9226, %v9221
    %v9727 = vpack.c.b16 %v9227, %v9222
    %v9728 = vpack.c.b16 %v9228, %v9223
    %v9729 = vpack.c.b16 %v9234, %v9229
    %v9730 = vpack.c.b16 %v9235, %v9230
    %v9731 = vpack.c.b16 %v9236, %v9231
    %v9732 = vpack.c.b16 %v9237, %v9232
    %v9733 = vpack.c.b16 %v9238, %v9233
    %v9734 = vpack.c.b16 %v9244, %v9239
    %v9735 = vpack.c.b16 %v9245, %v9240
    %v9736 = vpack.c.b16 %v9246, %v9241
    %v9737 = vpack.c.b16 %v9247, %v9242
    %v9738 = vpack.c.b16 %v9248, %v9243
    %v9739 = vpack.c.b16 %v9254, %v9249
    %v9740 = vpack.c.b16 %v9255, %v9250
    %v9741 = vpack.c.b16 %v9256, %v9251
    %v9742 = vpack.c.b16 %v9257, %v9252
    %v9743 = vpack.c.b16 %v9258, %v9253
    %v9744 = vpack.c.b16 %v9264, %v9259
    %v9745 = vpack.c.b16 %v9265, %v9260
    %v9746 = vpack.c.b16 %v9266, %v9261
    %v9747 = vpack.c.b16 %v9267, %v9262
    %v9748 = vpack.c.b16 %v9268, %v9263
    %v9749 = vpack.c.b16 %v9274, %v9269
    %v9750 = vpack.c.b16 %v9275, %v9270
    %v9751 = vpack.c.b16 %v9276, %v9271
    %v9752 = vpack.c.b16 %v9277, %v9272
    %v9753 = vpack.c.b16 %v9278, %v9273
    %v9754 = vpack.c.b16 %v9284, %v9279
    %v9755 = vpack.c.b16 %v9285, %v9280
    %v9756 = vpack.c.b16 %v9286, %v9281
    %v9757 = vpack.c.b16 %v9287, %v9282
    %v9758 = vpack.c.b16 %v9288, %v9283
    %v9759 = vpack.c.b16 %v9294, %v9289
    %v9760 = vpack.c.b16 %v9295, %v9290
    %v9761 = vpack.c.b16 %v9296, %v9291
    %v9762 = vpack.c.b16 %v9297, %v9292
    %v9763 = vpack.c.b16 %v9298, %v9293
    %v9764 = vpack.c.b16 %v9304, %v9299
    %v9765 = vpack.c.b16 %v9305, %v9300
    %v9766 = vpack.c.b16 %v9306, %v9301
    %v9767 = vpack.c.b16 %v9307, %v9302
    %v9768 = vpack.c.b16 %v9308, %v9303
    %v9769 = vpack.c.b16 %v9314, %v9309
    %v9770 = vpack.c.b16 %v9315, %v9310
    %v9771 = vpack.c.b16 %v9316, %v9311
    %v9772 = vpack.c.b16 %v9317, %v9312
    %v9773 = vpack.c.b16 %v9318, %v9313
    %v9774 = vpack.c.b16 %v9324, %v9319
    %v9775 = vpack.c.b16 %v9325, %v9320
    %v9776 = vpack.c.b16 %v9326, %v9321
    %v9777 = vpack.c.b16 %v9327, %v9322
    %v9778 = vpack.c.b16 %v9328, %v9323
    %v9779 = vpack.c.b16 %v9334, %v9329
    %v9780 = vpack.c.b16 %v9335, %v9330
    %v9781 = vpack.c.b16 %v9336, %v9331
    %v9782 = vpack.c.b16 %v9337, %v9332
    %v9783 = vpack.c.b16 %v9338, %v9333
    %v9784 = vpack.c.b16 %v9344, %v9339
    %v9785 = vpack.c.b16 %v9345, %v9340
    %v9786 = vpack.c.b16 %v9346, %v9341
    %v9787 = vpack.c.b16 %v9347, %v9342
    %v9788 = vpack.c.b16 %v9348, %v9343
    %v9789 = vpack.c.b16 %v9354, %v9349
    %v9790 = vpack.c.b16 %v9355, %v9350
    %v9791 = vpack.c.b16 %v9356, %v9351
    %v9792 = vpack.c.b16 %v9357, %v9352
    %v9793 = vpack.c.b16 %v9358, %v9353
    %v9794 = vpack.c.b16 %v9364, %v9359
    %v9795 = vpack.c.b16 %v9365, %v9360
    %v9796 = vpack.c.b16 %v9366, %v9361
    %v9797 = vpack.c.b16 %v9367, %v9362
    %v9798 = vpack.c.b16 %v9368, %v9363
    %v9799 = vpack.c.b16 %v9374, %v9369
    %v9800 = vpack.c.b16 %v9375, %v9370
    %v9801 = vpack.c.b16 %v9376, %v9371
    %v9802 = vpack.c.b16 %v9377, %v9372
    %v9803 = vpack.c.b16 %v9378, %v9373
    %v9804 = vpack.c.b16 %v9384, %v9379
    %v9805 = vpack.c.b16 %v9385, %v9380
    %v9806 = vpack.c.b16 %v9386, %v9381
    %v9807 = vpack.c.b16 %v9387, %v9382
    %v9808 = vpack.c.b16 %v9388, %v9383
    %v9809 = vpack.c.b16 %v9394, %v9389
    %v9810 = vpack.c.b16 %v9395, %v9390
    %v9811 = vpack.c.b16 %v9396, %v9391
    %v9812 = vpack.c.b16 %v9397, %v9392
    %v9813 = vpack.c.b16 %v9398, %v9393
    %v9814 = vpack.c.b16 %v9404, %v9399
    %v9815 = vpack.c.b16 %v9405, %v9400
    %v9816 = vpack.c.b16 %v9406, %v9401
    %v9817 = vpack.c.b16 %v9407, %v9402
    %v9818 = vpack.c.b16 %v9408, %v9403
    %v9819 = vpack.c.b16 %v9414, %v9409
    %v9820 = vpack.c.b16 %v9415, %v9410
    %v9821 = vpack.c.b16 %v9416, %v9411
    %v9822 = vpack.c.b16 %v9417, %v9412
    %v9823 = vpack.c.b16 %v9418, %v9413
    %v9824 = vpack.c.b16 %v9424, %v9419
    %v9825 = vpack.c.b16 %v9425, %v9420
    %v9826 = vpack.c.b16 %v9426, %v9421
    %v9827 = vpack.c.b16 %v9427, %v9422
    %v9828 = vpack.c.b16 %v9428, %v9423
    %v9829 = vpack.c.b16 %v9434, %v9429
    %v9830 = vpack.c.b16 %v9435, %v9430
    %v9831 = vpack.c.b16 %v9436, %v9431
    %v9832 = vpack.c.b16 %v9437, %v9432
    %v9833 = vpack.c.b16 %v9438, %v9433
    %v9834 = vpack.c.b16 %v9444, %v9439
    %v9835 = vpack.c.b16 %v9445, %v9440
    %v9836 = vpack.c.b16 %v9446, %v9441
    %v9837 = vpack.c.b16 %v9447, %v9442
    %v9838 = vpack.c.b16 %v9448, %v9443
    %v9839 = vpack.c.b16 %v9454, %v9449
    %v9840 = vpack.c.b16 %v9455, %v9450
    %v9841 = vpack.c.b16 %v9456, %v9451
    %v9842 = vpack.c.b16 %v9457, %v9452
    %v9843 = vpack.c.b16 %v9458, %v9453
    %v9844 = vpack.c.b16 %v9464, %v9459
    %v9845 = vpack.c.b16 %v9465, %v9460
    %v9846 = vpack.c.b16 %v9466, %v9461
    %v9847 = vpack.c.b16 %v9467, %v9462
    %v9848 = vpack.c.b16 %v9468, %v9463
    %v9849 = vpack.c.b16 %v9474, %v9469
    %v9850 = vpack.c.b16 %v9475, %v9470
    %v9851 = vpack.c.b16 %v9476, %v9471
    %v9852 = vpack.c.b16 %v9477, %v9472
    %v9853 = vpack.c.b16 %v9478, %v9473
    %v9854 = vpack.c.b16 %v9484, %v9479
    %v9855 = vpack.c.b16 %v9485, %v9480
    %v9856 = vpack.c.b16 %v9486, %v9481
    %v9857 = vpack.c.b16 %v9487, %v9482
    %v9858 = vpack.c.b16 %v9488, %v9483
    %v9859 = vpack.c.b16 %v9494, %v9489
    %v9860 = vpack.c.b16 %v9495, %v9490
    %v9861 = vpack.c.b16 %v9496, %v9491
    %v9862 = vpack.c.b16 %v9497, %v9492
    %v9863 = vpack.c.b16 %v9498, %v9493
    %v9864 = vpack.c.b16 %v9504, %v9499
    %v9865 = vpack.c.b16 %v9505, %v9500
    %v9866 = vpack.c.b16 %v9506, %v9501
    %v9867 = vpack.c.b16 %v9507, %v9502
    %v9868 = vpack.c.b16 %v9508, %v9503
    %v9869 = vpack.c.b16 %v9514, %v9509
    %v9870 = vpack.c.b16 %v9515, %v9510
    %v9871 = vpack.c.b16 %v9516, %v9511
    %v9872 = vpack.c.b16 %v9517, %v9512
    %v9873 = vpack.c.b16 %v9518, %v9513
    %v9874 = vpack.c.b16 %v9524, %v9519
    %v9875 = vpack.c.b16 %v9525, %v9520
    %v9876 = vpack.c.b16 %v9526, %v9521
    %v9877 = vpack.c.b16 %v9527, %v9522
    %v9878 = vpack.c.b16 %v9528, %v9523
    %v9879 = vpack.c.b16 %v9534, %v9529
    %v9880 = vpack.c.b16 %v9535, %v9530
    %v9881 = vpack.c.b16 %v9536, %v9531
    %v9882 = vpack.c.b16 %v9537, %v9532
    %v9883 = vpack.c.b16 %v9538, %v9533
    %v9884 = vpack.c.b16 %v9544, %v9539
    %v9885 = vpack.c.b16 %v9545, %v9540
    %v9886 = vpack.c.b16 %v9546, %v9541
    %v9887 = vpack.c.b16 %v9547, %v9542
    %v9888 = vpack.c.b16 %v9548, %v9543
    %v9889 = vpack.c.b16 %v9554, %v9549
    %v9890 = vpack.c.b16 %v9555, %v9550
    %v9891 = vpack.c.b16 %v9556, %v9551
    %v9892 = vpack.c.b16 %v9557, %v9552
    %v9893 = vpack.c.b16 %v9558, %v9553
    %v9894 = vpack.c.b16 %v9564, %v9559
    %v9895 = vpack.c.b16 %v9565, %v9560
    %v9896 = vpack.c.b16 %v9566, %v9561
    %v9897 = vpack.c.b16 %v9567, %v9562
    %v9898 = vpack.c.b16 %v9568, %v9563
    %v9899 = vpack.c.b16 %v9574, %v9569
    %v9900 = vpack.c.b16 %v9575, %v9570
    %v9901 = vpack.c.b16 %v9576, %v9571
    %v9902 = vpack.c.b16 %v9577, %v9572
    %v9903 = vpack.c.b16 %v9578, %v9573
    %v9904 = vpack.c.b16 %v9584, %v9579
    %v9905 = vpack.c.b16 %v9585, %v9580
    %v9906 = vpack.c.b16 %v9586, %v9581
    %v9907 = vpack.c.b16 %v9587, %v9582
    %v9908 = vpack.c.b16 %v9588, %v9583
    %10229 = vmatpush.bf16.msra.mxu0 %v9624
    %10230 = vmatpush.bf16.msra.mxu0 %v9619
    %10231 = vmatpush.bf16.msra.mxu0 %v9614
    %10232 = vmatpush.bf16.msra.mxu0 %v9609
    %10233 = vmatpush.bf16.msra.mxu0 %v9604
    %10234 = vmatpush.bf16.msra.mxu0 %v9599
    %10235 = vmatpush.bf16.msra.mxu0 %v9594
    %10236 = vmatpush.bf16.msra.mxu0 %v9589
    %10237 = vmatmul.bf16.gmra.mxu0 %v8161
    %v10238 = vpop.f32.mrf.mxu0
    %v10239 = vadd.f32 %v8555, %v10238
    %v10240 = vpop.f32.mrf.mxu0
    %v10241 = vadd.f32 %v8555, %v10240
    %10242 = vdwg.mxu0
    %10243 = vmatpush.bf16.msra.mxu0 %v9664
    %10244 = vmatpush.bf16.msra.mxu0 %v9659
    %10245 = vmatpush.bf16.msra.mxu0 %v9654
    %10246 = vmatpush.bf16.msra.mxu0 %v9649
    %10247 = vmatpush.bf16.msra.mxu0 %v9644
    %10248 = vmatpush.bf16.msra.mxu0 %v9639
    %10249 = vmatpush.bf16.msra.mxu0 %v9634
    %10250 = vmatpush.bf16.msra.mxu0 %v9629
    %10251 = vmatmul.bf16.gmra.mxu0 %v8162
    %v10252 = vpop.f32.mrf.mxu0
    %v10253 = vadd.f32 %v10239, %v10252
    %v10254 = vpop.f32.mrf.mxu0
    %v10255 = vadd.f32 %v10241, %v10254
    %10256 = vdwg.mxu0
    %10257 = vmatpush.bf16.msra.mxu0 %v9704
    %10258 = vmatpush.bf16.msra.mxu0 %v9699
    %10259 = vmatpush.bf16.msra.mxu0 %v9694
    %10260 = vmatpush.bf16.msra.mxu0 %v9689
    %10261 = vmatpush.bf16.msra.mxu0 %v9684
    %10262 = vmatpush.bf16.msra.mxu0 %v9679
    %10263 = vmatpush.bf16.msra.mxu0 %v9674
    %10264 = vmatpush.bf16.msra.mxu0 %v9669
    %10265 = vmatmul.bf16.gmra.mxu0 %v8163
    %v10266 = vpop.f32.mrf.mxu0
    %v10267 = vadd.f32 %v10253, %v10266
    %v10268 = vpop.f32.mrf.mxu0
    %v10269 = vadd.f32 %v10255, %v10268
    %10270 = vdwg.mxu0
    %10271 = vmatpush.bf16.msra.mxu0 %v9744
    %10272 = vmatpush.bf16.msra.mxu0 %v9739
    %10273 = vmatpush.bf16.msra.mxu0 %v9734
    %10274 = vmatpush.bf16.msra.mxu0 %v9729
    %10275 = vmatpush.bf16.msra.mxu0 %v9724
    %10276 = vmatpush.bf16.msra.mxu0 %v9719
    %10277 = vmatpush.bf16.msra.mxu0 %v9714
    %10278 = vmatpush.bf16.msra.mxu0 %v9709
    %10279 = vmatmul.bf16.gmra.mxu0 %v8164
    %v10280 = vpop.f32.mrf.mxu0
    %v10281 = vadd.f32 %v10267, %v10280
    %v10282 = vpop.f32.mrf.mxu0
    %v10283 = vadd.f32 %v10269, %v10282
    %10284 = vdwg.mxu0
    %10285 = vmatpush.bf16.msra.mxu0 %v9784
    %10286 = vmatpush.bf16.msra.mxu0 %v9779
    %10287 = vmatpush.bf16.msra.mxu0 %v9774
    %10288 = vmatpush.bf16.msra.mxu0 %v9769
    %10289 = vmatpush.bf16.msra.mxu0 %v9764
    %10290 = vmatpush.bf16.msra.mxu0 %v9759
    %10291 = vmatpush.bf16.msra.mxu0 %v9754
    %10292 = vmatpush.bf16.msra.mxu0 %v9749
    %10293 = vmatmul.bf16.gmra.mxu0 %v8165
    %v10294 = vpop.f32.mrf.mxu0
    %v10295 = vadd.f32 %v10281, %v10294
    %v10296 = vpop.f32.mrf.mxu0
    %v10297 = vadd.f32 %v10283, %v10296
    %10298 = vdwg.mxu0
    %10299 = vmatpush.bf16.msra.mxu0 %v9824
    %10300 = vmatpush.bf16.msra.mxu0 %v9819
    %10301 = vmatpush.bf16.msra.mxu0 %v9814
    %10302 = vmatpush.bf16.msra.mxu0 %v9809
    %10303 = vmatpush.bf16.msra.mxu0 %v9804
    %10304 = vmatpush.bf16.msra.mxu0 %v9799
    %10305 = vmatpush.bf16.msra.mxu0 %v9794
    %10306 = vmatpush.bf16.msra.mxu0 %v9789
    %10307 = vmatmul.bf16.gmra.mxu0 %v8166
    %v10308 = vpop.f32.mrf.mxu0
    %v10309 = vadd.f32 %v10295, %v10308
    %v10310 = vpop.f32.mrf.mxu0
    %v10311 = vadd.f32 %v10297, %v10310
    %10312 = vdwg.mxu0
    %10313 = vmatpush.bf16.msra.mxu0 %v9864
    %10314 = vmatpush.bf16.msra.mxu0 %v9859
    %10315 = vmatpush.bf16.msra.mxu0 %v9854
    %10316 = vmatpush.bf16.msra.mxu0 %v9849
    %10317 = vmatpush.bf16.msra.mxu0 %v9844
    %10318 = vmatpush.bf16.msra.mxu0 %v9839
    %10319 = vmatpush.bf16.msra.mxu0 %v9834
    %10320 = vmatpush.bf16.msra.mxu0 %v9829
    %10321 = vmatmul.bf16.gmra.mxu0 %v8167
    %v10322 = vpop.f32.mrf.mxu0
    %v10323 = vadd.f32 %v10309, %v10322
    %v10324 = vpop.f32.mrf.mxu0
    %v10325 = vadd.f32 %v10311, %v10324
    %10326 = vdwg.mxu0
    %10327 = vmatpush.bf16.msra.mxu0 %v9904
    %10328 = vmatpush.bf16.msra.mxu0 %v9899
    %10329 = vmatpush.bf16.msra.mxu0 %v9894
    %10330 = vmatpush.bf16.msra.mxu0 %v9889
    %10331 = vmatpush.bf16.msra.mxu0 %v9884
    %10332 = vmatpush.bf16.msra.mxu0 %v9879
    %10333 = vmatpush.bf16.msra.mxu0 %v9874
    %10334 = vmatpush.bf16.msra.mxu0 %v9869
    %10335 = vmatmul.bf16.gmra.mxu0 %v8168
    %v10336 = vpop.f32.mrf.mxu0
    %v10337 = vadd.f32 %v10323, %v10336
    %v10338 = vpop.f32.mrf.mxu0
    %v10339 = vadd.f32 %v10325, %v10338
    %10340 = vdwg.mxu0
    %10341 = vmatpush.bf16.msra.mxu0 %v9625
    %10342 = vmatpush.bf16.msra.mxu0 %v9620
    %10343 = vmatpush.bf16.msra.mxu0 %v9615
    %10344 = vmatpush.bf16.msra.mxu0 %v9610
    %10345 = vmatpush.bf16.msra.mxu0 %v9605
    %10346 = vmatpush.bf16.msra.mxu0 %v9600
    %10347 = vmatpush.bf16.msra.mxu0 %v9595
    %10348 = vmatpush.bf16.msra.mxu0 %v9590
    %10349 = vmatmul.bf16.gmra.mxu0 %v8161
    %v10350 = vpop.f32.mrf.mxu0
    %v10351 = vadd.f32 %v8556, %v10350
    %v10352 = vpop.f32.mrf.mxu0
    %v10353 = vadd.f32 %v8556, %v10352
    %10354 = vdwg.mxu0
    %10355 = vmatpush.bf16.msra.mxu0 %v9665
    %10356 = vmatpush.bf16.msra.mxu0 %v9660
    %10357 = vmatpush.bf16.msra.mxu0 %v9655
    %10358 = vmatpush.bf16.msra.mxu0 %v9650
    %10359 = vmatpush.bf16.msra.mxu0 %v9645
    %10360 = vmatpush.bf16.msra.mxu0 %v9640
    %10361 = vmatpush.bf16.msra.mxu0 %v9635
    %10362 = vmatpush.bf16.msra.mxu0 %v9630
    %10363 = vmatmul.bf16.gmra.mxu0 %v8162
    %v10364 = vpop.f32.mrf.mxu0
    %v10365 = vadd.f32 %v10351, %v10364
    %v10366 = vpop.f32.mrf.mxu0
    %v10367 = vadd.f32 %v10353, %v10366
    %10368 = vdwg.mxu0
    %10369 = vmatpush.bf16.msra.mxu0 %v9705
    %10370 = vmatpush.bf16.msra.mxu0 %v9700
    %10371 = vmatpush.bf16.msra.mxu0 %v9695
    %10372 = vmatpush.bf16.msra.mxu0 %v9690
    %10373 = vmatpush.bf16.msra.mxu0 %v9685
    %10374 = vmatpush.bf16.msra.mxu0 %v9680
    %10375 = vmatpush.bf16.msra.mxu0 %v9675
    %10376 = vmatpush.bf16.msra.mxu0 %v9670
    %10377 = vmatmul.bf16.gmra.mxu0 %v8163
    %v10378 = vpop.f32.mrf.mxu0
    %v10379 = vadd.f32 %v10365, %v10378
    %v10380 = vpop.f32.mrf.mxu0
    %v10381 = vadd.f32 %v10367, %v10380
    %10382 = vdwg.mxu0
    %10383 = vmatpush.bf16.msra.mxu0 %v9745
    %10384 = vmatpush.bf16.msra.mxu0 %v9740
    %10385 = vmatpush.bf16.msra.mxu0 %v9735
    %10386 = vmatpush.bf16.msra.mxu0 %v9730
    %10387 = vmatpush.bf16.msra.mxu0 %v9725
    %10388 = vmatpush.bf16.msra.mxu0 %v9720
    %10389 = vmatpush.bf16.msra.mxu0 %v9715
    %10390 = vmatpush.bf16.msra.mxu0 %v9710
    %10391 = vmatmul.bf16.gmra.mxu0 %v8164
    %v10392 = vpop.f32.mrf.mxu0
    %v10393 = vadd.f32 %v10379, %v10392
    %v10394 = vpop.f32.mrf.mxu0
    %v10395 = vadd.f32 %v10381, %v10394
    %10396 = vdwg.mxu0
    %10397 = vmatpush.bf16.msra.mxu0 %v9785
    %10398 = vmatpush.bf16.msra.mxu0 %v9780
    %10399 = vmatpush.bf16.msra.mxu0 %v9775
    %10400 = vmatpush.bf16.msra.mxu0 %v9770
    %10401 = vmatpush.bf16.msra.mxu0 %v9765
    %10402 = vmatpush.bf16.msra.mxu0 %v9760
    %10403 = vmatpush.bf16.msra.mxu0 %v9755
    %10404 = vmatpush.bf16.msra.mxu0 %v9750
    %10405 = vmatmul.bf16.gmra.mxu0 %v8165
    %v10406 = vpop.f32.mrf.mxu0
    %v10407 = vadd.f32 %v10393, %v10406
    %v10408 = vpop.f32.mrf.mxu0
    %v10409 = vadd.f32 %v10395, %v10408
    %10410 = vdwg.mxu0
    %10411 = vmatpush.bf16.msra.mxu0 %v9825
    %10412 = vmatpush.bf16.msra.mxu0 %v9820
    %10413 = vmatpush.bf16.msra.mxu0 %v9815
    %10414 = vmatpush.bf16.msra.mxu0 %v9810
    %10415 = vmatpush.bf16.msra.mxu0 %v9805
    %10416 = vmatpush.bf16.msra.mxu0 %v9800
    %10417 = vmatpush.bf16.msra.mxu0 %v9795
    %10418 = vmatpush.bf16.msra.mxu0 %v9790
    %10419 = vmatmul.bf16.gmra.mxu0 %v8166
    %v10420 = vpop.f32.mrf.mxu0
    %v10421 = vadd.f32 %v10407, %v10420
    %v10422 = vpop.f32.mrf.mxu0
    %v10423 = vadd.f32 %v10409, %v10422
    %10424 = vdwg.mxu0
    %10425 = vmatpush.bf16.msra.mxu0 %v9865
    %10426 = vmatpush.bf16.msra.mxu0 %v9860
    %10427 = vmatpush.bf16.msra.mxu0 %v9855
    %10428 = vmatpush.bf16.msra.mxu0 %v9850
    %10429 = vmatpush.bf16.msra.mxu0 %v9845
    %10430 = vmatpush.bf16.msra.mxu0 %v9840
    %10431 = vmatpush.bf16.msra.mxu0 %v9835
    %10432 = vmatpush.bf16.msra.mxu0 %v9830
    %10433 = vmatmul.bf16.gmra.mxu0 %v8167
    %v10434 = vpop.f32.mrf.mxu0
    %v10435 = vadd.f32 %v10421, %v10434
    %v10436 = vpop.f32.mrf.mxu0
    %v10437 = vadd.f32 %v10423, %v10436
    %10438 = vdwg.mxu0
    %10439 = vmatpush.bf16.msra.mxu0 %v9905
    %10440 = vmatpush.bf16.msra.mxu0 %v9900
    %10441 = vmatpush.bf16.msra.mxu0 %v9895
    %10442 = vmatpush.bf16.msra.mxu0 %v9890
    %10443 = vmatpush.bf16.msra.mxu0 %v9885
    %10444 = vmatpush.bf16.msra.mxu0 %v9880
    %10445 = vmatpush.bf16.msra.mxu0 %v9875
    %10446 = vmatpush.bf16.msra.mxu0 %v9870
    %10447 = vmatmul.bf16.gmra.mxu0 %v8168
    %v10448 = vpop.f32.mrf.mxu0
    %v10449 = vadd.f32 %v10435, %v10448
    %v10450 = vpop.f32.mrf.mxu0
    %v10451 = vadd.f32 %v10437, %v10450
    %10452 = vdwg.mxu0
    %10453 = vmatpush.bf16.msra.mxu0 %v9626
    %10454 = vmatpush.bf16.msra.mxu0 %v9621
    %10455 = vmatpush.bf16.msra.mxu0 %v9616
    %10456 = vmatpush.bf16.msra.mxu0 %v9611
    %10457 = vmatpush.bf16.msra.mxu0 %v9606
    %10458 = vmatpush.bf16.msra.mxu0 %v9601
    %10459 = vmatpush.bf16.msra.mxu0 %v9596
    %10460 = vmatpush.bf16.msra.mxu0 %v9591
    %10461 = vmatmul.bf16.gmra.mxu0 %v8161
    %v10462 = vpop.f32.mrf.mxu0
    %v10463 = vadd.f32 %v8557, %v10462
    %v10464 = vpop.f32.mrf.mxu0
    %v10465 = vadd.f32 %v8557, %v10464
    %10466 = vdwg.mxu0
    %10467 = vmatpush.bf16.msra.mxu0 %v9666
    %10468 = vmatpush.bf16.msra.mxu0 %v9661
    %10469 = vmatpush.bf16.msra.mxu0 %v9656
    %10470 = vmatpush.bf16.msra.mxu0 %v9651
    %10471 = vmatpush.bf16.msra.mxu0 %v9646
    %10472 = vmatpush.bf16.msra.mxu0 %v9641
    %10473 = vmatpush.bf16.msra.mxu0 %v9636
    %10474 = vmatpush.bf16.msra.mxu0 %v9631
    %10475 = vmatmul.bf16.gmra.mxu0 %v8162
    %v10476 = vpop.f32.mrf.mxu0
    %v10477 = vadd.f32 %v10463, %v10476
    %v10478 = vpop.f32.mrf.mxu0
    %v10479 = vadd.f32 %v10465, %v10478
    %10480 = vdwg.mxu0
    %10481 = vmatpush.bf16.msra.mxu0 %v9706
    %10482 = vmatpush.bf16.msra.mxu0 %v9701
    %10483 = vmatpush.bf16.msra.mxu0 %v9696
    %10484 = vmatpush.bf16.msra.mxu0 %v9691
    %10485 = vmatpush.bf16.msra.mxu0 %v9686
    %10486 = vmatpush.bf16.msra.mxu0 %v9681
    %10487 = vmatpush.bf16.msra.mxu0 %v9676
    %10488 = vmatpush.bf16.msra.mxu0 %v9671
    %10489 = vmatmul.bf16.gmra.mxu0 %v8163
    %v10490 = vpop.f32.mrf.mxu0
    %v10491 = vadd.f32 %v10477, %v10490
    %v10492 = vpop.f32.mrf.mxu0
    %v10493 = vadd.f32 %v10479, %v10492
    %10494 = vdwg.mxu0
    %10495 = vmatpush.bf16.msra.mxu0 %v9746
    %10496 = vmatpush.bf16.msra.mxu0 %v9741
    %10497 = vmatpush.bf16.msra.mxu0 %v9736
    %10498 = vmatpush.bf16.msra.mxu0 %v9731
    %10499 = vmatpush.bf16.msra.mxu0 %v9726
    %10500 = vmatpush.bf16.msra.mxu0 %v9721
    %10501 = vmatpush.bf16.msra.mxu0 %v9716
    %10502 = vmatpush.bf16.msra.mxu0 %v9711
    %10503 = vmatmul.bf16.gmra.mxu0 %v8164
    %v10504 = vpop.f32.mrf.mxu0
    %v10505 = vadd.f32 %v10491, %v10504
    %v10506 = vpop.f32.mrf.mxu0
    %v10507 = vadd.f32 %v10493, %v10506
    %10508 = vdwg.mxu0
    %10509 = vmatpush.bf16.msra.mxu0 %v9786
    %10510 = vmatpush.bf16.msra.mxu0 %v9781
    %10511 = vmatpush.bf16.msra.mxu0 %v9776
    %10512 = vmatpush.bf16.msra.mxu0 %v9771
    %10513 = vmatpush.bf16.msra.mxu0 %v9766
    %10514 = vmatpush.bf16.msra.mxu0 %v9761
    %10515 = vmatpush.bf16.msra.mxu0 %v9756
    %10516 = vmatpush.bf16.msra.mxu0 %v9751
    %10517 = vmatmul.bf16.gmra.mxu0 %v8165
    %v10518 = vpop.f32.mrf.mxu0
    %v10519 = vadd.f32 %v10505, %v10518
    %v10520 = vpop.f32.mrf.mxu0
    %v10521 = vadd.f32 %v10507, %v10520
    %10522 = vdwg.mxu0
    %10523 = vmatpush.bf16.msra.mxu0 %v9826
    %10524 = vmatpush.bf16.msra.mxu0 %v9821
    %10525 = vmatpush.bf16.msra.mxu0 %v9816
    %10526 = vmatpush.bf16.msra.mxu0 %v9811
    %10527 = vmatpush.bf16.msra.mxu0 %v9806
    %10528 = vmatpush.bf16.msra.mxu0 %v9801
    %10529 = vmatpush.bf16.msra.mxu0 %v9796
    %10530 = vmatpush.bf16.msra.mxu0 %v9791
    %10531 = vmatmul.bf16.gmra.mxu0 %v8166
    %v10532 = vpop.f32.mrf.mxu0
    %v10533 = vadd.f32 %v10519, %v10532
    %v10534 = vpop.f32.mrf.mxu0
    %v10535 = vadd.f32 %v10521, %v10534
    %10536 = vdwg.mxu0
    %10537 = vmatpush.bf16.msra.mxu0 %v9866
    %10538 = vmatpush.bf16.msra.mxu0 %v9861
    %10539 = vmatpush.bf16.msra.mxu0 %v9856
    %10540 = vmatpush.bf16.msra.mxu0 %v9851
    %10541 = vmatpush.bf16.msra.mxu0 %v9846
    %10542 = vmatpush.bf16.msra.mxu0 %v9841
    %10543 = vmatpush.bf16.msra.mxu0 %v9836
    %10544 = vmatpush.bf16.msra.mxu0 %v9831
    %10545 = vmatmul.bf16.gmra.mxu0 %v8167
    %v10546 = vpop.f32.mrf.mxu0
    %v10547 = vadd.f32 %v10533, %v10546
    %v10548 = vpop.f32.mrf.mxu0
    %v10549 = vadd.f32 %v10535, %v10548
    %10550 = vdwg.mxu0
    %10551 = vmatpush.bf16.msra.mxu0 %v9906
    %10552 = vmatpush.bf16.msra.mxu0 %v9901
    %10553 = vmatpush.bf16.msra.mxu0 %v9896
    %10554 = vmatpush.bf16.msra.mxu0 %v9891
    %10555 = vmatpush.bf16.msra.mxu0 %v9886
    %10556 = vmatpush.bf16.msra.mxu0 %v9881
    %10557 = vmatpush.bf16.msra.mxu0 %v9876
    %10558 = vmatpush.bf16.msra.mxu0 %v9871
    %10559 = vmatmul.bf16.gmra.mxu0 %v8168
    %v10560 = vpop.f32.mrf.mxu0
    %v10561 = vadd.f32 %v10547, %v10560
    %v10562 = vpop.f32.mrf.mxu0
    %v10563 = vadd.f32 %v10549, %v10562
    %10564 = vdwg.mxu0
    %10565 = vmatpush.bf16.msra.mxu0 %v9627
    %10566 = vmatpush.bf16.msra.mxu0 %v9622
    %10567 = vmatpush.bf16.msra.mxu0 %v9617
    %10568 = vmatpush.bf16.msra.mxu0 %v9612
    %10569 = vmatpush.bf16.msra.mxu0 %v9607
    %10570 = vmatpush.bf16.msra.mxu0 %v9602
    %10571 = vmatpush.bf16.msra.mxu0 %v9597
    %10572 = vmatpush.bf16.msra.mxu0 %v9592
    %10573 = vmatmul.bf16.gmra.mxu0 %v8161
    %v10574 = vpop.f32.mrf.mxu0
    %v10575 = vadd.f32 %v8558, %v10574
    %v10576 = vpop.f32.mrf.mxu0
    %v10577 = vadd.f32 %v8558, %v10576
    %10578 = vdwg.mxu0
    %10579 = vmatpush.bf16.msra.mxu0 %v9667
    %10580 = vmatpush.bf16.msra.mxu0 %v9662
    %10581 = vmatpush.bf16.msra.mxu0 %v9657
    %10582 = vmatpush.bf16.msra.mxu0 %v9652
    %10583 = vmatpush.bf16.msra.mxu0 %v9647
    %10584 = vmatpush.bf16.msra.mxu0 %v9642
    %10585 = vmatpush.bf16.msra.mxu0 %v9637
    %10586 = vmatpush.bf16.msra.mxu0 %v9632
    %10587 = vmatmul.bf16.gmra.mxu0 %v8162
    %v10588 = vpop.f32.mrf.mxu0
    %v10589 = vadd.f32 %v10575, %v10588
    %v10590 = vpop.f32.mrf.mxu0
    %v10591 = vadd.f32 %v10577, %v10590
    %10592 = vdwg.mxu0
    %10593 = vmatpush.bf16.msra.mxu0 %v9707
    %10594 = vmatpush.bf16.msra.mxu0 %v9702
    %10595 = vmatpush.bf16.msra.mxu0 %v9697
    %10596 = vmatpush.bf16.msra.mxu0 %v9692
    %10597 = vmatpush.bf16.msra.mxu0 %v9687
    %10598 = vmatpush.bf16.msra.mxu0 %v9682
    %10599 = vmatpush.bf16.msra.mxu0 %v9677
    %10600 = vmatpush.bf16.msra.mxu0 %v9672
    %10601 = vmatmul.bf16.gmra.mxu0 %v8163
    %v10602 = vpop.f32.mrf.mxu0
    %v10603 = vadd.f32 %v10589, %v10602
    %v10604 = vpop.f32.mrf.mxu0
    %v10605 = vadd.f32 %v10591, %v10604
    %10606 = vdwg.mxu0
    %10607 = vmatpush.bf16.msra.mxu0 %v9747
    %10608 = vmatpush.bf16.msra.mxu0 %v9742
    %10609 = vmatpush.bf16.msra.mxu0 %v9737
    %10610 = vmatpush.bf16.msra.mxu0 %v9732
    %10611 = vmatpush.bf16.msra.mxu0 %v9727
    %10612 = vmatpush.bf16.msra.mxu0 %v9722
    %10613 = vmatpush.bf16.msra.mxu0 %v9717
    %10614 = vmatpush.bf16.msra.mxu0 %v9712
    %10615 = vmatmul.bf16.gmra.mxu0 %v8164
    %v10616 = vpop.f32.mrf.mxu0
    %v10617 = vadd.f32 %v10603, %v10616
    %v10618 = vpop.f32.mrf.mxu0
    %v10619 = vadd.f32 %v10605, %v10618
    %10620 = vdwg.mxu0
    %10621 = vmatpush.bf16.msra.mxu0 %v9787
    %10622 = vmatpush.bf16.msra.mxu0 %v9782
    %10623 = vmatpush.bf16.msra.mxu0 %v9777
    %10624 = vmatpush.bf16.msra.mxu0 %v9772
    %10625 = vmatpush.bf16.msra.mxu0 %v9767
    %10626 = vmatpush.bf16.msra.mxu0 %v9762
    %10627 = vmatpush.bf16.msra.mxu0 %v9757
    %10628 = vmatpush.bf16.msra.mxu0 %v9752
    %10629 = vmatmul.bf16.gmra.mxu0 %v8165
    %v10630 = vpop.f32.mrf.mxu0
    %v10631 = vadd.f32 %v10617, %v10630
    %v10632 = vpop.f32.mrf.mxu0
    %v10633 = vadd.f32 %v10619, %v10632
    %10634 = vdwg.mxu0
    %10635 = vmatpush.bf16.msra.mxu0 %v9827
    %10636 = vmatpush.bf16.msra.mxu0 %v9822
    %10637 = vmatpush.bf16.msra.mxu0 %v9817
    %10638 = vmatpush.bf16.msra.mxu0 %v9812
    %10639 = vmatpush.bf16.msra.mxu0 %v9807
    %10640 = vmatpush.bf16.msra.mxu0 %v9802
    %10641 = vmatpush.bf16.msra.mxu0 %v9797
    %10642 = vmatpush.bf16.msra.mxu0 %v9792
    %10643 = vmatmul.bf16.gmra.mxu0 %v8166
    %v10644 = vpop.f32.mrf.mxu0
    %v10645 = vadd.f32 %v10631, %v10644
    %v10646 = vpop.f32.mrf.mxu0
    %v10647 = vadd.f32 %v10633, %v10646
    %10648 = vdwg.mxu0
    %10649 = vmatpush.bf16.msra.mxu0 %v9867
    %10650 = vmatpush.bf16.msra.mxu0 %v9862
    %10651 = vmatpush.bf16.msra.mxu0 %v9857
    %10652 = vmatpush.bf16.msra.mxu0 %v9852
    %10653 = vmatpush.bf16.msra.mxu0 %v9847
    %10654 = vmatpush.bf16.msra.mxu0 %v9842
    %10655 = vmatpush.bf16.msra.mxu0 %v9837
    %10656 = vmatpush.bf16.msra.mxu0 %v9832
    %10657 = vmatmul.bf16.gmra.mxu0 %v8167
    %v10658 = vpop.f32.mrf.mxu0
    %v10659 = vadd.f32 %v10645, %v10658
    %v10660 = vpop.f32.mrf.mxu0
    %v10661 = vadd.f32 %v10647, %v10660
    %10662 = vdwg.mxu0
    %10663 = vmatpush.bf16.msra.mxu0 %v9907
    %10664 = vmatpush.bf16.msra.mxu0 %v9902
    %10665 = vmatpush.bf16.msra.mxu0 %v9897
    %10666 = vmatpush.bf16.msra.mxu0 %v9892
    %10667 = vmatpush.bf16.msra.mxu0 %v9887
    %10668 = vmatpush.bf16.msra.mxu0 %v9882
    %10669 = vmatpush.bf16.msra.mxu0 %v9877
    %10670 = vmatpush.bf16.msra.mxu0 %v9872
    %10671 = vmatmul.bf16.gmra.mxu0 %v8168
    %v10672 = vpop.f32.mrf.mxu0
    %v10673 = vadd.f32 %v10659, %v10672
    %v10674 = vpop.f32.mrf.mxu0
    %v10675 = vadd.f32 %v10661, %v10674
    %10676 = vdwg.mxu0
    %10677 = vmatpush.bf16.msra.mxu0 %v9628
    %10678 = vmatpush.bf16.msra.mxu0 %v9623
    %10679 = vmatpush.bf16.msra.mxu0 %v9618
    %10680 = vmatpush.bf16.msra.mxu0 %v9613
    %10681 = vmatpush.bf16.msra.mxu0 %v9608
    %10682 = vmatpush.bf16.msra.mxu0 %v9603
    %10683 = vmatpush.bf16.msra.mxu0 %v9598
    %10684 = vmatpush.bf16.msra.mxu0 %v9593
    %10685 = vmatmul.bf16.gmra.mxu0 %v8161
    %v10686 = vpop.f32.mrf.mxu0
    %v10687 = vadd.f32 %v8559, %v10686
    %v10688 = vpop.f32.mrf.mxu0
    %v10689 = vadd.f32 %v8559, %v10688
    %10690 = vdwg.mxu0
    %10691 = vmatpush.bf16.msra.mxu0 %v9668
    %10692 = vmatpush.bf16.msra.mxu0 %v9663
    %10693 = vmatpush.bf16.msra.mxu0 %v9658
    %10694 = vmatpush.bf16.msra.mxu0 %v9653
    %10695 = vmatpush.bf16.msra.mxu0 %v9648
    %10696 = vmatpush.bf16.msra.mxu0 %v9643
    %10697 = vmatpush.bf16.msra.mxu0 %v9638
    %10698 = vmatpush.bf16.msra.mxu0 %v9633
    %10699 = vmatmul.bf16.gmra.mxu0 %v8162
    %v10700 = vpop.f32.mrf.mxu0
    %v10701 = vadd.f32 %v10687, %v10700
    %v10702 = vpop.f32.mrf.mxu0
    %v10703 = vadd.f32 %v10689, %v10702
    %10704 = vdwg.mxu0
    %10705 = vmatpush.bf16.msra.mxu0 %v9708
    %10706 = vmatpush.bf16.msra.mxu0 %v9703
    %10707 = vmatpush.bf16.msra.mxu0 %v9698
    %10708 = vmatpush.bf16.msra.mxu0 %v9693
    %10709 = vmatpush.bf16.msra.mxu0 %v9688
    %10710 = vmatpush.bf16.msra.mxu0 %v9683
    %10711 = vmatpush.bf16.msra.mxu0 %v9678
    %10712 = vmatpush.bf16.msra.mxu0 %v9673
    %10713 = vmatmul.bf16.gmra.mxu0 %v8163
    %v10714 = vpop.f32.mrf.mxu0
    %v10715 = vadd.f32 %v10701, %v10714
    %v10716 = vpop.f32.mrf.mxu0
    %v10717 = vadd.f32 %v10703, %v10716
    %10718 = vdwg.mxu0
    %10719 = vmatpush.bf16.msra.mxu0 %v9748
    %10720 = vmatpush.bf16.msra.mxu0 %v9743
    %10721 = vmatpush.bf16.msra.mxu0 %v9738
    %10722 = vmatpush.bf16.msra.mxu0 %v9733
    %10723 = vmatpush.bf16.msra.mxu0 %v9728
    %10724 = vmatpush.bf16.msra.mxu0 %v9723
    %10725 = vmatpush.bf16.msra.mxu0 %v9718
    %10726 = vmatpush.bf16.msra.mxu0 %v9713
    %10727 = vmatmul.bf16.gmra.mxu0 %v8164
    %v10728 = vpop.f32.mrf.mxu0
    %v10729 = vadd.f32 %v10715, %v10728
    %v10730 = vpop.f32.mrf.mxu0
    %v10731 = vadd.f32 %v10717, %v10730
    %10732 = vdwg.mxu0
    %10733 = vmatpush.bf16.msra.mxu0 %v9788
    %10734 = vmatpush.bf16.msra.mxu0 %v9783
    %10735 = vmatpush.bf16.msra.mxu0 %v9778
    %10736 = vmatpush.bf16.msra.mxu0 %v9773
    %10737 = vmatpush.bf16.msra.mxu0 %v9768
    %10738 = vmatpush.bf16.msra.mxu0 %v9763
    %10739 = vmatpush.bf16.msra.mxu0 %v9758
    %10740 = vmatpush.bf16.msra.mxu0 %v9753
    %10741 = vmatmul.bf16.gmra.mxu0 %v8165
    %v10742 = vpop.f32.mrf.mxu0
    %v10743 = vadd.f32 %v10729, %v10742
    %v10744 = vpop.f32.mrf.mxu0
    %v10745 = vadd.f32 %v10731, %v10744
    %10746 = vdwg.mxu0
    %10747 = vmatpush.bf16.msra.mxu0 %v9828
    %10748 = vmatpush.bf16.msra.mxu0 %v9823
    %10749 = vmatpush.bf16.msra.mxu0 %v9818
    %10750 = vmatpush.bf16.msra.mxu0 %v9813
    %10751 = vmatpush.bf16.msra.mxu0 %v9808
    %10752 = vmatpush.bf16.msra.mxu0 %v9803
    %10753 = vmatpush.bf16.msra.mxu0 %v9798
    %10754 = vmatpush.bf16.msra.mxu0 %v9793
    %10755 = vmatmul.bf16.gmra.mxu0 %v8166
    %v10756 = vpop.f32.mrf.mxu0
    %v10757 = vadd.f32 %v10743, %v10756
    %v10758 = vpop.f32.mrf.mxu0
    %v10759 = vadd.f32 %v10745, %v10758
    %10760 = vdwg.mxu0
    %10761 = vmatpush.bf16.msra.mxu0 %v9868
    %10762 = vmatpush.bf16.msra.mxu0 %v9863
    %10763 = vmatpush.bf16.msra.mxu0 %v9858
    %10764 = vmatpush.bf16.msra.mxu0 %v9853
    %10765 = vmatpush.bf16.msra.mxu0 %v9848
    %10766 = vmatpush.bf16.msra.mxu0 %v9843
    %10767 = vmatpush.bf16.msra.mxu0 %v9838
    %10768 = vmatpush.bf16.msra.mxu0 %v9833
    %10769 = vmatmul.bf16.gmra.mxu0 %v8167
    %v10770 = vpop.f32.mrf.mxu0
    %v10771 = vadd.f32 %v10757, %v10770
    %v10772 = vpop.f32.mrf.mxu0
    %v10773 = vadd.f32 %v10759, %v10772
    %10774 = vdwg.mxu0
    %10775 = vmatpush.bf16.msra.mxu0 %v9908
    %10776 = vmatpush.bf16.msra.mxu0 %v9903
    %10777 = vmatpush.bf16.msra.mxu0 %v9898
    %10778 = vmatpush.bf16.msra.mxu0 %v9893
    %10779 = vmatpush.bf16.msra.mxu0 %v9888
    %10780 = vmatpush.bf16.msra.mxu0 %v9883
    %10781 = vmatpush.bf16.msra.mxu0 %v9878
    %10782 = vmatpush.bf16.msra.mxu0 %v9873
    %10783 = vmatmul.bf16.gmra.mxu0 %v8168
    %v10784 = vpop.f32.mrf.mxu0
    %v10785 = vadd.f32 %v10771, %v10784
    %v10786 = vpop.f32.mrf.mxu0
    %v10787 = vadd.f32 %v10773, %v10786
    %10788 = vdwg.mxu0
    %v10789 = vxor.u32 %v10337, 2147483648
    %v10790 = vxor.u32 %v10449, 2147483648
    %v10791 = vxor.u32 %v10561, 2147483648
    %v10792 = vxor.u32 %v10673, 2147483648
    %v10793 = vxor.u32 %v10785, 2147483648
    %v10794 = vxor.u32 %v10339, 2147483648
    %v10795 = vxor.u32 %v10451, 2147483648
    %v10796 = vxor.u32 %v10563, 2147483648
    %v10797 = vxor.u32 %v10675, 2147483648
    %v10798 = vxor.u32 %v10787, 2147483648
    %v10799 = vmul.f32 %v10789, 1.442695
    %v10800 = vpow.pop %v10799
    %v10801 = vmul.f32 %v10790, 1.442695
    %v10802 = vpow.pop %v10801
    %v10803 = vmul.f32 %v10791, 1.442695
    %v10804 = vpow.pop %v10803
    %v10805 = vmul.f32 %v10792, 1.442695
    %v10806 = vpow.pop %v10805
    %v10807 = vmul.f32 %v10793, 1.442695
    %v10808 = vpow.pop %v10807
    %v10809 = vmul.f32 %v10794, 1.442695
    %v10810 = vpow.pop %v10809
    %v10811 = vmul.f32 %v10795, 1.442695
    %v10812 = vpow.pop %v10811
    %v10813 = vmul.f32 %v10796, 1.442695
    %v10814 = vpow.pop %v10813
    %v10815 = vmul.f32 %v10797, 1.442695
    %v10816 = vpow.pop %v10815
    %v10817 = vmul.f32 %v10798, 1.442695
    %v10818 = vpow.pop %v10817
    %v10819 = vadd.f32 %v10800, 1.0
    %v10820 = vadd.f32 %v10802, 1.0
    %v10821 = vadd.f32 %v10804, 1.0
    %v10822 = vadd.f32 %v10806, 1.0
    %v10823 = vadd.f32 %v10808, 1.0
    %v10824 = vadd.f32 %v10810, 1.0
    %v10825 = vadd.f32 %v10812, 1.0
    %v10826 = vadd.f32 %v10814, 1.0
    %v10827 = vadd.f32 %v10816, 1.0
    %v10828 = vadd.f32 %v10818, 1.0
    %v10829 = vrcp.pop %v10819
    %v10830 = vmul.f32 %v10819, %v10829
    %v10831 = vsub.f32 1.0, %v10830
    %v10832 = vmul.f32 %v10829, %v10831
    %v10833 = vadd.f32 %v10829, %v10832
    %vm10834 = vweird.f32 %v10819
    %vm10835 = vweird.f32 %v10829
    %vm10836 = vmor %vm10834, %vm10835
    %v10837 = vsel %vm10836, %v10829, %v10833
    %v10838 = vand.u32 2147483647, %v10819
    %vm10839 = vcmp.eq.f32.partialorder %v10838, 8.507059e+37
    %v10840 = vand.u32 %v10819, 2147483648
    %v10841 = vor.u32 1.1754944e-38, %v10840
    %v10842 = vsel %vm10839, %v10841, %v10837
    %v10843 = vmul.f32 1.0, %v10842
    %v10844 = vrcp.pop %v10820
    %v10845 = vmul.f32 %v10820, %v10844
    %v10846 = vsub.f32 1.0, %v10845
    %v10847 = vmul.f32 %v10844, %v10846
    %v10848 = vadd.f32 %v10844, %v10847
    %vm10849 = vweird.f32 %v10820
    %vm10850 = vweird.f32 %v10844
    %vm10851 = vmor %vm10849, %vm10850
    %v10852 = vsel %vm10851, %v10844, %v10848
    %v10853 = vand.u32 2147483647, %v10820
    %vm10854 = vcmp.eq.f32.partialorder %v10853, 8.507059e+37
    %v10855 = vand.u32 %v10820, 2147483648
    %v10856 = vor.u32 1.1754944e-38, %v10855
    %v10857 = vsel %vm10854, %v10856, %v10852
    %v10858 = vmul.f32 1.0, %v10857
    %v10859 = vrcp.pop %v10821
    %v10860 = vmul.f32 %v10821, %v10859
    %v10861 = vsub.f32 1.0, %v10860
    %v10862 = vmul.f32 %v10859, %v10861
    %v10863 = vadd.f32 %v10859, %v10862
    %vm10864 = vweird.f32 %v10821
    %vm10865 = vweird.f32 %v10859
    %vm10866 = vmor %vm10864, %vm10865
    %v10867 = vsel %vm10866, %v10859, %v10863
    %v10868 = vand.u32 2147483647, %v10821
    %vm10869 = vcmp.eq.f32.partialorder %v10868, 8.507059e+37
    %v10870 = vand.u32 %v10821, 2147483648
    %v10871 = vor.u32 1.1754944e-38, %v10870
    %v10872 = vsel %vm10869, %v10871, %v10867
    %v10873 = vmul.f32 1.0, %v10872
    %v10874 = vrcp.pop %v10822
    %v10875 = vmul.f32 %v10822, %v10874
    %v10876 = vsub.f32 1.0, %v10875
    %v10877 = vmul.f32 %v10874, %v10876
    %v10878 = vadd.f32 %v10874, %v10877
    %vm10879 = vweird.f32 %v10822
    %vm10880 = vweird.f32 %v10874
    %vm10881 = vmor %vm10879, %vm10880
    %v10882 = vsel %vm10881, %v10874, %v10878
    %v10883 = vand.u32 2147483647, %v10822
    %vm10884 = vcmp.eq.f32.partialorder %v10883, 8.507059e+37
    %v10885 = vand.u32 %v10822, 2147483648
    %v10886 = vor.u32 1.1754944e-38, %v10885
    %v10887 = vsel %vm10884, %v10886, %v10882
    %v10888 = vmul.f32 1.0, %v10887
    %v10889 = vrcp.pop %v10823
    %v10890 = vmul.f32 %v10823, %v10889
    %v10891 = vsub.f32 1.0, %v10890
    %v10892 = vmul.f32 %v10889, %v10891
    %v10893 = vadd.f32 %v10889, %v10892
    %vm10894 = vweird.f32 %v10823
    %vm10895 = vweird.f32 %v10889
    %vm10896 = vmor %vm10894, %vm10895
    %v10897 = vsel %vm10896, %v10889, %v10893
    %v10898 = vand.u32 2147483647, %v10823
    %vm10899 = vcmp.eq.f32.partialorder %v10898, 8.507059e+37
    %v10900 = vand.u32 %v10823, 2147483648
    %v10901 = vor.u32 1.1754944e-38, %v10900
    %v10902 = vsel %vm10899, %v10901, %v10897
    %v10903 = vmul.f32 1.0, %v10902
    %v10904 = vrcp.pop %v10824
    %v10905 = vmul.f32 %v10824, %v10904
    %v10906 = vsub.f32 1.0, %v10905
    %v10907 = vmul.f32 %v10904, %v10906
    %v10908 = vadd.f32 %v10904, %v10907
    %vm10909 = vweird.f32 %v10824
    %vm10910 = vweird.f32 %v10904
    %vm10911 = vmor %vm10909, %vm10910
    %v10912 = vsel %vm10911, %v10904, %v10908
    %v10913 = vand.u32 2147483647, %v10824
    %vm10914 = vcmp.eq.f32.partialorder %v10913, 8.507059e+37
    %v10915 = vand.u32 %v10824, 2147483648
    %v10916 = vor.u32 1.1754944e-38, %v10915
    %v10917 = vsel %vm10914, %v10916, %v10912
    %v10918 = vmul.f32 1.0, %v10917
    %v10919 = vrcp.pop %v10825
    %v10920 = vmul.f32 %v10825, %v10919
    %v10921 = vsub.f32 1.0, %v10920
    %v10922 = vmul.f32 %v10919, %v10921
    %v10923 = vadd.f32 %v10919, %v10922
    %vm10924 = vweird.f32 %v10825
    %vm10925 = vweird.f32 %v10919
    %vm10926 = vmor %vm10924, %vm10925
    %v10927 = vsel %vm10926, %v10919, %v10923
    %v10928 = vand.u32 2147483647, %v10825
    %vm10929 = vcmp.eq.f32.partialorder %v10928, 8.507059e+37
    %v10930 = vand.u32 %v10825, 2147483648
    %v10931 = vor.u32 1.1754944e-38, %v10930
    %v10932 = vsel %vm10929, %v10931, %v10927
    %v10933 = vmul.f32 1.0, %v10932
    %v10934 = vrcp.pop %v10826
    %v10935 = vmul.f32 %v10826, %v10934
    %v10936 = vsub.f32 1.0, %v10935
    %v10937 = vmul.f32 %v10934, %v10936
    %v10938 = vadd.f32 %v10934, %v10937
    %vm10939 = vweird.f32 %v10826
    %vm10940 = vweird.f32 %v10934
    %vm10941 = vmor %vm10939, %vm10940
    %v10942 = vsel %vm10941, %v10934, %v10938
    %v10943 = vand.u32 2147483647, %v10826
    %vm10944 = vcmp.eq.f32.partialorder %v10943, 8.507059e+37
    %v10945 = vand.u32 %v10826, 2147483648
    %v10946 = vor.u32 1.1754944e-38, %v10945
    %v10947 = vsel %vm10944, %v10946, %v10942
    %v10948 = vmul.f32 1.0, %v10947
    %v10949 = vrcp.pop %v10827
    %v10950 = vmul.f32 %v10827, %v10949
    %v10951 = vsub.f32 1.0, %v10950
    %v10952 = vmul.f32 %v10949, %v10951
    %v10953 = vadd.f32 %v10949, %v10952
    %vm10954 = vweird.f32 %v10827
    %vm10955 = vweird.f32 %v10949
    %vm10956 = vmor %vm10954, %vm10955
    %v10957 = vsel %vm10956, %v10949, %v10953
    %v10958 = vand.u32 2147483647, %v10827
    %vm10959 = vcmp.eq.f32.partialorder %v10958, 8.507059e+37
    %v10960 = vand.u32 %v10827, 2147483648
    %v10961 = vor.u32 1.1754944e-38, %v10960
    %v10962 = vsel %vm10959, %v10961, %v10957
    %v10963 = vmul.f32 1.0, %v10962
    %v10964 = vrcp.pop %v10828
    %v10965 = vmul.f32 %v10828, %v10964
    %v10966 = vsub.f32 1.0, %v10965
    %v10967 = vmul.f32 %v10964, %v10966
    %v10968 = vadd.f32 %v10964, %v10967
    %vm10969 = vweird.f32 %v10828
    %vm10970 = vweird.f32 %v10964
    %vm10971 = vmor %vm10969, %vm10970
    %v10972 = vsel %vm10971, %v10964, %v10968
    %v10973 = vand.u32 2147483647, %v10828
    %vm10974 = vcmp.eq.f32.partialorder %v10973, 8.507059e+37
    %v10975 = vand.u32 %v10828, 2147483648
    %v10976 = vor.u32 1.1754944e-38, %v10975
    %v10977 = vsel %vm10974, %v10976, %v10972
    %v10978 = vmul.f32 1.0, %v10977
    %10979 = vst [vmem:[#allocation11] sm:$0xff] %v10843
    %10980 = vst [vmem:[#allocation11 + $0x8] sm:$0xff] %v10858
    %10981 = vst [vmem:[#allocation11 + $0x10] sm:$0xff] %v10873
    %10982 = vst [vmem:[#allocation11 + $0x18] sm:$0xff] %v10888
    %10983 = vst [vmem:[#allocation11 + $0x20] sm:$0xff] %v10903
    %10984 = vst [vmem:[#allocation11 + $0x28] sm:$0xff] %v10918
    %10985 = vst [vmem:[#allocation11 + $0x30] sm:$0xff] %v10933
    %10986 = vst [vmem:[#allocation11 + $0x38] sm:$0xff] %v10948
    %10987 = vst [vmem:[#allocation11 + $0x40] sm:$0xff] %v10963
    %10988 = vst [vmem:[#allocation11 + $0x48] sm:$0xff] %v10978
    // Predicated region
    $region42: #{tpu_custom_call.1} parent=1 // pred_check
      _
    $region43: #{tpu_custom_call.1} parent=1 // pred_check_branch
      %10990 = sbr.rel (0) target = $region45
    $region44: #{tpu_custom_call.1} parent=1 // pred_region
      %10992 = vsyncadd [#allocation4], 0
      %s10993 = sshll.u32 [#allocation11], 4
      %s10994 = int_to_ptr.vmem [resolvable:$true] %s10993
      %s10995 = sshll.u32 %s5, 4
      %s10996 = int_to_ptr.hbm [resolvable:$true] %s10995
      %11001 = dma.vmem_to_hbm [thread:$0]  %s10994, 1280, %s10996, [#allocation4], 640, 640, 40
    $region45: #{tpu_custom_call.1} parent=1 // pred_fallthru
      _
    // Predicated region
    $region46: #{tpu_custom_call.1} parent=1 // pred_check
      _
    $region47: #{tpu_custom_call.1} parent=1 // pred_check_branch
      %11003 = sbr.rel (0) target = $region49
    $region48: #{tpu_custom_call.1} parent=1 // pred_region
      %11005 = dma.done [#allocation4], 1280
    $region49: #{tpu_custom_call.1} parent=1 // pred_fallthru
      _
    %11006 = vsyncpa [#allocation3], 1
    %11007 = vsyncpa [#allocation6], 1
    %11008 = vsyncpa [#allocation9], 1
    %11009 = vsyncpa [#allocation4], 1

</llo_original>
